<compile_context>
chip_gen: v7x
topology: tpu7x:2x2x1
jax: 0.10.0
libtpu: 0.0.40
codegen_flags: <defaults>
</compile_context>

<pallas_src>
import functools
import math

import jax
import jax.numpy as jnp
from jax.experimental import pallas as pl
from jax.experimental.pallas import tpu as pltpu

EPS = 1e-5
NEG_BIG = -1e30          # finite "-inf" used to disable padded vocab columns

PACKED_PARAM_ORDER = (
    "ln1a", "ln1b", "wqkv1", "bqkv1",
    "ln2a", "ln2b", "wq2", "bq2", "wkv2", "bkv2",
    "ln3a", "ln3b", "w1", "b1", "w2", "b2",
)


# ----------------------------- sizing helpers -----------------------------

def _round_up(x, m):
    return ((x + m - 1) // m) * m


def _pick_block_batch(B, N, D):
    # Fill the MXU M dim (aim for >=256..512 rows) while bounding the live
    # (BB*N, ~4D) f32 activation temporaries, and keep >= 2 batch blocks so the
    # "parallel" batch axis can feed both v7x TensorCores.
    rows_cap = max(128, (2 * 1024 * 1024) // max(4 * D, 1))
    target_rows = min(512, rows_cap)
    bb = max(1, min(B, max(1, target_rows // max(N, 1))))
    if B >= 2:
        bb = min(bb, max(1, (B + 1) // 2))
    return bb


def _pick_block_vocab(V):
    # Lane-dense vocab tiles (>=128, default 512): wide unmasked stores and a
    # full MXU N dim, independent of whether V has nice divisors (V is padded).
    return min(512, _round_up(max(V, 1), 128))


def _default_vmem_limit():
    try:
        kind = jax.devices()[0].device_kind.lower()
    except Exception:  # pragma: no cover - defensive
        kind = ""
    if "v7" in kind:
        return 48 * 1024 * 1024           # 64 MiB physical per TC on v7x
    if "v5" in kind or "v6" in kind:
        return 96 * 1024 * 1024           # 128 MiB physical VMEM
    return 32 * 1024 * 1024


# ----------------------------- decoder-layer kernel -----------------------------

def _make_decoder_layer_kernel(H, d_head, BB, N, D):
    scale = 1.0 / math.sqrt(d_head)
    BBN = BB * N

    def kernel(x_ref, y_ref, *rest):
        out_ref = rest[-1]
        p = dict(zip(PACKED_PARAM_ORDER, rest[:-1]))
        X = x_ref[...]          # (BB, N, D) f32 encoder output
        Y = y_ref[...]          # (BB, N, D) f32 current decoder state

        def layer_norm(z, a_ref, b_ref):
            # This module normalizes over the *sequence* axis (torch dim 1).
            mean = jnp.mean(z, axis=1, keepdims=True)
            var = jnp.mean((z - mean) ** 2, axis=1, keepdims=True)
            return ((z - mean) * jax.lax.rsqrt(var + EPS)
                    * a_ref[...][None] + b_ref[...][None])

        def matmul(x2d, w_ref, b_ref):
            # bf16 MXU operands, f32 accumulation, f32 bias add.
            return (jnp.dot(x2d.astype(jnp.bfloat16), w_ref[...],
                            preferred_element_type=jnp.float32) + b_ref[...])

        # Causal mask built once per layer (not per head).
        row = jax.lax.broadcasted_iota(jnp.int32, (N, N), 0)
        col = jax.lax.broadcasted_iota(jnp.int32, (N, N), 1)
        causal = (col > row)[None]                      # (1, N, N)

        def attend(Q, K, V, masked):
            # Q/K/V: (BB, N, D) with heads packed along lanes.  The small
            # per-head S = Q K^T and P V dots are batched over the packed batch
            # rows (single leading batch dim -> robust Mosaic lowering).
            outs = []
            for h in range(H):
                lo = h * d_head
                Qh = Q[:, :, lo:lo + d_head].astype(jnp.bfloat16)
                Kh = K[:, :, lo:lo + d_head].astype(jnp.bfloat16)
                Vh = V[:, :, lo:lo + d_head].astype(jnp.bfloat16)
                S = jnp.einsum("bqd,bkd->bqk", Qh, Kh,
                               preferred_element_type=jnp.float32)
                if masked:
                    S = jnp.where(causal, -jnp.inf, S)
                S = S * scale
                S = S - jnp.max(S, axis=-1, keepdims=True)
                E = jnp.exp(S)
                P = E * (1.0 / jnp.sum(E, axis=-1, keepdims=True))
                outs.append(jnp.einsum("bqk,bkd->bqd", P.astype(jnp.bfloat16),
                                       Vh, preferred_element_type=jnp.float32))
            return jnp.concatenate(outs, axis=-1)       # (BB, N, D)

        # 1) masked self-attention + residual (dropout = identity in eval mode)
        x1 = layer_norm(Y, p["ln1a"], p["ln1b"])
        qkv = matmul(x1.reshape(BBN, D), p["wqkv1"], p["bqkv1"])   # (BBN, 3D)
        Q = qkv[:, 0 * D:1 * D].reshape(BB, N, D)
        K = qkv[:, 1 * D:2 * D].reshape(BB, N, D)
        V = qkv[:, 2 * D:3 * D].reshape(BB, N, D)
        Y1 = Y + attend(Q, K, V, True)

        # 2) cross-attention: queries from normalized state, K/V from encoder X
        x2 = layer_norm(Y1, p["ln2a"], p["ln2b"])
        Qc = matmul(x2.reshape(BBN, D), p["wq2"], p["bq2"]).reshape(BB, N, D)
        kv = matmul(X.reshape(BBN, D), p["wkv2"], p["bkv2"])       # (BBN, 2D)
        Kc = kv[:, 0 * D:1 * D].reshape(BB, N, D)
        Vc = kv[:, 1 * D:2 * D].reshape(BB, N, D)
        Y2 = Y1 + attend(Qc, Kc, Vc, False)

        # 3) FFN + residual, fused over the packed (BB*N) rows
        x3 = layer_norm(Y2, p["ln3a"], p["ln3b"])
        h1 = jnp.maximum(matmul(x3.reshape(BBN, D), p["w1"], p["b1"]), 0.0)
        ffn = matmul(h1, p["w2"], p["b2"])
        out_ref[...] = Y2 + ffn.reshape(BB, N, D)

    return kernel


def decoder_layer_pallas(X, Y, p, H, block_batch, vmem_limit):
    B, N, D = X.shape
    BB = block_batch
    assert B % BB == 0 and D % H == 0
    act_spec = pl.BlockSpec((BB, N, D), lambda b: (b, 0, 0))
    params, in_specs = [], [act_spec, act_spec]
    for name in PACKED_PARAM_ORDER:
        arr = p[name]
        params.append(arr)
        # grid-invariant full-array block
        in_specs.append(pl.BlockSpec(arr.shape, lambda b, nd=arr.ndim: (0,) * nd))
    return pl.pallas_call(
        _make_decoder_layer_kernel(H, D // H, BB, N, D),
        out_shape=jax.ShapeDtypeStruct((B, N, D), jnp.float32),
        grid=(B // BB,),
        in_specs=in_specs,
        out_specs=pl.BlockSpec((BB, N, D), lambda b: (b, 0, 0)),
        input_output_aliases={1: 0},      # Y is dead after this layer
        compiler_params=pltpu.CompilerParams(
            dimension_semantics=("parallel",),   # batch blocks are independent
            vmem_limit_bytes=vmem_limit),
    )(X, Y, *params)


# ----------------------------- unembedding kernels -----------------------------

def _make_unembed_logits_kernel(BB, N, D, TV):
    BBN = BB * N

    def kernel(y_ref, wu_ref, bu_ref, logits_ref, m_ref, l_ref):
        v = pl.program_id(1)

        @pl.when(v == 0)
        def _():
            m_ref[...] = jnp.full_like(m_ref, -jnp.inf)
            l_ref[...] = jnp.zeros_like(l_ref)

        y2d = y_ref[...].reshape(BBN, D).astype(jnp.bfloat16)
        logits = (jnp.dot(y2d, wu_ref[...], preferred_element_type=jnp.float32)
                  + bu_ref[...])
        # bf16 intermediate logits (halves HBM traffic); stats are computed from
        # the same bf16-rounded values the normalize pass will re-read.
        logits_bf = logits.astype(jnp.bfloat16)
        logits_ref[...] = logits_bf.reshape(BB, N, TV)
        lf = logits_bf.astype(jnp.float32).reshape(BB, N, TV)
        # online (max, sum-exp) statistics across vocab tiles; the (BB, N, 1)
        # output blocks stay VMEM-resident across the whole vocab sweep.
        m_prev = m_ref[...]
        m_new = jnp.maximum(m_prev, jnp.max(lf, axis=-1, keepdims=True))
        l_ref[...] = (l_ref[...] * jnp.exp(m_prev - m_new)
                      + jnp.sum(jnp.exp(lf - m_new), axis=-1, keepdims=True))
        m_ref[...] = m_new

    return kernel


def _unembed_normalize_kernel(logits_ref, m_ref, l_ref, out_ref):
    lf = logits_ref[...].astype(jnp.float32)
    inv_l = 1.0 / l_ref[...]                 # exact; (BB, N, 1) is tiny
    out_ref[...] = jnp.exp(lf - m_ref[...]) * inv_l


def unembed_pallas(Y, wu_bf16, bu, block_batch, block_vocab, vmem_limit):
    B, N, D = Y.shape
    Vp = wu_bf16.shape[1]
    BB, TV = block_batch, block_vocab
    assert B % BB == 0 and Vp % TV == 0

    logits, m, l = pl.pallas_call(
        _make_unembed_logits_kernel(BB, N, D, TV),
        out_shape=(jax.ShapeDtypeStruct((B, N, Vp), jnp.bfloat16),
                   jax.ShapeDtypeStruct((B, N, 1), jnp.float32),
                   jax.ShapeDtypeStruct((B, N, 1), jnp.float32)),
        grid=(B // BB, Vp // TV),                    # vocab (reduction) axis last
        in_specs=[pl.BlockSpec((BB, N, D), lambda b, v: (b, 0, 0)),
                  pl.BlockSpec((D, TV), lambda b, v: (0, v)),
                  pl.BlockSpec((1, TV), lambda b, v: (0, v))],
        out_specs=(pl.BlockSpec((BB, N, TV), lambda b, v: (b, 0, v)),
                   pl.BlockSpec((BB, N, 1), lambda b, v: (b, 0, 0)),
                   pl.BlockSpec((BB, N, 1), lambda b, v: (b, 0, 0))),
        compiler_params=pltpu.CompilerParams(
            dimension_semantics=("parallel", "arbitrary"),
            vmem_limit_bytes=vmem_limit),
    )(Y, wu_bf16, bu)

    # Final probabilities stay f32 to match the PyTorch contract; the bf16
    # logits/f32 probs dtype mismatch prevents aliasing this output onto the
    # logits input.
    return pl.pallas_call(
        _unembed_normalize_kernel,
        out_shape=jax.ShapeDtypeStruct((B, N, Vp), jnp.float32),
        grid=(B // BB, Vp // TV),
        in_specs=[pl.BlockSpec((BB, N, TV), lambda b, v: (b, 0, v)),
                  pl.BlockSpec((BB, N, 1), lambda b, v: (b, 0, 0)),
                  pl.BlockSpec((BB, N, 1), lambda b, v: (b, 0, 0))],
        out_specs=pl.BlockSpec((BB, N, TV), lambda b, v: (b, 0, v)),
        compiler_params=pltpu.CompilerParams(
            dimension_semantics=("parallel", "parallel"),
            vmem_limit_bytes=vmem_limit),
    )(logits, m, l)


# ----------------------------- glue (plain JAX) -----------------------------

def make_pos_enc(N, D):
    pos = jnp.arange(N, dtype=jnp.float32)[:, None]
    i = jnp.arange(D // 2, dtype=jnp.float32)[None, :]
    denom = jnp.power(10000.0, 2.0 * i / D)
    pe = jnp.zeros((N, D), jnp.float32)
    pe = pe.at[:, 0::2].set(jnp.sin(pos / denom))
    pe = pe.at[:, 1::2].set(jnp.cos(pos / denom))
    return pe


def init_params(key, N, D, H, num_layers, vocab, w_scale=0.07):
    """Raw (PyTorch-layout-equivalent) parameters; see prepare_params for packing."""
    DFF = 4 * D
    keys = jax.random.split(key, num_layers + 1)

    def lin(k, shape):
        return jax.random.normal(k, shape, jnp.float32) * w_scale

    layers = []
    for li in range(num_layers):
        ks = jax.random.split(keys[li], 16)
        layers.append({
            # per-head Linears packed along the output axis: head h <-> cols
            # [h*Dh, (h+1)*Dh) of the (D, D) weight / (1, D) bias.
            "ln1a": jnp.ones((N, D), jnp.float32), "ln1b": jnp.zeros((N, D), jnp.float32),
            "wq1": lin(ks[0], (D, D)), "bq1": lin(ks[1], (1, D)),
            "wk1": lin(ks[2], (D, D)), "bk1": lin(ks[3], (1, D)),
            "wv1": lin(ks[4], (D, D)), "bv1": lin(ks[5], (1, D)),
            "ln2a": jnp.ones((N, D), jnp.float32), "ln2b": jnp.zeros((N, D), jnp.float32),
            "wq2": lin(ks[6], (D, D)), "bq2": lin(ks[7], (1, D)),
            "wk2": lin(ks[8], (D, D)), "bk2": lin(ks[9], (1, D)),
            "wv2": lin(ks[10], (D, D)), "bv2": lin(ks[11], (1, D)),
            "ln3a": jnp.ones((N, D), jnp.float32), "ln3b": jnp.zeros((N, D), jnp.float32),
            "w1": lin(ks[12], (D, DFF)), "b1": lin(ks[13], (1, DFF)),
            "w2": lin(ks[14], (DFF, D)), "b2": lin(ks[15], (1, D)),
        })
    ku, kb = jax.random.split(keys[-1])
    return {"pe": make_pos_enc(N, D), "layers": layers,
            "wu": lin(ku, (D, vocab)), "bu": lin(kb, (1, vocab))}


def prepare_params(raw, *, block_vocab=None):
    """One-time packing: fuse Q|K|V (and K|V) weights, pre-cast MXU weights to
    bf16, and pad the vocab axis to a lane-dense multiple of the vocab tile
    (padded bias = -1e30 so padded columns get zero probability).  Call OUTSIDE
    jit so the casts are not redone on every forward."""
    V = raw["wu"].shape[1]
    TV = block_vocab if block_vocab is not None else _pick_block_vocab(V)
    Vp = _round_up(V, TV)
    wu, bu = raw["wu"], raw["bu"]
    if Vp != V:
        wu = jnp.pad(wu, ((0, 0), (0, Vp - V)))
        bu = jnp.pad(bu, ((0, 0), (0, Vp - V)), constant_values=NEG_BIG)

    layers = []
    for p in raw["layers"]:
        layers.append({
            "ln1a": p["ln1a"], "ln1b": p["ln1b"],
            "wqkv1": jnp.concatenate([p["wq1"], p["wk1"], p["wv1"]],
                                     axis=1).astype(jnp.bfloat16),
            "bqkv1": jnp.concatenate([p["bq1"], p["bk1"], p["bv1"]], axis=1),
            "ln2a": p["ln2a"], "ln2b": p["ln2b"],
            "wq2": p["wq2"].astype(jnp.bfloat16), "bq2": p["bq2"],
            "wkv2": jnp.concatenate([p["wk2"], p["wv2"]],
                                    axis=1).astype(jnp.bfloat16),
            "bkv2": jnp.concatenate([p["bk2"], p["bv2"]], axis=1),
            "ln3a": p["ln3a"], "ln3b": p["ln3b"],
            "w1": p["w1"].astype(jnp.bfloat16), "b1": p["b1"],
            "w2": p["w2"].astype(jnp.bfloat16), "b2": p["b2"],
        })
    return {"pe": raw["pe"], "layers": layers,
            "wu": wu.astype(jnp.bfloat16), "bu": bu}


def decoder_forward_pallas(X, Y, params, *, H, vocab_size=None,
                           block_batch=None, block_vocab=None):
    B, N, D = X.shape
    Vp = params["wu"].shape[1]
    V = vocab_size if vocab_size is not None else Vp
    TV = block_vocab if block_vocab is not None else _pick_block_vocab(V)
    assert Vp % TV == 0
    BB = block_batch if block_batch is not None else _pick_block_batch(B, N, D)
    vmem_limit = _default_vmem_limit()

    # eval-mode: dropout layers are identities; PosEnc: Y + (Y + PE)
    Yc = X if Y is None else Y + (Y + params["pe"])

    # Pad the batch to a multiple of the batch block (padded rows are finite and
    # stripped at the end).
    B_pad = _round_up(B, BB)
    if B_pad != B:
        padw = ((0, B_pad - B), (0, 0), (0, 0))
        Xr, Yc = jnp.pad(X, padw), jnp.pad(Yc, padw)
    else:
        Xr = X

    for lp in params["layers"]:
        Yc = decoder_layer_pallas(Xr, Yc, lp, H, BB, vmem_limit)

    probs = unembed_pallas(Yc, params["wu"], params["bu"], BB, TV, vmem_limit)
    return probs[:B, :, :V]


# ----------------------------- pure-JAX references -----------------------------
# bf16=False : faithful f32 model of the PyTorch module (HIGHEST-precision dots).
# bf16=True  : same math but matmul operands cast to bf16 / f32 accumulation and
#              bf16-rounded logits, matching the kernel numerics (tight check).

def _ref_einsum(eq, a, b, bf16):
    if bf16:
        return jnp.einsum(eq, a.astype(jnp.bfloat16), b.astype(jnp.bfloat16),
                          preferred_element_type=jnp.float32)
    return jnp.einsum(eq, a, b, precision=jax.lax.Precision.HIGHEST,
                      preferred_element_type=jnp.float32)


def _ref_layer_norm(Z, a, b):
    mean = jnp.mean(Z, axis=1, keepdims=True)
    var = jnp.mean((Z - mean) ** 2, axis=1, keepdims=True)
    return (Z - mean) * jax.lax.rsqrt(var + EPS) * a + b


def _ref_mha(XQ, XKV, wq, bq, wk, bk, wv, bv, masked, H, bf16):
    B, N, D = XQ.shape
    Dh = D // H

    def proj(x, w, b):
        return (_ref_einsum("bnd,de->bne", x, w, bf16) + b).reshape(B, N, H, Dh)

    Q, K, V = proj(XQ, wq, bq), proj(XKV, wk, bk), proj(XKV, wv, bv)
    S = _ref_einsum("bqhd,bkhd->bhqk", Q, K, bf16)
    if masked:
        mask = jnp.triu(jnp.ones((N, N), bool), k=1)
        S = jnp.where(mask[None, None], -jnp.inf, S)
    P = jax.nn.softmax(S / math.sqrt(Dh), axis=-1)
    O = _ref_einsum("bhqk,bkhd->bqhd", P, V, bf16)
    return O.reshape(B, N, D)


def _ref_decoder_layer(X, Y, p, H, bf16):
    x1 = _ref_layer_norm(Y, p["ln1a"], p["ln1b"])
    Y1 = Y + _ref_mha(x1, x1, p["wq1"], p["bq1"], p["wk1"], p["bk1"],
                      p["wv1"], p["bv1"], True, H, bf16)
    x2 = _ref_layer_norm(Y1, p["ln2a"], p["ln2b"])
    Y2 = Y1 + _ref_mha(x2, X, p["wq2"], p["bq2"], p["wk2"], p["bk2"],
                       p["wv2"], p["bv2"], False, H, bf16)
    x3 = _ref_layer_norm(Y2, p["ln3a"], p["ln3b"])
    h1 = jnp.maximum(_ref_einsum("bnd,df->bnf", x3, p["w1"], bf16) + p["b1"], 0.0)
    return Y2 + _ref_einsum("bnf,fd->bnd", h1, p["w2"], bf16) + p["b2"]


def decoder_forward_ref(X, Y, params, H, bf16=False):
    Yc = X if Y is None else Y + (Y + params["pe"])
    for lp in params["layers"]:
        Yc = _ref_decoder_layer(X, Yc, lp, H, bf16)
    logits = _ref_einsum("bnd,dv->bnv", Yc, params["wu"], bf16) + params["bu"]
    if bf16:
        logits = logits.astype(jnp.bfloat16).astype(jnp.float32)
    return jax.nn.softmax(logits, axis=-1)


# ----------------------------- main -----------------------------

if __name__ == "__main__":
    B, N, D, H, NUM_LAYERS, VOCAB = 4, 8, 128, 4, 2, 256
    key = jax.random.PRNGKey(0)
    kx, ky, kp = jax.random.split(key, 3)
    X = jax.random.normal(kx, (B, N, D), jnp.float32)
    Y = jax.random.normal(ky, (B, N, D), jnp.float32)
    raw_params = init_params(kp, N, D, H, NUM_LAYERS, VOCAB)

    # One-time weight packing / bf16 pre-cast / vocab padding (outside jit).
    prepared = prepare_params(raw_params)

    fwd = jax.jit(functools.partial(decoder_forward_pallas, H=H,
                                    vocab_size=VOCAB))
    out = jax.block_until_ready(fwd(X, Y, prepared))
    assert out.shape == (B, N, VOCAB)
    assert out.dtype == jnp.float32
    assert bool(jnp.all(jnp.isfinite(out)))

    # Tight check vs a reference with matching bf16-matmul / bf16-logit numerics.
    ref_matched = decoder_forward_ref(X, Y, raw_params, H, bf16=True)
    err_matched = float(jnp.max(jnp.abs(out - ref_matched)))
    assert jnp.allclose(out, ref_matched, atol=1e-2, rtol=1e-2), \
        f"matched-numerics max_err={err_matched}"

    # Coarse sanity check vs the full-f32 reference (bf16 MXU numeric contract).
    ref_f32 = decoder_forward_ref(X, Y, raw_params, H, bf16=False)
    err_f32 = float(jnp.max(jnp.abs(out - ref_f32)))
    assert jnp.allclose(out, ref_f32, atol=1e-1, rtol=1e-1), \
        f"f32 max_err={err_f32}"

    print("KERNEL_OK")
</pallas_src>

<mosaic_0001>
module attributes {stable_mosaic.version = 11 : i64} {
  func.func @kernel(%arg0: i32, %arg1: i32, %arg2: memref<2x8x128xf32, #tpu.memory_space<vmem>>, %arg3: memref<128x256xbf16, #tpu.memory_space<vmem>>, %arg4: memref<1x256xf32, #tpu.memory_space<vmem>>, %arg5: memref<2x8x256xbf16, #tpu.memory_space<vmem>>, %arg6: memref<2x8x1xf32, #tpu.memory_space<vmem>>, %arg7: memref<2x8x1xf32, #tpu.memory_space<vmem>>) attributes {dimension_semantics = [#tpu.dimension_semantics<parallel>, #tpu.dimension_semantics<arbitrary>], iteration_bounds = array<i64: 2, 1>, scalar_prefetch = 0 : i64, scratch_operands = 0 : i64, tpu.core_type = #tpu.core_type<tc>, window_params = [{transform_indices = @transform_0, window_bounds = array<i64: 2, 8, 128>}, {transform_indices = @transform_1, window_bounds = array<i64: 128, 256>}, {transform_indices = @transform_2, window_bounds = array<i64: 1, 256>}, {transform_indices = @transform_3, window_bounds = array<i64: 2, 8, 256>}, {transform_indices = @transform_4, window_bounds = array<i64: 2, 8, 1>}, {transform_indices = @transform_5, window_bounds = array<i64: 2, 8, 1>}]} {
    %c0_i32 = arith.constant 0 : i32
    %0 = arith.cmpi eq, %arg1, %c0_i32 : i32
    %1 = arith.extui %0 : i1 to i32
    %c0_i32_0 = arith.constant 0 : i32
    %2 = arith.cmpi ne, %1, %c0_i32_0 : i32
    scf.if %2 {
      %cst_24 = arith.constant 0xFF800000 : f32
      %32 = vector.broadcast %cst_24 : f32 to vector<2x8x1xf32>
      %c0_25 = arith.constant 0 : index
      %c0_26 = arith.constant 0 : index
      %c0_27 = arith.constant 0 : index
      %33 = vector.load %arg6[%c0_25, %c0_26, %c0_27] : memref<2x8x1xf32, #tpu.memory_space<vmem>>, vector<2x8x1xf32>
      tpu.vector_store %arg6[%c0_25, %c0_26, %c0_27], %32 {strides = array<i32>} : memref<2x8x1xf32, #tpu.memory_space<vmem>>, vector<2x8x1xf32>,
      %cst_28 = arith.constant 0.000000e+00 : f32
      %34 = vector.broadcast %cst_28 : f32 to vector<2x8x1xf32>
      %c0_29 = arith.constant 0 : index
      %c0_30 = arith.constant 0 : index
      %c0_31 = arith.constant 0 : index
      %35 = vector.load %arg7[%c0_29, %c0_30, %c0_31] : memref<2x8x1xf32, #tpu.memory_space<vmem>>, vector<2x8x1xf32>
      tpu.vector_store %arg7[%c0_29, %c0_30, %c0_31], %34 {strides = array<i32>} : memref<2x8x1xf32, #tpu.memory_space<vmem>>, vector<2x8x1xf32>,
    } else {
    }
    %c0 = arith.constant 0 : index
    %c0_1 = arith.constant 0 : index
    %c0_2 = arith.constant 0 : index
    %3 = vector.load %arg2[%c0, %c0_1, %c0_2] : memref<2x8x128xf32, #tpu.memory_space<vmem>>, vector<2x8x128xf32>
    %4 = vector.shape_cast %3 : vector<2x8x128xf32> to vector<16x128xf32>
    %5 = arith.truncf %4 : vector<16x128xf32> to vector<16x128xbf16>
    %c0_3 = arith.constant 0 : index
    %c0_4 = arith.constant 0 : index
    %6 = vector.load %arg3[%c0_3, %c0_4] : memref<128x256xbf16, #tpu.memory_space<vmem>>, vector<128x256xbf16>
    %cst = arith.constant dense<0.000000e+00> : vector<16x256xf32>
    %7 = tpu.matmul %5, %6, %cst {dimension_numbers = #tpu.dot_dimension_numbers<[1], [0], [0], [1], [0, 0, 1, 1], [], []>} : vector<16x128xbf16>, vector<128x256xbf16>, vector<16x256xf32> -> vector<16x256xf32>
    %c0_5 = arith.constant 0 : index
    %c0_6 = arith.constant 0 : index
    %8 = vector.load %arg4[%c0_5, %c0_6] : memref<1x256xf32, #tpu.memory_space<vmem>>, vector<1x256xf32>
    %9 = vector.broadcast %8 : vector<1x256xf32> to vector<16x256xf32>
    %10 = arith.addf %7, %9 : vector<16x256xf32>
    %11 = arith.truncf %10 : vector<16x256xf32> to vector<16x256xbf16>
    %12 = vector.shape_cast %11 : vector<16x256xbf16> to vector<2x8x256xbf16>
    %c0_7 = arith.constant 0 : index
    %c0_8 = arith.constant 0 : index
    %c0_9 = arith.constant 0 : index
    %13 = vector.load %arg5[%c0_7, %c0_8, %c0_9] : memref<2x8x256xbf16, #tpu.memory_space<vmem>>, vector<2x8x256xbf16>
    tpu.vector_store %arg5[%c0_7, %c0_8, %c0_9], %12 {strides = array<i32>} : memref<2x8x256xbf16, #tpu.memory_space<vmem>>, vector<2x8x256xbf16>,
    %14 = arith.extf %11 : vector<16x256xbf16> to vector<16x256xf32>
    %15 = vector.shape_cast %14 : vector<16x256xf32> to vector<2x8x256xf32>
    %c0_10 = arith.constant 0 : index
    %c0_11 = arith.constant 0 : index
    %c0_12 = arith.constant 0 : index
    %16 = vector.load %arg6[%c0_10, %c0_11, %c0_12] : memref<2x8x1xf32, #tpu.memory_space<vmem>>, vector<2x8x1xf32>
    %cst_13 = arith.constant dense<0xFF800000> : vector<2x8xf32>
    %17 = vector.multi_reduction <maximumf>, %15, %cst_13 [2] : vector<2x8x256xf32> to vector<2x8xf32>
    %18 = vector.shape_cast %17 : vector<2x8xf32> to vector<2x8x1xf32>
    %19 = arith.maximumf %16, %18 : vector<2x8x1xf32>
    %c0_14 = arith.constant 0 : index
    %c0_15 = arith.constant 0 : index
    %c0_16 = arith.constant 0 : index
    %20 = vector.load %arg7[%c0_14, %c0_15, %c0_16] : memref<2x8x1xf32, #tpu.memory_space<vmem>>, vector<2x8x1xf32>
    %21 = arith.subf %16, %19 : vector<2x8x1xf32>
    %22 = math.exp %21 : vector<2x8x1xf32>
    %23 = arith.mulf %20, %22 : vector<2x8x1xf32>
    %24 = vector.broadcast %19 : vector<2x8x1xf32> to vector<2x8x256xf32>
    %25 = arith.subf %15, %24 : vector<2x8x256xf32>
    %26 = math.exp %25 : vector<2x8x256xf32>
    %cst_17 = arith.constant dense<0.000000e+00> : vector<2x8xf32>
    %27 = vector.multi_reduction <add>, %26, %cst_17 [2] : vector<2x8x256xf32> to vector<2x8xf32>
    %28 = vector.shape_cast %27 : vector<2x8xf32> to vector<2x8x1xf32>
    %29 = arith.addf %23, %28 : vector<2x8x1xf32>
    %c0_18 = arith.constant 0 : index
    %c0_19 = arith.constant 0 : index
    %c0_20 = arith.constant 0 : index
    %30 = vector.load %arg7[%c0_18, %c0_19, %c0_20] : memref<2x8x1xf32, #tpu.memory_space<vmem>>, vector<2x8x1xf32>
    tpu.vector_store %arg7[%c0_18, %c0_19, %c0_20], %29 {strides = array<i32>} : memref<2x8x1xf32, #tpu.memory_space<vmem>>, vector<2x8x1xf32>,
    %c0_21 = arith.constant 0 : index
    %c0_22 = arith.constant 0 : index
    %c0_23 = arith.constant 0 : index
    %31 = vector.load %arg6[%c0_21, %c0_22, %c0_23] : memref<2x8x1xf32, #tpu.memory_space<vmem>>, vector<2x8x1xf32>
    tpu.vector_store %arg6[%c0_21, %c0_22, %c0_23], %19 {strides = array<i32>} : memref<2x8x1xf32, #tpu.memory_space<vmem>>, vector<2x8x1xf32>,
    return
  }
  func.func @transform_0(%arg0: i32, %arg1: i32) -> (i32, i32, i32) {
    %c0_i32 = arith.constant 0 : i32
    %c0_i32_0 = arith.constant 0 : i32
    %c0_i32_1 = arith.constant 0 : i32
    return %arg0, %c0_i32, %c0_i32_0 : i32, i32, i32
  }
  func.func @transform_1(%arg0: i32, %arg1: i32) -> (i32, i32) {
    %c0_i32 = arith.constant 0 : i32
    %c0_i32_0 = arith.constant 0 : i32
    return %c0_i32, %arg1 : i32, i32
  }
  func.func @transform_2(%arg0: i32, %arg1: i32) -> (i32, i32) {
    %c0_i32 = arith.constant 0 : i32
    %c0_i32_0 = arith.constant 0 : i32
    return %c0_i32, %arg1 : i32, i32
  }
  func.func @transform_3(%arg0: i32, %arg1: i32) -> (i32, i32, i32) {
    %c0_i32 = arith.constant 0 : i32
    %c0_i32_0 = arith.constant 0 : i32
    return %arg0, %c0_i32, %arg1 : i32, i32, i32
  }
  func.func @transform_4(%arg0: i32, %arg1: i32) -> (i32, i32, i32) {
    %c0_i32 = arith.constant 0 : i32
    %c0_i32_0 = arith.constant 0 : i32
    %c0_i32_1 = arith.constant 0 : i32
    return %arg0, %c0_i32, %c0_i32_0 : i32, i32, i32
  }
  func.func @transform_5(%arg0: i32, %arg1: i32) -> (i32, i32, i32) {
    %c0_i32 = arith.constant 0 : i32
    %c0_i32_0 = arith.constant 0 : i32
    %c0_i32_1 = arith.constant 0 : i32
    return %arg0, %c0_i32, %c0_i32_0 : i32, i32, i32
  }
}

module attributes {stable_mosaic.version = 11 : i64} {
  func.func @kernel(%arg0: i32, %arg1: memref<2x8x128xf32, #tpu.memory_space<vmem>>, %arg2: memref<2x8x128xf32, #tpu.memory_space<vmem>>, %arg3: memref<8x128xf32, #tpu.memory_space<vmem>>, %arg4: memref<8x128xf32, #tpu.memory_space<vmem>>, %arg5: memref<128x384xbf16, #tpu.memory_space<vmem>>, %arg6: memref<1x384xf32, #tpu.memory_space<vmem>>, %arg7: memref<8x128xf32, #tpu.memory_space<vmem>>, %arg8: memref<8x128xf32, #tpu.memory_space<vmem>>, %arg9: memref<128x128xbf16, #tpu.memory_space<vmem>>, %arg10: memref<1x128xf32, #tpu.memory_space<vmem>>, %arg11: memref<128x256xbf16, #tpu.memory_space<vmem>>, %arg12: memref<1x256xf32, #tpu.memory_space<vmem>>, %arg13: memref<8x128xf32, #tpu.memory_space<vmem>>, %arg14: memref<8x128xf32, #tpu.memory_space<vmem>>, %arg15: memref<128x512xbf16, #tpu.memory_space<vmem>>, %arg16: memref<1x512xf32, #tpu.memory_space<vmem>>, %arg17: memref<512x128xbf16, #tpu.memory_space<vmem>>, %arg18: memref<1x128xf32, #tpu.memory_space<vmem>>, %arg19: memref<2x8x128xf32, #tpu.memory_space<vmem>>) attributes {dimension_semantics = [#tpu.dimension_semantics<parallel>], iteration_bounds = array<i64: 2>, scalar_prefetch = 0 : i64, scratch_operands = 0 : i64, tpu.core_type = #tpu.core_type<tc>, window_params = [{transform_indices = @transform_0, window_bounds = array<i64: 2, 8, 128>}, {transform_indices = @transform_1, window_bounds = array<i64: 2, 8, 128>}, {pipeline_mode = #tpu.pipeline_mode<synchronous>, transform_indices = @transform_2, window_bounds = array<i64: 8, 128>}, {pipeline_mode = #tpu.pipeline_mode<synchronous>, transform_indices = @transform_3, window_bounds = array<i64: 8, 128>}, {pipeline_mode = #tpu.pipeline_mode<synchronous>, transform_indices = @transform_4, window_bounds = array<i64: 128, 384>}, {pipeline_mode = #tpu.pipeline_mode<synchronous>, transform_indices = @transform_5, window_bounds = array<i64: 1, 384>}, {pipeline_mode = #tpu.pipeline_mode<synchronous>, transform_indices = @transform_6, window_bounds = array<i64: 8, 128>}, {pipeline_mode = #tpu.pipeline_mode<synchronous>, transform_indices = @transform_7, window_bounds = array<i64: 8, 128>}, {pipeline_mode = #tpu.pipeline_mode<synchronous>, transform_indices = @transform_8, window_bounds = array<i64: 128, 128>}, {pipeline_mode = #tpu.pipeline_mode<synchronous>, transform_indices = @transform_9, window_bounds = array<i64: 1, 128>}, {pipeline_mode = #tpu.pipeline_mode<synchronous>, transform_indices = @transform_10, window_bounds = array<i64: 128, 256>}, {pipeline_mode = #tpu.pipeline_mode<synchronous>, transform_indices = @transform_11, window_bounds = array<i64: 1, 256>}, {pipeline_mode = #tpu.pipeline_mode<synchronous>, transform_indices = @transform_12, window_bounds = array<i64: 8, 128>}, {pipeline_mode = #tpu.pipeline_mode<synchronous>, transform_indices = @transform_13, window_bounds = array<i64: 8, 128>}, {pipeline_mode = #tpu.pipeline_mode<synchronous>, transform_indices = @transform_14, window_bounds = array<i64: 128, 512>}, {pipeline_mode = #tpu.pipeline_mode<synchronous>, transform_indices = @transform_15, window_bounds = array<i64: 1, 512>}, {pipeline_mode = #tpu.pipeline_mode<synchronous>, transform_indices = @transform_16, window_bounds = array<i64: 512, 128>}, {pipeline_mode = #tpu.pipeline_mode<synchronous>, transform_indices = @transform_17, window_bounds = array<i64: 1, 128>}, {transform_indices = @transform_18, window_bounds = array<i64: 2, 8, 128>}]} {
    %c0 = arith.constant 0 : index
    %c0_0 = arith.constant 0 : index
    %c0_1 = arith.constant 0 : index
    %0 = vector.load %arg1[%c0, %c0_0, %c0_1] : memref<2x8x128xf32, #tpu.memory_space<vmem>>, vector<2x8x128xf32>
    %c0_2 = arith.constant 0 : index
    %c0_3 = arith.constant 0 : index
    %c0_4 = arith.constant 0 : index
    %1 = vector.load %arg2[%c0_2, %c0_3, %c0_4] : memref<2x8x128xf32, #tpu.memory_space<vmem>>, vector<2x8x128xf32>
    %2 = tpu.iota {dimensions = array<i32: 0>} : vector<8x8xi32>
    %3 = tpu.iota {dimensions = array<i32: 1>} : vector<8x8xi32>
    %4 = arith.cmpi sgt, %3, %2 : vector<8x8xi32>
    %5 = vector.shape_cast %4 : vector<8x8xi1> to vector<1x8x8xi1>
    %cst = arith.constant dense<0.000000e+00> : vector<2x128xf32>
    %6 = vector.multi_reduction <add>, %1, %cst [1] : vector<2x8x128xf32> to vector<2x128xf32>
    %7 = vector.shape_cast %6 : vector<2x128xf32> to vector<2x1x128xf32>
    %cst_5 = arith.constant 8.000000e+00 : f32
    %8 = vector.broadcast %cst_5 : f32 to vector<2x1x128xf32>
    %9 = arith.divf %7, %8 : vector<2x1x128xf32>
    %10 = vector.broadcast %9 : vector<2x1x128xf32> to vector<2x8x128xf32>
    %11 = arith.subf %1, %10 : vector<2x8x128xf32>
    %12 = arith.mulf %11, %11 : vector<2x8x128xf32>
    %cst_6 = arith.constant dense<0.000000e+00> : vector<2x128xf32>
    %13 = vector.multi_reduction <add>, %12, %cst_6 [1] : vector<2x8x128xf32> to vector<2x128xf32>
    %14 = vector.shape_cast %13 : vector<2x128xf32> to vector<2x1x128xf32>
    %cst_7 = arith.constant 8.000000e+00 : f32
    %15 = vector.broadcast %cst_7 : f32 to vector<2x1x128xf32>
    %16 = arith.divf %14, %15 : vector<2x1x128xf32>
    %17 = vector.broadcast %9 : vector<2x1x128xf32> to vector<2x8x128xf32>
    %18 = arith.subf %1, %17 : vector<2x8x128xf32>
    %cst_8 = arith.constant 9.99999974E-6 : f32
    %19 = vector.broadcast %cst_8 : f32 to vector<2x1x128xf32>
    %20 = arith.addf %16, %19 : vector<2x1x128xf32>
    %21 = math.rsqrt %20 : vector<2x1x128xf32>
    %22 = vector.broadcast %21 : vector<2x1x128xf32> to vector<2x8x128xf32>
    %23 = arith.mulf %18, %22 : vector<2x8x128xf32>
    %c0_9 = arith.constant 0 : index
    %c0_10 = arith.constant 0 : index
    %24 = vector.load %arg3[%c0_9, %c0_10] : memref<8x128xf32, #tpu.memory_space<vmem>>, vector<8x128xf32>
    %25 = vector.shape_cast %24 : vector<8x128xf32> to vector<1x8x128xf32>
    %26 = vector.broadcast %25 : vector<1x8x128xf32> to vector<2x8x128xf32>
    %27 = arith.mulf %23, %26 : vector<2x8x128xf32>
    %c0_11 = arith.constant 0 : index
    %c0_12 = arith.constant 0 : index
    %28 = vector.load %arg4[%c0_11, %c0_12] : memref<8x128xf32, #tpu.memory_space<vmem>>, vector<8x128xf32>
    %29 = vector.shape_cast %28 : vector<8x128xf32> to vector<1x8x128xf32>
    %30 = vector.broadcast %29 : vector<1x8x128xf32> to vector<2x8x128xf32>
    %31 = arith.addf %27, %30 : vector<2x8x128xf32>
    %32 = vector.shape_cast %31 : vector<2x8x128xf32> to vector<16x128xf32>
    %33 = arith.truncf %32 : vector<16x128xf32> to vector<16x128xbf16>
    %c0_13 = arith.constant 0 : index
    %c0_14 = arith.constant 0 : index
    %34 = vector.load %arg5[%c0_13, %c0_14] : memref<128x384xbf16, #tpu.memory_space<vmem>>, vector<128x384xbf16>
    %cst_15 = arith.constant dense<0.000000e+00> : vector<16x384xf32>
    %35 = tpu.matmul %33, %34, %cst_15 {dimension_numbers = #tpu.dot_dimension_numbers<[1], [0], [0], [1], [0, 0, 1, 1], [], []>} : vector<16x128xbf16>, vector<128x384xbf16>, vector<16x384xf32> -> vector<16x384xf32>
    %c0_16 = arith.constant 0 : index
    %c0_17 = arith.constant 0 : index
    %36 = vector.load %arg6[%c0_16, %c0_17] : memref<1x384xf32, #tpu.memory_space<vmem>>, vector<1x384xf32>
    %37 = vector.broadcast %36 : vector<1x384xf32> to vector<16x384xf32>
    %38 = arith.addf %35, %37 : vector<16x384xf32>
    %39 = vector.extract_strided_slice %38 {offsets = [0, 0], sizes = [16, 128], strides = [1, 1]} : vector<16x384xf32> to vector<16x128xf32>
    %40 = vector.shape_cast %39 : vector<16x128xf32> to vector<2x8x128xf32>
    %41 = vector.extract_strided_slice %38 {offsets = [0, 128], sizes = [16, 128], strides = [1, 1]} : vector<16x384xf32> to vector<16x128xf32>
    %42 = vector.shape_cast %41 : vector<16x128xf32> to vector<2x8x128xf32>
    %43 = vector.extract_strided_slice %38 {offsets = [0, 256], sizes = [16, 128], strides = [1, 1]} : vector<16x384xf32> to vector<16x128xf32>
    %44 = vector.shape_cast %43 : vector<16x128xf32> to vector<2x8x128xf32>
    %45 = vector.extract_strided_slice %40 {offsets = [0, 0, 0], sizes = [2, 8, 32], strides = [1, 1, 1]} : vector<2x8x128xf32> to vector<2x8x32xf32>
    %46 = arith.truncf %45 : vector<2x8x32xf32> to vector<2x8x32xbf16>
    %47 = vector.extract_strided_slice %42 {offsets = [0, 0, 0], sizes = [2, 8, 32], strides = [1, 1, 1]} : vector<2x8x128xf32> to vector<2x8x32xf32>
    %48 = arith.truncf %47 : vector<2x8x32xf32> to vector<2x8x32xbf16>
    %49 = vector.extract_strided_slice %44 {offsets = [0, 0, 0], sizes = [2, 8, 32], strides = [1, 1, 1]} : vector<2x8x128xf32> to vector<2x8x32xf32>
    %50 = arith.truncf %49 : vector<2x8x32xf32> to vector<2x8x32xbf16>
    "tpu.trace_start"() <{level = 10 : i32, message = "bqd,bkd->bqk"}> : () -> ()
    %cst_18 = arith.constant dense<0.000000e+00> : vector<2x8x8xf32>
    %51 = tpu.matmul %46, %48, %cst_18 {dimension_numbers = #tpu.dot_dimension_numbers<[2], [2], [1], [1], [0, 0, 0, 1, 1, 1], [0], [0]>} : vector<2x8x32xbf16>, vector<2x8x32xbf16>, vector<2x8x8xf32> -> vector<2x8x8xf32>
    %cst_19 = arith.constant 0xFF800000 : f32
    "tpu.trace_stop"() : () -> ()
    %52 = vector.shape_cast %5 : vector<1x8x8xi1> to vector<1x8x8xi1>
    %53 = vector.broadcast %52 : vector<1x8x8xi1> to vector<2x8x8xi1>
    %54 = vector.broadcast %cst_19 : f32 to vector<2x8x8xf32>
    %55 = arith.select %53, %54, %51 : vector<2x8x8xi1>, vector<2x8x8xf32>
    %cst_20 = arith.constant 0.176776692 : f32
    %56 = vector.broadcast %cst_20 : f32 to vector<2x8x8xf32>
    %57 = arith.mulf %55, %56 : vector<2x8x8xf32>
    %cst_21 = arith.constant dense<0xFF800000> : vector<2x8xf32>
    %58 = vector.multi_reduction <maximumf>, %57, %cst_21 [2] : vector<2x8x8xf32> to vector<2x8xf32>
    %59 = vector.shape_cast %58 : vector<2x8xf32> to vector<2x8x1xf32>
    %60 = vector.broadcast %59 : vector<2x8x1xf32> to vector<2x8x8xf32>
    %61 = arith.subf %57, %60 : vector<2x8x8xf32>
    %62 = math.exp %61 : vector<2x8x8xf32>
    %cst_22 = arith.constant dense<0.000000e+00> : vector<2x8xf32>
    %63 = vector.multi_reduction <add>, %62, %cst_22 [2] : vector<2x8x8xf32> to vector<2x8xf32>
    %64 = vector.shape_cast %63 : vector<2x8xf32> to vector<2x8x1xf32>
    %cst_23 = arith.constant 1.000000e+00 : f32
    %65 = vector.broadcast %cst_23 : f32 to vector<2x8x1xf32>
    %66 = arith.divf %65, %64 : vector<2x8x1xf32>
    %67 = vector.broadcast %66 : vector<2x8x1xf32> to vector<2x8x8xf32>
    %68 = arith.mulf %62, %67 : vector<2x8x8xf32>
    %69 = arith.truncf %68 : vector<2x8x8xf32> to vector<2x8x8xbf16>
    "tpu.trace_start"() <{level = 10 : i32, message = "bqk,bkd->bqd"}> : () -> ()
    %cst_24 = arith.constant dense<0.000000e+00> : vector<2x8x32xf32>
    %70 = tpu.matmul %69, %50, %cst_24 {dimension_numbers = #tpu.dot_dimension_numbers<[2], [1], [1], [2], [0, 0, 0, 1, 1, 2], [0], [0]>} : vector<2x8x8xbf16>, vector<2x8x32xbf16>, vector<2x8x32xf32> -> vector<2x8x32xf32>
    "tpu.trace_stop"() : () -> ()
    %71 = vector.extract_strided_slice %40 {offsets = [0, 0, 32], sizes = [2, 8, 32], strides = [1, 1, 1]} : vector<2x8x128xf32> to vector<2x8x32xf32>
    %72 = arith.truncf %71 : vector<2x8x32xf32> to vector<2x8x32xbf16>
    %73 = vector.extract_strided_slice %42 {offsets = [0, 0, 32], sizes = [2, 8, 32], strides = [1, 1, 1]} : vector<2x8x128xf32> to vector<2x8x32xf32>
    %74 = arith.truncf %73 : vector<2x8x32xf32> to vector<2x8x32xbf16>
    %75 = vector.extract_strided_slice %44 {offsets = [0, 0, 32], sizes = [2, 8, 32], strides = [1, 1, 1]} : vector<2x8x128xf32> to vector<2x8x32xf32>
    %76 = arith.truncf %75 : vector<2x8x32xf32> to vector<2x8x32xbf16>
    "tpu.trace_start"() <{level = 10 : i32, message = "bqd,bkd->bqk"}> : () -> ()
    %cst_25 = arith.constant dense<0.000000e+00> : vector<2x8x8xf32>
    %77 = tpu.matmul %72, %74, %cst_25 {dimension_numbers = #tpu.dot_dimension_numbers<[2], [2], [1], [1], [0, 0, 0, 1, 1, 1], [0], [0]>} : vector<2x8x32xbf16>, vector<2x8x32xbf16>, vector<2x8x8xf32> -> vector<2x8x8xf32>
    %cst_26 = arith.constant 0xFF800000 : f32
    "tpu.trace_stop"() : () -> ()
    %78 = vector.shape_cast %5 : vector<1x8x8xi1> to vector<1x8x8xi1>
    %79 = vector.broadcast %78 : vector<1x8x8xi1> to vector<2x8x8xi1>
    %80 = vector.broadcast %cst_26 : f32 to vector<2x8x8xf32>
    %81 = arith.select %79, %80, %77 : vector<2x8x8xi1>, vector<2x8x8xf32>
    %cst_27 = arith.constant 0.176776692 : f32
    %82 = vector.broadcast %cst_27 : f32 to vector<2x8x8xf32>
    %83 = arith.mulf %81, %82 : vector<2x8x8xf32>
    %cst_28 = arith.constant dense<0xFF800000> : vector<2x8xf32>
    %84 = vector.multi_reduction <maximumf>, %83, %cst_28 [2] : vector<2x8x8xf32> to vector<2x8xf32>
    %85 = vector.shape_cast %84 : vector<2x8xf32> to vector<2x8x1xf32>
    %86 = vector.broadcast %85 : vector<2x8x1xf32> to vector<2x8x8xf32>
    %87 = arith.subf %83, %86 : vector<2x8x8xf32>
    %88 = math.exp %87 : vector<2x8x8xf32>
    %cst_29 = arith.constant dense<0.000000e+00> : vector<2x8xf32>
    %89 = vector.multi_reduction <add>, %88, %cst_29 [2] : vector<2x8x8xf32> to vector<2x8xf32>
    %90 = vector.shape_cast %89 : vector<2x8xf32> to vector<2x8x1xf32>
    %cst_30 = arith.constant 1.000000e+00 : f32
    %91 = vector.broadcast %cst_30 : f32 to vector<2x8x1xf32>
    %92 = arith.divf %91, %90 : vector<2x8x1xf32>
    %93 = vector.broadcast %92 : vector<2x8x1xf32> to vector<2x8x8xf32>
    %94 = arith.mulf %88, %93 : vector<2x8x8xf32>
    %95 = arith.truncf %94 : vector<2x8x8xf32> to vector<2x8x8xbf16>
    "tpu.trace_start"() <{level = 10 : i32, message = "bqk,bkd->bqd"}> : () -> ()
    %cst_31 = arith.constant dense<0.000000e+00> : vector<2x8x32xf32>
    %96 = tpu.matmul %95, %76, %cst_31 {dimension_numbers = #tpu.dot_dimension_numbers<[2], [1], [1], [2], [0, 0, 0, 1, 1, 2], [0], [0]>} : vector<2x8x8xbf16>, vector<2x8x32xbf16>, vector<2x8x32xf32> -> vector<2x8x32xf32>
    "tpu.trace_stop"() : () -> ()
    %97 = vector.extract_strided_slice %40 {offsets = [0, 0, 64], sizes = [2, 8, 32], strides = [1, 1, 1]} : vector<2x8x128xf32> to vector<2x8x32xf32>
    %98 = arith.truncf %97 : vector<2x8x32xf32> to vector<2x8x32xbf16>
    %99 = vector.extract_strided_slice %42 {offsets = [0, 0, 64], sizes = [2, 8, 32], strides = [1, 1, 1]} : vector<2x8x128xf32> to vector<2x8x32xf32>
    %100 = arith.truncf %99 : vector<2x8x32xf32> to vector<2x8x32xbf16>
    %101 = vector.extract_strided_slice %44 {offsets = [0, 0, 64], sizes = [2, 8, 32], strides = [1, 1, 1]} : vector<2x8x128xf32> to vector<2x8x32xf32>
    %102 = arith.truncf %101 : vector<2x8x32xf32> to vector<2x8x32xbf16>
    "tpu.trace_start"() <{level = 10 : i32, message = "bqd,bkd->bqk"}> : () -> ()
    %cst_32 = arith.constant dense<0.000000e+00> : vector<2x8x8xf32>
    %103 = tpu.matmul %98, %100, %cst_32 {dimension_numbers = #tpu.dot_dimension_numbers<[2], [2], [1], [1], [0, 0, 0, 1, 1, 1], [0], [0]>} : vector<2x8x32xbf16>, vector<2x8x32xbf16>, vector<2x8x8xf32> -> vector<2x8x8xf32>
    %cst_33 = arith.constant 0xFF800000 : f32
    "tpu.trace_stop"() : () -> ()
    %104 = vector.shape_cast %5 : vector<1x8x8xi1> to vector<1x8x8xi1>
    %105 = vector.broadcast %104 : vector<1x8x8xi1> to vector<2x8x8xi1>
    %106 = vector.broadcast %cst_33 : f32 to vector<2x8x8xf32>
    %107 = arith.select %105, %106, %103 : vector<2x8x8xi1>, vector<2x8x8xf32>
    %cst_34 = arith.constant 0.176776692 : f32
    %108 = vector.broadcast %cst_34 : f32 to vector<2x8x8xf32>
    %109 = arith.mulf %107, %108 : vector<2x8x8xf32>
    %cst_35 = arith.constant dense<0xFF800000> : vector<2x8xf32>
    %110 = vector.multi_reduction <maximumf>, %109, %cst_35 [2] : vector<2x8x8xf32> to vector<2x8xf32>
    %111 = vector.shape_cast %110 : vector<2x8xf32> to vector<2x8x1xf32>
    %112 = vector.broadcast %111 : vector<2x8x1xf32> to vector<2x8x8xf32>
    %113 = arith.subf %109, %112 : vector<2x8x8xf32>
    %114 = math.exp %113 : vector<2x8x8xf32>
    %cst_36 = arith.constant dense<0.000000e+00> : vector<2x8xf32>
    %115 = vector.multi_reduction <add>, %114, %cst_36 [2] : vector<2x8x8xf32> to vector<2x8xf32>
    %116 = vector.shape_cast %115 : vector<2x8xf32> to vector<2x8x1xf32>
    %cst_37 = arith.constant 1.000000e+00 : f32
    %117 = vector.broadcast %cst_37 : f32 to vector<2x8x1xf32>
    %118 = arith.divf %117, %116 : vector<2x8x1xf32>
    %119 = vector.broadcast %118 : vector<2x8x1xf32> to vector<2x8x8xf32>
    %120 = arith.mulf %114, %119 : vector<2x8x8xf32>
    %121 = arith.truncf %120 : vector<2x8x8xf32> to vector<2x8x8xbf16>
    "tpu.trace_start"() <{level = 10 : i32, message = "bqk,bkd->bqd"}> : () -> ()
    %cst_38 = arith.constant dense<0.000000e+00> : vector<2x8x32xf32>
    %122 = tpu.matmul %121, %102, %cst_38 {dimension_numbers = #tpu.dot_dimension_numbers<[2], [1], [1], [2], [0, 0, 0, 1, 1, 2], [0], [0]>} : vector<2x8x8xbf16>, vector<2x8x32xbf16>, vector<2x8x32xf32> -> vector<2x8x32xf32>
    "tpu.trace_stop"() : () -> ()
    %123 = vector.extract_strided_slice %40 {offsets = [0, 0, 96], sizes = [2, 8, 32], strides = [1, 1, 1]} : vector<2x8x128xf32> to vector<2x8x32xf32>
    %124 = arith.truncf %123 : vector<2x8x32xf32> to vector<2x8x32xbf16>
    %125 = vector.extract_strided_slice %42 {offsets = [0, 0, 96], sizes = [2, 8, 32], strides = [1, 1, 1]} : vector<2x8x128xf32> to vector<2x8x32xf32>
    %126 = arith.truncf %125 : vector<2x8x32xf32> to vector<2x8x32xbf16>
    %127 = vector.extract_strided_slice %44 {offsets = [0, 0, 96], sizes = [2, 8, 32], strides = [1, 1, 1]} : vector<2x8x128xf32> to vector<2x8x32xf32>
    %128 = arith.truncf %127 : vector<2x8x32xf32> to vector<2x8x32xbf16>
    "tpu.trace_start"() <{level = 10 : i32, message = "bqd,bkd->bqk"}> : () -> ()
    %cst_39 = arith.constant dense<0.000000e+00> : vector<2x8x8xf32>
    %129 = tpu.matmul %124, %126, %cst_39 {dimension_numbers = #tpu.dot_dimension_numbers<[2], [2], [1], [1], [0, 0, 0, 1, 1, 1], [0], [0]>} : vector<2x8x32xbf16>, vector<2x8x32xbf16>, vector<2x8x8xf32> -> vector<2x8x8xf32>
    %cst_40 = arith.constant 0xFF800000 : f32
    "tpu.trace_stop"() : () -> ()
    %130 = vector.shape_cast %5 : vector<1x8x8xi1> to vector<1x8x8xi1>
    %131 = vector.broadcast %130 : vector<1x8x8xi1> to vector<2x8x8xi1>
    %132 = vector.broadcast %cst_40 : f32 to vector<2x8x8xf32>
    %133 = arith.select %131, %132, %129 : vector<2x8x8xi1>, vector<2x8x8xf32>
    %cst_41 = arith.constant 0.176776692 : f32
    %134 = vector.broadcast %cst_41 : f32 to vector<2x8x8xf32>
    %135 = arith.mulf %133, %134 : vector<2x8x8xf32>
    %cst_42 = arith.constant dense<0xFF800000> : vector<2x8xf32>
    %136 = vector.multi_reduction <maximumf>, %135, %cst_42 [2] : vector<2x8x8xf32> to vector<2x8xf32>
    %137 = vector.shape_cast %136 : vector<2x8xf32> to vector<2x8x1xf32>
    %138 = vector.broadcast %137 : vector<2x8x1xf32> to vector<2x8x8xf32>
    %139 = arith.subf %135, %138 : vector<2x8x8xf32>
    %140 = math.exp %139 : vector<2x8x8xf32>
    %cst_43 = arith.constant dense<0.000000e+00> : vector<2x8xf32>
    %141 = vector.multi_reduction <add>, %140, %cst_43 [2] : vector<2x8x8xf32> to vector<2x8xf32>
    %142 = vector.shape_cast %141 : vector<2x8xf32> to vector<2x8x1xf32>
    %cst_44 = arith.constant 1.000000e+00 : f32
    %143 = vector.broadcast %cst_44 : f32 to vector<2x8x1xf32>
    %144 = arith.divf %143, %142 : vector<2x8x1xf32>
    %145 = vector.broadcast %144 : vector<2x8x1xf32> to vector<2x8x8xf32>
    %146 = arith.mulf %140, %145 : vector<2x8x8xf32>
    %147 = arith.truncf %146 : vector<2x8x8xf32> to vector<2x8x8xbf16>
    "tpu.trace_start"() <{level = 10 : i32, message = "bqk,bkd->bqd"}> : () -> ()
    %cst_45 = arith.constant dense<0.000000e+00> : vector<2x8x32xf32>
    %148 = tpu.matmul %147, %128, %cst_45 {dimension_numbers = #tpu.dot_dimension_numbers<[2], [1], [1], [2], [0, 0, 0, 1, 1, 2], [0], [0]>} : vector<2x8x8xbf16>, vector<2x8x32xbf16>, vector<2x8x32xf32> -> vector<2x8x32xf32>
    "tpu.trace_stop"() : () -> ()
    %149 = tpu.concatenate %70, %96, %122, %148 in 2 : vector<2x8x32xf32>, vector<2x8x32xf32>, vector<2x8x32xf32>, vector<2x8x32xf32> -> vector<2x8x128xf32>
    %150 = arith.addf %1, %149 : vector<2x8x128xf32>
    %cst_46 = arith.constant dense<0.000000e+00> : vector<2x128xf32>
    %151 = vector.multi_reduction <add>, %150, %cst_46 [1] : vector<2x8x128xf32> to vector<2x128xf32>
    %152 = vector.shape_cast %151 : vector<2x128xf32> to vector<2x1x128xf32>
    %cst_47 = arith.constant 8.000000e+00 : f32
    %153 = vector.broadcast %cst_47 : f32 to vector<2x1x128xf32>
    %154 = arith.divf %152, %153 : vector<2x1x128xf32>
    %155 = vector.broadcast %154 : vector<2x1x128xf32> to vector<2x8x128xf32>
    %156 = arith.subf %150, %155 : vector<2x8x128xf32>
    %157 = arith.mulf %156, %156 : vector<2x8x128xf32>
    %cst_48 = arith.constant dense<0.000000e+00> : vector<2x128xf32>
    %158 = vector.multi_reduction <add>, %157, %cst_48 [1] : vector<2x8x128xf32> to vector<2x128xf32>
    %159 = vector.shape_cast %158 : vector<2x128xf32> to vector<2x1x128xf32>
    %cst_49 = arith.constant 8.000000e+00 : f32
    %160 = vector.broadcast %cst_49 : f32 to vector<2x1x128xf32>
    %161 = arith.divf %159, %160 : vector<2x1x128xf32>
    %162 = vector.broadcast %154 : vector<2x1x128xf32> to vector<2x8x128xf32>
    %163 = arith.subf %150, %162 : vector<2x8x128xf32>
    %cst_50 = arith.constant 9.99999974E-6 : f32
    %164 = vector.broadcast %cst_50 : f32 to vector<2x1x128xf32>
    %165 = arith.addf %161, %164 : vector<2x1x128xf32>
    %166 = math.rsqrt %165 : vector<2x1x128xf32>
    %167 = vector.broadcast %166 : vector<2x1x128xf32> to vector<2x8x128xf32>
    %168 = arith.mulf %163, %167 : vector<2x8x128xf32>
    %c0_51 = arith.constant 0 : index
    %c0_52 = arith.constant 0 : index
    %169 = vector.load %arg7[%c0_51, %c0_52] : memref<8x128xf32, #tpu.memory_space<vmem>>, vector<8x128xf32>
    %170 = vector.shape_cast %169 : vector<8x128xf32> to vector<1x8x128xf32>
    %171 = vector.broadcast %170 : vector<1x8x128xf32> to vector<2x8x128xf32>
    %172 = arith.mulf %168, %171 : vector<2x8x128xf32>
    %c0_53 = arith.constant 0 : index
    %c0_54 = arith.constant 0 : index
    %173 = vector.load %arg8[%c0_53, %c0_54] : memref<8x128xf32, #tpu.memory_space<vmem>>, vector<8x128xf32>
    %174 = vector.shape_cast %173 : vector<8x128xf32> to vector<1x8x128xf32>
    %175 = vector.broadcast %174 : vector<1x8x128xf32> to vector<2x8x128xf32>
    %176 = arith.addf %172, %175 : vector<2x8x128xf32>
    %177 = vector.shape_cast %176 : vector<2x8x128xf32> to vector<16x128xf32>
    %178 = arith.truncf %177 : vector<16x128xf32> to vector<16x128xbf16>
    %c0_55 = arith.constant 0 : index
    %c0_56 = arith.constant 0 : index
    %179 = vector.load %arg9[%c0_55, %c0_56] : memref<128x128xbf16, #tpu.memory_space<vmem>>, vector<128x128xbf16>
    %cst_57 = arith.constant dense<0.000000e+00> : vector<16x128xf32>
    %180 = tpu.matmul %178, %179, %cst_57 {dimension_numbers = #tpu.dot_dimension_numbers<[1], [0], [0], [1], [0, 0, 1, 1], [], []>} : vector<16x128xbf16>, vector<128x128xbf16>, vector<16x128xf32> -> vector<16x128xf32>
    %c0_58 = arith.constant 0 : index
    %c0_59 = arith.constant 0 : index
    %181 = vector.load %arg10[%c0_58, %c0_59] : memref<1x128xf32, #tpu.memory_space<vmem>>, vector<1x128xf32>
    %182 = vector.broadcast %181 : vector<1x128xf32> to vector<16x128xf32>
    %183 = arith.addf %180, %182 : vector<16x128xf32>
    %184 = vector.shape_cast %183 : vector<16x128xf32> to vector<2x8x128xf32>
    %185 = vector.shape_cast %0 : vector<2x8x128xf32> to vector<16x128xf32>
    %186 = arith.truncf %185 : vector<16x128xf32> to vector<16x128xbf16>
    %c0_60 = arith.constant 0 : index
    %c0_61 = arith.constant 0 : index
    %187 = vector.load %arg11[%c0_60, %c0_61] : memref<128x256xbf16, #tpu.memory_space<vmem>>, vector<128x256xbf16>
    %cst_62 = arith.constant dense<0.000000e+00> : vector<16x256xf32>
    %188 = tpu.matmul %186, %187, %cst_62 {dimension_numbers = #tpu.dot_dimension_numbers<[1], [0], [0], [1], [0, 0, 1, 1], [], []>} : vector<16x128xbf16>, vector<128x256xbf16>, vector<16x256xf32> -> vector<16x256xf32>
    %c0_63 = arith.constant 0 : index
    %c0_64 = arith.constant 0 : index
    %189 = vector.load %arg12[%c0_63, %c0_64] : memref<1x256xf32, #tpu.memory_space<vmem>>, vector<1x256xf32>
    %190 = vector.broadcast %189 : vector<1x256xf32> to vector<16x256xf32>
    %191 = arith.addf %188, %190 : vector<16x256xf32>
    %192 = vector.extract_strided_slice %191 {offsets = [0, 0], sizes = [16, 128], strides = [1, 1]} : vector<16x256xf32> to vector<16x128xf32>
    %193 = vector.shape_cast %192 : vector<16x128xf32> to vector<2x8x128xf32>
    %194 = vector.extract_strided_slice %191 {offsets = [0, 128], sizes = [16, 128], strides = [1, 1]} : vector<16x256xf32> to vector<16x128xf32>
    %195 = vector.shape_cast %194 : vector<16x128xf32> to vector<2x8x128xf32>
    %196 = vector.extract_strided_slice %184 {offsets = [0, 0, 0], sizes = [2, 8, 32], strides = [1, 1, 1]} : vector<2x8x128xf32> to vector<2x8x32xf32>
    %197 = arith.truncf %196 : vector<2x8x32xf32> to vector<2x8x32xbf16>
    %198 = vector.extract_strided_slice %193 {offsets = [0, 0, 0], sizes = [2, 8, 32], strides = [1, 1, 1]} : vector<2x8x128xf32> to vector<2x8x32xf32>
    %199 = arith.truncf %198 : vector<2x8x32xf32> to vector<2x8x32xbf16>
    %200 = vector.extract_strided_slice %195 {offsets = [0, 0, 0], sizes = [2, 8, 32], strides = [1, 1, 1]} : vector<2x8x128xf32> to vector<2x8x32xf32>
    %201 = arith.truncf %200 : vector<2x8x32xf32> to vector<2x8x32xbf16>
    "tpu.trace_start"() <{level = 10 : i32, message = "bqd,bkd->bqk"}> : () -> ()
    %cst_65 = arith.constant dense<0.000000e+00> : vector<2x8x8xf32>
    %202 = tpu.matmul %197, %199, %cst_65 {dimension_numbers = #tpu.dot_dimension_numbers<[2], [2], [1], [1], [0, 0, 0, 1, 1, 1], [0], [0]>} : vector<2x8x32xbf16>, vector<2x8x32xbf16>, vector<2x8x8xf32> -> vector<2x8x8xf32>
    "tpu.trace_stop"() : () -> ()
    %cst_66 = arith.constant 0.176776692 : f32
    %203 = vector.broadcast %cst_66 : f32 to vector<2x8x8xf32>
    %204 = arith.mulf %202, %203 : vector<2x8x8xf32>
    %cst_67 = arith.constant dense<0xFF800000> : vector<2x8xf32>
    %205 = vector.multi_reduction <maximumf>, %204, %cst_67 [2] : vector<2x8x8xf32> to vector<2x8xf32>
    %206 = vector.shape_cast %205 : vector<2x8xf32> to vector<2x8x1xf32>
    %207 = vector.broadcast %206 : vector<2x8x1xf32> to vector<2x8x8xf32>
    %208 = arith.subf %204, %207 : vector<2x8x8xf32>
    %209 = math.exp %208 : vector<2x8x8xf32>
    %cst_68 = arith.constant dense<0.000000e+00> : vector<2x8xf32>
    %210 = vector.multi_reduction <add>, %209, %cst_68 [2] : vector<2x8x8xf32> to vector<2x8xf32>
    %211 = vector.shape_cast %210 : vector<2x8xf32> to vector<2x8x1xf32>
    %cst_69 = arith.constant 1.000000e+00 : f32
    %212 = vector.broadcast %cst_69 : f32 to vector<2x8x1xf32>
    %213 = arith.divf %212, %211 : vector<2x8x1xf32>
    %214 = vector.broadcast %213 : vector<2x8x1xf32> to vector<2x8x8xf32>
    %215 = arith.mulf %209, %214 : vector<2x8x8xf32>
    %216 = arith.truncf %215 : vector<2x8x8xf32> to vector<2x8x8xbf16>
    "tpu.trace_start"() <{level = 10 : i32, message = "bqk,bkd->bqd"}> : () -> ()
    %cst_70 = arith.constant dense<0.000000e+00> : vector<2x8x32xf32>
    %217 = tpu.matmul %216, %201, %cst_70 {dimension_numbers = #tpu.dot_dimension_numbers<[2], [1], [1], [2], [0, 0, 0, 1, 1, 2], [0], [0]>} : vector<2x8x8xbf16>, vector<2x8x32xbf16>, vector<2x8x32xf32> -> vector<2x8x32xf32>
    "tpu.trace_stop"() : () -> ()
    %218 = vector.extract_strided_slice %184 {offsets = [0, 0, 32], sizes = [2, 8, 32], strides = [1, 1, 1]} : vector<2x8x128xf32> to vector<2x8x32xf32>
    %219 = arith.truncf %218 : vector<2x8x32xf32> to vector<2x8x32xbf16>
    %220 = vector.extract_strided_slice %193 {offsets = [0, 0, 32], sizes = [2, 8, 32], strides = [1, 1, 1]} : vector<2x8x128xf32> to vector<2x8x32xf32>
    %221 = arith.truncf %220 : vector<2x8x32xf32> to vector<2x8x32xbf16>
    %222 = vector.extract_strided_slice %195 {offsets = [0, 0, 32], sizes = [2, 8, 32], strides = [1, 1, 1]} : vector<2x8x128xf32> to vector<2x8x32xf32>
    %223 = arith.truncf %222 : vector<2x8x32xf32> to vector<2x8x32xbf16>
    "tpu.trace_start"() <{level = 10 : i32, message = "bqd,bkd->bqk"}> : () -> ()
    %cst_71 = arith.constant dense<0.000000e+00> : vector<2x8x8xf32>
    %224 = tpu.matmul %219, %221, %cst_71 {dimension_numbers = #tpu.dot_dimension_numbers<[2], [2], [1], [1], [0, 0, 0, 1, 1, 1], [0], [0]>} : vector<2x8x32xbf16>, vector<2x8x32xbf16>, vector<2x8x8xf32> -> vector<2x8x8xf32>
    "tpu.trace_stop"() : () -> ()
    %cst_72 = arith.constant 0.176776692 : f32
    %225 = vector.broadcast %cst_72 : f32 to vector<2x8x8xf32>
    %226 = arith.mulf %224, %225 : vector<2x8x8xf32>
    %cst_73 = arith.constant dense<0xFF800000> : vector<2x8xf32>
    %227 = vector.multi_reduction <maximumf>, %226, %cst_73 [2] : vector<2x8x8xf32> to vector<2x8xf32>
    %228 = vector.shape_cast %227 : vector<2x8xf32> to vector<2x8x1xf32>
    %229 = vector.broadcast %228 : vector<2x8x1xf32> to vector<2x8x8xf32>
    %230 = arith.subf %226, %229 : vector<2x8x8xf32>
    %231 = math.exp %230 : vector<2x8x8xf32>
    %cst_74 = arith.constant dense<0.000000e+00> : vector<2x8xf32>
    %232 = vector.multi_reduction <add>, %231, %cst_74 [2] : vector<2x8x8xf32> to vector<2x8xf32>
    %233 = vector.shape_cast %232 : vector<2x8xf32> to vector<2x8x1xf32>
    %cst_75 = arith.constant 1.000000e+00 : f32
    %234 = vector.broadcast %cst_75 : f32 to vector<2x8x1xf32>
    %235 = arith.divf %234, %233 : vector<2x8x1xf32>
    %236 = vector.broadcast %235 : vector<2x8x1xf32> to vector<2x8x8xf32>
    %237 = arith.mulf %231, %236 : vector<2x8x8xf32>
    %238 = arith.truncf %237 : vector<2x8x8xf32> to vector<2x8x8xbf16>
    "tpu.trace_start"() <{level = 10 : i32, message = "bqk,bkd->bqd"}> : () -> ()
    %cst_76 = arith.constant dense<0.000000e+00> : vector<2x8x32xf32>
    %239 = tpu.matmul %238, %223, %cst_76 {dimension_numbers = #tpu.dot_dimension_numbers<[2], [1], [1], [2], [0, 0, 0, 1, 1, 2], [0], [0]>} : vector<2x8x8xbf16>, vector<2x8x32xbf16>, vector<2x8x32xf32> -> vector<2x8x32xf32>
    "tpu.trace_stop"() : () -> ()
    %240 = vector.extract_strided_slice %184 {offsets = [0, 0, 64], sizes = [2, 8, 32], strides = [1, 1, 1]} : vector<2x8x128xf32> to vector<2x8x32xf32>
    %241 = arith.truncf %240 : vector<2x8x32xf32> to vector<2x8x32xbf16>
    %242 = vector.extract_strided_slice %193 {offsets = [0, 0, 64], sizes = [2, 8, 32], strides = [1, 1, 1]} : vector<2x8x128xf32> to vector<2x8x32xf32>
    %243 = arith.truncf %242 : vector<2x8x32xf32> to vector<2x8x32xbf16>
    %244 = vector.extract_strided_slice %195 {offsets = [0, 0, 64], sizes = [2, 8, 32], strides = [1, 1, 1]} : vector<2x8x128xf32> to vector<2x8x32xf32>
    %245 = arith.truncf %244 : vector<2x8x32xf32> to vector<2x8x32xbf16>
    "tpu.trace_start"() <{level = 10 : i32, message = "bqd,bkd->bqk"}> : () -> ()
    %cst_77 = arith.constant dense<0.000000e+00> : vector<2x8x8xf32>
    %246 = tpu.matmul %241, %243, %cst_77 {dimension_numbers = #tpu.dot_dimension_numbers<[2], [2], [1], [1], [0, 0, 0, 1, 1, 1], [0], [0]>} : vector<2x8x32xbf16>, vector<2x8x32xbf16>, vector<2x8x8xf32> -> vector<2x8x8xf32>
    "tpu.trace_stop"() : () -> ()
    %cst_78 = arith.constant 0.176776692 : f32
    %247 = vector.broadcast %cst_78 : f32 to vector<2x8x8xf32>
    %248 = arith.mulf %246, %247 : vector<2x8x8xf32>
    %cst_79 = arith.constant dense<0xFF800000> : vector<2x8xf32>
    %249 = vector.multi_reduction <maximumf>, %248, %cst_79 [2] : vector<2x8x8xf32> to vector<2x8xf32>
    %250 = vector.shape_cast %249 : vector<2x8xf32> to vector<2x8x1xf32>
    %251 = vector.broadcast %250 : vector<2x8x1xf32> to vector<2x8x8xf32>
    %252 = arith.subf %248, %251 : vector<2x8x8xf32>
    %253 = math.exp %252 : vector<2x8x8xf32>
    %cst_80 = arith.constant dense<0.000000e+00> : vector<2x8xf32>
    %254 = vector.multi_reduction <add>, %253, %cst_80 [2] : vector<2x8x8xf32> to vector<2x8xf32>
    %255 = vector.shape_cast %254 : vector<2x8xf32> to vector<2x8x1xf32>
    %cst_81 = arith.constant 1.000000e+00 : f32
    %256 = vector.broadcast %cst_81 : f32 to vector<2x8x1xf32>
    %257 = arith.divf %256, %255 : vector<2x8x1xf32>
    %258 = vector.broadcast %257 : vector<2x8x1xf32> to vector<2x8x8xf32>
    %259 = arith.mulf %253, %258 : vector<2x8x8xf32>
    %260 = arith.truncf %259 : vector<2x8x8xf32> to vector<2x8x8xbf16>
    "tpu.trace_start"() <{level = 10 : i32, message = "bqk,bkd->bqd"}> : () -> ()
    %cst_82 = arith.constant dense<0.000000e+00> : vector<2x8x32xf32>
    %261 = tpu.matmul %260, %245, %cst_82 {dimension_numbers = #tpu.dot_dimension_numbers<[2], [1], [1], [2], [0, 0, 0, 1, 1, 2], [0], [0]>} : vector<2x8x8xbf16>, vector<2x8x32xbf16>, vector<2x8x32xf32> -> vector<2x8x32xf32>
    "tpu.trace_stop"() : () -> ()
    %262 = vector.extract_strided_slice %184 {offsets = [0, 0, 96], sizes = [2, 8, 32], strides = [1, 1, 1]} : vector<2x8x128xf32> to vector<2x8x32xf32>
    %263 = arith.truncf %262 : vector<2x8x32xf32> to vector<2x8x32xbf16>
    %264 = vector.extract_strided_slice %193 {offsets = [0, 0, 96], sizes = [2, 8, 32], strides = [1, 1, 1]} : vector<2x8x128xf32> to vector<2x8x32xf32>
    %265 = arith.truncf %264 : vector<2x8x32xf32> to vector<2x8x32xbf16>
    %266 = vector.extract_strided_slice %195 {offsets = [0, 0, 96], sizes = [2, 8, 32], strides = [1, 1, 1]} : vector<2x8x128xf32> to vector<2x8x32xf32>
    %267 = arith.truncf %266 : vector<2x8x32xf32> to vector<2x8x32xbf16>
    "tpu.trace_start"() <{level = 10 : i32, message = "bqd,bkd->bqk"}> : () -> ()
    %cst_83 = arith.constant dense<0.000000e+00> : vector<2x8x8xf32>
    %268 = tpu.matmul %263, %265, %cst_83 {dimension_numbers = #tpu.dot_dimension_numbers<[2], [2], [1], [1], [0, 0, 0, 1, 1, 1], [0], [0]>} : vector<2x8x32xbf16>, vector<2x8x32xbf16>, vector<2x8x8xf32> -> vector<2x8x8xf32>
    "tpu.trace_stop"() : () -> ()
    %cst_84 = arith.constant 0.176776692 : f32
    %269 = vector.broadcast %cst_84 : f32 to vector<2x8x8xf32>
    %270 = arith.mulf %268, %269 : vector<2x8x8xf32>
    %cst_85 = arith.constant dense<0xFF800000> : vector<2x8xf32>
    %271 = vector.multi_reduction <maximumf>, %270, %cst_85 [2] : vector<2x8x8xf32> to vector<2x8xf32>
    %272 = vector.shape_cast %271 : vector<2x8xf32> to vector<2x8x1xf32>
    %273 = vector.broadcast %272 : vector<2x8x1xf32> to vector<2x8x8xf32>
    %274 = arith.subf %270, %273 : vector<2x8x8xf32>
    %275 = math.exp %274 : vector<2x8x8xf32>
    %cst_86 = arith.constant dense<0.000000e+00> : vector<2x8xf32>
    %276 = vector.multi_reduction <add>, %275, %cst_86 [2] : vector<2x8x8xf32> to vector<2x8xf32>
    %277 = vector.shape_cast %276 : vector<2x8xf32> to vector<2x8x1xf32>
    %cst_87 = arith.constant 1.000000e+00 : f32
    %278 = vector.broadcast %cst_87 : f32 to vector<2x8x1xf32>
    %279 = arith.divf %278, %277 : vector<2x8x1xf32>
    %280 = vector.broadcast %279 : vector<2x8x1xf32> to vector<2x8x8xf32>
    %281 = arith.mulf %275, %280 : vector<2x8x8xf32>
    %282 = arith.truncf %281 : vector<2x8x8xf32> to vector<2x8x8xbf16>
    "tpu.trace_start"() <{level = 10 : i32, message = "bqk,bkd->bqd"}> : () -> ()
    %cst_88 = arith.constant dense<0.000000e+00> : vector<2x8x32xf32>
    %283 = tpu.matmul %282, %267, %cst_88 {dimension_numbers = #tpu.dot_dimension_numbers<[2], [1], [1], [2], [0, 0, 0, 1, 1, 2], [0], [0]>} : vector<2x8x8xbf16>, vector<2x8x32xbf16>, vector<2x8x32xf32> -> vector<2x8x32xf32>
    "tpu.trace_stop"() : () -> ()
    %284 = tpu.concatenate %217, %239, %261, %283 in 2 : vector<2x8x32xf32>, vector<2x8x32xf32>, vector<2x8x32xf32>, vector<2x8x32xf32> -> vector<2x8x128xf32>
    %285 = arith.addf %150, %284 : vector<2x8x128xf32>
    %cst_89 = arith.constant dense<0.000000e+00> : vector<2x128xf32>
    %286 = vector.multi_reduction <add>, %285, %cst_89 [1] : vector<2x8x128xf32> to vector<2x128xf32>
    %287 = vector.shape_cast %286 : vector<2x128xf32> to vector<2x1x128xf32>
    %cst_90 = arith.constant 8.000000e+00 : f32
    %288 = vector.broadcast %cst_90 : f32 to vector<2x1x128xf32>
    %289 = arith.divf %287, %288 : vector<2x1x128xf32>
    %290 = vector.broadcast %289 : vector<2x1x128xf32> to vector<2x8x128xf32>
    %291 = arith.subf %285, %290 : vector<2x8x128xf32>
    %292 = arith.mulf %291, %291 : vector<2x8x128xf32>
    %cst_91 = arith.constant dense<0.000000e+00> : vector<2x128xf32>
    %293 = vector.multi_reduction <add>, %292, %cst_91 [1] : vector<2x8x128xf32> to vector<2x128xf32>
    %294 = vector.shape_cast %293 : vector<2x128xf32> to vector<2x1x128xf32>
    %cst_92 = arith.constant 8.000000e+00 : f32
    %295 = vector.broadcast %cst_92 : f32 to vector<2x1x128xf32>
    %296 = arith.divf %294, %295 : vector<2x1x128xf32>
    %297 = vector.broadcast %289 : vector<2x1x128xf32> to vector<2x8x128xf32>
    %298 = arith.subf %285, %297 : vector<2x8x128xf32>
    %cst_93 = arith.constant 9.99999974E-6 : f32
    %299 = vector.broadcast %cst_93 : f32 to vector<2x1x128xf32>
    %300 = arith.addf %296, %299 : vector<2x1x128xf32>
    %301 = math.rsqrt %300 : vector<2x1x128xf32>
    %302 = vector.broadcast %301 : vector<2x1x128xf32> to vector<2x8x128xf32>
    %303 = arith.mulf %298, %302 : vector<2x8x128xf32>
    %c0_94 = arith.constant 0 : index
    %c0_95 = arith.constant 0 : index
    %304 = vector.load %arg13[%c0_94, %c0_95] : memref<8x128xf32, #tpu.memory_space<vmem>>, vector<8x128xf32>
    %305 = vector.shape_cast %304 : vector<8x128xf32> to vector<1x8x128xf32>
    %306 = vector.broadcast %305 : vector<1x8x128xf32> to vector<2x8x128xf32>
    %307 = arith.mulf %303, %306 : vector<2x8x128xf32>
    %c0_96 = arith.constant 0 : index
    %c0_97 = arith.constant 0 : index
    %308 = vector.load %arg14[%c0_96, %c0_97] : memref<8x128xf32, #tpu.memory_space<vmem>>, vector<8x128xf32>
    %309 = vector.shape_cast %308 : vector<8x128xf32> to vector<1x8x128xf32>
    %310 = vector.broadcast %309 : vector<1x8x128xf32> to vector<2x8x128xf32>
    %311 = arith.addf %307, %310 : vector<2x8x128xf32>
    %312 = vector.shape_cast %311 : vector<2x8x128xf32> to vector<16x128xf32>
    %313 = arith.truncf %312 : vector<16x128xf32> to vector<16x128xbf16>
    %c0_98 = arith.constant 0 : index
    %c0_99 = arith.constant 0 : index
    %314 = vector.load %arg15[%c0_98, %c0_99] : memref<128x512xbf16, #tpu.memory_space<vmem>>, vector<128x512xbf16>
    %cst_100 = arith.constant dense<0.000000e+00> : vector<16x512xf32>
    %315 = tpu.matmul %313, %314, %cst_100 {dimension_numbers = #tpu.dot_dimension_numbers<[1], [0], [0], [1], [0, 0, 1, 1], [], []>} : vector<16x128xbf16>, vector<128x512xbf16>, vector<16x512xf32> -> vector<16x512xf32>
    %c0_101 = arith.constant 0 : index
    %c0_102 = arith.constant 0 : index
    %316 = vector.load %arg16[%c0_101, %c0_102] : memref<1x512xf32, #tpu.memory_space<vmem>>, vector<1x512xf32>
    %317 = vector.broadcast %316 : vector<1x512xf32> to vector<16x512xf32>
    %318 = arith.addf %315, %317 : vector<16x512xf32>
    %cst_103 = arith.constant 0.000000e+00 : f32
    %319 = vector.broadcast %cst_103 : f32 to vector<16x512xf32>
    %320 = arith.maximumf %318, %319 : vector<16x512xf32>
    %321 = arith.truncf %320 : vector<16x512xf32> to vector<16x512xbf16>
    %c0_104 = arith.constant 0 : index
    %c0_105 = arith.constant 0 : index
    %322 = vector.load %arg17[%c0_104, %c0_105] : memref<512x128xbf16, #tpu.memory_space<vmem>>, vector<512x128xbf16>
    %cst_106 = arith.constant dense<0.000000e+00> : vector<16x128xf32>
    %323 = tpu.matmul %321, %322, %cst_106 {dimension_numbers = #tpu.dot_dimension_numbers<[1], [0], [0], [1], [0, 0, 1, 1], [], []>} : vector<16x512xbf16>, vector<512x128xbf16>, vector<16x128xf32> -> vector<16x128xf32>
    %c0_107 = arith.constant 0 : index
    %c0_108 = arith.constant 0 : index
    %324 = vector.load %arg18[%c0_107, %c0_108] : memref<1x128xf32, #tpu.memory_space<vmem>>, vector<1x128xf32>
    %325 = vector.broadcast %324 : vector<1x128xf32> to vector<16x128xf32>
    %326 = arith.addf %323, %325 : vector<16x128xf32>
    %327 = vector.shape_cast %326 : vector<16x128xf32> to vector<2x8x128xf32>
    %328 = arith.addf %285, %327 : vector<2x8x128xf32>
    %c0_109 = arith.constant 0 : index
    %c0_110 = arith.constant 0 : index
    %c0_111 = arith.constant 0 : index
    %329 = vector.load %arg19[%c0_109, %c0_110, %c0_111] : memref<2x8x128xf32, #tpu.memory_space<vmem>>, vector<2x8x128xf32>
    tpu.vector_store %arg19[%c0_109, %c0_110, %c0_111], %328 {strides = array<i32>} : memref<2x8x128xf32, #tpu.memory_space<vmem>>, vector<2x8x128xf32>,
    return
  }
  func.func @transform_0(%arg0: i32) -> (i32, i32, i32) {
    %c0_i32 = arith.constant 0 : i32
    %c0_i32_0 = arith.constant 0 : i32
    %c0_i32_1 = arith.constant 0 : i32
    return %arg0, %c0_i32, %c0_i32_0 : i32, i32, i32
  }
  func.func @transform_1(%arg0: i32) -> (i32, i32, i32) {
    %c0_i32 = arith.constant 0 : i32
    %c0_i32_0 = arith.constant 0 : i32
    %c0_i32_1 = arith.constant 0 : i32
    return %arg0, %c0_i32, %c0_i32_0 : i32, i32, i32
  }
  func.func @transform_2(%arg0: i32) -> (i32, i32) {
    %c0_i32 = arith.constant 0 : i32
    %c0_i32_0 = arith.constant 0 : i32
    %c0_i32_1 = arith.constant 0 : i32
    return %c0_i32, %c0_i32_0 : i32, i32
  }
  func.func @transform_3(%arg0: i32) -> (i32, i32) {
    %c0_i32 = arith.constant 0 : i32
    %c0_i32_0 = arith.constant 0 : i32
    %c0_i32_1 = arith.constant 0 : i32
    return %c0_i32, %c0_i32_0 : i32, i32
  }
  func.func @transform_4(%arg0: i32) -> (i32, i32) {
    %c0_i32 = arith.constant 0 : i32
    %c0_i32_0 = arith.constant 0 : i32
    %c0_i32_1 = arith.constant 0 : i32
    return %c0_i32, %c0_i32_0 : i32, i32
  }
  func.func @transform_5(%arg0: i32) -> (i32, i32) {
    %c0_i32 = arith.constant 0 : i32
    %c0_i32_0 = arith.constant 0 : i32
    %c0_i32_1 = arith.constant 0 : i32
    return %c0_i32, %c0_i32_0 : i32, i32
  }
  func.func @transform_6(%arg0: i32) -> (i32, i32) {
    %c0_i32 = arith.constant 0 : i32
    %c0_i32_0 = arith.constant 0 : i32
    %c0_i32_1 = arith.constant 0 : i32
    return %c0_i32, %c0_i32_0 : i32, i32
  }
  func.func @transform_7(%arg0: i32) -> (i32, i32) {
    %c0_i32 = arith.constant 0 : i32
    %c0_i32_0 = arith.constant 0 : i32
    %c0_i32_1 = arith.constant 0 : i32
    return %c0_i32, %c0_i32_0 : i32, i32
  }
  func.func @transform_8(%arg0: i32) -> (i32, i32) {
    %c0_i32 = arith.constant 0 : i32
    %c0_i32_0 = arith.constant 0 : i32
    %c0_i32_1 = arith.constant 0 : i32
    return %c0_i32, %c0_i32_0 : i32, i32
  }
  func.func @transform_9(%arg0: i32) -> (i32, i32) {
    %c0_i32 = arith.constant 0 : i32
    %c0_i32_0 = arith.constant 0 : i32
    %c0_i32_1 = arith.constant 0 : i32
    return %c0_i32, %c0_i32_0 : i32, i32
  }
  func.func @transform_10(%arg0: i32) -> (i32, i32) {
    %c0_i32 = arith.constant 0 : i32
    %c0_i32_0 = arith.constant 0 : i32
    %c0_i32_1 = arith.constant 0 : i32
    return %c0_i32, %c0_i32_0 : i32, i32
  }
  func.func @transform_11(%arg0: i32) -> (i32, i32) {
    %c0_i32 = arith.constant 0 : i32
    %c0_i32_0 = arith.constant 0 : i32
    %c0_i32_1 = arith.constant 0 : i32
    return %c0_i32, %c0_i32_0 : i32, i32
  }
  func.func @transform_12(%arg0: i32) -> (i32, i32) {
    %c0_i32 = arith.constant 0 : i32
    %c0_i32_0 = arith.constant 0 : i32
    %c0_i32_1 = arith.constant 0 : i32
    return %c0_i32, %c0_i32_0 : i32, i32
  }
  func.func @transform_13(%arg0: i32) -> (i32, i32) {
    %c0_i32 = arith.constant 0 : i32
    %c0_i32_0 = arith.constant 0 : i32
    %c0_i32_1 = arith.constant 0 : i32
    return %c0_i32, %c0_i32_0 : i32, i32
  }
  func.func @transform_14(%arg0: i32) -> (i32, i32) {
    %c0_i32 = arith.constant 0 : i32
    %c0_i32_0 = arith.constant 0 : i32
    %c0_i32_1 = arith.constant 0 : i32
    return %c0_i32, %c0_i32_0 : i32, i32
  }
  func.func @transform_15(%arg0: i32) -> (i32, i32) {
    %c0_i32 = arith.constant 0 : i32
    %c0_i32_0 = arith.constant 0 : i32
    %c0_i32_1 = arith.constant 0 : i32
    return %c0_i32, %c0_i32_0 : i32, i32
  }
  func.func @transform_16(%arg0: i32) -> (i32, i32) {
    %c0_i32 = arith.constant 0 : i32
    %c0_i32_0 = arith.constant 0 : i32
    %c0_i32_1 = arith.constant 0 : i32
    return %c0_i32, %c0_i32_0 : i32, i32
  }
  func.func @transform_17(%arg0: i32) -> (i32, i32) {
    %c0_i32 = arith.constant 0 : i32
    %c0_i32_0 = arith.constant 0 : i32
    %c0_i32_1 = arith.constant 0 : i32
    return %c0_i32, %c0_i32_0 : i32, i32
  }
  func.func @transform_18(%arg0: i32) -> (i32, i32, i32) {
    %c0_i32 = arith.constant 0 : i32
    %c0_i32_0 = arith.constant 0 : i32
    %c0_i32_1 = arith.constant 0 : i32
    return %arg0, %c0_i32, %c0_i32_0 : i32, i32, i32
  }
}

module attributes {stable_mosaic.version = 11 : i64} {
  func.func @kernel(%arg0: i32, %arg1: memref<2x8x128xf32, #tpu.memory_space<vmem>>, %arg2: memref<2x8x128xf32, #tpu.memory_space<vmem>>, %arg3: memref<8x128xf32, #tpu.memory_space<vmem>>, %arg4: memref<8x128xf32, #tpu.memory_space<vmem>>, %arg5: memref<128x384xbf16, #tpu.memory_space<vmem>>, %arg6: memref<1x384xf32, #tpu.memory_space<vmem>>, %arg7: memref<8x128xf32, #tpu.memory_space<vmem>>, %arg8: memref<8x128xf32, #tpu.memory_space<vmem>>, %arg9: memref<128x128xbf16, #tpu.memory_space<vmem>>, %arg10: memref<1x128xf32, #tpu.memory_space<vmem>>, %arg11: memref<128x256xbf16, #tpu.memory_space<vmem>>, %arg12: memref<1x256xf32, #tpu.memory_space<vmem>>, %arg13: memref<8x128xf32, #tpu.memory_space<vmem>>, %arg14: memref<8x128xf32, #tpu.memory_space<vmem>>, %arg15: memref<128x512xbf16, #tpu.memory_space<vmem>>, %arg16: memref<1x512xf32, #tpu.memory_space<vmem>>, %arg17: memref<512x128xbf16, #tpu.memory_space<vmem>>, %arg18: memref<1x128xf32, #tpu.memory_space<vmem>>, %arg19: memref<2x8x128xf32, #tpu.memory_space<vmem>>) attributes {dimension_semantics = [#tpu.dimension_semantics<parallel>], iteration_bounds = array<i64: 2>, scalar_prefetch = 0 : i64, scratch_operands = 0 : i64, tpu.core_type = #tpu.core_type<tc>, window_params = [{transform_indices = @transform_0, window_bounds = array<i64: 2, 8, 128>}, {transform_indices = @transform_1, window_bounds = array<i64: 2, 8, 128>}, {pipeline_mode = #tpu.pipeline_mode<synchronous>, transform_indices = @transform_2, window_bounds = array<i64: 8, 128>}, {pipeline_mode = #tpu.pipeline_mode<synchronous>, transform_indices = @transform_3, window_bounds = array<i64: 8, 128>}, {pipeline_mode = #tpu.pipeline_mode<synchronous>, transform_indices = @transform_4, window_bounds = array<i64: 128, 384>}, {pipeline_mode = #tpu.pipeline_mode<synchronous>, transform_indices = @transform_5, window_bounds = array<i64: 1, 384>}, {pipeline_mode = #tpu.pipeline_mode<synchronous>, transform_indices = @transform_6, window_bounds = array<i64: 8, 128>}, {pipeline_mode = #tpu.pipeline_mode<synchronous>, transform_indices = @transform_7, window_bounds = array<i64: 8, 128>}, {pipeline_mode = #tpu.pipeline_mode<synchronous>, transform_indices = @transform_8, window_bounds = array<i64: 128, 128>}, {pipeline_mode = #tpu.pipeline_mode<synchronous>, transform_indices = @transform_9, window_bounds = array<i64: 1, 128>}, {pipeline_mode = #tpu.pipeline_mode<synchronous>, transform_indices = @transform_10, window_bounds = array<i64: 128, 256>}, {pipeline_mode = #tpu.pipeline_mode<synchronous>, transform_indices = @transform_11, window_bounds = array<i64: 1, 256>}, {pipeline_mode = #tpu.pipeline_mode<synchronous>, transform_indices = @transform_12, window_bounds = array<i64: 8, 128>}, {pipeline_mode = #tpu.pipeline_mode<synchronous>, transform_indices = @transform_13, window_bounds = array<i64: 8, 128>}, {pipeline_mode = #tpu.pipeline_mode<synchronous>, transform_indices = @transform_14, window_bounds = array<i64: 128, 512>}, {pipeline_mode = #tpu.pipeline_mode<synchronous>, transform_indices = @transform_15, window_bounds = array<i64: 1, 512>}, {pipeline_mode = #tpu.pipeline_mode<synchronous>, transform_indices = @transform_16, window_bounds = array<i64: 512, 128>}, {pipeline_mode = #tpu.pipeline_mode<synchronous>, transform_indices = @transform_17, window_bounds = array<i64: 1, 128>}, {transform_indices = @transform_18, window_bounds = array<i64: 2, 8, 128>}]} {
    %c0 = arith.constant 0 : index
    %c0_0 = arith.constant 0 : index
    %c0_1 = arith.constant 0 : index
    %0 = vector.load %arg1[%c0, %c0_0, %c0_1] : memref<2x8x128xf32, #tpu.memory_space<vmem>>, vector<2x8x128xf32>
    %c0_2 = arith.constant 0 : index
    %c0_3 = arith.constant 0 : index
    %c0_4 = arith.constant 0 : index
    %1 = vector.load %arg2[%c0_2, %c0_3, %c0_4] : memref<2x8x128xf32, #tpu.memory_space<vmem>>, vector<2x8x128xf32>
    %2 = tpu.iota {dimensions = array<i32: 0>} : vector<8x8xi32>
    %3 = tpu.iota {dimensions = array<i32: 1>} : vector<8x8xi32>
    %4 = arith.cmpi sgt, %3, %2 : vector<8x8xi32>
    %5 = vector.shape_cast %4 : vector<8x8xi1> to vector<1x8x8xi1>
    %cst = arith.constant dense<0.000000e+00> : vector<2x128xf32>
    %6 = vector.multi_reduction <add>, %1, %cst [1] : vector<2x8x128xf32> to vector<2x128xf32>
    %7 = vector.shape_cast %6 : vector<2x128xf32> to vector<2x1x128xf32>
    %cst_5 = arith.constant 8.000000e+00 : f32
    %8 = vector.broadcast %cst_5 : f32 to vector<2x1x128xf32>
    %9 = arith.divf %7, %8 : vector<2x1x128xf32>
    %10 = vector.broadcast %9 : vector<2x1x128xf32> to vector<2x8x128xf32>
    %11 = arith.subf %1, %10 : vector<2x8x128xf32>
    %12 = arith.mulf %11, %11 : vector<2x8x128xf32>
    %cst_6 = arith.constant dense<0.000000e+00> : vector<2x128xf32>
    %13 = vector.multi_reduction <add>, %12, %cst_6 [1] : vector<2x8x128xf32> to vector<2x128xf32>
    %14 = vector.shape_cast %13 : vector<2x128xf32> to vector<2x1x128xf32>
    %cst_7 = arith.constant 8.000000e+00 : f32
    %15 = vector.broadcast %cst_7 : f32 to vector<2x1x128xf32>
    %16 = arith.divf %14, %15 : vector<2x1x128xf32>
    %17 = vector.broadcast %9 : vector<2x1x128xf32> to vector<2x8x128xf32>
    %18 = arith.subf %1, %17 : vector<2x8x128xf32>
    %cst_8 = arith.constant 9.99999974E-6 : f32
    %19 = vector.broadcast %cst_8 : f32 to vector<2x1x128xf32>
    %20 = arith.addf %16, %19 : vector<2x1x128xf32>
    %21 = math.rsqrt %20 : vector<2x1x128xf32>
    %22 = vector.broadcast %21 : vector<2x1x128xf32> to vector<2x8x128xf32>
    %23 = arith.mulf %18, %22 : vector<2x8x128xf32>
    %c0_9 = arith.constant 0 : index
    %c0_10 = arith.constant 0 : index
    %24 = vector.load %arg3[%c0_9, %c0_10] : memref<8x128xf32, #tpu.memory_space<vmem>>, vector<8x128xf32>
    %25 = vector.shape_cast %24 : vector<8x128xf32> to vector<1x8x128xf32>
    %26 = vector.broadcast %25 : vector<1x8x128xf32> to vector<2x8x128xf32>
    %27 = arith.mulf %23, %26 : vector<2x8x128xf32>
    %c0_11 = arith.constant 0 : index
    %c0_12 = arith.constant 0 : index
    %28 = vector.load %arg4[%c0_11, %c0_12] : memref<8x128xf32, #tpu.memory_space<vmem>>, vector<8x128xf32>
    %29 = vector.shape_cast %28 : vector<8x128xf32> to vector<1x8x128xf32>
    %30 = vector.broadcast %29 : vector<1x8x128xf32> to vector<2x8x128xf32>
    %31 = arith.addf %27, %30 : vector<2x8x128xf32>
    %32 = vector.shape_cast %31 : vector<2x8x128xf32> to vector<16x128xf32>
    %33 = arith.truncf %32 : vector<16x128xf32> to vector<16x128xbf16>
    %c0_13 = arith.constant 0 : index
    %c0_14 = arith.constant 0 : index
    %34 = vector.load %arg5[%c0_13, %c0_14] : memref<128x384xbf16, #tpu.memory_space<vmem>>, vector<128x384xbf16>
    %cst_15 = arith.constant dense<0.000000e+00> : vector<16x384xf32>
    %35 = tpu.matmul %33, %34, %cst_15 {dimension_numbers = #tpu.dot_dimension_numbers<[1], [0], [0], [1], [0, 0, 1, 1], [], []>} : vector<16x128xbf16>, vector<128x384xbf16>, vector<16x384xf32> -> vector<16x384xf32>
    %c0_16 = arith.constant 0 : index
    %c0_17 = arith.constant 0 : index
    %36 = vector.load %arg6[%c0_16, %c0_17] : memref<1x384xf32, #tpu.memory_space<vmem>>, vector<1x384xf32>
    %37 = vector.broadcast %36 : vector<1x384xf32> to vector<16x384xf32>
    %38 = arith.addf %35, %37 : vector<16x384xf32>
    %39 = vector.extract_strided_slice %38 {offsets = [0, 0], sizes = [16, 128], strides = [1, 1]} : vector<16x384xf32> to vector<16x128xf32>
    %40 = vector.shape_cast %39 : vector<16x128xf32> to vector<2x8x128xf32>
    %41 = vector.extract_strided_slice %38 {offsets = [0, 128], sizes = [16, 128], strides = [1, 1]} : vector<16x384xf32> to vector<16x128xf32>
    %42 = vector.shape_cast %41 : vector<16x128xf32> to vector<2x8x128xf32>
    %43 = vector.extract_strided_slice %38 {offsets = [0, 256], sizes = [16, 128], strides = [1, 1]} : vector<16x384xf32> to vector<16x128xf32>
    %44 = vector.shape_cast %43 : vector<16x128xf32> to vector<2x8x128xf32>
    %45 = vector.extract_strided_slice %40 {offsets = [0, 0, 0], sizes = [2, 8, 32], strides = [1, 1, 1]} : vector<2x8x128xf32> to vector<2x8x32xf32>
    %46 = arith.truncf %45 : vector<2x8x32xf32> to vector<2x8x32xbf16>
    %47 = vector.extract_strided_slice %42 {offsets = [0, 0, 0], sizes = [2, 8, 32], strides = [1, 1, 1]} : vector<2x8x128xf32> to vector<2x8x32xf32>
    %48 = arith.truncf %47 : vector<2x8x32xf32> to vector<2x8x32xbf16>
    %49 = vector.extract_strided_slice %44 {offsets = [0, 0, 0], sizes = [2, 8, 32], strides = [1, 1, 1]} : vector<2x8x128xf32> to vector<2x8x32xf32>
    %50 = arith.truncf %49 : vector<2x8x32xf32> to vector<2x8x32xbf16>
    "tpu.trace_start"() <{level = 10 : i32, message = "bqd,bkd->bqk"}> : () -> ()
    %cst_18 = arith.constant dense<0.000000e+00> : vector<2x8x8xf32>
    %51 = tpu.matmul %46, %48, %cst_18 {dimension_numbers = #tpu.dot_dimension_numbers<[2], [2], [1], [1], [0, 0, 0, 1, 1, 1], [0], [0]>} : vector<2x8x32xbf16>, vector<2x8x32xbf16>, vector<2x8x8xf32> -> vector<2x8x8xf32>
    %cst_19 = arith.constant 0xFF800000 : f32
    "tpu.trace_stop"() : () -> ()
    %52 = vector.shape_cast %5 : vector<1x8x8xi1> to vector<1x8x8xi1>
    %53 = vector.broadcast %52 : vector<1x8x8xi1> to vector<2x8x8xi1>
    %54 = vector.broadcast %cst_19 : f32 to vector<2x8x8xf32>
    %55 = arith.select %53, %54, %51 : vector<2x8x8xi1>, vector<2x8x8xf32>
    %cst_20 = arith.constant 0.176776692 : f32
    %56 = vector.broadcast %cst_20 : f32 to vector<2x8x8xf32>
    %57 = arith.mulf %55, %56 : vector<2x8x8xf32>
    %cst_21 = arith.constant dense<0xFF800000> : vector<2x8xf32>
    %58 = vector.multi_reduction <maximumf>, %57, %cst_21 [2] : vector<2x8x8xf32> to vector<2x8xf32>
    %59 = vector.shape_cast %58 : vector<2x8xf32> to vector<2x8x1xf32>
    %60 = vector.broadcast %59 : vector<2x8x1xf32> to vector<2x8x8xf32>
    %61 = arith.subf %57, %60 : vector<2x8x8xf32>
    %62 = math.exp %61 : vector<2x8x8xf32>
    %cst_22 = arith.constant dense<0.000000e+00> : vector<2x8xf32>
    %63 = vector.multi_reduction <add>, %62, %cst_22 [2] : vector<2x8x8xf32> to vector<2x8xf32>
    %64 = vector.shape_cast %63 : vector<2x8xf32> to vector<2x8x1xf32>
    %cst_23 = arith.constant 1.000000e+00 : f32
    %65 = vector.broadcast %cst_23 : f32 to vector<2x8x1xf32>
    %66 = arith.divf %65, %64 : vector<2x8x1xf32>
    %67 = vector.broadcast %66 : vector<2x8x1xf32> to vector<2x8x8xf32>
    %68 = arith.mulf %62, %67 : vector<2x8x8xf32>
    %69 = arith.truncf %68 : vector<2x8x8xf32> to vector<2x8x8xbf16>
    "tpu.trace_start"() <{level = 10 : i32, message = "bqk,bkd->bqd"}> : () -> ()
    %cst_24 = arith.constant dense<0.000000e+00> : vector<2x8x32xf32>
    %70 = tpu.matmul %69, %50, %cst_24 {dimension_numbers = #tpu.dot_dimension_numbers<[2], [1], [1], [2], [0, 0, 0, 1, 1, 2], [0], [0]>} : vector<2x8x8xbf16>, vector<2x8x32xbf16>, vector<2x8x32xf32> -> vector<2x8x32xf32>
    "tpu.trace_stop"() : () -> ()
    %71 = vector.extract_strided_slice %40 {offsets = [0, 0, 32], sizes = [2, 8, 32], strides = [1, 1, 1]} : vector<2x8x128xf32> to vector<2x8x32xf32>
    %72 = arith.truncf %71 : vector<2x8x32xf32> to vector<2x8x32xbf16>
    %73 = vector.extract_strided_slice %42 {offsets = [0, 0, 32], sizes = [2, 8, 32], strides = [1, 1, 1]} : vector<2x8x128xf32> to vector<2x8x32xf32>
    %74 = arith.truncf %73 : vector<2x8x32xf32> to vector<2x8x32xbf16>
    %75 = vector.extract_strided_slice %44 {offsets = [0, 0, 32], sizes = [2, 8, 32], strides = [1, 1, 1]} : vector<2x8x128xf32> to vector<2x8x32xf32>
    %76 = arith.truncf %75 : vector<2x8x32xf32> to vector<2x8x32xbf16>
    "tpu.trace_start"() <{level = 10 : i32, message = "bqd,bkd->bqk"}> : () -> ()
    %cst_25 = arith.constant dense<0.000000e+00> : vector<2x8x8xf32>
    %77 = tpu.matmul %72, %74, %cst_25 {dimension_numbers = #tpu.dot_dimension_numbers<[2], [2], [1], [1], [0, 0, 0, 1, 1, 1], [0], [0]>} : vector<2x8x32xbf16>, vector<2x8x32xbf16>, vector<2x8x8xf32> -> vector<2x8x8xf32>
    %cst_26 = arith.constant 0xFF800000 : f32
    "tpu.trace_stop"() : () -> ()
    %78 = vector.shape_cast %5 : vector<1x8x8xi1> to vector<1x8x8xi1>
    %79 = vector.broadcast %78 : vector<1x8x8xi1> to vector<2x8x8xi1>
    %80 = vector.broadcast %cst_26 : f32 to vector<2x8x8xf32>
    %81 = arith.select %79, %80, %77 : vector<2x8x8xi1>, vector<2x8x8xf32>
    %cst_27 = arith.constant 0.176776692 : f32
    %82 = vector.broadcast %cst_27 : f32 to vector<2x8x8xf32>
    %83 = arith.mulf %81, %82 : vector<2x8x8xf32>
    %cst_28 = arith.constant dense<0xFF800000> : vector<2x8xf32>
    %84 = vector.multi_reduction <maximumf>, %83, %cst_28 [2] : vector<2x8x8xf32> to vector<2x8xf32>
    %85 = vector.shape_cast %84 : vector<2x8xf32> to vector<2x8x1xf32>
    %86 = vector.broadcast %85 : vector<2x8x1xf32> to vector<2x8x8xf32>
    %87 = arith.subf %83, %86 : vector<2x8x8xf32>
    %88 = math.exp %87 : vector<2x8x8xf32>
    %cst_29 = arith.constant dense<0.000000e+00> : vector<2x8xf32>
    %89 = vector.multi_reduction <add>, %88, %cst_29 [2] : vector<2x8x8xf32> to vector<2x8xf32>
    %90 = vector.shape_cast %89 : vector<2x8xf32> to vector<2x8x1xf32>
    %cst_30 = arith.constant 1.000000e+00 : f32
    %91 = vector.broadcast %cst_30 : f32 to vector<2x8x1xf32>
    %92 = arith.divf %91, %90 : vector<2x8x1xf32>
    %93 = vector.broadcast %92 : vector<2x8x1xf32> to vector<2x8x8xf32>
    %94 = arith.mulf %88, %93 : vector<2x8x8xf32>
    %95 = arith.truncf %94 : vector<2x8x8xf32> to vector<2x8x8xbf16>
    "tpu.trace_start"() <{level = 10 : i32, message = "bqk,bkd->bqd"}> : () -> ()
    %cst_31 = arith.constant dense<0.000000e+00> : vector<2x8x32xf32>
    %96 = tpu.matmul %95, %76, %cst_31 {dimension_numbers = #tpu.dot_dimension_numbers<[2], [1], [1], [2], [0, 0, 0, 1, 1, 2], [0], [0]>} : vector<2x8x8xbf16>, vector<2x8x32xbf16>, vector<2x8x32xf32> -> vector<2x8x32xf32>
    "tpu.trace_stop"() : () -> ()
    %97 = vector.extract_strided_slice %40 {offsets = [0, 0, 64], sizes = [2, 8, 32], strides = [1, 1, 1]} : vector<2x8x128xf32> to vector<2x8x32xf32>
    %98 = arith.truncf %97 : vector<2x8x32xf32> to vector<2x8x32xbf16>
    %99 = vector.extract_strided_slice %42 {offsets = [0, 0, 64], sizes = [2, 8, 32], strides = [1, 1, 1]} : vector<2x8x128xf32> to vector<2x8x32xf32>
    %100 = arith.truncf %99 : vector<2x8x32xf32> to vector<2x8x32xbf16>
    %101 = vector.extract_strided_slice %44 {offsets = [0, 0, 64], sizes = [2, 8, 32], strides = [1, 1, 1]} : vector<2x8x128xf32> to vector<2x8x32xf32>
    %102 = arith.truncf %101 : vector<2x8x32xf32> to vector<2x8x32xbf16>
    "tpu.trace_start"() <{level = 10 : i32, message = "bqd,bkd->bqk"}> : () -> ()
    %cst_32 = arith.constant dense<0.000000e+00> : vector<2x8x8xf32>
    %103 = tpu.matmul %98, %100, %cst_32 {dimension_numbers = #tpu.dot_dimension_numbers<[2], [2], [1], [1], [0, 0, 0, 1, 1, 1], [0], [0]>} : vector<2x8x32xbf16>, vector<2x8x32xbf16>, vector<2x8x8xf32> -> vector<2x8x8xf32>
    %cst_33 = arith.constant 0xFF800000 : f32
    "tpu.trace_stop"() : () -> ()
    %104 = vector.shape_cast %5 : vector<1x8x8xi1> to vector<1x8x8xi1>
    %105 = vector.broadcast %104 : vector<1x8x8xi1> to vector<2x8x8xi1>
    %106 = vector.broadcast %cst_33 : f32 to vector<2x8x8xf32>
    %107 = arith.select %105, %106, %103 : vector<2x8x8xi1>, vector<2x8x8xf32>
    %cst_34 = arith.constant 0.176776692 : f32
    %108 = vector.broadcast %cst_34 : f32 to vector<2x8x8xf32>
    %109 = arith.mulf %107, %108 : vector<2x8x8xf32>
    %cst_35 = arith.constant dense<0xFF800000> : vector<2x8xf32>
    %110 = vector.multi_reduction <maximumf>, %109, %cst_35 [2] : vector<2x8x8xf32> to vector<2x8xf32>
    %111 = vector.shape_cast %110 : vector<2x8xf32> to vector<2x8x1xf32>
    %112 = vector.broadcast %111 : vector<2x8x1xf32> to vector<2x8x8xf32>
    %113 = arith.subf %109, %112 : vector<2x8x8xf32>
    %114 = math.exp %113 : vector<2x8x8xf32>
    %cst_36 = arith.constant dense<0.000000e+00> : vector<2x8xf32>
    %115 = vector.multi_reduction <add>, %114, %cst_36 [2] : vector<2x8x8xf32> to vector<2x8xf32>
    %116 = vector.shape_cast %115 : vector<2x8xf32> to vector<2x8x1xf32>
    %cst_37 = arith.constant 1.000000e+00 : f32
    %117 = vector.broadcast %cst_37 : f32 to vector<2x8x1xf32>
    %118 = arith.divf %117, %116 : vector<2x8x1xf32>
    %119 = vector.broadcast %118 : vector<2x8x1xf32> to vector<2x8x8xf32>
    %120 = arith.mulf %114, %119 : vector<2x8x8xf32>
    %121 = arith.truncf %120 : vector<2x8x8xf32> to vector<2x8x8xbf16>
    "tpu.trace_start"() <{level = 10 : i32, message = "bqk,bkd->bqd"}> : () -> ()
    %cst_38 = arith.constant dense<0.000000e+00> : vector<2x8x32xf32>
    %122 = tpu.matmul %121, %102, %cst_38 {dimension_numbers = #tpu.dot_dimension_numbers<[2], [1], [1], [2], [0, 0, 0, 1, 1, 2], [0], [0]>} : vector<2x8x8xbf16>, vector<2x8x32xbf16>, vector<2x8x32xf32> -> vector<2x8x32xf32>
    "tpu.trace_stop"() : () -> ()
    %123 = vector.extract_strided_slice %40 {offsets = [0, 0, 96], sizes = [2, 8, 32], strides = [1, 1, 1]} : vector<2x8x128xf32> to vector<2x8x32xf32>
    %124 = arith.truncf %123 : vector<2x8x32xf32> to vector<2x8x32xbf16>
    %125 = vector.extract_strided_slice %42 {offsets = [0, 0, 96], sizes = [2, 8, 32], strides = [1, 1, 1]} : vector<2x8x128xf32> to vector<2x8x32xf32>
    %126 = arith.truncf %125 : vector<2x8x32xf32> to vector<2x8x32xbf16>
    %127 = vector.extract_strided_slice %44 {offsets = [0, 0, 96], sizes = [2, 8, 32], strides = [1, 1, 1]} : vector<2x8x128xf32> to vector<2x8x32xf32>
    %128 = arith.truncf %127 : vector<2x8x32xf32> to vector<2x8x32xbf16>
    "tpu.trace_start"() <{level = 10 : i32, message = "bqd,bkd->bqk"}> : () -> ()
    %cst_39 = arith.constant dense<0.000000e+00> : vector<2x8x8xf32>
    %129 = tpu.matmul %124, %126, %cst_39 {dimension_numbers = #tpu.dot_dimension_numbers<[2], [2], [1], [1], [0, 0, 0, 1, 1, 1], [0], [0]>} : vector<2x8x32xbf16>, vector<2x8x32xbf16>, vector<2x8x8xf32> -> vector<2x8x8xf32>
    %cst_40 = arith.constant 0xFF800000 : f32
    "tpu.trace_stop"() : () -> ()
    %130 = vector.shape_cast %5 : vector<1x8x8xi1> to vector<1x8x8xi1>
    %131 = vector.broadcast %130 : vector<1x8x8xi1> to vector<2x8x8xi1>
    %132 = vector.broadcast %cst_40 : f32 to vector<2x8x8xf32>
    %133 = arith.select %131, %132, %129 : vector<2x8x8xi1>, vector<2x8x8xf32>
    %cst_41 = arith.constant 0.176776692 : f32
    %134 = vector.broadcast %cst_41 : f32 to vector<2x8x8xf32>
    %135 = arith.mulf %133, %134 : vector<2x8x8xf32>
    %cst_42 = arith.constant dense<0xFF800000> : vector<2x8xf32>
    %136 = vector.multi_reduction <maximumf>, %135, %cst_42 [2] : vector<2x8x8xf32> to vector<2x8xf32>
    %137 = vector.shape_cast %136 : vector<2x8xf32> to vector<2x8x1xf32>
    %138 = vector.broadcast %137 : vector<2x8x1xf32> to vector<2x8x8xf32>
    %139 = arith.subf %135, %138 : vector<2x8x8xf32>
    %140 = math.exp %139 : vector<2x8x8xf32>
    %cst_43 = arith.constant dense<0.000000e+00> : vector<2x8xf32>
    %141 = vector.multi_reduction <add>, %140, %cst_43 [2] : vector<2x8x8xf32> to vector<2x8xf32>
    %142 = vector.shape_cast %141 : vector<2x8xf32> to vector<2x8x1xf32>
    %cst_44 = arith.constant 1.000000e+00 : f32
    %143 = vector.broadcast %cst_44 : f32 to vector<2x8x1xf32>
    %144 = arith.divf %143, %142 : vector<2x8x1xf32>
    %145 = vector.broadcast %144 : vector<2x8x1xf32> to vector<2x8x8xf32>
    %146 = arith.mulf %140, %145 : vector<2x8x8xf32>
    %147 = arith.truncf %146 : vector<2x8x8xf32> to vector<2x8x8xbf16>
    "tpu.trace_start"() <{level = 10 : i32, message = "bqk,bkd->bqd"}> : () -> ()
    %cst_45 = arith.constant dense<0.000000e+00> : vector<2x8x32xf32>
    %148 = tpu.matmul %147, %128, %cst_45 {dimension_numbers = #tpu.dot_dimension_numbers<[2], [1], [1], [2], [0, 0, 0, 1, 1, 2], [0], [0]>} : vector<2x8x8xbf16>, vector<2x8x32xbf16>, vector<2x8x32xf32> -> vector<2x8x32xf32>
    "tpu.trace_stop"() : () -> ()
    %149 = tpu.concatenate %70, %96, %122, %148 in 2 : vector<2x8x32xf32>, vector<2x8x32xf32>, vector<2x8x32xf32>, vector<2x8x32xf32> -> vector<2x8x128xf32>
    %150 = arith.addf %1, %149 : vector<2x8x128xf32>
    %cst_46 = arith.constant dense<0.000000e+00> : vector<2x128xf32>
    %151 = vector.multi_reduction <add>, %150, %cst_46 [1] : vector<2x8x128xf32> to vector<2x128xf32>
    %152 = vector.shape_cast %151 : vector<2x128xf32> to vector<2x1x128xf32>
    %cst_47 = arith.constant 8.000000e+00 : f32
    %153 = vector.broadcast %cst_47 : f32 to vector<2x1x128xf32>
    %154 = arith.divf %152, %153 : vector<2x1x128xf32>
    %155 = vector.broadcast %154 : vector<2x1x128xf32> to vector<2x8x128xf32>
    %156 = arith.subf %150, %155 : vector<2x8x128xf32>
    %157 = arith.mulf %156, %156 : vector<2x8x128xf32>
    %cst_48 = arith.constant dense<0.000000e+00> : vector<2x128xf32>
    %158 = vector.multi_reduction <add>, %157, %cst_48 [1] : vector<2x8x128xf32> to vector<2x128xf32>
    %159 = vector.shape_cast %158 : vector<2x128xf32> to vector<2x1x128xf32>
    %cst_49 = arith.constant 8.000000e+00 : f32
    %160 = vector.broadcast %cst_49 : f32 to vector<2x1x128xf32>
    %161 = arith.divf %159, %160 : vector<2x1x128xf32>
    %162 = vector.broadcast %154 : vector<2x1x128xf32> to vector<2x8x128xf32>
    %163 = arith.subf %150, %162 : vector<2x8x128xf32>
    %cst_50 = arith.constant 9.99999974E-6 : f32
    %164 = vector.broadcast %cst_50 : f32 to vector<2x1x128xf32>
    %165 = arith.addf %161, %164 : vector<2x1x128xf32>
    %166 = math.rsqrt %165 : vector<2x1x128xf32>
    %167 = vector.broadcast %166 : vector<2x1x128xf32> to vector<2x8x128xf32>
    %168 = arith.mulf %163, %167 : vector<2x8x128xf32>
    %c0_51 = arith.constant 0 : index
    %c0_52 = arith.constant 0 : index
    %169 = vector.load %arg7[%c0_51, %c0_52] : memref<8x128xf32, #tpu.memory_space<vmem>>, vector<8x128xf32>
    %170 = vector.shape_cast %169 : vector<8x128xf32> to vector<1x8x128xf32>
    %171 = vector.broadcast %170 : vector<1x8x128xf32> to vector<2x8x128xf32>
    %172 = arith.mulf %168, %171 : vector<2x8x128xf32>
    %c0_53 = arith.constant 0 : index
    %c0_54 = arith.constant 0 : index
    %173 = vector.load %arg8[%c0_53, %c0_54] : memref<8x128xf32, #tpu.memory_space<vmem>>, vector<8x128xf32>
    %174 = vector.shape_cast %173 : vector<8x128xf32> to vector<1x8x128xf32>
    %175 = vector.broadcast %174 : vector<1x8x128xf32> to vector<2x8x128xf32>
    %176 = arith.addf %172, %175 : vector<2x8x128xf32>
    %177 = vector.shape_cast %176 : vector<2x8x128xf32> to vector<16x128xf32>
    %178 = arith.truncf %177 : vector<16x128xf32> to vector<16x128xbf16>
    %c0_55 = arith.constant 0 : index
    %c0_56 = arith.constant 0 : index
    %179 = vector.load %arg9[%c0_55, %c0_56] : memref<128x128xbf16, #tpu.memory_space<vmem>>, vector<128x128xbf16>
    %cst_57 = arith.constant dense<0.000000e+00> : vector<16x128xf32>
    %180 = tpu.matmul %178, %179, %cst_57 {dimension_numbers = #tpu.dot_dimension_numbers<[1], [0], [0], [1], [0, 0, 1, 1], [], []>} : vector<16x128xbf16>, vector<128x128xbf16>, vector<16x128xf32> -> vector<16x128xf32>
    %c0_58 = arith.constant 0 : index
    %c0_59 = arith.constant 0 : index
    %181 = vector.load %arg10[%c0_58, %c0_59] : memref<1x128xf32, #tpu.memory_space<vmem>>, vector<1x128xf32>
    %182 = vector.broadcast %181 : vector<1x128xf32> to vector<16x128xf32>
    %183 = arith.addf %180, %182 : vector<16x128xf32>
    %184 = vector.shape_cast %183 : vector<16x128xf32> to vector<2x8x128xf32>
    %185 = vector.shape_cast %0 : vector<2x8x128xf32> to vector<16x128xf32>
    %186 = arith.truncf %185 : vector<16x128xf32> to vector<16x128xbf16>
    %c0_60 = arith.constant 0 : index
    %c0_61 = arith.constant 0 : index
    %187 = vector.load %arg11[%c0_60, %c0_61] : memref<128x256xbf16, #tpu.memory_space<vmem>>, vector<128x256xbf16>
    %cst_62 = arith.constant dense<0.000000e+00> : vector<16x256xf32>
    %188 = tpu.matmul %186, %187, %cst_62 {dimension_numbers = #tpu.dot_dimension_numbers<[1], [0], [0], [1], [0, 0, 1, 1], [], []>} : vector<16x128xbf16>, vector<128x256xbf16>, vector<16x256xf32> -> vector<16x256xf32>
    %c0_63 = arith.constant 0 : index
    %c0_64 = arith.constant 0 : index
    %189 = vector.load %arg12[%c0_63, %c0_64] : memref<1x256xf32, #tpu.memory_space<vmem>>, vector<1x256xf32>
    %190 = vector.broadcast %189 : vector<1x256xf32> to vector<16x256xf32>
    %191 = arith.addf %188, %190 : vector<16x256xf32>
    %192 = vector.extract_strided_slice %191 {offsets = [0, 0], sizes = [16, 128], strides = [1, 1]} : vector<16x256xf32> to vector<16x128xf32>
    %193 = vector.shape_cast %192 : vector<16x128xf32> to vector<2x8x128xf32>
    %194 = vector.extract_strided_slice %191 {offsets = [0, 128], sizes = [16, 128], strides = [1, 1]} : vector<16x256xf32> to vector<16x128xf32>
    %195 = vector.shape_cast %194 : vector<16x128xf32> to vector<2x8x128xf32>
    %196 = vector.extract_strided_slice %184 {offsets = [0, 0, 0], sizes = [2, 8, 32], strides = [1, 1, 1]} : vector<2x8x128xf32> to vector<2x8x32xf32>
    %197 = arith.truncf %196 : vector<2x8x32xf32> to vector<2x8x32xbf16>
    %198 = vector.extract_strided_slice %193 {offsets = [0, 0, 0], sizes = [2, 8, 32], strides = [1, 1, 1]} : vector<2x8x128xf32> to vector<2x8x32xf32>
    %199 = arith.truncf %198 : vector<2x8x32xf32> to vector<2x8x32xbf16>
    %200 = vector.extract_strided_slice %195 {offsets = [0, 0, 0], sizes = [2, 8, 32], strides = [1, 1, 1]} : vector<2x8x128xf32> to vector<2x8x32xf32>
    %201 = arith.truncf %200 : vector<2x8x32xf32> to vector<2x8x32xbf16>
    "tpu.trace_start"() <{level = 10 : i32, message = "bqd,bkd->bqk"}> : () -> ()
    %cst_65 = arith.constant dense<0.000000e+00> : vector<2x8x8xf32>
    %202 = tpu.matmul %197, %199, %cst_65 {dimension_numbers = #tpu.dot_dimension_numbers<[2], [2], [1], [1], [0, 0, 0, 1, 1, 1], [0], [0]>} : vector<2x8x32xbf16>, vector<2x8x32xbf16>, vector<2x8x8xf32> -> vector<2x8x8xf32>
    "tpu.trace_stop"() : () -> ()
    %cst_66 = arith.constant 0.176776692 : f32
    %203 = vector.broadcast %cst_66 : f32 to vector<2x8x8xf32>
    %204 = arith.mulf %202, %203 : vector<2x8x8xf32>
    %cst_67 = arith.constant dense<0xFF800000> : vector<2x8xf32>
    %205 = vector.multi_reduction <maximumf>, %204, %cst_67 [2] : vector<2x8x8xf32> to vector<2x8xf32>
    %206 = vector.shape_cast %205 : vector<2x8xf32> to vector<2x8x1xf32>
    %207 = vector.broadcast %206 : vector<2x8x1xf32> to vector<2x8x8xf32>
    %208 = arith.subf %204, %207 : vector<2x8x8xf32>
    %209 = math.exp %208 : vector<2x8x8xf32>
    %cst_68 = arith.constant dense<0.000000e+00> : vector<2x8xf32>
    %210 = vector.multi_reduction <add>, %209, %cst_68 [2] : vector<2x8x8xf32> to vector<2x8xf32>
    %211 = vector.shape_cast %210 : vector<2x8xf32> to vector<2x8x1xf32>
    %cst_69 = arith.constant 1.000000e+00 : f32
    %212 = vector.broadcast %cst_69 : f32 to vector<2x8x1xf32>
    %213 = arith.divf %212, %211 : vector<2x8x1xf32>
    %214 = vector.broadcast %213 : vector<2x8x1xf32> to vector<2x8x8xf32>
    %215 = arith.mulf %209, %214 : vector<2x8x8xf32>
    %216 = arith.truncf %215 : vector<2x8x8xf32> to vector<2x8x8xbf16>
    "tpu.trace_start"() <{level = 10 : i32, message = "bqk,bkd->bqd"}> : () -> ()
    %cst_70 = arith.constant dense<0.000000e+00> : vector<2x8x32xf32>
    %217 = tpu.matmul %216, %201, %cst_70 {dimension_numbers = #tpu.dot_dimension_numbers<[2], [1], [1], [2], [0, 0, 0, 1, 1, 2], [0], [0]>} : vector<2x8x8xbf16>, vector<2x8x32xbf16>, vector<2x8x32xf32> -> vector<2x8x32xf32>
    "tpu.trace_stop"() : () -> ()
    %218 = vector.extract_strided_slice %184 {offsets = [0, 0, 32], sizes = [2, 8, 32], strides = [1, 1, 1]} : vector<2x8x128xf32> to vector<2x8x32xf32>
    %219 = arith.truncf %218 : vector<2x8x32xf32> to vector<2x8x32xbf16>
    %220 = vector.extract_strided_slice %193 {offsets = [0, 0, 32], sizes = [2, 8, 32], strides = [1, 1, 1]} : vector<2x8x128xf32> to vector<2x8x32xf32>
    %221 = arith.truncf %220 : vector<2x8x32xf32> to vector<2x8x32xbf16>
    %222 = vector.extract_strided_slice %195 {offsets = [0, 0, 32], sizes = [2, 8, 32], strides = [1, 1, 1]} : vector<2x8x128xf32> to vector<2x8x32xf32>
    %223 = arith.truncf %222 : vector<2x8x32xf32> to vector<2x8x32xbf16>
    "tpu.trace_start"() <{level = 10 : i32, message = "bqd,bkd->bqk"}> : () -> ()
    %cst_71 = arith.constant dense<0.000000e+00> : vector<2x8x8xf32>
    %224 = tpu.matmul %219, %221, %cst_71 {dimension_numbers = #tpu.dot_dimension_numbers<[2], [2], [1], [1], [0, 0, 0, 1, 1, 1], [0], [0]>} : vector<2x8x32xbf16>, vector<2x8x32xbf16>, vector<2x8x8xf32> -> vector<2x8x8xf32>
    "tpu.trace_stop"() : () -> ()
    %cst_72 = arith.constant 0.176776692 : f32
    %225 = vector.broadcast %cst_72 : f32 to vector<2x8x8xf32>
    %226 = arith.mulf %224, %225 : vector<2x8x8xf32>
    %cst_73 = arith.constant dense<0xFF800000> : vector<2x8xf32>
    %227 = vector.multi_reduction <maximumf>, %226, %cst_73 [2] : vector<2x8x8xf32> to vector<2x8xf32>
    %228 = vector.shape_cast %227 : vector<2x8xf32> to vector<2x8x1xf32>
    %229 = vector.broadcast %228 : vector<2x8x1xf32> to vector<2x8x8xf32>
    %230 = arith.subf %226, %229 : vector<2x8x8xf32>
    %231 = math.exp %230 : vector<2x8x8xf32>
    %cst_74 = arith.constant dense<0.000000e+00> : vector<2x8xf32>
    %232 = vector.multi_reduction <add>, %231, %cst_74 [2] : vector<2x8x8xf32> to vector<2x8xf32>
    %233 = vector.shape_cast %232 : vector<2x8xf32> to vector<2x8x1xf32>
    %cst_75 = arith.constant 1.000000e+00 : f32
    %234 = vector.broadcast %cst_75 : f32 to vector<2x8x1xf32>
    %235 = arith.divf %234, %233 : vector<2x8x1xf32>
    %236 = vector.broadcast %235 : vector<2x8x1xf32> to vector<2x8x8xf32>
    %237 = arith.mulf %231, %236 : vector<2x8x8xf32>
    %238 = arith.truncf %237 : vector<2x8x8xf32> to vector<2x8x8xbf16>
    "tpu.trace_start"() <{level = 10 : i32, message = "bqk,bkd->bqd"}> : () -> ()
    %cst_76 = arith.constant dense<0.000000e+00> : vector<2x8x32xf32>
    %239 = tpu.matmul %238, %223, %cst_76 {dimension_numbers = #tpu.dot_dimension_numbers<[2], [1], [1], [2], [0, 0, 0, 1, 1, 2], [0], [0]>} : vector<2x8x8xbf16>, vector<2x8x32xbf16>, vector<2x8x32xf32> -> vector<2x8x32xf32>
    "tpu.trace_stop"() : () -> ()
    %240 = vector.extract_strided_slice %184 {offsets = [0, 0, 64], sizes = [2, 8, 32], strides = [1, 1, 1]} : vector<2x8x128xf32> to vector<2x8x32xf32>
    %241 = arith.truncf %240 : vector<2x8x32xf32> to vector<2x8x32xbf16>
    %242 = vector.extract_strided_slice %193 {offsets = [0, 0, 64], sizes = [2, 8, 32], strides = [1, 1, 1]} : vector<2x8x128xf32> to vector<2x8x32xf32>
    %243 = arith.truncf %242 : vector<2x8x32xf32> to vector<2x8x32xbf16>
    %244 = vector.extract_strided_slice %195 {offsets = [0, 0, 64], sizes = [2, 8, 32], strides = [1, 1, 1]} : vector<2x8x128xf32> to vector<2x8x32xf32>
    %245 = arith.truncf %244 : vector<2x8x32xf32> to vector<2x8x32xbf16>
    "tpu.trace_start"() <{level = 10 : i32, message = "bqd,bkd->bqk"}> : () -> ()
    %cst_77 = arith.constant dense<0.000000e+00> : vector<2x8x8xf32>
    %246 = tpu.matmul %241, %243, %cst_77 {dimension_numbers = #tpu.dot_dimension_numbers<[2], [2], [1], [1], [0, 0, 0, 1, 1, 1], [0], [0]>} : vector<2x8x32xbf16>, vector<2x8x32xbf16>, vector<2x8x8xf32> -> vector<2x8x8xf32>
    "tpu.trace_stop"() : () -> ()
    %cst_78 = arith.constant 0.176776692 : f32
    %247 = vector.broadcast %cst_78 : f32 to vector<2x8x8xf32>
    %248 = arith.mulf %246, %247 : vector<2x8x8xf32>
    %cst_79 = arith.constant dense<0xFF800000> : vector<2x8xf32>
    %249 = vector.multi_reduction <maximumf>, %248, %cst_79 [2] : vector<2x8x8xf32> to vector<2x8xf32>
    %250 = vector.shape_cast %249 : vector<2x8xf32> to vector<2x8x1xf32>
    %251 = vector.broadcast %250 : vector<2x8x1xf32> to vector<2x8x8xf32>
    %252 = arith.subf %248, %251 : vector<2x8x8xf32>
    %253 = math.exp %252 : vector<2x8x8xf32>
    %cst_80 = arith.constant dense<0.000000e+00> : vector<2x8xf32>
    %254 = vector.multi_reduction <add>, %253, %cst_80 [2] : vector<2x8x8xf32> to vector<2x8xf32>
    %255 = vector.shape_cast %254 : vector<2x8xf32> to vector<2x8x1xf32>
    %cst_81 = arith.constant 1.000000e+00 : f32
    %256 = vector.broadcast %cst_81 : f32 to vector<2x8x1xf32>
    %257 = arith.divf %256, %255 : vector<2x8x1xf32>
    %258 = vector.broadcast %257 : vector<2x8x1xf32> to vector<2x8x8xf32>
    %259 = arith.mulf %253, %258 : vector<2x8x8xf32>
    %260 = arith.truncf %259 : vector<2x8x8xf32> to vector<2x8x8xbf16>
    "tpu.trace_start"() <{level = 10 : i32, message = "bqk,bkd->bqd"}> : () -> ()
    %cst_82 = arith.constant dense<0.000000e+00> : vector<2x8x32xf32>
    %261 = tpu.matmul %260, %245, %cst_82 {dimension_numbers = #tpu.dot_dimension_numbers<[2], [1], [1], [2], [0, 0, 0, 1, 1, 2], [0], [0]>} : vector<2x8x8xbf16>, vector<2x8x32xbf16>, vector<2x8x32xf32> -> vector<2x8x32xf32>
    "tpu.trace_stop"() : () -> ()
    %262 = vector.extract_strided_slice %184 {offsets = [0, 0, 96], sizes = [2, 8, 32], strides = [1, 1, 1]} : vector<2x8x128xf32> to vector<2x8x32xf32>
    %263 = arith.truncf %262 : vector<2x8x32xf32> to vector<2x8x32xbf16>
    %264 = vector.extract_strided_slice %193 {offsets = [0, 0, 96], sizes = [2, 8, 32], strides = [1, 1, 1]} : vector<2x8x128xf32> to vector<2x8x32xf32>
    %265 = arith.truncf %264 : vector<2x8x32xf32> to vector<2x8x32xbf16>
    %266 = vector.extract_strided_slice %195 {offsets = [0, 0, 96], sizes = [2, 8, 32], strides = [1, 1, 1]} : vector<2x8x128xf32> to vector<2x8x32xf32>
    %267 = arith.truncf %266 : vector<2x8x32xf32> to vector<2x8x32xbf16>
    "tpu.trace_start"() <{level = 10 : i32, message = "bqd,bkd->bqk"}> : () -> ()
    %cst_83 = arith.constant dense<0.000000e+00> : vector<2x8x8xf32>
    %268 = tpu.matmul %263, %265, %cst_83 {dimension_numbers = #tpu.dot_dimension_numbers<[2], [2], [1], [1], [0, 0, 0, 1, 1, 1], [0], [0]>} : vector<2x8x32xbf16>, vector<2x8x32xbf16>, vector<2x8x8xf32> -> vector<2x8x8xf32>
    "tpu.trace_stop"() : () -> ()
    %cst_84 = arith.constant 0.176776692 : f32
    %269 = vector.broadcast %cst_84 : f32 to vector<2x8x8xf32>
    %270 = arith.mulf %268, %269 : vector<2x8x8xf32>
    %cst_85 = arith.constant dense<0xFF800000> : vector<2x8xf32>
    %271 = vector.multi_reduction <maximumf>, %270, %cst_85 [2] : vector<2x8x8xf32> to vector<2x8xf32>
    %272 = vector.shape_cast %271 : vector<2x8xf32> to vector<2x8x1xf32>
    %273 = vector.broadcast %272 : vector<2x8x1xf32> to vector<2x8x8xf32>
    %274 = arith.subf %270, %273 : vector<2x8x8xf32>
    %275 = math.exp %274 : vector<2x8x8xf32>
    %cst_86 = arith.constant dense<0.000000e+00> : vector<2x8xf32>
    %276 = vector.multi_reduction <add>, %275, %cst_86 [2] : vector<2x8x8xf32> to vector<2x8xf32>
    %277 = vector.shape_cast %276 : vector<2x8xf32> to vector<2x8x1xf32>
    %cst_87 = arith.constant 1.000000e+00 : f32
    %278 = vector.broadcast %cst_87 : f32 to vector<2x8x1xf32>
    %279 = arith.divf %278, %277 : vector<2x8x1xf32>
    %280 = vector.broadcast %279 : vector<2x8x1xf32> to vector<2x8x8xf32>
    %281 = arith.mulf %275, %280 : vector<2x8x8xf32>
    %282 = arith.truncf %281 : vector<2x8x8xf32> to vector<2x8x8xbf16>
    "tpu.trace_start"() <{level = 10 : i32, message = "bqk,bkd->bqd"}> : () -> ()
    %cst_88 = arith.constant dense<0.000000e+00> : vector<2x8x32xf32>
    %283 = tpu.matmul %282, %267, %cst_88 {dimension_numbers = #tpu.dot_dimension_numbers<[2], [1], [1], [2], [0, 0, 0, 1, 1, 2], [0], [0]>} : vector<2x8x8xbf16>, vector<2x8x32xbf16>, vector<2x8x32xf32> -> vector<2x8x32xf32>
    "tpu.trace_stop"() : () -> ()
    %284 = tpu.concatenate %217, %239, %261, %283 in 2 : vector<2x8x32xf32>, vector<2x8x32xf32>, vector<2x8x32xf32>, vector<2x8x32xf32> -> vector<2x8x128xf32>
    %285 = arith.addf %150, %284 : vector<2x8x128xf32>
    %cst_89 = arith.constant dense<0.000000e+00> : vector<2x128xf32>
    %286 = vector.multi_reduction <add>, %285, %cst_89 [1] : vector<2x8x128xf32> to vector<2x128xf32>
    %287 = vector.shape_cast %286 : vector<2x128xf32> to vector<2x1x128xf32>
    %cst_90 = arith.constant 8.000000e+00 : f32
    %288 = vector.broadcast %cst_90 : f32 to vector<2x1x128xf32>
    %289 = arith.divf %287, %288 : vector<2x1x128xf32>
    %290 = vector.broadcast %289 : vector<2x1x128xf32> to vector<2x8x128xf32>
    %291 = arith.subf %285, %290 : vector<2x8x128xf32>
    %292 = arith.mulf %291, %291 : vector<2x8x128xf32>
    %cst_91 = arith.constant dense<0.000000e+00> : vector<2x128xf32>
    %293 = vector.multi_reduction <add>, %292, %cst_91 [1] : vector<2x8x128xf32> to vector<2x128xf32>
    %294 = vector.shape_cast %293 : vector<2x128xf32> to vector<2x1x128xf32>
    %cst_92 = arith.constant 8.000000e+00 : f32
    %295 = vector.broadcast %cst_92 : f32 to vector<2x1x128xf32>
    %296 = arith.divf %294, %295 : vector<2x1x128xf32>
    %297 = vector.broadcast %289 : vector<2x1x128xf32> to vector<2x8x128xf32>
    %298 = arith.subf %285, %297 : vector<2x8x128xf32>
    %cst_93 = arith.constant 9.99999974E-6 : f32
    %299 = vector.broadcast %cst_93 : f32 to vector<2x1x128xf32>
    %300 = arith.addf %296, %299 : vector<2x1x128xf32>
    %301 = math.rsqrt %300 : vector<2x1x128xf32>
    %302 = vector.broadcast %301 : vector<2x1x128xf32> to vector<2x8x128xf32>
    %303 = arith.mulf %298, %302 : vector<2x8x128xf32>
    %c0_94 = arith.constant 0 : index
    %c0_95 = arith.constant 0 : index
    %304 = vector.load %arg13[%c0_94, %c0_95] : memref<8x128xf32, #tpu.memory_space<vmem>>, vector<8x128xf32>
    %305 = vector.shape_cast %304 : vector<8x128xf32> to vector<1x8x128xf32>
    %306 = vector.broadcast %305 : vector<1x8x128xf32> to vector<2x8x128xf32>
    %307 = arith.mulf %303, %306 : vector<2x8x128xf32>
    %c0_96 = arith.constant 0 : index
    %c0_97 = arith.constant 0 : index
    %308 = vector.load %arg14[%c0_96, %c0_97] : memref<8x128xf32, #tpu.memory_space<vmem>>, vector<8x128xf32>
    %309 = vector.shape_cast %308 : vector<8x128xf32> to vector<1x8x128xf32>
    %310 = vector.broadcast %309 : vector<1x8x128xf32> to vector<2x8x128xf32>
    %311 = arith.addf %307, %310 : vector<2x8x128xf32>
    %312 = vector.shape_cast %311 : vector<2x8x128xf32> to vector<16x128xf32>
    %313 = arith.truncf %312 : vector<16x128xf32> to vector<16x128xbf16>
    %c0_98 = arith.constant 0 : index
    %c0_99 = arith.constant 0 : index
    %314 = vector.load %arg15[%c0_98, %c0_99] : memref<128x512xbf16, #tpu.memory_space<vmem>>, vector<128x512xbf16>
    %cst_100 = arith.constant dense<0.000000e+00> : vector<16x512xf32>
    %315 = tpu.matmul %313, %314, %cst_100 {dimension_numbers = #tpu.dot_dimension_numbers<[1], [0], [0], [1], [0, 0, 1, 1], [], []>} : vector<16x128xbf16>, vector<128x512xbf16>, vector<16x512xf32> -> vector<16x512xf32>
    %c0_101 = arith.constant 0 : index
    %c0_102 = arith.constant 0 : index
    %316 = vector.load %arg16[%c0_101, %c0_102] : memref<1x512xf32, #tpu.memory_space<vmem>>, vector<1x512xf32>
    %317 = vector.broadcast %316 : vector<1x512xf32> to vector<16x512xf32>
    %318 = arith.addf %315, %317 : vector<16x512xf32>
    %cst_103 = arith.constant 0.000000e+00 : f32
    %319 = vector.broadcast %cst_103 : f32 to vector<16x512xf32>
    %320 = arith.maximumf %318, %319 : vector<16x512xf32>
    %321 = arith.truncf %320 : vector<16x512xf32> to vector<16x512xbf16>
    %c0_104 = arith.constant 0 : index
    %c0_105 = arith.constant 0 : index
    %322 = vector.load %arg17[%c0_104, %c0_105] : memref<512x128xbf16, #tpu.memory_space<vmem>>, vector<512x128xbf16>
    %cst_106 = arith.constant dense<0.000000e+00> : vector<16x128xf32>
    %323 = tpu.matmul %321, %322, %cst_106 {dimension_numbers = #tpu.dot_dimension_numbers<[1], [0], [0], [1], [0, 0, 1, 1], [], []>} : vector<16x512xbf16>, vector<512x128xbf16>, vector<16x128xf32> -> vector<16x128xf32>
    %c0_107 = arith.constant 0 : index
    %c0_108 = arith.constant 0 : index
    %324 = vector.load %arg18[%c0_107, %c0_108] : memref<1x128xf32, #tpu.memory_space<vmem>>, vector<1x128xf32>
    %325 = vector.broadcast %324 : vector<1x128xf32> to vector<16x128xf32>
    %326 = arith.addf %323, %325 : vector<16x128xf32>
    %327 = vector.shape_cast %326 : vector<16x128xf32> to vector<2x8x128xf32>
    %328 = arith.addf %285, %327 : vector<2x8x128xf32>
    %c0_109 = arith.constant 0 : index
    %c0_110 = arith.constant 0 : index
    %c0_111 = arith.constant 0 : index
    %329 = vector.load %arg19[%c0_109, %c0_110, %c0_111] : memref<2x8x128xf32, #tpu.memory_space<vmem>>, vector<2x8x128xf32>
    tpu.vector_store %arg19[%c0_109, %c0_110, %c0_111], %328 {strides = array<i32>} : memref<2x8x128xf32, #tpu.memory_space<vmem>>, vector<2x8x128xf32>,
    return
  }
  func.func @transform_0(%arg0: i32) -> (i32, i32, i32) {
    %c0_i32 = arith.constant 0 : i32
    %c0_i32_0 = arith.constant 0 : i32
    %c0_i32_1 = arith.constant 0 : i32
    return %arg0, %c0_i32, %c0_i32_0 : i32, i32, i32
  }
  func.func @transform_1(%arg0: i32) -> (i32, i32, i32) {
    %c0_i32 = arith.constant 0 : i32
    %c0_i32_0 = arith.constant 0 : i32
    %c0_i32_1 = arith.constant 0 : i32
    return %arg0, %c0_i32, %c0_i32_0 : i32, i32, i32
  }
  func.func @transform_2(%arg0: i32) -> (i32, i32) {
    %c0_i32 = arith.constant 0 : i32
    %c0_i32_0 = arith.constant 0 : i32
    %c0_i32_1 = arith.constant 0 : i32
    return %c0_i32, %c0_i32_0 : i32, i32
  }
  func.func @transform_3(%arg0: i32) -> (i32, i32) {
    %c0_i32 = arith.constant 0 : i32
    %c0_i32_0 = arith.constant 0 : i32
    %c0_i32_1 = arith.constant 0 : i32
    return %c0_i32, %c0_i32_0 : i32, i32
  }
  func.func @transform_4(%arg0: i32) -> (i32, i32) {
    %c0_i32 = arith.constant 0 : i32
    %c0_i32_0 = arith.constant 0 : i32
    %c0_i32_1 = arith.constant 0 : i32
    return %c0_i32, %c0_i32_0 : i32, i32
  }
  func.func @transform_5(%arg0: i32) -> (i32, i32) {
    %c0_i32 = arith.constant 0 : i32
    %c0_i32_0 = arith.constant 0 : i32
    %c0_i32_1 = arith.constant 0 : i32
    return %c0_i32, %c0_i32_0 : i32, i32
  }
  func.func @transform_6(%arg0: i32) -> (i32, i32) {
    %c0_i32 = arith.constant 0 : i32
    %c0_i32_0 = arith.constant 0 : i32
    %c0_i32_1 = arith.constant 0 : i32
    return %c0_i32, %c0_i32_0 : i32, i32
  }
  func.func @transform_7(%arg0: i32) -> (i32, i32) {
    %c0_i32 = arith.constant 0 : i32
    %c0_i32_0 = arith.constant 0 : i32
    %c0_i32_1 = arith.constant 0 : i32
    return %c0_i32, %c0_i32_0 : i32, i32
  }
  func.func @transform_8(%arg0: i32) -> (i32, i32) {
    %c0_i32 = arith.constant 0 : i32
    %c0_i32_0 = arith.constant 0 : i32
    %c0_i32_1 = arith.constant 0 : i32
    return %c0_i32, %c0_i32_0 : i32, i32
  }
  func.func @transform_9(%arg0: i32) -> (i32, i32) {
    %c0_i32 = arith.constant 0 : i32
    %c0_i32_0 = arith.constant 0 : i32
    %c0_i32_1 = arith.constant 0 : i32
    return %c0_i32, %c0_i32_0 : i32, i32
  }
  func.func @transform_10(%arg0: i32) -> (i32, i32) {
    %c0_i32 = arith.constant 0 : i32
    %c0_i32_0 = arith.constant 0 : i32
    %c0_i32_1 = arith.constant 0 : i32
    return %c0_i32, %c0_i32_0 : i32, i32
  }
  func.func @transform_11(%arg0: i32) -> (i32, i32) {
    %c0_i32 = arith.constant 0 : i32
    %c0_i32_0 = arith.constant 0 : i32
    %c0_i32_1 = arith.constant 0 : i32
    return %c0_i32, %c0_i32_0 : i32, i32
  }
  func.func @transform_12(%arg0: i32) -> (i32, i32) {
    %c0_i32 = arith.constant 0 : i32
    %c0_i32_0 = arith.constant 0 : i32
    %c0_i32_1 = arith.constant 0 : i32
    return %c0_i32, %c0_i32_0 : i32, i32
  }
  func.func @transform_13(%arg0: i32) -> (i32, i32) {
    %c0_i32 = arith.constant 0 : i32
    %c0_i32_0 = arith.constant 0 : i32
    %c0_i32_1 = arith.constant 0 : i32
    return %c0_i32, %c0_i32_0 : i32, i32
  }
  func.func @transform_14(%arg0: i32) -> (i32, i32) {
    %c0_i32 = arith.constant 0 : i32
    %c0_i32_0 = arith.constant 0 : i32
    %c0_i32_1 = arith.constant 0 : i32
    return %c0_i32, %c0_i32_0 : i32, i32
  }
  func.func @transform_15(%arg0: i32) -> (i32, i32) {
    %c0_i32 = arith.constant 0 : i32
    %c0_i32_0 = arith.constant 0 : i32
    %c0_i32_1 = arith.constant 0 : i32
    return %c0_i32, %c0_i32_0 : i32, i32
  }
  func.func @transform_16(%arg0: i32) -> (i32, i32) {
    %c0_i32 = arith.constant 0 : i32
    %c0_i32_0 = arith.constant 0 : i32
    %c0_i32_1 = arith.constant 0 : i32
    return %c0_i32, %c0_i32_0 : i32, i32
  }
  func.func @transform_17(%arg0: i32) -> (i32, i32) {
    %c0_i32 = arith.constant 0 : i32
    %c0_i32_0 = arith.constant 0 : i32
    %c0_i32_1 = arith.constant 0 : i32
    return %c0_i32, %c0_i32_0 : i32, i32
  }
  func.func @transform_18(%arg0: i32) -> (i32, i32, i32) {
    %c0_i32 = arith.constant 0 : i32
    %c0_i32_0 = arith.constant 0 : i32
    %c0_i32_1 = arith.constant 0 : i32
    return %arg0, %c0_i32, %c0_i32_0 : i32, i32, i32
  }
}

module attributes {stable_mosaic.version = 11 : i64} {
  func.func @_unembed_normalize_kernel(%arg0: i32, %arg1: i32, %arg2: memref<2x8x256xbf16, #tpu.memory_space<vmem>>, %arg3: memref<2x8x1xf32, #tpu.memory_space<vmem>>, %arg4: memref<2x8x1xf32, #tpu.memory_space<vmem>>, %arg5: memref<2x8x256xf32, #tpu.memory_space<vmem>>) attributes {dimension_semantics = [#tpu.dimension_semantics<parallel>, #tpu.dimension_semantics<parallel>], iteration_bounds = array<i64: 2, 1>, scalar_prefetch = 0 : i64, scratch_operands = 0 : i64, tpu.core_type = #tpu.core_type<tc>, window_params = [{transform_indices = @transform_0, window_bounds = array<i64: 2, 8, 256>}, {transform_indices = @transform_1, window_bounds = array<i64: 2, 8, 1>}, {transform_indices = @transform_2, window_bounds = array<i64: 2, 8, 1>}, {transform_indices = @transform_3, window_bounds = array<i64: 2, 8, 256>}]} {
    %c0 = arith.constant 0 : index
    %c0_0 = arith.constant 0 : index
    %c0_1 = arith.constant 0 : index
    %0 = vector.load %arg2[%c0, %c0_0, %c0_1] : memref<2x8x256xbf16, #tpu.memory_space<vmem>>, vector<2x8x256xbf16>
    %1 = arith.extf %0 : vector<2x8x256xbf16> to vector<2x8x256xf32>
    %c0_2 = arith.constant 0 : index
    %c0_3 = arith.constant 0 : index
    %c0_4 = arith.constant 0 : index
    %2 = vector.load %arg4[%c0_2, %c0_3, %c0_4] : memref<2x8x1xf32, #tpu.memory_space<vmem>>, vector<2x8x1xf32>
    %cst = arith.constant 1.000000e+00 : f32
    %3 = vector.broadcast %cst : f32 to vector<2x8x1xf32>
    %4 = arith.divf %3, %2 : vector<2x8x1xf32>
    %c0_5 = arith.constant 0 : index
    %c0_6 = arith.constant 0 : index
    %c0_7 = arith.constant 0 : index
    %5 = vector.load %arg3[%c0_5, %c0_6, %c0_7] : memref<2x8x1xf32, #tpu.memory_space<vmem>>, vector<2x8x1xf32>
    %6 = vector.broadcast %5 : vector<2x8x1xf32> to vector<2x8x256xf32>
    %7 = arith.subf %1, %6 : vector<2x8x256xf32>
    %8 = math.exp %7 : vector<2x8x256xf32>
    %9 = vector.broadcast %4 : vector<2x8x1xf32> to vector<2x8x256xf32>
    %10 = arith.mulf %8, %9 : vector<2x8x256xf32>
    %c0_8 = arith.constant 0 : index
    %c0_9 = arith.constant 0 : index
    %c0_10 = arith.constant 0 : index
    %11 = vector.load %arg5[%c0_8, %c0_9, %c0_10] : memref<2x8x256xf32, #tpu.memory_space<vmem>>, vector<2x8x256xf32>
    tpu.vector_store %arg5[%c0_8, %c0_9, %c0_10], %10 {strides = array<i32>} : memref<2x8x256xf32, #tpu.memory_space<vmem>>, vector<2x8x256xf32>,
    return
  }
  func.func @transform_0(%arg0: i32, %arg1: i32) -> (i32, i32, i32) {
    %c0_i32 = arith.constant 0 : i32
    %c0_i32_0 = arith.constant 0 : i32
    return %arg0, %c0_i32, %arg1 : i32, i32, i32
  }
  func.func @transform_1(%arg0: i32, %arg1: i32) -> (i32, i32, i32) {
    %c0_i32 = arith.constant 0 : i32
    %c0_i32_0 = arith.constant 0 : i32
    %c0_i32_1 = arith.constant 0 : i32
    return %arg0, %c0_i32, %c0_i32_0 : i32, i32, i32
  }
  func.func @transform_2(%arg0: i32, %arg1: i32) -> (i32, i32, i32) {
    %c0_i32 = arith.constant 0 : i32
    %c0_i32_0 = arith.constant 0 : i32
    %c0_i32_1 = arith.constant 0 : i32
    return %arg0, %c0_i32, %c0_i32_0 : i32, i32, i32
  }
  func.func @transform_3(%arg0: i32, %arg1: i32) -> (i32, i32, i32) {
    %c0_i32 = arith.constant 0 : i32
    %c0_i32_0 = arith.constant 0 : i32
    return %arg0, %c0_i32, %arg1 : i32, i32, i32
  }
}

</mosaic_0001>

<llo_original>
// kernel: decoder_forward_pallas.6
$region0: #{decoder_forward_pallas.6}
  #allocation0 [shape = 'u32[]', space=smem, size = 0x4, offset = 0x4, fixed_abs, tag = 'smem constant byte address 0x4 - core index']
  #allocation1 [shape = 'u32[144,128]{1,0:T(1,128)}', space=vmem, size = 0x12000, scoped, tag = 'internal scratch']
  %s0 = inlined_call_operand.vmem [shape: f32[4,8,128], index: 0, kind: input, shape index: {}]
  %s1 = inlined_call_operand.vmem [shape: bf16[128,256], index: 1, kind: input, shape index: {}]
  %s2 = inlined_call_operand.vmem [shape: f32[1,256], index: 2, kind: input, shape index: {}]
  %s3 = inlined_call_operand.vmem [shape: bf16[4,8,256], index: 3, kind: output, shape index: {0}]
  %s4 = inlined_call_operand.vmem [shape: f32[4,8,1], index: 4, kind: output, shape index: {1}]
  %s5 = inlined_call_operand.vmem [shape: f32[4,8,1], index: 5, kind: output, shape index: {2}]
  %6 = xla_tuple %s3, %s4, %s5
  %s7 = sld [smem:[#allocation0]]
  $region65: #{decoder_forward_pallas.6} parent=0
    _
  %s9 = ssub.s32 1, %s7
  %s10 = scalar_select 0, %s9, %s7
  loop: start=0, step=1, limit=4
  $region2: #{decoder_forward_pallas.6} parent=0 // loop_pre_header
    _
  $region3: #{decoder_forward_pallas.6} parent=0 // loop_header
    %s12 = sphi 0, %s16
    %p13 = scmp.ge.s32.totalorder %s12, 4
    %s19 = sphi 0, %s31
    %s20 = sphi 0, %s27
    %s21 = sphi 0, %s19
    %s22 = sphi 0, %s20
    %s23 = sphi 0, %s21
    %s24 = sphi 0, %s22
    %s34 = sphi 0, %s36
    %s37 = sphi 0, %s34
    %s38 = sphi 0, %s37
    %s54 = sphi 0, %s38
    %s60 = sphi 0, %s62
    %s63 = sphi 0, %s60
    %s64 = sphi 0, %s63
    %s80 = sphi 0, %s64
    %s86 = sphi 0, %s88
    %s89 = sphi 0, %s86
    %s90 = sphi 0, %s89
    %s106 = sphi 0, %s90
    %s114 = sphi 0, %s116
    %s117 = sphi 0, %s114
    %s118 = sphi 0, %s117
    %s134 = sphi 0, %s118
    %s140 = sphi 0, %s142
    %s143 = sphi 0, %s140
    %s144 = sphi 0, %s143
    %s160 = sphi 0, %s144
    %s166 = sphi 0, %s168
    %s169 = sphi 0, %s166
    %s170 = sphi 0, %s169
    %s186 = sphi 0, %s170
  $region4: #{decoder_forward_pallas.6} parent=0 // loop_header_branch
    %15 = sbr.rel (%p13) target = $region8
  $region5: #{decoder_forward_pallas.6} parent=0 // loop_body
    %s17 = ssub.s32 %s12, 1
    %s18 = ssub.s32 %s12, 2
    %s25 = sadd.s32 1, %s20
    %p26 = scmp.ge.s32.totalorder %s25, 1
    %s27 = scalar_select %p26, 0, %s25
    %s28 = sadd.s32 1, %s19
    %s29 = scalar_select %p26, %s28, %s19
    %p30 = scmp.ge.s32.totalorder %s29, 2
    %s31 = scalar_select %p30, 0, %s29
    %s32 = ssub.s32 %s19, %s31
    %p33 = scmp.eq.s32.totalorder %s32, 0
    %s35 = sadd.s32 %s34, 1
    %s36 = scalar_select %p33, %s34, %s35
    %p39 = pneg %p33
    %p40 = scmp.eq.s32.totalorder %s12, 1
    %p41 = por %p39, %p40
    %p42 = scmp.ne.s32.totalorder %s34, %s37
    %p43 = scmp.eq.s32.totalorder %s12, 0
    %p44 = por %p42, %p43
    %p45 = scmp.ne.s32.totalorder %s34, %s37
    %p46 = scmp.eq.s32.totalorder %s17, 1
    %p47 = por %p45, %p46
    %p48 = scmp.ne.s32.totalorder %s37, %s38
    %p49 = scmp.eq.s32.totalorder %s17, 0
    %p50 = por %p48, %p49
    %p51 = scmp.ne.s32.totalorder %s37, %s38
    %p52 = scmp.eq.s32.totalorder %s18, 1
    %p53 = por %p51, %p52
    %p55 = scmp.ne.s32.totalorder %s38, %s54
    %p56 = scmp.eq.s32.totalorder %s18, 0
    %p57 = por %p55, %p56
    %s58 = ssub.s32 %s20, %s27
    %p59 = scmp.eq.s32.totalorder %s58, 0
    %s61 = sadd.s32 %s60, 1
    %s62 = scalar_select %p59, %s60, %s61
    %p65 = pneg %p59
    %p66 = scmp.eq.s32.totalorder %s12, 1
    %p67 = por %p65, %p66
    %p68 = scmp.ne.s32.totalorder %s60, %s63
    %p69 = scmp.eq.s32.totalorder %s12, 0
    %p70 = por %p68, %p69
    %p71 = scmp.ne.s32.totalorder %s60, %s63
    %p72 = scmp.eq.s32.totalorder %s17, 1
    %p73 = por %p71, %p72
    %p74 = scmp.ne.s32.totalorder %s63, %s64
    %p75 = scmp.eq.s32.totalorder %s17, 0
    %p76 = por %p74, %p75
    %p77 = scmp.ne.s32.totalorder %s63, %s64
    %p78 = scmp.eq.s32.totalorder %s18, 1
    %p79 = por %p77, %p78
    %p81 = scmp.ne.s32.totalorder %s64, %s80
    %p82 = scmp.eq.s32.totalorder %s18, 0
    %p83 = por %p81, %p82
    %s84 = ssub.s32 %s20, %s27
    %p85 = scmp.eq.s32.totalorder %s84, 0
    %s87 = sadd.s32 %s86, 1
    %s88 = scalar_select %p85, %s86, %s87
    %p91 = pneg %p85
    %p92 = scmp.eq.s32.totalorder %s12, 1
    %p93 = por %p91, %p92
    %p94 = scmp.ne.s32.totalorder %s86, %s89
    %p95 = scmp.eq.s32.totalorder %s12, 0
    %p96 = por %p94, %p95
    %p97 = scmp.ne.s32.totalorder %s86, %s89
    %p98 = scmp.eq.s32.totalorder %s17, 1
    %p99 = por %p97, %p98
    %p100 = scmp.ne.s32.totalorder %s89, %s90
    %p101 = scmp.eq.s32.totalorder %s17, 0
    %p102 = por %p100, %p101
    %p103 = scmp.ne.s32.totalorder %s89, %s90
    %p104 = scmp.eq.s32.totalorder %s18, 1
    %p105 = por %p103, %p104
    %p107 = scmp.ne.s32.totalorder %s90, %s106
    %p108 = scmp.eq.s32.totalorder %s18, 0
    %p109 = por %p107, %p108
    %s110 = ssub.s32 %s19, %s31
    %s111 = ssub.s32 %s20, %s27
    %s112 = sor.u32 %s110, %s111
    %p113 = scmp.eq.s32.totalorder %s112, 0
    %s115 = sadd.s32 %s114, 1
    %s116 = scalar_select %p113, %s114, %s115
    %p119 = pneg %p113
    %p120 = scmp.eq.s32.totalorder %s12, 1
    %p121 = por %p119, %p120
    %p122 = scmp.ne.s32.totalorder %s114, %s117
    %p123 = scmp.eq.s32.totalorder %s12, 0
    %p124 = por %p122, %p123
    %p125 = scmp.ne.s32.totalorder %s114, %s117
    %p126 = scmp.eq.s32.totalorder %s17, 1
    %p127 = por %p125, %p126
    %p128 = scmp.ne.s32.totalorder %s117, %s118
    %p129 = scmp.eq.s32.totalorder %s17, 0
    %p130 = por %p128, %p129
    %p131 = scmp.ne.s32.totalorder %s117, %s118
    %p132 = scmp.eq.s32.totalorder %s18, 1
    %p133 = por %p131, %p132
    %p135 = scmp.ne.s32.totalorder %s118, %s134
    %p136 = scmp.eq.s32.totalorder %s18, 0
    %p137 = por %p135, %p136
    %s138 = ssub.s32 %s19, %s31
    %p139 = scmp.eq.s32.totalorder %s138, 0
    %s141 = sadd.s32 %s140, 1
    %s142 = scalar_select %p139, %s140, %s141
    %p145 = pneg %p139
    %p146 = scmp.eq.s32.totalorder %s12, 1
    %p147 = por %p145, %p146
    %p148 = scmp.ne.s32.totalorder %s140, %s143
    %p149 = scmp.eq.s32.totalorder %s12, 0
    %p150 = por %p148, %p149
    %p151 = scmp.ne.s32.totalorder %s140, %s143
    %p152 = scmp.eq.s32.totalorder %s17, 1
    %p153 = por %p151, %p152
    %p154 = scmp.ne.s32.totalorder %s143, %s144
    %p155 = scmp.eq.s32.totalorder %s17, 0
    %p156 = por %p154, %p155
    %p157 = scmp.ne.s32.totalorder %s143, %s144
    %p158 = scmp.eq.s32.totalorder %s18, 1
    %p159 = por %p157, %p158
    %p161 = scmp.ne.s32.totalorder %s144, %s160
    %p162 = scmp.eq.s32.totalorder %s18, 0
    %p163 = por %p161, %p162
    %s164 = ssub.s32 %s19, %s31
    %p165 = scmp.eq.s32.totalorder %s164, 0
    %s167 = sadd.s32 %s166, 1
    %s168 = scalar_select %p165, %s166, %s167
    %p171 = pneg %p165
    %p172 = scmp.eq.s32.totalorder %s12, 1
    %p173 = por %p171, %p172
    %p174 = scmp.ne.s32.totalorder %s166, %s169
    %p175 = scmp.eq.s32.totalorder %s12, 0
    %p176 = por %p174, %p175
    %p177 = scmp.ne.s32.totalorder %s166, %s169
    %p178 = scmp.eq.s32.totalorder %s17, 1
    %p179 = por %p177, %p178
    %p180 = scmp.ne.s32.totalorder %s169, %s170
    %p181 = scmp.eq.s32.totalorder %s17, 0
    %p182 = por %p180, %p181
    %p183 = scmp.ne.s32.totalorder %s169, %s170
    %p184 = scmp.eq.s32.totalorder %s18, 1
    %p185 = por %p183, %p184
    %p187 = scmp.ne.s32.totalorder %s170, %s186
    %p188 = scmp.eq.s32.totalorder %s18, 0
    %p189 = por %p187, %p188
    %p190 = scmp.le.s32.totalorder 1, %s12
    %p191 = scmp.lt.s32.totalorder %s12, 3
    %p192 = pnand %p190, %p191
    %p193 = pneg %p192
    // Predicated region
    $region9: #{decoder_forward_pallas.6} parent=5 // pred_check
      _
    $region10: #{decoder_forward_pallas.6} parent=5 // pred_check_branch
      %195 = sbr.rel (%p192) target = $region12
    $region11: #{decoder_forward_pallas.6} parent=5 // pred_region
      %s196 = ssub.s32 %s12, 1
      // Predicated region
      $region13: #{decoder_forward_pallas.6} parent=11 // pred_check
        %p197 = pneg %p76
      $region14: #{decoder_forward_pallas.6} parent=11 // pred_check_branch
        %199 = sbr.rel (%p197) target = $region16
      $region15: #{decoder_forward_pallas.6} parent=11 // pred_region
        %s200 = smul.u32 2, %s22
        %p201 = scmp.lt.s32.totalorder %s200, 1
        %s202 = scalar_select %p201, %s200, 1
        %s203 = smul.addr %s202, 4
        %s204 = scalar_lea.vmem %s1, %s203
        %s205 = smul.u32 2, %s22
      $region16: #{decoder_forward_pallas.6} parent=11 // pred_fallthru
        _
      // Predicated region
      $region17: #{decoder_forward_pallas.6} parent=11 // pred_check
        %p206 = pneg %p102
      $region18: #{decoder_forward_pallas.6} parent=11 // pred_check_branch
        %208 = sbr.rel (%p206) target = $region20
      $region19: #{decoder_forward_pallas.6} parent=11 // pred_region
        %s209 = smul.u32 2, %s22
        %p210 = scmp.lt.s32.totalorder %s209, 1
        %s211 = scalar_select %p210, %s209, 1
        %s212 = scalar_lea.vmem %s2, %s211
        %s213 = smul.u32 2, %s22
      $region20: #{decoder_forward_pallas.6} parent=11 // pred_fallthru
        _
    $region12: #{decoder_forward_pallas.6} parent=5 // pred_fallthru
      _
    %p214 = scmp.lt.s32.totalorder %s12, 2
    // Predicated region
    $region21: #{decoder_forward_pallas.6} parent=5 // pred_check
      %p215 = pneg %p214
    $region22: #{decoder_forward_pallas.6} parent=5 // pred_check_branch
      %217 = sbr.rel (%p215) target = $region24
    $region23: #{decoder_forward_pallas.6} parent=5 // pred_region
      // Predicated region
      $region25: #{decoder_forward_pallas.6} parent=23 // pred_check
        %p218 = pneg %p44
      $region26: #{decoder_forward_pallas.6} parent=23 // pred_check_branch
        %220 = sbr.rel (%p218) target = $region28
      $region27: #{decoder_forward_pallas.6} parent=23 // pred_region
        %s221 = smul.u32 2, %s19
        %p222 = scmp.lt.s32.totalorder %s221, 3
        %s223 = scalar_select %p222, %s221, 3
        %s224 = smul.addr %s223, 8
        %s225 = scalar_lea.vmem %s0, %s224
        %s226 = smul.u32 2, %s19
      $region28: #{decoder_forward_pallas.6} parent=23 // pred_fallthru
        _
    $region24: #{decoder_forward_pallas.6} parent=5 // pred_fallthru
      _
    %p227 = scmp.le.s32.totalorder 1, %s12
    %p228 = scmp.lt.s32.totalorder %s12, 3
    %p229 = pnand %p227, %p228
    %p230 = pneg %p229
    // Predicated region
    $region29: #{decoder_forward_pallas.6} parent=5 // pred_check
      _
    $region30: #{decoder_forward_pallas.6} parent=5 // pred_check_branch
      %232 = sbr.rel (%p229) target = $region32
    $region31: #{decoder_forward_pallas.6} parent=5 // pred_region
      %s233 = ssub.s32 %s12, 1
      %s234 = smul.u32 2, %s21
      %p235 = scmp.lt.s32.totalorder %s234, 3
      %s236 = scalar_select %p235, %s234, 3
      %s237 = smul.addr %s236, 8
      %s238 = scalar_lea.vmem %s0, %s237
      %p239 = pneg %p50
      %p240 = pneg %p47
      %s241 = smul.u32 2, %s22
      %p242 = scmp.lt.s32.totalorder %s241, 1
      %s243 = scalar_select %p242, %s241, 1
      %s244 = smul.addr %s243, 4
      %s245 = scalar_lea.vmem %s1, %s244
      %p246 = pneg %p76
      %p247 = pneg %p73
      %s248 = smul.u32 2, %s22
      %p249 = scmp.lt.s32.totalorder %s248, 1
      %s250 = scalar_select %p249, %s248, 1
      %s251 = scalar_lea.vmem %s2, %s250
      %p252 = pneg %p102
      %p253 = pneg %p99
      %p254 = pneg %p130
      %p255 = pneg %p127
      %s256 = smul.u32 2, %s21
      %s257 = smul.u32 2, %s22
      %p258 = scmp.lt.s32.totalorder %s256, 3
      %s259 = scalar_select %p258, %s256, 3
      %p260 = scmp.lt.s32.totalorder %s257, 1
      %s261 = scalar_select %p260, %s257, 1
      %s262 = smul.addr %s259, 2
      %s263 = sadd.s32 %s261, %s262
      %s264 = smul.addr %s263, 4
      %s265 = scalar_lea.vmem %s3, %s264
      %p266 = pneg %p156
      %p267 = pneg %p153
      %s268 = smul.u32 2, %s21
      %p269 = scmp.lt.s32.totalorder %s268, 3
      %s270 = scalar_select %p269, %s268, 3
      %s271 = smul.addr %s270, 8
      %s272 = scalar_lea.vmem %s4, %s271
      %p273 = pneg %p182
      %p274 = pneg %p179
      %s275 = smul.u32 2, %s21
      %p276 = scmp.lt.s32.totalorder %s275, 3
      %s277 = scalar_select %p276, %s275, 3
      %s278 = smul.addr %s277, 8
      %s279 = scalar_lea.vmem %s5, %s278
      %s280 = smul.u32 2, %s21
      %p281 = scmp.lt.s32.totalorder %s280, 3
      %s282 = scalar_select %p281, %s280, 3
      %s283 = smul.addr %s282, 8
      %s284 = scalar_lea.vmem %s0, %s283
      %s285 = smul.u32 2, %s21
      %s286 = smul.u32 2, %s22
      %p287 = scmp.lt.s32.totalorder %s286, 1
      %s288 = scalar_select %p287, %s286, 1
      %s289 = smul.addr %s288, 4
      %s290 = scalar_lea.vmem %s1, %s289
      %s291 = smul.u32 2, %s22
      %s292 = smul.u32 2, %s22
      %p293 = scmp.lt.s32.totalorder %s292, 1
      %s294 = scalar_select %p293, %s292, 1
      %s295 = scalar_lea.vmem %s2, %s294
      %s296 = smul.u32 2, %s22
      %s297 = smul.u32 2, %s21
      %s298 = smul.u32 2, %s22
      %p299 = scmp.lt.s32.totalorder %s297, 3
      %s300 = scalar_select %p299, %s297, 3
      %p301 = scmp.lt.s32.totalorder %s298, 1
      %s302 = scalar_select %p301, %s298, 1
      %s303 = smul.addr %s300, 2
      %s304 = sadd.s32 %s302, %s303
      %s305 = smul.addr %s304, 4
      %s306 = scalar_lea.vmem %s3, %s305
      %s307 = smul.u32 2, %s21
      %s308 = smul.u32 2, %s22
      %s309 = smul.u32 2, %s21
      %p310 = scmp.lt.s32.totalorder %s309, 3
      %s311 = scalar_select %p310, %s309, 3
      %s312 = smul.addr %s311, 8
      %s313 = scalar_lea.vmem %s4, %s312
      %s314 = smul.u32 2, %s21
      %s315 = smul.u32 2, %s21
      %p316 = scmp.lt.s32.totalorder %s315, 3
      %s317 = scalar_select %p316, %s315, 3
      %s318 = smul.addr %s317, 8
      %s319 = scalar_lea.vmem %s5, %s318
      %s320 = smul.u32 2, %s21
      %p322 = scmp.eq.s32.totalorder %s22, 0
      // Predicated region
      $region33: #{decoder_forward_pallas.6} parent=31 // pred_check
        %p323 = pneg %p322
      $region34: #{decoder_forward_pallas.6} parent=31 // pred_check_branch
        %325 = sbr.rel (%p323) target = $region36
      $region35: #{decoder_forward_pallas.6} parent=31 // pred_region
        %vm326 = vcmask 7168
        %327 = vst.msk [vmem:[%s313] sm:$0xff] %vm326, -inf
        %328 = vst.msk [vmem:[%s313 + $0x8] sm:$0xff] %vm326, -inf
        %329 = vst.msk [vmem:[%s319] sm:$0xff] %vm326, 0.0
        %330 = vst.msk [vmem:[%s319 + $0x8] sm:$0xff] %vm326, 0.0
      $region36: #{decoder_forward_pallas.6} parent=31 // pred_fallthru
        _
      %v331 = vld [vmem:[%s284] sm:$0xff]
      %v332 = vld [vmem:[%s284 + $0x8] sm:$0xff]
      %v333 = vpack.c.bf16 %v332, %v331
      %v334 = vld [vmem:[%s290] sm:$0xff]
      %v335 = vld [vmem:[%s290 + $0x8] sm:$0xff]
      %v336 = vld [vmem:[%s290 + $0x10] sm:$0xff]
      %v337 = vld [vmem:[%s290 + $0x18] sm:$0xff]
      %v338 = vld [vmem:[%s290 + $0x20] sm:$0xff]
      %v339 = vld [vmem:[%s290 + $0x28] sm:$0xff]
      %v340 = vld [vmem:[%s290 + $0x30] sm:$0xff]
      %v341 = vld [vmem:[%s290 + $0x38] sm:$0xff]
      %v342 = vld [vmem:[%s290 + $0x40] sm:$0xff]
      %v343 = vld [vmem:[%s290 + $0x48] sm:$0xff]
      %v344 = vld [vmem:[%s290 + $0x50] sm:$0xff]
      %v345 = vld [vmem:[%s290 + $0x58] sm:$0xff]
      %v346 = vld [vmem:[%s290 + $0x60] sm:$0xff]
      %v347 = vld [vmem:[%s290 + $0x68] sm:$0xff]
      %v348 = vld [vmem:[%s290 + $0x70] sm:$0xff]
      %v349 = vld [vmem:[%s290 + $0x78] sm:$0xff]
      %v350 = vld [vmem:[%s295] sm:$0x3]
      %v352 = vlaneseq
      %v353 = vshrl.u32 %v352, 7
      %v354 = vsub.s32 0, %v353
      %v355 = vrot.slane %v350, %v354
      %v356 = vlaneseq
      %v357 = vshrl.u32 %v356, 7
      %v358 = vsub.s32 1, %v357
      %v359 = vrot.slane %v350, %v358
      %v378 = vunpack.c.l.b16 %v334
      %v379 = vunpack.c.h.b16 %v334
      %v380 = vunpack.c.l.b16 %v335
      %v381 = vunpack.c.h.b16 %v335
      %v382 = vunpack.c.l.b16 %v336
      %v383 = vunpack.c.h.b16 %v336
      %v384 = vunpack.c.l.b16 %v337
      %v385 = vunpack.c.h.b16 %v337
      %v386 = vunpack.c.l.b16 %v338
      %v387 = vunpack.c.h.b16 %v338
      %v388 = vunpack.c.l.b16 %v339
      %v389 = vunpack.c.h.b16 %v339
      %v390 = vunpack.c.l.b16 %v340
      %v391 = vunpack.c.h.b16 %v340
      %v392 = vunpack.c.l.b16 %v341
      %v393 = vunpack.c.h.b16 %v341
      %v394 = vunpack.c.l.b16 %v342
      %v395 = vunpack.c.h.b16 %v342
      %v396 = vunpack.c.l.b16 %v343
      %v397 = vunpack.c.h.b16 %v343
      %v398 = vunpack.c.l.b16 %v344
      %v399 = vunpack.c.h.b16 %v344
      %v400 = vunpack.c.l.b16 %v345
      %v401 = vunpack.c.h.b16 %v345
      %v402 = vunpack.c.l.b16 %v346
      %v403 = vunpack.c.h.b16 %v346
      %v404 = vunpack.c.l.b16 %v347
      %v405 = vunpack.c.h.b16 %v347
      %v406 = vunpack.c.l.b16 %v348
      %v407 = vunpack.c.h.b16 %v348
      %v408 = vunpack.c.l.b16 %v349
      %v409 = vunpack.c.h.b16 %v349
      %v410 = vpack.c.b16 %v380, %v378
      %v411 = vpack.c.b16 %v381, %v379
      %v412 = vpack.c.b16 %v384, %v382
      %v413 = vpack.c.b16 %v385, %v383
      %v414 = vpack.c.b16 %v388, %v386
      %v415 = vpack.c.b16 %v389, %v387
      %v416 = vpack.c.b16 %v392, %v390
      %v417 = vpack.c.b16 %v393, %v391
      %v418 = vpack.c.b16 %v396, %v394
      %v419 = vpack.c.b16 %v397, %v395
      %v420 = vpack.c.b16 %v400, %v398
      %v421 = vpack.c.b16 %v401, %v399
      %v422 = vpack.c.b16 %v404, %v402
      %v423 = vpack.c.b16 %v405, %v403
      %v424 = vpack.c.b16 %v408, %v406
      %v425 = vpack.c.b16 %v409, %v407
      %442 = vmatprep.subr.bf16.mxu0 %v411
      %443 = vmatpush1.bf16.msra.mxu0 %v410
      %444 = vmatprep.subr.bf16.mxu0 %v413
      %445 = vmatpush1.bf16.msra.mxu0 %v412
      %446 = vmatprep.subr.bf16.mxu0 %v415
      %447 = vmatpush1.bf16.msra.mxu0 %v414
      %448 = vmatprep.subr.bf16.mxu0 %v417
      %449 = vmatpush1.bf16.msra.mxu0 %v416
      %450 = vmatprep.subr.bf16.mxu0 %v419
      %451 = vmatpush1.bf16.msra.mxu0 %v418
      %452 = vmatprep.subr.bf16.mxu0 %v421
      %453 = vmatpush1.bf16.msra.mxu0 %v420
      %454 = vmatprep.subr.bf16.mxu0 %v423
      %455 = vmatpush1.bf16.msra.mxu0 %v422
      %456 = vmatprep.subr.bf16.mxu0 %v425
      %457 = vmatpush1.bf16.msra.mxu0 %v424
      %458 = vmatprep.subr.bf16.mxu0 0
      %459 = vmatpush1.bf16.msra.mxu0 0
      %460 = vmatprep.subr.bf16.mxu0 0
      %461 = vmatpush1.bf16.msra.mxu0 0
      %462 = vmatprep.subr.bf16.mxu0 0
      %463 = vmatpush1.bf16.msra.mxu0 0
      %464 = vmatprep.subr.bf16.mxu0 0
      %465 = vmatpush1.bf16.msra.mxu0 0
      %466 = vmatprep.subr.bf16.mxu0 0
      %467 = vmatpush1.bf16.msra.mxu0 0
      %468 = vmatprep.subr.bf16.mxu0 0
      %469 = vmatpush1.bf16.msra.mxu0 0
      %470 = vmatprep.subr.bf16.mxu0 0
      %471 = vmatpush1.bf16.msra.mxu0 0
      %472 = vmatprep.subr.bf16.mxu0 0
      %473 = vmatpush1.bf16.msra.mxu0 0
      %474 = vmatprep.mubr.bf16.mxu0 0
      %475 = vmatmul.mubr.bf16.gmra.mrb[0].mxu0 %v333
      %v476 = vpop.f32.mrb[0].mxu0
      %v477 = vadd.f32 %v355, %v476
      %v478 = vpop.f32.mrb[0].mxu0
      %v479 = vadd.f32 %v359, %v478
      %v480 = vpop.f32.mrb[0].mxu0
      %v481 = vadd.f32 %v355, %v480
      %v482 = vpop.f32.mrb[0].mxu0
      %v483 = vadd.f32 %v359, %v482
      %484 = vdwg.mxu0
      %v485 = vpack.c.bf16 %v481, %v477
      %v486 = vpack.c.bf16 %v483, %v479
      %v489 = vunpack.c.l.b16 %v485
      %v490 = vunpack.c.l.b16 %v486
      %v491 = vunpack.c.h.b16 %v485
      %v492 = vunpack.c.h.b16 %v486
      %v493 = vpack.c.b16 %v490, %v489
      %v494 = vpack.c.b16 %v492, %v491
      %497 = vst [vmem:[%s306] sm:$0xff] %v493
      %498 = vst [vmem:[%s306 + $0x8] sm:$0xff] %v494
      %v499 = vunpack.c.l.bf16 %v485
      %v500 = vunpack.c.l.bf16 %v486
      %v501 = vunpack.c.h.bf16 %v485
      %v502 = vunpack.c.h.bf16 %v486
      %v503 = vld [vmem:[%s313] sm:$0xff]
      %v504 = vld [vmem:[%s313 + $0x8] sm:$0xff]
      %v505 = vmax.f32 %v499, %v500
      %506 = vmax.xlane.f32.xlu0 %v505
      %v507 = vpop.xlane.xlu0 %506
      %v508 = vmax.f32 %v501, %v502
      %509 = vmax.xlane.f32.xlu0 %v508
      %v510 = vpop.xlane.xlu0 %509
      %v511 = vmax.f32 %v503, %v507
      %v512 = vmax.f32 %v504, %v510
      %v513 = vld [vmem:[%s319] sm:$0xff]
      %v514 = vld [vmem:[%s319 + $0x8] sm:$0xff]
      %v515 = vsub.f32 %v503, %v511
      %v516 = vsub.f32 %v504, %v512
      %v517 = vmul.f32 %v515, 1.442695
      %v518 = vpow.pop %v517
      %v519 = vmul.f32 %v516, 1.442695
      %v520 = vpow.pop %v519
      %v521 = vmul.f32 %v513, %v518
      %v522 = vmul.f32 %v514, %v520
      %524 = vset.pattern.permute.xlu0 0
      %525 = vperm.xlu0 %524, %v511
      %v526 = vpop.permute.xlu0 %525
      %529 = vset.pattern.permute.xlu0 0
      %530 = vperm.xlu0 %529, %v512
      %v531 = vpop.permute.xlu0 %530
      %v533 = vsub.f32 %v499, %v526
      %v534 = vsub.f32 %v500, %v526
      %v535 = vsub.f32 %v501, %v531
      %v536 = vsub.f32 %v502, %v531
      %v537 = vmul.f32 %v533, 1.442695
      %v538 = vpow.pop %v537
      %v539 = vmul.f32 %v534, 1.442695
      %v540 = vpow.pop %v539
      %v541 = vmul.f32 %v535, 1.442695
      %v542 = vpow.pop %v541
      %v543 = vmul.f32 %v536, 1.442695
      %v544 = vpow.pop %v543
      %v545 = vadd.f32 %v538, %v540
      %546 = vadd.xlane.f32.xlu0 %v545
      %v547 = vpop.xlane.xlu0 %546
      %v548 = vadd.f32 %v542, %v544
      %549 = vadd.xlane.f32.xlu0 %v548
      %v550 = vpop.xlane.xlu0 %549
      %v551 = vadd.f32 %v521, %v547
      %v552 = vadd.f32 %v522, %v550
      %vm553 = vcmask 7168
      %554 = vst.msk [vmem:[%s319] sm:$0xff] %vm553, %v551
      %555 = vst.msk [vmem:[%s319 + $0x8] sm:$0xff] %vm553, %v552
      %556 = vst.msk [vmem:[%s313] sm:$0xff] %vm553, %v511
      %557 = vst.msk [vmem:[%s313 + $0x8] sm:$0xff] %vm553, %v512
      %s558 = smul.u32 2, %s21
      %s559 = smul.u32 2, %s22
      %p560 = scmp.lt.s32.totalorder %s558, 3
      %s561 = scalar_select %p560, %s558, 3
      %p562 = scmp.lt.s32.totalorder %s559, 1
      %s563 = scalar_select %p562, %s559, 1
      %s564 = smul.addr %s561, 2
      %s565 = sadd.s32 %s563, %s564
      %s566 = smul.addr %s565, 4
      %s567 = scalar_lea.vmem %s3, %s566
      %s568 = smul.u32 2, %s21
      %p569 = scmp.lt.s32.totalorder %s568, 3
      %s570 = scalar_select %p569, %s568, 3
      %s571 = smul.addr %s570, 8
      %s572 = scalar_lea.vmem %s4, %s571
      %s573 = smul.u32 2, %s21
      %p574 = scmp.lt.s32.totalorder %s573, 3
      %s575 = scalar_select %p574, %s573, 3
      %s576 = smul.addr %s575, 8
      %s577 = scalar_lea.vmem %s5, %s576
      // Predicated region
      $region37: #{decoder_forward_pallas.6} parent=31 // pred_check
        %p578 = pneg %p127
      $region38: #{decoder_forward_pallas.6} parent=31 // pred_check_branch
        %580 = sbr.rel (%p578) target = $region40
      $region39: #{decoder_forward_pallas.6} parent=31 // pred_region
        %s581 = smul.u32 2, %s21
        %s582 = smul.u32 2, %s22
      $region40: #{decoder_forward_pallas.6} parent=31 // pred_fallthru
        _
      // Predicated region
      $region41: #{decoder_forward_pallas.6} parent=31 // pred_check
        %p583 = pneg %p153
      $region42: #{decoder_forward_pallas.6} parent=31 // pred_check_branch
        %585 = sbr.rel (%p583) target = $region44
      $region43: #{decoder_forward_pallas.6} parent=31 // pred_region
        %s586 = smul.u32 2, %s21
      $region44: #{decoder_forward_pallas.6} parent=31 // pred_fallthru
        _
      // Predicated region
      $region45: #{decoder_forward_pallas.6} parent=31 // pred_check
        %p587 = pneg %p179
      $region46: #{decoder_forward_pallas.6} parent=31 // pred_check_branch
        %589 = sbr.rel (%p587) target = $region48
      $region47: #{decoder_forward_pallas.6} parent=31 // pred_region
        %s590 = smul.u32 2, %s21
      $region48: #{decoder_forward_pallas.6} parent=31 // pred_fallthru
        _
    $region32: #{decoder_forward_pallas.6} parent=5 // pred_fallthru
      _
    %p591 = scmp.le.s32.totalorder 2, %s12
    // Predicated region
    $region49: #{decoder_forward_pallas.6} parent=5 // pred_check
      %p592 = pneg %p591
    $region50: #{decoder_forward_pallas.6} parent=5 // pred_check_branch
      %594 = sbr.rel (%p592) target = $region52
    $region51: #{decoder_forward_pallas.6} parent=5 // pred_region
      %s595 = ssub.s32 %s12, 2
      // Predicated region
      $region53: #{decoder_forward_pallas.6} parent=51 // pred_check
        %p596 = pneg %p133
      $region54: #{decoder_forward_pallas.6} parent=51 // pred_check_branch
        %598 = sbr.rel (%p596) target = $region56
      $region55: #{decoder_forward_pallas.6} parent=51 // pred_region
        %s599 = smul.u32 2, %s23
        %s600 = smul.u32 2, %s24
        %p601 = scmp.lt.s32.totalorder %s599, 3
        %s602 = scalar_select %p601, %s599, 3
        %p603 = scmp.lt.s32.totalorder %s600, 1
        %s604 = scalar_select %p603, %s600, 1
        %s605 = smul.addr %s602, 2
        %s606 = sadd.s32 %s604, %s605
        %s607 = smul.addr %s606, 4
        %s608 = scalar_lea.vmem %s3, %s607
      $region56: #{decoder_forward_pallas.6} parent=51 // pred_fallthru
        _
      // Predicated region
      $region57: #{decoder_forward_pallas.6} parent=51 // pred_check
        %p609 = pneg %p159
      $region58: #{decoder_forward_pallas.6} parent=51 // pred_check_branch
        %611 = sbr.rel (%p609) target = $region60
      $region59: #{decoder_forward_pallas.6} parent=51 // pred_region
        %s612 = smul.u32 2, %s23
        %p613 = scmp.lt.s32.totalorder %s612, 3
        %s614 = scalar_select %p613, %s612, 3
        %s615 = smul.addr %s614, 8
        %s616 = scalar_lea.vmem %s4, %s615
      $region60: #{decoder_forward_pallas.6} parent=51 // pred_fallthru
        _
      // Predicated region
      $region61: #{decoder_forward_pallas.6} parent=51 // pred_check
        %p617 = pneg %p185
      $region62: #{decoder_forward_pallas.6} parent=51 // pred_check_branch
        %619 = sbr.rel (%p617) target = $region64
      $region63: #{decoder_forward_pallas.6} parent=51 // pred_region
        %s620 = smul.u32 2, %s23
        %p621 = scmp.lt.s32.totalorder %s620, 3
        %s622 = scalar_select %p621, %s620, 3
        %s623 = smul.addr %s622, 8
        %s624 = scalar_lea.vmem %s5, %s623
      $region64: #{decoder_forward_pallas.6} parent=51 // pred_fallthru
        _
    $region52: #{decoder_forward_pallas.6} parent=5 // pred_fallthru
      _
  $region6: #{decoder_forward_pallas.6} parent=0 // loop_footer
    %s16 = sadd.s32 1, %s12
  $region7: #{decoder_forward_pallas.6} parent=0 // loop_footer_branch
    %11 = sbr.rel target = $region3
  $region8: #{decoder_forward_pallas.6} parent=0 // loop_exit
    _

// kernel: decoder_forward_pallas.7
$region0: #{decoder_forward_pallas.7}
  #allocation0 [shape = 'u32[]', space=smem, size = 0x4, offset = 0x4, fixed_abs, tag = 'smem constant byte address 0x4 - core index']
  #allocation1 [shape = 'u32[144,128]{1,0:T(1,128)}', space=vmem, size = 0x12000, scoped, tag = 'internal scratch']
  %s0 = inlined_call_operand.vmem [shape: bf16[4,8,256], index: 0, kind: input, shape index: {}]
  %s1 = inlined_call_operand.vmem [shape: f32[4,8,1], index: 1, kind: input, shape index: {}]
  %s2 = inlined_call_operand.vmem [shape: f32[4,8,1], index: 2, kind: input, shape index: {}]
  %s3 = inlined_call_operand.hbm [shape: f32[4,8,256], index: 3, kind: output, shape index: {}]
  %s4 = sld [smem:[#allocation0]]
  $region45: #{decoder_forward_pallas.7} parent=0
    _
  %s6 = ssub.s32 1, %s4
  %s7 = scalar_select 0, %s6, %s4
  $region1: #{decoder_forward_pallas.7} parent=0
    #allocation2 [shape = 'u8[32768]{0}', space=vmem, size = 0x8000, scoped, tag = 'output window, operand 0']
    #allocation3 [shape = 's32[2]{0}', space=sflag, size = 0x8, scoped, tag = 'scoped memory for decoder_forward_pallas.7']
    %8 = vsyncpa [#allocation3], 0
    %s9 = scalar_lea.sflag [#allocation3], 1
    %10 = vsyncpa %s9, 0
    loop: start=0, step=1, limit=4
    $region2: #{decoder_forward_pallas.7} parent=1 // loop_pre_header
      _
    $region3: #{decoder_forward_pallas.7} parent=1 // loop_header
      %s12 = sphi 0, %s16
      %p13 = scmp.ge.s32.totalorder %s12, 4
      %s19 = sphi 0, %s31
      %s20 = sphi 0, %s27
      %s21 = sphi 0, %s19
      %s22 = sphi 0, %s20
      %s23 = sphi 0, %s21
      %s24 = sphi 0, %s22
      %s36 = sphi 0, %s38
      %s39 = sphi 0, %s36
      %s40 = sphi 0, %s39
      %s56 = sphi 0, %s40
      %s62 = sphi 0, %s64
      %s65 = sphi 0, %s62
      %s66 = sphi 0, %s65
      %s82 = sphi 0, %s66
      %s88 = sphi 0, %s90
      %s91 = sphi 0, %s88
      %s92 = sphi 0, %s91
      %s108 = sphi 0, %s92
      %s116 = sphi 0, %s118
      %s119 = sphi 0, %s116
      %s120 = sphi 0, %s119
      %s136 = sphi 0, %s120
    $region4: #{decoder_forward_pallas.7} parent=1 // loop_header_branch
      %15 = sbr.rel (%p13) target = $region8
    $region5: #{decoder_forward_pallas.7} parent=1 // loop_body
      %s17 = ssub.s32 %s12, 1
      %s18 = ssub.s32 %s12, 2
      %s25 = sadd.s32 1, %s20
      %p26 = scmp.ge.s32.totalorder %s25, 1
      %s27 = scalar_select %p26, 0, %s25
      %s28 = sadd.s32 1, %s19
      %s29 = scalar_select %p26, %s28, %s19
      %p30 = scmp.ge.s32.totalorder %s29, 2
      %s31 = scalar_select %p30, 0, %s29
      %s32 = ssub.s32 %s19, %s31
      %s33 = ssub.s32 %s20, %s27
      %s34 = sor.u32 %s32, %s33
      %p35 = scmp.eq.s32.totalorder %s34, 0
      %s37 = sadd.s32 %s36, 1
      %s38 = scalar_select %p35, %s36, %s37
      %p41 = pneg %p35
      %p42 = scmp.eq.s32.totalorder %s12, 1
      %p43 = por %p41, %p42
      %p44 = scmp.ne.s32.totalorder %s36, %s39
      %p45 = scmp.eq.s32.totalorder %s12, 0
      %p46 = por %p44, %p45
      %p47 = scmp.ne.s32.totalorder %s36, %s39
      %p48 = scmp.eq.s32.totalorder %s17, 1
      %p49 = por %p47, %p48
      %p50 = scmp.ne.s32.totalorder %s39, %s40
      %p51 = scmp.eq.s32.totalorder %s17, 0
      %p52 = por %p50, %p51
      %p53 = scmp.ne.s32.totalorder %s39, %s40
      %p54 = scmp.eq.s32.totalorder %s18, 1
      %p55 = por %p53, %p54
      %p57 = scmp.ne.s32.totalorder %s40, %s56
      %p58 = scmp.eq.s32.totalorder %s18, 0
      %p59 = por %p57, %p58
      %s60 = ssub.s32 %s19, %s31
      %p61 = scmp.eq.s32.totalorder %s60, 0
      %s63 = sadd.s32 %s62, 1
      %s64 = scalar_select %p61, %s62, %s63
      %p67 = pneg %p61
      %p68 = scmp.eq.s32.totalorder %s12, 1
      %p69 = por %p67, %p68
      %p70 = scmp.ne.s32.totalorder %s62, %s65
      %p71 = scmp.eq.s32.totalorder %s12, 0
      %p72 = por %p70, %p71
      %p73 = scmp.ne.s32.totalorder %s62, %s65
      %p74 = scmp.eq.s32.totalorder %s17, 1
      %p75 = por %p73, %p74
      %p76 = scmp.ne.s32.totalorder %s65, %s66
      %p77 = scmp.eq.s32.totalorder %s17, 0
      %p78 = por %p76, %p77
      %p79 = scmp.ne.s32.totalorder %s65, %s66
      %p80 = scmp.eq.s32.totalorder %s18, 1
      %p81 = por %p79, %p80
      %p83 = scmp.ne.s32.totalorder %s66, %s82
      %p84 = scmp.eq.s32.totalorder %s18, 0
      %p85 = por %p83, %p84
      %s86 = ssub.s32 %s19, %s31
      %p87 = scmp.eq.s32.totalorder %s86, 0
      %s89 = sadd.s32 %s88, 1
      %s90 = scalar_select %p87, %s88, %s89
      %p93 = pneg %p87
      %p94 = scmp.eq.s32.totalorder %s12, 1
      %p95 = por %p93, %p94
      %p96 = scmp.ne.s32.totalorder %s88, %s91
      %p97 = scmp.eq.s32.totalorder %s12, 0
      %p98 = por %p96, %p97
      %p99 = scmp.ne.s32.totalorder %s88, %s91
      %p100 = scmp.eq.s32.totalorder %s17, 1
      %p101 = por %p99, %p100
      %p102 = scmp.ne.s32.totalorder %s91, %s92
      %p103 = scmp.eq.s32.totalorder %s17, 0
      %p104 = por %p102, %p103
      %p105 = scmp.ne.s32.totalorder %s91, %s92
      %p106 = scmp.eq.s32.totalorder %s18, 1
      %p107 = por %p105, %p106
      %p109 = scmp.ne.s32.totalorder %s92, %s108
      %p110 = scmp.eq.s32.totalorder %s18, 0
      %p111 = por %p109, %p110
      %s112 = ssub.s32 %s19, %s31
      %s113 = ssub.s32 %s20, %s27
      %s114 = sor.u32 %s112, %s113
      %p115 = scmp.eq.s32.totalorder %s114, 0
      %s117 = sadd.s32 %s116, 1
      %s118 = scalar_select %p115, %s116, %s117
      %p121 = pneg %p115
      %p122 = scmp.eq.s32.totalorder %s12, 1
      %p123 = por %p121, %p122
      %p124 = scmp.ne.s32.totalorder %s116, %s119
      %p125 = scmp.eq.s32.totalorder %s12, 0
      %p126 = por %p124, %p125
      %p127 = scmp.ne.s32.totalorder %s116, %s119
      %p128 = scmp.eq.s32.totalorder %s17, 1
      %p129 = por %p127, %p128
      %p130 = scmp.ne.s32.totalorder %s119, %s120
      %p131 = scmp.eq.s32.totalorder %s17, 0
      %p132 = por %p130, %p131
      %p133 = scmp.ne.s32.totalorder %s119, %s120
      %p134 = scmp.eq.s32.totalorder %s18, 1
      %p135 = por %p133, %p134
      %p137 = scmp.ne.s32.totalorder %s120, %s136
      %p138 = scmp.eq.s32.totalorder %s18, 0
      %p139 = por %p137, %p138
      %p140 = scmp.le.s32.totalorder 1, %s12
      %p141 = scmp.lt.s32.totalorder %s12, 3
      %p142 = pnand %p140, %p141
      %p143 = pneg %p142
      // Predicated region
      $region9: #{decoder_forward_pallas.7} parent=5 // pred_check
        _
      $region10: #{decoder_forward_pallas.7} parent=5 // pred_check_branch
        %145 = sbr.rel (%p142) target = $region12
      $region11: #{decoder_forward_pallas.7} parent=5 // pred_region
        %s146 = ssub.s32 %s12, 1
      $region12: #{decoder_forward_pallas.7} parent=5 // pred_fallthru
        _
      %p147 = scmp.lt.s32.totalorder %s12, 2
      // Predicated region
      $region13: #{decoder_forward_pallas.7} parent=5 // pred_check
        %p148 = pneg %p147
      $region14: #{decoder_forward_pallas.7} parent=5 // pred_check_branch
        %150 = sbr.rel (%p148) target = $region16
      $region15: #{decoder_forward_pallas.7} parent=5 // pred_region
        // Predicated region
        $region17: #{decoder_forward_pallas.7} parent=15 // pred_check
          %p151 = pneg %p46
        $region18: #{decoder_forward_pallas.7} parent=15 // pred_check_branch
          %153 = sbr.rel (%p151) target = $region20
        $region19: #{decoder_forward_pallas.7} parent=15 // pred_region
          %s154 = smul.u32 2, %s19
          %s155 = smul.u32 2, %s20
          %p156 = scmp.lt.s32.totalorder %s154, 3
          %s157 = scalar_select %p156, %s154, 3
          %p158 = scmp.lt.s32.totalorder %s155, 1
          %s159 = scalar_select %p158, %s155, 1
          %s160 = smul.addr %s157, 2
          %s161 = sadd.s32 %s159, %s160
          %s162 = smul.addr %s161, 4
          %s163 = scalar_lea.vmem %s0, %s162
          %s164 = smul.u32 2, %s19
          %s165 = smul.u32 2, %s20
        $region20: #{decoder_forward_pallas.7} parent=15 // pred_fallthru
          _
        // Predicated region
        $region21: #{decoder_forward_pallas.7} parent=15 // pred_check
          %p166 = pneg %p72
        $region22: #{decoder_forward_pallas.7} parent=15 // pred_check_branch
          %168 = sbr.rel (%p166) target = $region24
        $region23: #{decoder_forward_pallas.7} parent=15 // pred_region
          %s169 = smul.u32 2, %s19
          %p170 = scmp.lt.s32.totalorder %s169, 3
          %s171 = scalar_select %p170, %s169, 3
          %s172 = smul.addr %s171, 8
          %s173 = scalar_lea.vmem %s1, %s172
          %s174 = smul.u32 2, %s19
        $region24: #{decoder_forward_pallas.7} parent=15 // pred_fallthru
          _
        // Predicated region
        $region25: #{decoder_forward_pallas.7} parent=15 // pred_check
          %p175 = pneg %p98
        $region26: #{decoder_forward_pallas.7} parent=15 // pred_check_branch
          %177 = sbr.rel (%p175) target = $region28
        $region27: #{decoder_forward_pallas.7} parent=15 // pred_region
          %s178 = smul.u32 2, %s19
          %p179 = scmp.lt.s32.totalorder %s178, 3
          %s180 = scalar_select %p179, %s178, 3
          %s181 = smul.addr %s180, 8
          %s182 = scalar_lea.vmem %s2, %s181
          %s183 = smul.u32 2, %s19
        $region28: #{decoder_forward_pallas.7} parent=15 // pred_fallthru
          _
      $region16: #{decoder_forward_pallas.7} parent=5 // pred_fallthru
        _
      %p184 = scmp.le.s32.totalorder 1, %s12
      %p185 = scmp.lt.s32.totalorder %s12, 3
      %p186 = pnand %p184, %p185
      %p187 = pneg %p186
      // Predicated region
      $region29: #{decoder_forward_pallas.7} parent=5 // pred_check
        _
      $region30: #{decoder_forward_pallas.7} parent=5 // pred_check_branch
        %189 = sbr.rel (%p186) target = $region32
      $region31: #{decoder_forward_pallas.7} parent=5 // pred_region
        %s190 = ssub.s32 %s12, 1
        %s191 = smul.u32 2, %s21
        %s192 = smul.u32 2, %s22
        %p193 = scmp.lt.s32.totalorder %s191, 3
        %s194 = scalar_select %p193, %s191, 3
        %p195 = scmp.lt.s32.totalorder %s192, 1
        %s196 = scalar_select %p195, %s192, 1
        %s197 = smul.addr %s194, 2
        %s198 = sadd.s32 %s196, %s197
        %s199 = smul.addr %s198, 4
        %s200 = scalar_lea.vmem %s0, %s199
        %p201 = pneg %p52
        %p202 = pneg %p49
        %s203 = smul.u32 2, %s21
        %p204 = scmp.lt.s32.totalorder %s203, 3
        %s205 = scalar_select %p204, %s203, 3
        %s206 = smul.addr %s205, 8
        %s207 = scalar_lea.vmem %s1, %s206
        %p208 = pneg %p78
        %p209 = pneg %p75
        %s210 = smul.u32 2, %s21
        %p211 = scmp.lt.s32.totalorder %s210, 3
        %s212 = scalar_select %p211, %s210, 3
        %s213 = smul.addr %s212, 8
        %s214 = scalar_lea.vmem %s2, %s213
        %p215 = pneg %p104
        %p216 = pneg %p101
        %p217 = pneg %p132
        %p218 = pneg %p129
        %s219 = sand.u32 %s119, 1
        %s220 = scalar_lea.sflag [#allocation3], %s219
        %s221 = sand.u32 %s119, 1
        %s222 = smul.addr %s221, 32
        %s223 = scalar_lea.vmem [#allocation2], %s222
        %s224 = smul.u32 2, %s21
        %s225 = smul.u32 2, %s22
        %p226 = scmp.lt.s32.totalorder %s224, 3
        %s227 = scalar_select %p226, %s224, 3
        %p228 = scmp.lt.s32.totalorder %s225, 1
        %s229 = scalar_select %p228, %s225, 1
        %s230 = smul.addr %s227, 2
        %s231 = sadd.s32 %s229, %s230
        %s232 = smul.addr %s231, 4
        %s233 = scalar_lea.vmem %s0, %s232
        %s234 = smul.u32 2, %s21
        %s235 = smul.u32 2, %s22
        %s236 = smul.u32 2, %s21
        %p237 = scmp.lt.s32.totalorder %s236, 3
        %s238 = scalar_select %p237, %s236, 3
        %s239 = smul.addr %s238, 8
        %s240 = scalar_lea.vmem %s1, %s239
        %s241 = smul.u32 2, %s21
        %s242 = smul.u32 2, %s21
        %p243 = scmp.lt.s32.totalorder %s242, 3
        %s244 = scalar_select %p243, %s242, 3
        %s245 = smul.addr %s244, 8
        %s246 = scalar_lea.vmem %s2, %s245
        %s247 = smul.u32 2, %s21
        %s248 = smul.u32 2, %s21
        %s249 = smul.u32 2, %s22
        %v250 = vld [vmem:[%s233] sm:$0xff]
        %v251 = vld [vmem:[%s233 + $0x8] sm:$0xff]
        %v252 = vunpack.c.l.bf16 %v250
        %v253 = vunpack.c.h.bf16 %v250
        %v254 = vunpack.c.l.bf16 %v251
        %v255 = vunpack.c.h.bf16 %v251
        %v256 = vld [vmem:[%s246] sm:$0xff]
        %v257 = vld [vmem:[%s246 + $0x8] sm:$0xff]
        %v258 = vrcp.pop %v256
        %v259 = vmul.f32 1.0, %v258
        %v260 = vrcp.pop %v257
        %v261 = vmul.f32 1.0, %v260
        %v262 = vld [vmem:[%s240] sm:$0xff]
        %v263 = vld [vmem:[%s240 + $0x8] sm:$0xff]
        %265 = vset.pattern.permute.xlu0 0
        %266 = vperm.xlu0 %265, %v262
        %v267 = vpop.permute.xlu0 %266
        %270 = vset.pattern.permute.xlu0 0
        %271 = vperm.xlu0 %270, %v263
        %v272 = vpop.permute.xlu0 %271
        %v274 = vsub.f32 %v252, %v267
        %v275 = vsub.f32 %v253, %v267
        %v276 = vsub.f32 %v254, %v272
        %v277 = vsub.f32 %v255, %v272
        %v278 = vmul.f32 %v274, 1.442695
        %v279 = vpow.pop %v278
        %v280 = vmul.f32 %v275, 1.442695
        %v281 = vpow.pop %v280
        %v282 = vmul.f32 %v276, 1.442695
        %v283 = vpow.pop %v282
        %v284 = vmul.f32 %v277, 1.442695
        %v285 = vpow.pop %v284
        %287 = vset.pattern.permute.xlu0 0
        %288 = vperm.xlu0 %287, %v259
        %v289 = vpop.permute.xlu0 %288
        %292 = vset.pattern.permute.xlu0 0
        %293 = vperm.xlu0 %292, %v261
        %v294 = vpop.permute.xlu0 %293
        %v296 = vmul.f32 %v279, %v289
        %v297 = vmul.f32 %v281, %v289
        %v298 = vmul.f32 %v283, %v294
        %v299 = vmul.f32 %v285, %v294
        %300 = vst [vmem:[%s223] sm:$0xff] %v296
        %301 = vst [vmem:[%s223 + $0x8] sm:$0xff] %v297
        %302 = vst [vmem:[%s223 + $0x10] sm:$0xff] %v298
        %303 = vst [vmem:[%s223 + $0x18] sm:$0xff] %v299
        %s304 = sand.u32 %s119, 1
        %s305 = scalar_lea.sflag [#allocation3], %s304
        %s306 = sand.u32 %s119, 1
        %s307 = smul.addr %s306, 32
        %s308 = scalar_lea.vmem [#allocation2], %s307
        // Predicated region
        $region33: #{decoder_forward_pallas.7} parent=31 // pred_check
          %p309 = pneg %p129
        $region34: #{decoder_forward_pallas.7} parent=31 // pred_check_branch
          %311 = sbr.rel (%p309) target = $region36
        $region35: #{decoder_forward_pallas.7} parent=31 // pred_region
          %s312 = smul.u32 2, %s21
          %s313 = smul.u32 2, %s22
          %s315 = ssub.s32 512, 512
          %316 = vsyncadd %s305, %s315
          %s317 = smul.addr %s312, 2
          %s318 = sadd.s32 %s313, %s317
          %s319 = smul.addr %s318, 128
          %s320 = scalar_lea.hbm %s3, %s319
          %s321 = sshll.u32 %s308, 4
          %s322 = int_to_ptr.vmem [resolvable:$true] %s321
          %327 = dma.vmem_to_hbm [thread:$0]  %s322, 512, %s320, %s305, 256, 256, 16
        $region36: #{decoder_forward_pallas.7} parent=31 // pred_fallthru
          _
      $region32: #{decoder_forward_pallas.7} parent=5 // pred_fallthru
        _
      %p328 = scmp.le.s32.totalorder 2, %s12
      // Predicated region
      $region37: #{decoder_forward_pallas.7} parent=5 // pred_check
        %p329 = pneg %p328
      $region38: #{decoder_forward_pallas.7} parent=5 // pred_check_branch
        %331 = sbr.rel (%p329) target = $region40
      $region39: #{decoder_forward_pallas.7} parent=5 // pred_region
        %s332 = ssub.s32 %s12, 2
        // Predicated region
        $region41: #{decoder_forward_pallas.7} parent=39 // pred_check
          %p333 = pneg %p135
        $region42: #{decoder_forward_pallas.7} parent=39 // pred_check_branch
          %335 = sbr.rel (%p333) target = $region44
        $region43: #{decoder_forward_pallas.7} parent=39 // pred_region
          %s336 = sand.u32 %s120, 1
          %s337 = scalar_lea.sflag [#allocation3], %s336
          %s338 = sand.u32 %s120, 1
          %s339 = smul.addr %s338, 32
          %s340 = scalar_lea.vmem [#allocation2], %s339
          %341 = dma.done %s337, 512
        $region44: #{decoder_forward_pallas.7} parent=39 // pred_fallthru
          _
      $region40: #{decoder_forward_pallas.7} parent=5 // pred_fallthru
        _
    $region6: #{decoder_forward_pallas.7} parent=1 // loop_footer
      %s16 = sadd.s32 1, %s12
    $region7: #{decoder_forward_pallas.7} parent=1 // loop_footer_branch
      %11 = sbr.rel target = $region3
    $region8: #{decoder_forward_pallas.7} parent=1 // loop_exit
      _
    %342 = vsyncpa [#allocation3], 1
    %s343 = scalar_lea.sflag [#allocation3], 1
    %344 = vsyncpa %s343, 1

// kernel: decoder_forward_pallas.5
$region0: #{decoder_forward_pallas.5}
  #allocation0 [shape = 'u32[]', space=smem, size = 0x4, offset = 0x4, fixed_abs, tag = 'smem constant byte address 0x4 - core index']
  #allocation1 [shape = 'u32[144,128]{1,0:T(1,128)}', space=vmem, size = 0x12000, scoped, tag = 'internal scratch']
  %s0 = inlined_call_operand.vmem [shape: f32[4,8,128], index: 0, kind: input, shape index: {}]
  %s1 = inlined_call_operand.vmem [shape: f32[4,8,128], index: 1, kind: input, shape index: {}, may-alias: {1,18}]
  %s2 = inlined_call_operand.vmem [shape: f32[8,128], index: 2, kind: input, shape index: {}]
  %s3 = inlined_call_operand.vmem [shape: f32[8,128], index: 3, kind: input, shape index: {}]
  %s4 = inlined_call_operand.vmem [shape: bf16[128,384], index: 4, kind: input, shape index: {}]
  %s5 = inlined_call_operand.vmem [shape: f32[1,384], index: 5, kind: input, shape index: {}]
  %s6 = inlined_call_operand.vmem [shape: f32[8,128], index: 6, kind: input, shape index: {}]
  %s7 = inlined_call_operand.vmem [shape: f32[8,128], index: 7, kind: input, shape index: {}]
  %s8 = inlined_call_operand.vmem [shape: bf16[128,128], index: 8, kind: input, shape index: {}]
  %s9 = inlined_call_operand.vmem [shape: f32[1,128], index: 9, kind: input, shape index: {}]
  %s10 = inlined_call_operand.vmem [shape: bf16[128,256], index: 10, kind: input, shape index: {}]
  %s11 = inlined_call_operand.vmem [shape: f32[1,256], index: 11, kind: input, shape index: {}]
  %s12 = inlined_call_operand.vmem [shape: f32[8,128], index: 12, kind: input, shape index: {}]
  %s13 = inlined_call_operand.vmem [shape: f32[8,128], index: 13, kind: input, shape index: {}]
  %s14 = inlined_call_operand.vmem [shape: bf16[128,512], index: 14, kind: input, shape index: {}]
  %s15 = inlined_call_operand.vmem [shape: f32[1,512], index: 15, kind: input, shape index: {}]
  %s16 = inlined_call_operand.vmem [shape: bf16[512,128], index: 16, kind: input, shape index: {}]
  %s17 = inlined_call_operand.vmem [shape: f32[1,128], index: 17, kind: input, shape index: {}]
  %s18 = inlined_call_operand.vmem [shape: f32[4,8,128], index: 18, kind: output, shape index: {}, may-alias: {1,18}]
  %s19 = sld [smem:[#allocation0]]
  $region105: #{decoder_forward_pallas.5} parent=0
    _
  %s21 = ssub.s32 1, %s19
  %s22 = scalar_select 0, %s21, %s19
  loop: start=0, step=1, limit=4
  $region2: #{decoder_forward_pallas.5} parent=0 // loop_pre_header
    _
  $region3: #{decoder_forward_pallas.5} parent=0 // loop_header
    %s24 = sphi 0, %s28
    %p25 = scmp.ge.s32.totalorder %s24, 4
    %s34 = sphi 0, %s36
    %s37 = sphi 0, %s34
    %s38 = sphi 0, %s37
    %s54 = sphi 0, %s38
    %s60 = sphi 0, %s62
    %s63 = sphi 0, %s60
    %s64 = sphi 0, %s63
    %s80 = sphi 0, %s64
    %s84 = sphi 0, %s84
    %s86 = sphi 0, %s84
    %s87 = sphi 0, %s86
    %s101 = sphi 0, %s87
    %s105 = sphi 0, %s105
    %s107 = sphi 0, %s105
    %s108 = sphi 0, %s107
    %s122 = sphi 0, %s108
    %s126 = sphi 0, %s126
    %s128 = sphi 0, %s126
    %s129 = sphi 0, %s128
    %s143 = sphi 0, %s129
    %s147 = sphi 0, %s147
    %s149 = sphi 0, %s147
    %s150 = sphi 0, %s149
    %s164 = sphi 0, %s150
    %s168 = sphi 0, %s168
    %s170 = sphi 0, %s168
    %s171 = sphi 0, %s170
    %s185 = sphi 0, %s171
    %s189 = sphi 0, %s189
    %s191 = sphi 0, %s189
    %s192 = sphi 0, %s191
    %s206 = sphi 0, %s192
    %s210 = sphi 0, %s210
    %s212 = sphi 0, %s210
    %s213 = sphi 0, %s212
    %s227 = sphi 0, %s213
    %s231 = sphi 0, %s231
    %s233 = sphi 0, %s231
    %s234 = sphi 0, %s233
    %s248 = sphi 0, %s234
    %s252 = sphi 0, %s252
    %s254 = sphi 0, %s252
    %s255 = sphi 0, %s254
    %s269 = sphi 0, %s255
    %s273 = sphi 0, %s273
    %s275 = sphi 0, %s273
    %s276 = sphi 0, %s275
    %s290 = sphi 0, %s276
    %s294 = sphi 0, %s294
    %s296 = sphi 0, %s294
    %s297 = sphi 0, %s296
    %s311 = sphi 0, %s297
    %s315 = sphi 0, %s315
    %s317 = sphi 0, %s315
    %s318 = sphi 0, %s317
    %s332 = sphi 0, %s318
    %s336 = sphi 0, %s336
    %s338 = sphi 0, %s336
    %s339 = sphi 0, %s338
    %s353 = sphi 0, %s339
    %s357 = sphi 0, %s357
    %s359 = sphi 0, %s357
    %s360 = sphi 0, %s359
    %s374 = sphi 0, %s360
    %s378 = sphi 0, %s378
    %s380 = sphi 0, %s378
    %s381 = sphi 0, %s380
    %s395 = sphi 0, %s381
    %s399 = sphi 0, %s399
    %s401 = sphi 0, %s399
    %s402 = sphi 0, %s401
    %s416 = sphi 0, %s402
    %s422 = sphi 0, %s424
    %s425 = sphi 0, %s422
    %s426 = sphi 0, %s425
    %s442 = sphi 0, %s426
  $region4: #{decoder_forward_pallas.5} parent=0 // loop_header_branch
    %27 = sbr.rel (%p25) target = $region8
  $region5: #{decoder_forward_pallas.5} parent=0 // loop_body
    %s29 = ssub.s32 %s24, 1
    %s30 = ssub.s32 %s24, 2
    %s31 = sadd.s32 %s24, 1
    %s32 = ssub.s32 %s24, %s31
    %p33 = scmp.eq.s32.totalorder %s32, 0
    %s35 = sadd.s32 %s34, 1
    %s36 = scalar_select %p33, %s34, %s35
    %p39 = pneg %p33
    %p40 = scmp.eq.s32.totalorder %s24, 1
    %p41 = por %p39, %p40
    %p42 = scmp.ne.s32.totalorder %s34, %s37
    %p43 = scmp.eq.s32.totalorder %s24, 0
    %p44 = por %p42, %p43
    %p45 = scmp.ne.s32.totalorder %s34, %s37
    %p46 = scmp.eq.s32.totalorder %s29, 1
    %p47 = por %p45, %p46
    %p48 = scmp.ne.s32.totalorder %s37, %s38
    %p49 = scmp.eq.s32.totalorder %s29, 0
    %p50 = por %p48, %p49
    %p51 = scmp.ne.s32.totalorder %s37, %s38
    %p52 = scmp.eq.s32.totalorder %s30, 1
    %p53 = por %p51, %p52
    %p55 = scmp.ne.s32.totalorder %s38, %s54
    %p56 = scmp.eq.s32.totalorder %s30, 0
    %p57 = por %p55, %p56
    %s58 = ssub.s32 %s24, %s31
    %p59 = scmp.eq.s32.totalorder %s58, 0
    %s61 = sadd.s32 %s60, 1
    %s62 = scalar_select %p59, %s60, %s61
    %p65 = pneg %p59
    %p66 = scmp.eq.s32.totalorder %s24, 1
    %p67 = por %p65, %p66
    %p68 = scmp.ne.s32.totalorder %s60, %s63
    %p69 = scmp.eq.s32.totalorder %s24, 0
    %p70 = por %p68, %p69
    %p71 = scmp.ne.s32.totalorder %s60, %s63
    %p72 = scmp.eq.s32.totalorder %s29, 1
    %p73 = por %p71, %p72
    %p74 = scmp.ne.s32.totalorder %s63, %s64
    %p75 = scmp.eq.s32.totalorder %s29, 0
    %p76 = por %p74, %p75
    %p77 = scmp.ne.s32.totalorder %s63, %s64
    %p78 = scmp.eq.s32.totalorder %s30, 1
    %p79 = por %p77, %p78
    %p81 = scmp.ne.s32.totalorder %s64, %s80
    %p82 = scmp.eq.s32.totalorder %s30, 0
    %p83 = por %p81, %p82
    %s85 = sadd.s32 %s84, 1
    %p88 = scmp.eq.s32.totalorder %s24, 1
    %p89 = scmp.ne.s32.totalorder %s84, %s86
    %p90 = scmp.eq.s32.totalorder %s24, 0
    %p91 = por %p89, %p90
    %p92 = scmp.ne.s32.totalorder %s84, %s86
    %p93 = scmp.eq.s32.totalorder %s29, 1
    %p94 = por %p92, %p93
    %p95 = scmp.ne.s32.totalorder %s86, %s87
    %p96 = scmp.eq.s32.totalorder %s29, 0
    %p97 = por %p95, %p96
    %p98 = scmp.ne.s32.totalorder %s86, %s87
    %p99 = scmp.eq.s32.totalorder %s30, 1
    %p100 = por %p98, %p99
    %p102 = scmp.ne.s32.totalorder %s87, %s101
    %p103 = scmp.eq.s32.totalorder %s30, 0
    %p104 = por %p102, %p103
    %s106 = sadd.s32 %s105, 1
    %p109 = scmp.eq.s32.totalorder %s24, 1
    %p110 = scmp.ne.s32.totalorder %s105, %s107
    %p111 = scmp.eq.s32.totalorder %s24, 0
    %p112 = por %p110, %p111
    %p113 = scmp.ne.s32.totalorder %s105, %s107
    %p114 = scmp.eq.s32.totalorder %s29, 1
    %p115 = por %p113, %p114
    %p116 = scmp.ne.s32.totalorder %s107, %s108
    %p117 = scmp.eq.s32.totalorder %s29, 0
    %p118 = por %p116, %p117
    %p119 = scmp.ne.s32.totalorder %s107, %s108
    %p120 = scmp.eq.s32.totalorder %s30, 1
    %p121 = por %p119, %p120
    %p123 = scmp.ne.s32.totalorder %s108, %s122
    %p124 = scmp.eq.s32.totalorder %s30, 0
    %p125 = por %p123, %p124
    %s127 = sadd.s32 %s126, 1
    %p130 = scmp.eq.s32.totalorder %s24, 1
    %p131 = scmp.ne.s32.totalorder %s126, %s128
    %p132 = scmp.eq.s32.totalorder %s24, 0
    %p133 = por %p131, %p132
    %p134 = scmp.ne.s32.totalorder %s126, %s128
    %p135 = scmp.eq.s32.totalorder %s29, 1
    %p136 = por %p134, %p135
    %p137 = scmp.ne.s32.totalorder %s128, %s129
    %p138 = scmp.eq.s32.totalorder %s29, 0
    %p139 = por %p137, %p138
    %p140 = scmp.ne.s32.totalorder %s128, %s129
    %p141 = scmp.eq.s32.totalorder %s30, 1
    %p142 = por %p140, %p141
    %p144 = scmp.ne.s32.totalorder %s129, %s143
    %p145 = scmp.eq.s32.totalorder %s30, 0
    %p146 = por %p144, %p145
    %s148 = sadd.s32 %s147, 1
    %p151 = scmp.eq.s32.totalorder %s24, 1
    %p152 = scmp.ne.s32.totalorder %s147, %s149
    %p153 = scmp.eq.s32.totalorder %s24, 0
    %p154 = por %p152, %p153
    %p155 = scmp.ne.s32.totalorder %s147, %s149
    %p156 = scmp.eq.s32.totalorder %s29, 1
    %p157 = por %p155, %p156
    %p158 = scmp.ne.s32.totalorder %s149, %s150
    %p159 = scmp.eq.s32.totalorder %s29, 0
    %p160 = por %p158, %p159
    %p161 = scmp.ne.s32.totalorder %s149, %s150
    %p162 = scmp.eq.s32.totalorder %s30, 1
    %p163 = por %p161, %p162
    %p165 = scmp.ne.s32.totalorder %s150, %s164
    %p166 = scmp.eq.s32.totalorder %s30, 0
    %p167 = por %p165, %p166
    %s169 = sadd.s32 %s168, 1
    %p172 = scmp.eq.s32.totalorder %s24, 1
    %p173 = scmp.ne.s32.totalorder %s168, %s170
    %p174 = scmp.eq.s32.totalorder %s24, 0
    %p175 = por %p173, %p174
    %p176 = scmp.ne.s32.totalorder %s168, %s170
    %p177 = scmp.eq.s32.totalorder %s29, 1
    %p178 = por %p176, %p177
    %p179 = scmp.ne.s32.totalorder %s170, %s171
    %p180 = scmp.eq.s32.totalorder %s29, 0
    %p181 = por %p179, %p180
    %p182 = scmp.ne.s32.totalorder %s170, %s171
    %p183 = scmp.eq.s32.totalorder %s30, 1
    %p184 = por %p182, %p183
    %p186 = scmp.ne.s32.totalorder %s171, %s185
    %p187 = scmp.eq.s32.totalorder %s30, 0
    %p188 = por %p186, %p187
    %s190 = sadd.s32 %s189, 1
    %p193 = scmp.eq.s32.totalorder %s24, 1
    %p194 = scmp.ne.s32.totalorder %s189, %s191
    %p195 = scmp.eq.s32.totalorder %s24, 0
    %p196 = por %p194, %p195
    %p197 = scmp.ne.s32.totalorder %s189, %s191
    %p198 = scmp.eq.s32.totalorder %s29, 1
    %p199 = por %p197, %p198
    %p200 = scmp.ne.s32.totalorder %s191, %s192
    %p201 = scmp.eq.s32.totalorder %s29, 0
    %p202 = por %p200, %p201
    %p203 = scmp.ne.s32.totalorder %s191, %s192
    %p204 = scmp.eq.s32.totalorder %s30, 1
    %p205 = por %p203, %p204
    %p207 = scmp.ne.s32.totalorder %s192, %s206
    %p208 = scmp.eq.s32.totalorder %s30, 0
    %p209 = por %p207, %p208
    %s211 = sadd.s32 %s210, 1
    %p214 = scmp.eq.s32.totalorder %s24, 1
    %p215 = scmp.ne.s32.totalorder %s210, %s212
    %p216 = scmp.eq.s32.totalorder %s24, 0
    %p217 = por %p215, %p216
    %p218 = scmp.ne.s32.totalorder %s210, %s212
    %p219 = scmp.eq.s32.totalorder %s29, 1
    %p220 = por %p218, %p219
    %p221 = scmp.ne.s32.totalorder %s212, %s213
    %p222 = scmp.eq.s32.totalorder %s29, 0
    %p223 = por %p221, %p222
    %p224 = scmp.ne.s32.totalorder %s212, %s213
    %p225 = scmp.eq.s32.totalorder %s30, 1
    %p226 = por %p224, %p225
    %p228 = scmp.ne.s32.totalorder %s213, %s227
    %p229 = scmp.eq.s32.totalorder %s30, 0
    %p230 = por %p228, %p229
    %s232 = sadd.s32 %s231, 1
    %p235 = scmp.eq.s32.totalorder %s24, 1
    %p236 = scmp.ne.s32.totalorder %s231, %s233
    %p237 = scmp.eq.s32.totalorder %s24, 0
    %p238 = por %p236, %p237
    %p239 = scmp.ne.s32.totalorder %s231, %s233
    %p240 = scmp.eq.s32.totalorder %s29, 1
    %p241 = por %p239, %p240
    %p242 = scmp.ne.s32.totalorder %s233, %s234
    %p243 = scmp.eq.s32.totalorder %s29, 0
    %p244 = por %p242, %p243
    %p245 = scmp.ne.s32.totalorder %s233, %s234
    %p246 = scmp.eq.s32.totalorder %s30, 1
    %p247 = por %p245, %p246
    %p249 = scmp.ne.s32.totalorder %s234, %s248
    %p250 = scmp.eq.s32.totalorder %s30, 0
    %p251 = por %p249, %p250
    %s253 = sadd.s32 %s252, 1
    %p256 = scmp.eq.s32.totalorder %s24, 1
    %p257 = scmp.ne.s32.totalorder %s252, %s254
    %p258 = scmp.eq.s32.totalorder %s24, 0
    %p259 = por %p257, %p258
    %p260 = scmp.ne.s32.totalorder %s252, %s254
    %p261 = scmp.eq.s32.totalorder %s29, 1
    %p262 = por %p260, %p261
    %p263 = scmp.ne.s32.totalorder %s254, %s255
    %p264 = scmp.eq.s32.totalorder %s29, 0
    %p265 = por %p263, %p264
    %p266 = scmp.ne.s32.totalorder %s254, %s255
    %p267 = scmp.eq.s32.totalorder %s30, 1
    %p268 = por %p266, %p267
    %p270 = scmp.ne.s32.totalorder %s255, %s269
    %p271 = scmp.eq.s32.totalorder %s30, 0
    %p272 = por %p270, %p271
    %s274 = sadd.s32 %s273, 1
    %p277 = scmp.eq.s32.totalorder %s24, 1
    %p278 = scmp.ne.s32.totalorder %s273, %s275
    %p279 = scmp.eq.s32.totalorder %s24, 0
    %p280 = por %p278, %p279
    %p281 = scmp.ne.s32.totalorder %s273, %s275
    %p282 = scmp.eq.s32.totalorder %s29, 1
    %p283 = por %p281, %p282
    %p284 = scmp.ne.s32.totalorder %s275, %s276
    %p285 = scmp.eq.s32.totalorder %s29, 0
    %p286 = por %p284, %p285
    %p287 = scmp.ne.s32.totalorder %s275, %s276
    %p288 = scmp.eq.s32.totalorder %s30, 1
    %p289 = por %p287, %p288
    %p291 = scmp.ne.s32.totalorder %s276, %s290
    %p292 = scmp.eq.s32.totalorder %s30, 0
    %p293 = por %p291, %p292
    %s295 = sadd.s32 %s294, 1
    %p298 = scmp.eq.s32.totalorder %s24, 1
    %p299 = scmp.ne.s32.totalorder %s294, %s296
    %p300 = scmp.eq.s32.totalorder %s24, 0
    %p301 = por %p299, %p300
    %p302 = scmp.ne.s32.totalorder %s294, %s296
    %p303 = scmp.eq.s32.totalorder %s29, 1
    %p304 = por %p302, %p303
    %p305 = scmp.ne.s32.totalorder %s296, %s297
    %p306 = scmp.eq.s32.totalorder %s29, 0
    %p307 = por %p305, %p306
    %p308 = scmp.ne.s32.totalorder %s296, %s297
    %p309 = scmp.eq.s32.totalorder %s30, 1
    %p310 = por %p308, %p309
    %p312 = scmp.ne.s32.totalorder %s297, %s311
    %p313 = scmp.eq.s32.totalorder %s30, 0
    %p314 = por %p312, %p313
    %s316 = sadd.s32 %s315, 1
    %p319 = scmp.eq.s32.totalorder %s24, 1
    %p320 = scmp.ne.s32.totalorder %s315, %s317
    %p321 = scmp.eq.s32.totalorder %s24, 0
    %p322 = por %p320, %p321
    %p323 = scmp.ne.s32.totalorder %s315, %s317
    %p324 = scmp.eq.s32.totalorder %s29, 1
    %p325 = por %p323, %p324
    %p326 = scmp.ne.s32.totalorder %s317, %s318
    %p327 = scmp.eq.s32.totalorder %s29, 0
    %p328 = por %p326, %p327
    %p329 = scmp.ne.s32.totalorder %s317, %s318
    %p330 = scmp.eq.s32.totalorder %s30, 1
    %p331 = por %p329, %p330
    %p333 = scmp.ne.s32.totalorder %s318, %s332
    %p334 = scmp.eq.s32.totalorder %s30, 0
    %p335 = por %p333, %p334
    %s337 = sadd.s32 %s336, 1
    %p340 = scmp.eq.s32.totalorder %s24, 1
    %p341 = scmp.ne.s32.totalorder %s336, %s338
    %p342 = scmp.eq.s32.totalorder %s24, 0
    %p343 = por %p341, %p342
    %p344 = scmp.ne.s32.totalorder %s336, %s338
    %p345 = scmp.eq.s32.totalorder %s29, 1
    %p346 = por %p344, %p345
    %p347 = scmp.ne.s32.totalorder %s338, %s339
    %p348 = scmp.eq.s32.totalorder %s29, 0
    %p349 = por %p347, %p348
    %p350 = scmp.ne.s32.totalorder %s338, %s339
    %p351 = scmp.eq.s32.totalorder %s30, 1
    %p352 = por %p350, %p351
    %p354 = scmp.ne.s32.totalorder %s339, %s353
    %p355 = scmp.eq.s32.totalorder %s30, 0
    %p356 = por %p354, %p355
    %s358 = sadd.s32 %s357, 1
    %p361 = scmp.eq.s32.totalorder %s24, 1
    %p362 = scmp.ne.s32.totalorder %s357, %s359
    %p363 = scmp.eq.s32.totalorder %s24, 0
    %p364 = por %p362, %p363
    %p365 = scmp.ne.s32.totalorder %s357, %s359
    %p366 = scmp.eq.s32.totalorder %s29, 1
    %p367 = por %p365, %p366
    %p368 = scmp.ne.s32.totalorder %s359, %s360
    %p369 = scmp.eq.s32.totalorder %s29, 0
    %p370 = por %p368, %p369
    %p371 = scmp.ne.s32.totalorder %s359, %s360
    %p372 = scmp.eq.s32.totalorder %s30, 1
    %p373 = por %p371, %p372
    %p375 = scmp.ne.s32.totalorder %s360, %s374
    %p376 = scmp.eq.s32.totalorder %s30, 0
    %p377 = por %p375, %p376
    %s379 = sadd.s32 %s378, 1
    %p382 = scmp.eq.s32.totalorder %s24, 1
    %p383 = scmp.ne.s32.totalorder %s378, %s380
    %p384 = scmp.eq.s32.totalorder %s24, 0
    %p385 = por %p383, %p384
    %p386 = scmp.ne.s32.totalorder %s378, %s380
    %p387 = scmp.eq.s32.totalorder %s29, 1
    %p388 = por %p386, %p387
    %p389 = scmp.ne.s32.totalorder %s380, %s381
    %p390 = scmp.eq.s32.totalorder %s29, 0
    %p391 = por %p389, %p390
    %p392 = scmp.ne.s32.totalorder %s380, %s381
    %p393 = scmp.eq.s32.totalorder %s30, 1
    %p394 = por %p392, %p393
    %p396 = scmp.ne.s32.totalorder %s381, %s395
    %p397 = scmp.eq.s32.totalorder %s30, 0
    %p398 = por %p396, %p397
    %s400 = sadd.s32 %s399, 1
    %p403 = scmp.eq.s32.totalorder %s24, 1
    %p404 = scmp.ne.s32.totalorder %s399, %s401
    %p405 = scmp.eq.s32.totalorder %s24, 0
    %p406 = por %p404, %p405
    %p407 = scmp.ne.s32.totalorder %s399, %s401
    %p408 = scmp.eq.s32.totalorder %s29, 1
    %p409 = por %p407, %p408
    %p410 = scmp.ne.s32.totalorder %s401, %s402
    %p411 = scmp.eq.s32.totalorder %s29, 0
    %p412 = por %p410, %p411
    %p413 = scmp.ne.s32.totalorder %s401, %s402
    %p414 = scmp.eq.s32.totalorder %s30, 1
    %p415 = por %p413, %p414
    %p417 = scmp.ne.s32.totalorder %s402, %s416
    %p418 = scmp.eq.s32.totalorder %s30, 0
    %p419 = por %p417, %p418
    %s420 = ssub.s32 %s24, %s31
    %p421 = scmp.eq.s32.totalorder %s420, 0
    %s423 = sadd.s32 %s422, 1
    %s424 = scalar_select %p421, %s422, %s423
    %p427 = pneg %p421
    %p428 = scmp.eq.s32.totalorder %s24, 1
    %p429 = por %p427, %p428
    %p430 = scmp.ne.s32.totalorder %s422, %s425
    %p431 = scmp.eq.s32.totalorder %s24, 0
    %p432 = por %p430, %p431
    %p433 = scmp.ne.s32.totalorder %s422, %s425
    %p434 = scmp.eq.s32.totalorder %s29, 1
    %p435 = por %p433, %p434
    %p436 = scmp.ne.s32.totalorder %s425, %s426
    %p437 = scmp.eq.s32.totalorder %s29, 0
    %p438 = por %p436, %p437
    %p439 = scmp.ne.s32.totalorder %s425, %s426
    %p440 = scmp.eq.s32.totalorder %s30, 1
    %p441 = por %p439, %p440
    %p443 = scmp.ne.s32.totalorder %s426, %s442
    %p444 = scmp.eq.s32.totalorder %s30, 0
    %p445 = por %p443, %p444
    %p446 = scmp.le.s32.totalorder 1, %s24
    %p447 = scmp.lt.s32.totalorder %s24, 3
    %p448 = pnand %p446, %p447
    %p449 = pneg %p448
    // Predicated region
    $region9: #{decoder_forward_pallas.5} parent=5 // pred_check
      _
    $region10: #{decoder_forward_pallas.5} parent=5 // pred_check_branch
      %451 = sbr.rel (%p448) target = $region12
    $region11: #{decoder_forward_pallas.5} parent=5 // pred_region
      %s452 = ssub.s32 %s24, 1
      // Predicated region
      $region13: #{decoder_forward_pallas.5} parent=11 // pred_check
        %p453 = pneg %p97
      $region14: #{decoder_forward_pallas.5} parent=11 // pred_check_branch
        %455 = sbr.rel (%p453) target = $region16
      $region15: #{decoder_forward_pallas.5} parent=11 // pred_region
        _
      $region16: #{decoder_forward_pallas.5} parent=11 // pred_fallthru
        _
      // Predicated region
      $region17: #{decoder_forward_pallas.5} parent=11 // pred_check
        %p456 = pneg %p118
      $region18: #{decoder_forward_pallas.5} parent=11 // pred_check_branch
        %458 = sbr.rel (%p456) target = $region20
      $region19: #{decoder_forward_pallas.5} parent=11 // pred_region
        _
      $region20: #{decoder_forward_pallas.5} parent=11 // pred_fallthru
        _
      // Predicated region
      $region21: #{decoder_forward_pallas.5} parent=11 // pred_check
        %p459 = pneg %p139
      $region22: #{decoder_forward_pallas.5} parent=11 // pred_check_branch
        %461 = sbr.rel (%p459) target = $region24
      $region23: #{decoder_forward_pallas.5} parent=11 // pred_region
        _
      $region24: #{decoder_forward_pallas.5} parent=11 // pred_fallthru
        _
      // Predicated region
      $region25: #{decoder_forward_pallas.5} parent=11 // pred_check
        %p462 = pneg %p160
      $region26: #{decoder_forward_pallas.5} parent=11 // pred_check_branch
        %464 = sbr.rel (%p462) target = $region28
      $region27: #{decoder_forward_pallas.5} parent=11 // pred_region
        _
      $region28: #{decoder_forward_pallas.5} parent=11 // pred_fallthru
        _
      // Predicated region
      $region29: #{decoder_forward_pallas.5} parent=11 // pred_check
        %p465 = pneg %p181
      $region30: #{decoder_forward_pallas.5} parent=11 // pred_check_branch
        %467 = sbr.rel (%p465) target = $region32
      $region31: #{decoder_forward_pallas.5} parent=11 // pred_region
        _
      $region32: #{decoder_forward_pallas.5} parent=11 // pred_fallthru
        _
      // Predicated region
      $region33: #{decoder_forward_pallas.5} parent=11 // pred_check
        %p468 = pneg %p202
      $region34: #{decoder_forward_pallas.5} parent=11 // pred_check_branch
        %470 = sbr.rel (%p468) target = $region36
      $region35: #{decoder_forward_pallas.5} parent=11 // pred_region
        _
      $region36: #{decoder_forward_pallas.5} parent=11 // pred_fallthru
        _
      // Predicated region
      $region37: #{decoder_forward_pallas.5} parent=11 // pred_check
        %p471 = pneg %p223
      $region38: #{decoder_forward_pallas.5} parent=11 // pred_check_branch
        %473 = sbr.rel (%p471) target = $region40
      $region39: #{decoder_forward_pallas.5} parent=11 // pred_region
        _
      $region40: #{decoder_forward_pallas.5} parent=11 // pred_fallthru
        _
      // Predicated region
      $region41: #{decoder_forward_pallas.5} parent=11 // pred_check
        %p474 = pneg %p244
      $region42: #{decoder_forward_pallas.5} parent=11 // pred_check_branch
        %476 = sbr.rel (%p474) target = $region44
      $region43: #{decoder_forward_pallas.5} parent=11 // pred_region
        _
      $region44: #{decoder_forward_pallas.5} parent=11 // pred_fallthru
        _
      // Predicated region
      $region45: #{decoder_forward_pallas.5} parent=11 // pred_check
        %p477 = pneg %p265
      $region46: #{decoder_forward_pallas.5} parent=11 // pred_check_branch
        %479 = sbr.rel (%p477) target = $region48
      $region47: #{decoder_forward_pallas.5} parent=11 // pred_region
        _
      $region48: #{decoder_forward_pallas.5} parent=11 // pred_fallthru
        _
      // Predicated region
      $region49: #{decoder_forward_pallas.5} parent=11 // pred_check
        %p480 = pneg %p286
      $region50: #{decoder_forward_pallas.5} parent=11 // pred_check_branch
        %482 = sbr.rel (%p480) target = $region52
      $region51: #{decoder_forward_pallas.5} parent=11 // pred_region
        _
      $region52: #{decoder_forward_pallas.5} parent=11 // pred_fallthru
        _
      // Predicated region
      $region53: #{decoder_forward_pallas.5} parent=11 // pred_check
        %p483 = pneg %p307
      $region54: #{decoder_forward_pallas.5} parent=11 // pred_check_branch
        %485 = sbr.rel (%p483) target = $region56
      $region55: #{decoder_forward_pallas.5} parent=11 // pred_region
        _
      $region56: #{decoder_forward_pallas.5} parent=11 // pred_fallthru
        _
      // Predicated region
      $region57: #{decoder_forward_pallas.5} parent=11 // pred_check
        %p486 = pneg %p328
      $region58: #{decoder_forward_pallas.5} parent=11 // pred_check_branch
        %488 = sbr.rel (%p486) target = $region60
      $region59: #{decoder_forward_pallas.5} parent=11 // pred_region
        _
      $region60: #{decoder_forward_pallas.5} parent=11 // pred_fallthru
        _
      // Predicated region
      $region61: #{decoder_forward_pallas.5} parent=11 // pred_check
        %p489 = pneg %p349
      $region62: #{decoder_forward_pallas.5} parent=11 // pred_check_branch
        %491 = sbr.rel (%p489) target = $region64
      $region63: #{decoder_forward_pallas.5} parent=11 // pred_region
        _
      $region64: #{decoder_forward_pallas.5} parent=11 // pred_fallthru
        _
      // Predicated region
      $region65: #{decoder_forward_pallas.5} parent=11 // pred_check
        %p492 = pneg %p370
      $region66: #{decoder_forward_pallas.5} parent=11 // pred_check_branch
        %494 = sbr.rel (%p492) target = $region68
      $region67: #{decoder_forward_pallas.5} parent=11 // pred_region
        _
      $region68: #{decoder_forward_pallas.5} parent=11 // pred_fallthru
        _
      // Predicated region
      $region69: #{decoder_forward_pallas.5} parent=11 // pred_check
        %p495 = pneg %p391
      $region70: #{decoder_forward_pallas.5} parent=11 // pred_check_branch
        %497 = sbr.rel (%p495) target = $region72
      $region71: #{decoder_forward_pallas.5} parent=11 // pred_region
        _
      $region72: #{decoder_forward_pallas.5} parent=11 // pred_fallthru
        _
      // Predicated region
      $region73: #{decoder_forward_pallas.5} parent=11 // pred_check
        %p498 = pneg %p412
      $region74: #{decoder_forward_pallas.5} parent=11 // pred_check_branch
        %500 = sbr.rel (%p498) target = $region76
      $region75: #{decoder_forward_pallas.5} parent=11 // pred_region
        _
      $region76: #{decoder_forward_pallas.5} parent=11 // pred_fallthru
        _
    $region12: #{decoder_forward_pallas.5} parent=5 // pred_fallthru
      _
    %p501 = scmp.lt.s32.totalorder %s24, 2
    // Predicated region
    $region77: #{decoder_forward_pallas.5} parent=5 // pred_check
      %p502 = pneg %p501
    $region78: #{decoder_forward_pallas.5} parent=5 // pred_check_branch
      %504 = sbr.rel (%p502) target = $region80
    $region79: #{decoder_forward_pallas.5} parent=5 // pred_region
      // Predicated region
      $region81: #{decoder_forward_pallas.5} parent=79 // pred_check
        %p505 = pneg %p44
      $region82: #{decoder_forward_pallas.5} parent=79 // pred_check_branch
        %507 = sbr.rel (%p505) target = $region84
      $region83: #{decoder_forward_pallas.5} parent=79 // pred_region
        %s508 = smul.u32 2, %s24
        %p509 = scmp.lt.s32.totalorder %s508, 3
        %s510 = scalar_select %p509, %s508, 3
        %s511 = smul.addr %s510, 8
        %s512 = scalar_lea.vmem %s0, %s511
        %s513 = smul.u32 2, %s24
      $region84: #{decoder_forward_pallas.5} parent=79 // pred_fallthru
        _
      // Predicated region
      $region85: #{decoder_forward_pallas.5} parent=79 // pred_check
        %p514 = pneg %p70
      $region86: #{decoder_forward_pallas.5} parent=79 // pred_check_branch
        %516 = sbr.rel (%p514) target = $region88
      $region87: #{decoder_forward_pallas.5} parent=79 // pred_region
        %s517 = smul.u32 2, %s24
        %p518 = scmp.lt.s32.totalorder %s517, 3
        %s519 = scalar_select %p518, %s517, 3
        %s520 = smul.addr %s519, 8
        %s521 = scalar_lea.vmem %s1, %s520
        %s522 = smul.u32 2, %s24
      $region88: #{decoder_forward_pallas.5} parent=79 // pred_fallthru
        _
    $region80: #{decoder_forward_pallas.5} parent=5 // pred_fallthru
      _
    %p523 = scmp.le.s32.totalorder 1, %s24
    %p524 = scmp.lt.s32.totalorder %s24, 3
    %p525 = pnand %p523, %p524
    %p526 = pneg %p525
    // Predicated region
    $region89: #{decoder_forward_pallas.5} parent=5 // pred_check
      _
    $region90: #{decoder_forward_pallas.5} parent=5 // pred_check_branch
      %528 = sbr.rel (%p525) target = $region92
    $region91: #{decoder_forward_pallas.5} parent=5 // pred_region
      %s529 = ssub.s32 %s24, 1
      %s530 = smul.u32 2, %s29
      %p531 = scmp.lt.s32.totalorder %s530, 3
      %s532 = scalar_select %p531, %s530, 3
      %s533 = smul.addr %s532, 8
      %s534 = scalar_lea.vmem %s0, %s533
      %p535 = pneg %p50
      %p536 = pneg %p47
      %s537 = smul.u32 2, %s29
      %p538 = scmp.lt.s32.totalorder %s537, 3
      %s539 = scalar_select %p538, %s537, 3
      %s540 = smul.addr %s539, 8
      %s541 = scalar_lea.vmem %s1, %s540
      %p542 = pneg %p76
      %p543 = pneg %p73
      %p544 = pneg %p97
      %p545 = pneg %p94
      %p546 = pneg %p118
      %p547 = pneg %p115
      %p548 = pneg %p139
      %p549 = pneg %p136
      %p550 = pneg %p160
      %p551 = pneg %p157
      %p552 = pneg %p181
      %p553 = pneg %p178
      %p554 = pneg %p202
      %p555 = pneg %p199
      %p556 = pneg %p223
      %p557 = pneg %p220
      %p558 = pneg %p244
      %p559 = pneg %p241
      %p560 = pneg %p265
      %p561 = pneg %p262
      %p562 = pneg %p286
      %p563 = pneg %p283
      %p564 = pneg %p307
      %p565 = pneg %p304
      %p566 = pneg %p328
      %p567 = pneg %p325
      %p568 = pneg %p349
      %p569 = pneg %p346
      %p570 = pneg %p370
      %p571 = pneg %p367
      %p572 = pneg %p391
      %p573 = pneg %p388
      %p574 = pneg %p412
      %p575 = pneg %p409
      %p576 = pneg %p438
      %p577 = pneg %p435
      %s578 = smul.u32 2, %s29
      %p579 = scmp.lt.s32.totalorder %s578, 3
      %s580 = scalar_select %p579, %s578, 3
      %s581 = smul.addr %s580, 8
      %s582 = scalar_lea.vmem %s18, %s581
      %s583 = smul.u32 2, %s29
      %p584 = scmp.lt.s32.totalorder %s583, 3
      %s585 = scalar_select %p584, %s583, 3
      %s586 = smul.addr %s585, 8
      %s587 = scalar_lea.vmem %s0, %s586
      %s588 = smul.u32 2, %s29
      %s589 = smul.u32 2, %s29
      %p590 = scmp.lt.s32.totalorder %s589, 3
      %s591 = scalar_select %p590, %s589, 3
      %s592 = smul.addr %s591, 8
      %s593 = scalar_lea.vmem %s1, %s592
      %s594 = smul.u32 2, %s29
      %s595 = smul.u32 2, %s29
      %p596 = scmp.lt.s32.totalorder %s595, 3
      %s597 = scalar_select %p596, %s595, 3
      %s598 = smul.addr %s597, 8
      %s599 = scalar_lea.vmem %s18, %s598
      %s600 = smul.u32 2, %s29
      %v602 = vld [vmem:[%s587] sm:$0xff]
      %v603 = vld [vmem:[%s587 + $0x8] sm:$0xff]
      %v604 = vld [vmem:[%s593] sm:$0xff]
      %v605 = vld [vmem:[%s593 + $0x8] sm:$0xff]
      %v606 = vlaneseq
      %v607 = vshrl.u32 %v606, 7
      %v608 = vlaneseq
      %v609 = vand.u32 %v608, 127
      %vm610 = vcmp.gt.s32.totalorder %v609, %v607
      %v611 = vrot.slane %v604, 4
      %v612 = vadd.f32 %v604, %v611
      %v613 = vrot.slane %v612, 2
      %v614 = vadd.f32 %v612, %v613
      %v615 = vrot.slane %v614, 1
      %v616 = vadd.f32 %v614, %v615
      %v617 = vrot.slane %v605, 4
      %v618 = vadd.f32 %v605, %v617
      %v619 = vrot.slane %v618, 2
      %v620 = vadd.f32 %v618, %v619
      %v621 = vrot.slane %v620, 1
      %v622 = vadd.f32 %v620, %v621
      %v623 = vrcp.pop 8.0
      %v624 = vmul.f32 %v616, %v623
      %v625 = vmul.f32 %v622, %v623
      %v626 = vsub.f32 %v604, %v624
      %v627 = vsub.f32 %v605, %v625
      %v628 = vmul.f32 %v626, %v626
      %v629 = vmul.f32 %v627, %v627
      %v630 = vrot.slane %v628, 4
      %v631 = vadd.f32 %v628, %v630
      %v632 = vrot.slane %v631, 2
      %v633 = vadd.f32 %v631, %v632
      %v634 = vrot.slane %v633, 1
      %v635 = vadd.f32 %v633, %v634
      %v636 = vrot.slane %v629, 4
      %v637 = vadd.f32 %v629, %v636
      %v638 = vrot.slane %v637, 2
      %v639 = vadd.f32 %v637, %v638
      %v640 = vrot.slane %v639, 1
      %v641 = vadd.f32 %v639, %v640
      %v642 = vmul.f32 %v635, %v623
      %v643 = vmul.f32 %v641, %v623
      %v644 = vadd.f32 %v642, 1e-05
      %v645 = vadd.f32 %v643, 1e-05
      %v646 = vrsqrt.pop %v644
      %v647 = vrsqrt.pop %v645
      %v648 = vmul.f32 %v626, %v646
      %v649 = vmul.f32 %v627, %v647
      %v650 = vld [vmem:[%s2] sm:$0xff]
      %v651 = vmul.f32 %v648, %v650
      %v652 = vmul.f32 %v649, %v650
      %v653 = vld [vmem:[%s3] sm:$0xff]
      %v654 = vadd.f32 %v651, %v653
      %v655 = vadd.f32 %v652, %v653
      %v656 = vpack.c.bf16 %v655, %v654
      %v657 = vld [vmem:[%s4] sm:$0xff]
      %v658 = vld [vmem:[%s4 + $0x8] sm:$0xf]
      %v659 = vld [vmem:[%s4 + $0xc] sm:$0xff]
      %v660 = vld [vmem:[%s4 + $0x14] sm:$0xf]
      %v661 = vld [vmem:[%s4 + $0x18] sm:$0xff]
      %v662 = vld [vmem:[%s4 + $0x20] sm:$0xf]
      %v663 = vld [vmem:[%s4 + $0x24] sm:$0xff]
      %v664 = vld [vmem:[%s4 + $0x2c] sm:$0xf]
      %v665 = vld [vmem:[%s4 + $0x30] sm:$0xff]
      %v666 = vld [vmem:[%s4 + $0x38] sm:$0xf]
      %v667 = vld [vmem:[%s4 + $0x3c] sm:$0xff]
      %v668 = vld [vmem:[%s4 + $0x44] sm:$0xf]
      %v669 = vld [vmem:[%s4 + $0x48] sm:$0xff]
      %v670 = vld [vmem:[%s4 + $0x50] sm:$0xf]
      %v671 = vld [vmem:[%s4 + $0x54] sm:$0xff]
      %v672 = vld [vmem:[%s4 + $0x5c] sm:$0xf]
      %v673 = vld [vmem:[%s4 + $0x60] sm:$0xff]
      %v674 = vld [vmem:[%s4 + $0x68] sm:$0xf]
      %v675 = vld [vmem:[%s4 + $0x6c] sm:$0xff]
      %v676 = vld [vmem:[%s4 + $0x74] sm:$0xf]
      %v677 = vld [vmem:[%s4 + $0x78] sm:$0xff]
      %v678 = vld [vmem:[%s4 + $0x80] sm:$0xf]
      %v679 = vld [vmem:[%s4 + $0x84] sm:$0xff]
      %v680 = vld [vmem:[%s4 + $0x8c] sm:$0xf]
      %v681 = vld [vmem:[%s4 + $0x90] sm:$0xff]
      %v682 = vld [vmem:[%s4 + $0x98] sm:$0xf]
      %v683 = vld [vmem:[%s4 + $0x9c] sm:$0xff]
      %v684 = vld [vmem:[%s4 + $0xa4] sm:$0xf]
      %v685 = vld [vmem:[%s4 + $0xa8] sm:$0xff]
      %v686 = vld [vmem:[%s4 + $0xb0] sm:$0xf]
      %v687 = vld [vmem:[%s4 + $0xb4] sm:$0xff]
      %v688 = vld [vmem:[%s4 + $0xbc] sm:$0xf]
      %v689 = vld [vmem:[%s5] sm:$0x7]
      %v691 = vlaneseq
      %v692 = vshrl.u32 %v691, 7
      %v693 = vsub.s32 0, %v692
      %v694 = vrot.slane %v689, %v693
      %v695 = vlaneseq
      %v696 = vshrl.u32 %v695, 7
      %v697 = vsub.s32 1, %v696
      %v698 = vrot.slane %v689, %v697
      %v699 = vlaneseq
      %v700 = vshrl.u32 %v699, 7
      %v701 = vsub.s32 2, %v700
      %v702 = vrot.slane %v689, %v701
      %v738 = vunpack.c.l.b16 %v657
      %v739 = vunpack.c.h.b16 %v657
      %v740 = vunpack.c.l.b16 %v658
      %v741 = vunpack.c.l.b16 %v659
      %v742 = vunpack.c.h.b16 %v659
      %v743 = vunpack.c.l.b16 %v660
      %v744 = vunpack.c.l.b16 %v661
      %v745 = vunpack.c.h.b16 %v661
      %v746 = vunpack.c.l.b16 %v662
      %v747 = vunpack.c.l.b16 %v663
      %v748 = vunpack.c.h.b16 %v663
      %v749 = vunpack.c.l.b16 %v664
      %v750 = vunpack.c.l.b16 %v665
      %v751 = vunpack.c.h.b16 %v665
      %v752 = vunpack.c.l.b16 %v666
      %v753 = vunpack.c.l.b16 %v667
      %v754 = vunpack.c.h.b16 %v667
      %v755 = vunpack.c.l.b16 %v668
      %v756 = vunpack.c.l.b16 %v669
      %v757 = vunpack.c.h.b16 %v669
      %v758 = vunpack.c.l.b16 %v670
      %v759 = vunpack.c.l.b16 %v671
      %v760 = vunpack.c.h.b16 %v671
      %v761 = vunpack.c.l.b16 %v672
      %v762 = vunpack.c.l.b16 %v673
      %v763 = vunpack.c.h.b16 %v673
      %v764 = vunpack.c.l.b16 %v674
      %v765 = vunpack.c.l.b16 %v675
      %v766 = vunpack.c.h.b16 %v675
      %v767 = vunpack.c.l.b16 %v676
      %v768 = vunpack.c.l.b16 %v677
      %v769 = vunpack.c.h.b16 %v677
      %v770 = vunpack.c.l.b16 %v678
      %v771 = vunpack.c.l.b16 %v679
      %v772 = vunpack.c.h.b16 %v679
      %v773 = vunpack.c.l.b16 %v680
      %v774 = vunpack.c.l.b16 %v681
      %v775 = vunpack.c.h.b16 %v681
      %v776 = vunpack.c.l.b16 %v682
      %v777 = vunpack.c.l.b16 %v683
      %v778 = vunpack.c.h.b16 %v683
      %v779 = vunpack.c.l.b16 %v684
      %v780 = vunpack.c.l.b16 %v685
      %v781 = vunpack.c.h.b16 %v685
      %v782 = vunpack.c.l.b16 %v686
      %v783 = vunpack.c.l.b16 %v687
      %v784 = vunpack.c.h.b16 %v687
      %v785 = vunpack.c.l.b16 %v688
      %v786 = vpack.c.b16 %v741, %v738
      %v787 = vpack.c.b16 %v742, %v739
      %v788 = vpack.c.b16 %v743, %v740
      %v789 = vpack.c.b16 %v747, %v744
      %v790 = vpack.c.b16 %v748, %v745
      %v791 = vpack.c.b16 %v749, %v746
      %v792 = vpack.c.b16 %v753, %v750
      %v793 = vpack.c.b16 %v754, %v751
      %v794 = vpack.c.b16 %v755, %v752
      %v795 = vpack.c.b16 %v759, %v756
      %v796 = vpack.c.b16 %v760, %v757
      %v797 = vpack.c.b16 %v761, %v758
      %v798 = vpack.c.b16 %v765, %v762
      %v799 = vpack.c.b16 %v766, %v763
      %v800 = vpack.c.b16 %v767, %v764
      %v801 = vpack.c.b16 %v771, %v768
      %v802 = vpack.c.b16 %v772, %v769
      %v803 = vpack.c.b16 %v773, %v770
      %v804 = vpack.c.b16 %v777, %v774
      %v805 = vpack.c.b16 %v778, %v775
      %v806 = vpack.c.b16 %v779, %v776
      %v807 = vpack.c.b16 %v783, %v780
      %v808 = vpack.c.b16 %v784, %v781
      %v809 = vpack.c.b16 %v785, %v782
      %834 = vmatprep.subr.bf16.mxu0 %v787
      %835 = vmatpush1.bf16.msra.mxu0 %v786
      %836 = vmatprep.subr.bf16.mxu0 %v790
      %837 = vmatpush1.bf16.msra.mxu0 %v789
      %838 = vmatprep.subr.bf16.mxu0 %v793
      %839 = vmatpush1.bf16.msra.mxu0 %v792
      %840 = vmatprep.subr.bf16.mxu0 %v796
      %841 = vmatpush1.bf16.msra.mxu0 %v795
      %842 = vmatprep.subr.bf16.mxu0 %v799
      %843 = vmatpush1.bf16.msra.mxu0 %v798
      %844 = vmatprep.subr.bf16.mxu0 %v802
      %845 = vmatpush1.bf16.msra.mxu0 %v801
      %846 = vmatprep.subr.bf16.mxu0 %v805
      %847 = vmatpush1.bf16.msra.mxu0 %v804
      %848 = vmatprep.subr.bf16.mxu0 %v808
      %849 = vmatpush1.bf16.msra.mxu0 %v807
      %850 = vmatprep.subr.bf16.mxu0 0
      %851 = vmatpush1.bf16.msra.mxu0 0
      %852 = vmatprep.subr.bf16.mxu0 0
      %853 = vmatpush1.bf16.msra.mxu0 0
      %854 = vmatprep.subr.bf16.mxu0 0
      %855 = vmatpush1.bf16.msra.mxu0 0
      %856 = vmatprep.subr.bf16.mxu0 0
      %857 = vmatpush1.bf16.msra.mxu0 0
      %858 = vmatprep.subr.bf16.mxu0 0
      %859 = vmatpush1.bf16.msra.mxu0 0
      %860 = vmatprep.subr.bf16.mxu0 0
      %861 = vmatpush1.bf16.msra.mxu0 0
      %862 = vmatprep.subr.bf16.mxu0 0
      %863 = vmatpush1.bf16.msra.mxu0 0
      %864 = vmatprep.subr.bf16.mxu0 0
      %865 = vmatpush1.bf16.msra.mxu0 0
      %866 = vmatprep.mubr.bf16.mxu0 0
      %867 = vmatmul.mubr.bf16.gmra.mrb[0].mxu0 %v656
      %v868 = vpop.f32.mrb[0].mxu0
      %v869 = vadd.f32 %v694, %v868
      %v870 = vpop.f32.mrb[0].mxu0
      %v871 = vadd.f32 %v698, %v870
      %v872 = vpop.f32.mrb[0].mxu0
      %v873 = vadd.f32 %v694, %v872
      %v874 = vpop.f32.mrb[0].mxu0
      %v875 = vadd.f32 %v698, %v874
      %876 = vdwg.mxu0
      %877 = vmatprep.subr.bf16.mxu0 0
      %878 = vmatpush1.bf16.msra.mxu0 %v788
      %879 = vmatprep.subr.bf16.mxu0 0
      %880 = vmatpush1.bf16.msra.mxu0 %v791
      %881 = vmatprep.subr.bf16.mxu0 0
      %882 = vmatpush1.bf16.msra.mxu0 %v794
      %883 = vmatprep.subr.bf16.mxu0 0
      %884 = vmatpush1.bf16.msra.mxu0 %v797
      %885 = vmatprep.subr.bf16.mxu0 0
      %886 = vmatpush1.bf16.msra.mxu0 %v800
      %887 = vmatprep.subr.bf16.mxu0 0
      %888 = vmatpush1.bf16.msra.mxu0 %v803
      %889 = vmatprep.subr.bf16.mxu0 0
      %890 = vmatpush1.bf16.msra.mxu0 %v806
      %891 = vmatprep.subr.bf16.mxu0 0
      %892 = vmatpush1.bf16.msra.mxu0 %v809
      %893 = vmatprep.subr.bf16.mxu0 0
      %894 = vmatpush1.bf16.msra.mxu0 0
      %895 = vmatprep.subr.bf16.mxu0 0
      %896 = vmatpush1.bf16.msra.mxu0 0
      %897 = vmatprep.subr.bf16.mxu0 0
      %898 = vmatpush1.bf16.msra.mxu0 0
      %899 = vmatprep.subr.bf16.mxu0 0
      %900 = vmatpush1.bf16.msra.mxu0 0
      %901 = vmatprep.subr.bf16.mxu0 0
      %902 = vmatpush1.bf16.msra.mxu0 0
      %903 = vmatprep.subr.bf16.mxu0 0
      %904 = vmatpush1.bf16.msra.mxu0 0
      %905 = vmatprep.subr.bf16.mxu0 0
      %906 = vmatpush1.bf16.msra.mxu0 0
      %907 = vmatprep.subr.bf16.mxu0 0
      %908 = vmatpush1.bf16.msra.mxu0 0
      %909 = vmatprep.mubr.bf16.mxu0 0
      %910 = vmatmul.mubr.bf16.gmra.mrb[0].mxu0 %v656
      %v911 = vpop.f32.mrb[0].mxu0
      %v912 = vadd.f32 %v702, %v911
      %v913 = vpop.f32.mrb[0].mxu0
      %v914 = vpop.f32.mrb[0].mxu0
      %v915 = vadd.f32 %v702, %v914
      %v916 = vpop.f32.mrb[0].mxu0
      %917 = vdwg.mxu0
      %v918 = vpack.c.bf16 %v869, %v869
      %v919 = vpack.c.bf16 %v873, %v873
      %v920 = vpack.c.bf16 %v871, %v871
      %v921 = vpack.c.bf16 %v875, %v875
      %v922 = vpack.c.bf16 %v912, %v912
      %v923 = vpack.c.bf16 %v915, %v915
      %vm924 = vcmask 261120
      %v926 = vsel %vm924, %v918, 0
      %v929 = vsel %vm924, %v920, 0
      %931 = vmatprep.subr.bf16.mxu0 0
      %932 = vmatpush1.bf16.xpose.msra.mxu0 %v929
      %933 = vmatprep.subr.bf16.mxu0 0
      %934 = vmatpush1.bf16.xpose.msra.mxu0 0
      %935 = vmatprep.subr.bf16.mxu0 0
      %936 = vmatpush1.bf16.xpose.msra.mxu0 0
      %937 = vmatprep.subr.bf16.mxu0 0
      %938 = vmatpush1.bf16.xpose.msra.mxu0 0
      %939 = vmatprep.subr.bf16.mxu0 0
      %940 = vmatpush1.bf16.xpose.msra.mxu0 0
      %941 = vmatprep.subr.bf16.mxu0 0
      %942 = vmatpush1.bf16.xpose.msra.mxu0 0
      %943 = vmatprep.subr.bf16.mxu0 0
      %944 = vmatpush1.bf16.xpose.msra.mxu0 0
      %945 = vmatprep.subr.bf16.mxu0 0
      %946 = vmatpush1.bf16.xpose.msra.mxu0 0
      %947 = vmatprep.subr.bf16.mxu0 0
      %948 = vmatpush1.bf16.xpose.msra.mxu0 0
      %949 = vmatprep.subr.bf16.mxu0 0
      %950 = vmatpush1.bf16.xpose.msra.mxu0 0
      %951 = vmatprep.subr.bf16.mxu0 0
      %952 = vmatpush1.bf16.xpose.msra.mxu0 0
      %953 = vmatprep.subr.bf16.mxu0 0
      %954 = vmatpush1.bf16.xpose.msra.mxu0 0
      %955 = vmatprep.subr.bf16.mxu0 0
      %956 = vmatpush1.bf16.xpose.msra.mxu0 0
      %957 = vmatprep.subr.bf16.mxu0 0
      %958 = vmatpush1.bf16.xpose.msra.mxu0 0
      %959 = vmatprep.subr.bf16.mxu0 0
      %960 = vmatpush1.bf16.xpose.msra.mxu0 0
      %961 = vmatprep.subr.bf16.mxu0 0
      %962 = vmatpush1.bf16.xpose.msra.mxu0 0
      %963 = vmatprep.mubr.bf16.mxu0 0
      %964 = vmatmul.mubr.bf16.gmra.mrb[0].mxu0 %v926
      %v965 = vpop.f32.mrb[0].mxu0
      %v966 = vadd.f32 0.0, %v965
      %v967 = vpop.f32.mrb[0].mxu0
      %v968 = vpop.f32.mrb[0].mxu0
      %v969 = vpop.f32.mrb[0].mxu0
      %970 = vdwg.mxu0
      %v972 = vsel %vm924, %v919, 0
      %v975 = vsel %vm924, %v921, 0
      %977 = vmatprep.subr.bf16.mxu0 0
      %978 = vmatpush1.bf16.xpose.msra.mxu0 %v975
      %979 = vmatprep.subr.bf16.mxu0 0
      %980 = vmatpush1.bf16.xpose.msra.mxu0 0
      %981 = vmatprep.subr.bf16.mxu0 0
      %982 = vmatpush1.bf16.xpose.msra.mxu0 0
      %983 = vmatprep.subr.bf16.mxu0 0
      %984 = vmatpush1.bf16.xpose.msra.mxu0 0
      %985 = vmatprep.subr.bf16.mxu0 0
      %986 = vmatpush1.bf16.xpose.msra.mxu0 0
      %987 = vmatprep.subr.bf16.mxu0 0
      %988 = vmatpush1.bf16.xpose.msra.mxu0 0
      %989 = vmatprep.subr.bf16.mxu0 0
      %990 = vmatpush1.bf16.xpose.msra.mxu0 0
      %991 = vmatprep.subr.bf16.mxu0 0
      %992 = vmatpush1.bf16.xpose.msra.mxu0 0
      %993 = vmatprep.subr.bf16.mxu0 0
      %994 = vmatpush1.bf16.xpose.msra.mxu0 0
      %995 = vmatprep.subr.bf16.mxu0 0
      %996 = vmatpush1.bf16.xpose.msra.mxu0 0
      %997 = vmatprep.subr.bf16.mxu0 0
      %998 = vmatpush1.bf16.xpose.msra.mxu0 0
      %999 = vmatprep.subr.bf16.mxu0 0
      %1000 = vmatpush1.bf16.xpose.msra.mxu0 0
      %1001 = vmatprep.subr.bf16.mxu0 0
      %1002 = vmatpush1.bf16.xpose.msra.mxu0 0
      %1003 = vmatprep.subr.bf16.mxu0 0
      %1004 = vmatpush1.bf16.xpose.msra.mxu0 0
      %1005 = vmatprep.subr.bf16.mxu0 0
      %1006 = vmatpush1.bf16.xpose.msra.mxu0 0
      %1007 = vmatprep.subr.bf16.mxu0 0
      %1008 = vmatpush1.bf16.xpose.msra.mxu0 0
      %1009 = vmatprep.mubr.bf16.mxu0 0
      %1010 = vmatmul.mubr.bf16.gmra.mrb[0].mxu0 %v972
      %v1011 = vpop.f32.mrb[0].mxu0
      %v1012 = vadd.f32 0.0, %v1011
      %v1013 = vpop.f32.mrb[0].mxu0
      %v1014 = vpop.f32.mrb[0].mxu0
      %v1015 = vpop.f32.mrb[0].mxu0
      %1016 = vdwg.mxu0
      %v1017 = vsel %vm610, 1, 0
      %vm1018 = vcmp.eq.s32.totalorder %v1017, 1
      %v1019 = vsel %vm1018, -inf, %v966
      %v1020 = vsel %vm1018, -inf, %v1012
      %v1021 = vmul.f32 %v1019, 0.17677669
      %v1022 = vmul.f32 %v1020, 0.17677669
      %vm1023 = vcmask 64512
      %v1024 = vsel %vm1023, %v1021, -inf
      %1025 = vmax.xlane.f32.xlu0 %v1024
      %v1026 = vpop.xlane.xlu0 %1025
      %v1027 = vsel %vm1023, %v1022, -inf
      %1028 = vmax.xlane.f32.xlu0 %v1027
      %v1029 = vpop.xlane.xlu0 %1028
      %v1030 = vsub.f32 %v1021, %v1026
      %v1031 = vsub.f32 %v1022, %v1029
      %v1032 = vmul.f32 %v1030, 1.442695
      %v1033 = vpow.pop %v1032
      %v1034 = vmul.f32 %v1031, 1.442695
      %v1035 = vpow.pop %v1034
      %v1036 = vsel %vm1023, %v1033, 0.0
      %1037 = vadd.xlane.f32.xlu0 %v1036
      %v1038 = vpop.xlane.xlu0 %1037
      %v1039 = vsel %vm1023, %v1035, 0.0
      %1040 = vadd.xlane.f32.xlu0 %v1039
      %v1041 = vpop.xlane.xlu0 %1040
      %v1042 = vrcp.pop %v1038
      %v1043 = vmul.f32 1.0, %v1042
      %v1044 = vrcp.pop %v1041
      %v1045 = vmul.f32 1.0, %v1044
      %v1046 = vmul.f32 %v1033, %v1043
      %v1047 = vmul.f32 %v1035, %v1045
      %v1048 = vpack.c.bf16 %v1046, %v1046
      %v1049 = vpack.c.bf16 %v1047, %v1047
      %v1051 = vsel %vm1023, %v1048, 0
      %vm1053 = vcmask 1043456
      %v1055 = vsel %vm1053, %v922, 0
      %1057 = vmatprep.subr.bf16.mxu0 0
      %1058 = vmatpush1.bf16.msra.mxu0 %v1055
      %1059 = vmatprep.subr.bf16.mxu0 0
      %1060 = vmatpush1.bf16.msra.mxu0 0
      %1061 = vmatprep.subr.bf16.mxu0 0
      %1062 = vmatpush1.bf16.msra.mxu0 0
      %1063 = vmatprep.subr.bf16.mxu0 0
      %1064 = vmatpush1.bf16.msra.mxu0 0
      %1065 = vmatprep.subr.bf16.mxu0 0
      %1066 = vmatpush1.bf16.msra.mxu0 0
      %1067 = vmatprep.subr.bf16.mxu0 0
      %1068 = vmatpush1.bf16.msra.mxu0 0
      %1069 = vmatprep.subr.bf16.mxu0 0
      %1070 = vmatpush1.bf16.msra.mxu0 0
      %1071 = vmatprep.subr.bf16.mxu0 0
      %1072 = vmatpush1.bf16.msra.mxu0 0
      %1073 = vmatprep.subr.bf16.mxu0 0
      %1074 = vmatpush1.bf16.msra.mxu0 0
      %1075 = vmatprep.subr.bf16.mxu0 0
      %1076 = vmatpush1.bf16.msra.mxu0 0
      %1077 = vmatprep.subr.bf16.mxu0 0
      %1078 = vmatpush1.bf16.msra.mxu0 0
      %1079 = vmatprep.subr.bf16.mxu0 0
      %1080 = vmatpush1.bf16.msra.mxu0 0
      %1081 = vmatprep.subr.bf16.mxu0 0
      %1082 = vmatpush1.bf16.msra.mxu0 0
      %1083 = vmatprep.subr.bf16.mxu0 0
      %1084 = vmatpush1.bf16.msra.mxu0 0
      %1085 = vmatprep.subr.bf16.mxu0 0
      %1086 = vmatpush1.bf16.msra.mxu0 0
      %1087 = vmatprep.subr.bf16.mxu0 0
      %1088 = vmatpush1.bf16.msra.mxu0 0
      %1089 = vmatprep.mubr.bf16.mxu0 0
      %1090 = vmatmul.mubr.bf16.gmra.mrb[0].mxu0 %v1051
      %v1091 = vpop.f32.mrb[0].mxu0
      %v1092 = vadd.f32 0.0, %v1091
      %v1093 = vpop.f32.mrb[0].mxu0
      %v1094 = vpop.f32.mrb[0].mxu0
      %v1095 = vpop.f32.mrb[0].mxu0
      %1096 = vdwg.mxu0
      %v1098 = vsel %vm1023, %v1049, 0
      %v1101 = vsel %vm1053, %v923, 0
      %1103 = vmatprep.subr.bf16.mxu0 0
      %1104 = vmatpush1.bf16.msra.mxu0 %v1101
      %1105 = vmatprep.subr.bf16.mxu0 0
      %1106 = vmatpush1.bf16.msra.mxu0 0
      %1107 = vmatprep.subr.bf16.mxu0 0
      %1108 = vmatpush1.bf16.msra.mxu0 0
      %1109 = vmatprep.subr.bf16.mxu0 0
      %1110 = vmatpush1.bf16.msra.mxu0 0
      %1111 = vmatprep.subr.bf16.mxu0 0
      %1112 = vmatpush1.bf16.msra.mxu0 0
      %1113 = vmatprep.subr.bf16.mxu0 0
      %1114 = vmatpush1.bf16.msra.mxu0 0
      %1115 = vmatprep.subr.bf16.mxu0 0
      %1116 = vmatpush1.bf16.msra.mxu0 0
      %1117 = vmatprep.subr.bf16.mxu0 0
      %1118 = vmatpush1.bf16.msra.mxu0 0
      %1119 = vmatprep.subr.bf16.mxu0 0
      %1120 = vmatpush1.bf16.msra.mxu0 0
      %1121 = vmatprep.subr.bf16.mxu0 0
      %1122 = vmatpush1.bf16.msra.mxu0 0
      %1123 = vmatprep.subr.bf16.mxu0 0
      %1124 = vmatpush1.bf16.msra.mxu0 0
      %1125 = vmatprep.subr.bf16.mxu0 0
      %1126 = vmatpush1.bf16.msra.mxu0 0
      %1127 = vmatprep.subr.bf16.mxu0 0
      %1128 = vmatpush1.bf16.msra.mxu0 0
      %1129 = vmatprep.subr.bf16.mxu0 0
      %1130 = vmatpush1.bf16.msra.mxu0 0
      %1131 = vmatprep.subr.bf16.mxu0 0
      %1132 = vmatpush1.bf16.msra.mxu0 0
      %1133 = vmatprep.subr.bf16.mxu0 0
      %1134 = vmatpush1.bf16.msra.mxu0 0
      %1135 = vmatprep.mubr.bf16.mxu0 0
      %1136 = vmatmul.mubr.bf16.gmra.mrb[0].mxu0 %v1098
      %v1137 = vpop.f32.mrb[0].mxu0
      %v1138 = vadd.f32 0.0, %v1137
      %v1139 = vpop.f32.mrb[0].mxu0
      %v1140 = vpop.f32.mrb[0].mxu0
      %v1141 = vpop.f32.mrb[0].mxu0
      %1142 = vdwg.mxu0
      %1144 = vrot.lane.b32.xlu0 %v918, 96
      %v1145 = vpop.permute.xlu0 %1144
      %1147 = vrot.lane.b32.xlu0 %v920, 96
      %v1148 = vpop.permute.xlu0 %1147
      %v1150 = vsel %vm924, %v1145, 0
      %v1153 = vsel %vm924, %v1148, 0
      %1155 = vmatprep.subr.bf16.mxu0 0
      %1156 = vmatpush1.bf16.xpose.msra.mxu0 %v1153
      %1157 = vmatprep.subr.bf16.mxu0 0
      %1158 = vmatpush1.bf16.xpose.msra.mxu0 0
      %1159 = vmatprep.subr.bf16.mxu0 0
      %1160 = vmatpush1.bf16.xpose.msra.mxu0 0
      %1161 = vmatprep.subr.bf16.mxu0 0
      %1162 = vmatpush1.bf16.xpose.msra.mxu0 0
      %1163 = vmatprep.subr.bf16.mxu0 0
      %1164 = vmatpush1.bf16.xpose.msra.mxu0 0
      %1165 = vmatprep.subr.bf16.mxu0 0
      %1166 = vmatpush1.bf16.xpose.msra.mxu0 0
      %1167 = vmatprep.subr.bf16.mxu0 0
      %1168 = vmatpush1.bf16.xpose.msra.mxu0 0
      %1169 = vmatprep.subr.bf16.mxu0 0
      %1170 = vmatpush1.bf16.xpose.msra.mxu0 0
      %1171 = vmatprep.subr.bf16.mxu0 0
      %1172 = vmatpush1.bf16.xpose.msra.mxu0 0
      %1173 = vmatprep.subr.bf16.mxu0 0
      %1174 = vmatpush1.bf16.xpose.msra.mxu0 0
      %1175 = vmatprep.subr.bf16.mxu0 0
      %1176 = vmatpush1.bf16.xpose.msra.mxu0 0
      %1177 = vmatprep.subr.bf16.mxu0 0
      %1178 = vmatpush1.bf16.xpose.msra.mxu0 0
      %1179 = vmatprep.subr.bf16.mxu0 0
      %1180 = vmatpush1.bf16.xpose.msra.mxu0 0
      %1181 = vmatprep.subr.bf16.mxu0 0
      %1182 = vmatpush1.bf16.xpose.msra.mxu0 0
      %1183 = vmatprep.subr.bf16.mxu0 0
      %1184 = vmatpush1.bf16.xpose.msra.mxu0 0
      %1185 = vmatprep.subr.bf16.mxu0 0
      %1186 = vmatpush1.bf16.xpose.msra.mxu0 0
      %1187 = vmatprep.mubr.bf16.mxu0 0
      %1188 = vmatmul.mubr.bf16.gmra.mrb[0].mxu0 %v1150
      %v1189 = vpop.f32.mrb[0].mxu0
      %v1190 = vadd.f32 0.0, %v1189
      %v1191 = vpop.f32.mrb[0].mxu0
      %v1192 = vpop.f32.mrb[0].mxu0
      %v1193 = vpop.f32.mrb[0].mxu0
      %1194 = vdwg.mxu0
      %1196 = vrot.lane.b32.xlu0 %v919, 96
      %v1197 = vpop.permute.xlu0 %1196
      %1199 = vrot.lane.b32.xlu0 %v921, 96
      %v1200 = vpop.permute.xlu0 %1199
      %v1202 = vsel %vm924, %v1197, 0
      %v1205 = vsel %vm924, %v1200, 0
      %1207 = vmatprep.subr.bf16.mxu0 0
      %1208 = vmatpush1.bf16.xpose.msra.mxu0 %v1205
      %1209 = vmatprep.subr.bf16.mxu0 0
      %1210 = vmatpush1.bf16.xpose.msra.mxu0 0
      %1211 = vmatprep.subr.bf16.mxu0 0
      %1212 = vmatpush1.bf16.xpose.msra.mxu0 0
      %1213 = vmatprep.subr.bf16.mxu0 0
      %1214 = vmatpush1.bf16.xpose.msra.mxu0 0
      %1215 = vmatprep.subr.bf16.mxu0 0
      %1216 = vmatpush1.bf16.xpose.msra.mxu0 0
      %1217 = vmatprep.subr.bf16.mxu0 0
      %1218 = vmatpush1.bf16.xpose.msra.mxu0 0
      %1219 = vmatprep.subr.bf16.mxu0 0
      %1220 = vmatpush1.bf16.xpose.msra.mxu0 0
      %1221 = vmatprep.subr.bf16.mxu0 0
      %1222 = vmatpush1.bf16.xpose.msra.mxu0 0
      %1223 = vmatprep.subr.bf16.mxu0 0
      %1224 = vmatpush1.bf16.xpose.msra.mxu0 0
      %1225 = vmatprep.subr.bf16.mxu0 0
      %1226 = vmatpush1.bf16.xpose.msra.mxu0 0
      %1227 = vmatprep.subr.bf16.mxu0 0
      %1228 = vmatpush1.bf16.xpose.msra.mxu0 0
      %1229 = vmatprep.subr.bf16.mxu0 0
      %1230 = vmatpush1.bf16.xpose.msra.mxu0 0
      %1231 = vmatprep.subr.bf16.mxu0 0
      %1232 = vmatpush1.bf16.xpose.msra.mxu0 0
      %1233 = vmatprep.subr.bf16.mxu0 0
      %1234 = vmatpush1.bf16.xpose.msra.mxu0 0
      %1235 = vmatprep.subr.bf16.mxu0 0
      %1236 = vmatpush1.bf16.xpose.msra.mxu0 0
      %1237 = vmatprep.subr.bf16.mxu0 0
      %1238 = vmatpush1.bf16.xpose.msra.mxu0 0
      %1239 = vmatprep.mubr.bf16.mxu0 0
      %1240 = vmatmul.mubr.bf16.gmra.mrb[0].mxu0 %v1202
      %v1241 = vpop.f32.mrb[0].mxu0
      %v1242 = vadd.f32 0.0, %v1241
      %v1243 = vpop.f32.mrb[0].mxu0
      %v1244 = vpop.f32.mrb[0].mxu0
      %v1245 = vpop.f32.mrb[0].mxu0
      %1246 = vdwg.mxu0
      %v1247 = vsel %vm1018, -inf, %v1190
      %v1248 = vsel %vm1018, -inf, %v1242
      %v1249 = vmul.f32 %v1247, 0.17677669
      %v1250 = vmul.f32 %v1248, 0.17677669
      %v1251 = vsel %vm1023, %v1249, -inf
      %1252 = vmax.xlane.f32.xlu0 %v1251
      %v1253 = vpop.xlane.xlu0 %1252
      %v1254 = vsel %vm1023, %v1250, -inf
      %1255 = vmax.xlane.f32.xlu0 %v1254
      %v1256 = vpop.xlane.xlu0 %1255
      %v1257 = vsub.f32 %v1249, %v1253
      %v1258 = vsub.f32 %v1250, %v1256
      %v1259 = vmul.f32 %v1257, 1.442695
      %v1260 = vpow.pop %v1259
      %v1261 = vmul.f32 %v1258, 1.442695
      %v1262 = vpow.pop %v1261
      %v1263 = vsel %vm1023, %v1260, 0.0
      %1264 = vadd.xlane.f32.xlu0 %v1263
      %v1265 = vpop.xlane.xlu0 %1264
      %v1266 = vsel %vm1023, %v1262, 0.0
      %1267 = vadd.xlane.f32.xlu0 %v1266
      %v1268 = vpop.xlane.xlu0 %1267
      %v1269 = vrcp.pop %v1265
      %v1270 = vmul.f32 1.0, %v1269
      %v1271 = vrcp.pop %v1268
      %v1272 = vmul.f32 1.0, %v1271
      %v1273 = vmul.f32 %v1260, %v1270
      %v1274 = vmul.f32 %v1262, %v1272
      %v1275 = vpack.c.bf16 %v1273, %v1273
      %v1276 = vpack.c.bf16 %v1274, %v1274
      %1278 = vrot.lane.b32.xlu0 %v922, 96
      %v1279 = vpop.permute.xlu0 %1278
      %v1281 = vsel %vm1023, %v1275, 0
      %v1284 = vsel %vm1053, %v1279, 0
      %1286 = vmatprep.subr.bf16.mxu0 0
      %1287 = vmatpush1.bf16.msra.mxu0 %v1284
      %1288 = vmatprep.subr.bf16.mxu0 0
      %1289 = vmatpush1.bf16.msra.mxu0 0
      %1290 = vmatprep.subr.bf16.mxu0 0
      %1291 = vmatpush1.bf16.msra.mxu0 0
      %1292 = vmatprep.subr.bf16.mxu0 0
      %1293 = vmatpush1.bf16.msra.mxu0 0
      %1294 = vmatprep.subr.bf16.mxu0 0
      %1295 = vmatpush1.bf16.msra.mxu0 0
      %1296 = vmatprep.subr.bf16.mxu0 0
      %1297 = vmatpush1.bf16.msra.mxu0 0
      %1298 = vmatprep.subr.bf16.mxu0 0
      %1299 = vmatpush1.bf16.msra.mxu0 0
      %1300 = vmatprep.subr.bf16.mxu0 0
      %1301 = vmatpush1.bf16.msra.mxu0 0
      %1302 = vmatprep.subr.bf16.mxu0 0
      %1303 = vmatpush1.bf16.msra.mxu0 0
      %1304 = vmatprep.subr.bf16.mxu0 0
      %1305 = vmatpush1.bf16.msra.mxu0 0
      %1306 = vmatprep.subr.bf16.mxu0 0
      %1307 = vmatpush1.bf16.msra.mxu0 0
      %1308 = vmatprep.subr.bf16.mxu0 0
      %1309 = vmatpush1.bf16.msra.mxu0 0
      %1310 = vmatprep.subr.bf16.mxu0 0
      %1311 = vmatpush1.bf16.msra.mxu0 0
      %1312 = vmatprep.subr.bf16.mxu0 0
      %1313 = vmatpush1.bf16.msra.mxu0 0
      %1314 = vmatprep.subr.bf16.mxu0 0
      %1315 = vmatpush1.bf16.msra.mxu0 0
      %1316 = vmatprep.subr.bf16.mxu0 0
      %1317 = vmatpush1.bf16.msra.mxu0 0
      %1318 = vmatprep.mubr.bf16.mxu0 0
      %1319 = vmatmul.mubr.bf16.gmra.mrb[0].mxu0 %v1281
      %v1320 = vpop.f32.mrb[0].mxu0
      %v1321 = vadd.f32 0.0, %v1320
      %v1322 = vpop.f32.mrb[0].mxu0
      %v1323 = vpop.f32.mrb[0].mxu0
      %v1324 = vpop.f32.mrb[0].mxu0
      %1325 = vdwg.mxu0
      %1327 = vrot.lane.b32.xlu0 %v923, 96
      %v1328 = vpop.permute.xlu0 %1327
      %v1330 = vsel %vm1023, %v1276, 0
      %v1333 = vsel %vm1053, %v1328, 0
      %1335 = vmatprep.subr.bf16.mxu0 0
      %1336 = vmatpush1.bf16.msra.mxu0 %v1333
      %1337 = vmatprep.subr.bf16.mxu0 0
      %1338 = vmatpush1.bf16.msra.mxu0 0
      %1339 = vmatprep.subr.bf16.mxu0 0
      %1340 = vmatpush1.bf16.msra.mxu0 0
      %1341 = vmatprep.subr.bf16.mxu0 0
      %1342 = vmatpush1.bf16.msra.mxu0 0
      %1343 = vmatprep.subr.bf16.mxu0 0
      %1344 = vmatpush1.bf16.msra.mxu0 0
      %1345 = vmatprep.subr.bf16.mxu0 0
      %1346 = vmatpush1.bf16.msra.mxu0 0
      %1347 = vmatprep.subr.bf16.mxu0 0
      %1348 = vmatpush1.bf16.msra.mxu0 0
      %1349 = vmatprep.subr.bf16.mxu0 0
      %1350 = vmatpush1.bf16.msra.mxu0 0
      %1351 = vmatprep.subr.bf16.mxu0 0
      %1352 = vmatpush1.bf16.msra.mxu0 0
      %1353 = vmatprep.subr.bf16.mxu0 0
      %1354 = vmatpush1.bf16.msra.mxu0 0
      %1355 = vmatprep.subr.bf16.mxu0 0
      %1356 = vmatpush1.bf16.msra.mxu0 0
      %1357 = vmatprep.subr.bf16.mxu0 0
      %1358 = vmatpush1.bf16.msra.mxu0 0
      %1359 = vmatprep.subr.bf16.mxu0 0
      %1360 = vmatpush1.bf16.msra.mxu0 0
      %1361 = vmatprep.subr.bf16.mxu0 0
      %1362 = vmatpush1.bf16.msra.mxu0 0
      %1363 = vmatprep.subr.bf16.mxu0 0
      %1364 = vmatpush1.bf16.msra.mxu0 0
      %1365 = vmatprep.subr.bf16.mxu0 0
      %1366 = vmatpush1.bf16.msra.mxu0 0
      %1367 = vmatprep.mubr.bf16.mxu0 0
      %1368 = vmatmul.mubr.bf16.gmra.mrb[0].mxu0 %v1330
      %v1369 = vpop.f32.mrb[0].mxu0
      %v1370 = vadd.f32 0.0, %v1369
      %v1371 = vpop.f32.mrb[0].mxu0
      %v1372 = vpop.f32.mrb[0].mxu0
      %v1373 = vpop.f32.mrb[0].mxu0
      %1374 = vdwg.mxu0
      %1375 = vrot.lane.b32.xlu0 %v918, 64
      %v1376 = vpop.permute.xlu0 %1375
      %1377 = vrot.lane.b32.xlu0 %v920, 64
      %v1378 = vpop.permute.xlu0 %1377
      %v1380 = vsel %vm924, %v1376, 0
      %v1383 = vsel %vm924, %v1378, 0
      %1385 = vmatprep.subr.bf16.mxu0 0
      %1386 = vmatpush1.bf16.xpose.msra.mxu0 %v1383
      %1387 = vmatprep.subr.bf16.mxu0 0
      %1388 = vmatpush1.bf16.xpose.msra.mxu0 0
      %1389 = vmatprep.subr.bf16.mxu0 0
      %1390 = vmatpush1.bf16.xpose.msra.mxu0 0
      %1391 = vmatprep.subr.bf16.mxu0 0
      %1392 = vmatpush1.bf16.xpose.msra.mxu0 0
      %1393 = vmatprep.subr.bf16.mxu0 0
      %1394 = vmatpush1.bf16.xpose.msra.mxu0 0
      %1395 = vmatprep.subr.bf16.mxu0 0
      %1396 = vmatpush1.bf16.xpose.msra.mxu0 0
      %1397 = vmatprep.subr.bf16.mxu0 0
      %1398 = vmatpush1.bf16.xpose.msra.mxu0 0
      %1399 = vmatprep.subr.bf16.mxu0 0
      %1400 = vmatpush1.bf16.xpose.msra.mxu0 0
      %1401 = vmatprep.subr.bf16.mxu0 0
      %1402 = vmatpush1.bf16.xpose.msra.mxu0 0
      %1403 = vmatprep.subr.bf16.mxu0 0
      %1404 = vmatpush1.bf16.xpose.msra.mxu0 0
      %1405 = vmatprep.subr.bf16.mxu0 0
      %1406 = vmatpush1.bf16.xpose.msra.mxu0 0
      %1407 = vmatprep.subr.bf16.mxu0 0
      %1408 = vmatpush1.bf16.xpose.msra.mxu0 0
      %1409 = vmatprep.subr.bf16.mxu0 0
      %1410 = vmatpush1.bf16.xpose.msra.mxu0 0
      %1411 = vmatprep.subr.bf16.mxu0 0
      %1412 = vmatpush1.bf16.xpose.msra.mxu0 0
      %1413 = vmatprep.subr.bf16.mxu0 0
      %1414 = vmatpush1.bf16.xpose.msra.mxu0 0
      %1415 = vmatprep.subr.bf16.mxu0 0
      %1416 = vmatpush1.bf16.xpose.msra.mxu0 0
      %1417 = vmatprep.mubr.bf16.mxu0 0
      %1418 = vmatmul.mubr.bf16.gmra.mrb[0].mxu0 %v1380
      %v1419 = vpop.f32.mrb[0].mxu0
      %v1420 = vadd.f32 0.0, %v1419
      %v1421 = vpop.f32.mrb[0].mxu0
      %v1422 = vpop.f32.mrb[0].mxu0
      %v1423 = vpop.f32.mrb[0].mxu0
      %1424 = vdwg.mxu0
      %1425 = vrot.lane.b32.xlu0 %v919, 64
      %v1426 = vpop.permute.xlu0 %1425
      %1427 = vrot.lane.b32.xlu0 %v921, 64
      %v1428 = vpop.permute.xlu0 %1427
      %v1430 = vsel %vm924, %v1426, 0
      %v1433 = vsel %vm924, %v1428, 0
      %1435 = vmatprep.subr.bf16.mxu0 0
      %1436 = vmatpush1.bf16.xpose.msra.mxu0 %v1433
      %1437 = vmatprep.subr.bf16.mxu0 0
      %1438 = vmatpush1.bf16.xpose.msra.mxu0 0
      %1439 = vmatprep.subr.bf16.mxu0 0
      %1440 = vmatpush1.bf16.xpose.msra.mxu0 0
      %1441 = vmatprep.subr.bf16.mxu0 0
      %1442 = vmatpush1.bf16.xpose.msra.mxu0 0
      %1443 = vmatprep.subr.bf16.mxu0 0
      %1444 = vmatpush1.bf16.xpose.msra.mxu0 0
      %1445 = vmatprep.subr.bf16.mxu0 0
      %1446 = vmatpush1.bf16.xpose.msra.mxu0 0
      %1447 = vmatprep.subr.bf16.mxu0 0
      %1448 = vmatpush1.bf16.xpose.msra.mxu0 0
      %1449 = vmatprep.subr.bf16.mxu0 0
      %1450 = vmatpush1.bf16.xpose.msra.mxu0 0
      %1451 = vmatprep.subr.bf16.mxu0 0
      %1452 = vmatpush1.bf16.xpose.msra.mxu0 0
      %1453 = vmatprep.subr.bf16.mxu0 0
      %1454 = vmatpush1.bf16.xpose.msra.mxu0 0
      %1455 = vmatprep.subr.bf16.mxu0 0
      %1456 = vmatpush1.bf16.xpose.msra.mxu0 0
      %1457 = vmatprep.subr.bf16.mxu0 0
      %1458 = vmatpush1.bf16.xpose.msra.mxu0 0
      %1459 = vmatprep.subr.bf16.mxu0 0
      %1460 = vmatpush1.bf16.xpose.msra.mxu0 0
      %1461 = vmatprep.subr.bf16.mxu0 0
      %1462 = vmatpush1.bf16.xpose.msra.mxu0 0
      %1463 = vmatprep.subr.bf16.mxu0 0
      %1464 = vmatpush1.bf16.xpose.msra.mxu0 0
      %1465 = vmatprep.subr.bf16.mxu0 0
      %1466 = vmatpush1.bf16.xpose.msra.mxu0 0
      %1467 = vmatprep.mubr.bf16.mxu0 0
      %1468 = vmatmul.mubr.bf16.gmra.mrb[0].mxu0 %v1430
      %v1469 = vpop.f32.mrb[0].mxu0
      %v1470 = vadd.f32 0.0, %v1469
      %v1471 = vpop.f32.mrb[0].mxu0
      %v1472 = vpop.f32.mrb[0].mxu0
      %v1473 = vpop.f32.mrb[0].mxu0
      %1474 = vdwg.mxu0
      %v1475 = vsel %vm1018, -inf, %v1420
      %v1476 = vsel %vm1018, -inf, %v1470
      %v1477 = vmul.f32 %v1475, 0.17677669
      %v1478 = vmul.f32 %v1476, 0.17677669
      %v1479 = vsel %vm1023, %v1477, -inf
      %1480 = vmax.xlane.f32.xlu0 %v1479
      %v1481 = vpop.xlane.xlu0 %1480
      %v1482 = vsel %vm1023, %v1478, -inf
      %1483 = vmax.xlane.f32.xlu0 %v1482
      %v1484 = vpop.xlane.xlu0 %1483
      %v1485 = vsub.f32 %v1477, %v1481
      %v1486 = vsub.f32 %v1478, %v1484
      %v1487 = vmul.f32 %v1485, 1.442695
      %v1488 = vpow.pop %v1487
      %v1489 = vmul.f32 %v1486, 1.442695
      %v1490 = vpow.pop %v1489
      %v1491 = vsel %vm1023, %v1488, 0.0
      %1492 = vadd.xlane.f32.xlu0 %v1491
      %v1493 = vpop.xlane.xlu0 %1492
      %v1494 = vsel %vm1023, %v1490, 0.0
      %1495 = vadd.xlane.f32.xlu0 %v1494
      %v1496 = vpop.xlane.xlu0 %1495
      %v1497 = vrcp.pop %v1493
      %v1498 = vmul.f32 1.0, %v1497
      %v1499 = vrcp.pop %v1496
      %v1500 = vmul.f32 1.0, %v1499
      %v1501 = vmul.f32 %v1488, %v1498
      %v1502 = vmul.f32 %v1490, %v1500
      %v1503 = vpack.c.bf16 %v1501, %v1501
      %v1504 = vpack.c.bf16 %v1502, %v1502
      %1505 = vrot.lane.b32.xlu0 %v922, 64
      %v1506 = vpop.permute.xlu0 %1505
      %v1508 = vsel %vm1023, %v1503, 0
      %v1511 = vsel %vm1053, %v1506, 0
      %1513 = vmatprep.subr.bf16.mxu0 0
      %1514 = vmatpush1.bf16.msra.mxu0 %v1511
      %1515 = vmatprep.subr.bf16.mxu0 0
      %1516 = vmatpush1.bf16.msra.mxu0 0
      %1517 = vmatprep.subr.bf16.mxu0 0
      %1518 = vmatpush1.bf16.msra.mxu0 0
      %1519 = vmatprep.subr.bf16.mxu0 0
      %1520 = vmatpush1.bf16.msra.mxu0 0
      %1521 = vmatprep.subr.bf16.mxu0 0
      %1522 = vmatpush1.bf16.msra.mxu0 0
      %1523 = vmatprep.subr.bf16.mxu0 0
      %1524 = vmatpush1.bf16.msra.mxu0 0
      %1525 = vmatprep.subr.bf16.mxu0 0
      %1526 = vmatpush1.bf16.msra.mxu0 0
      %1527 = vmatprep.subr.bf16.mxu0 0
      %1528 = vmatpush1.bf16.msra.mxu0 0
      %1529 = vmatprep.subr.bf16.mxu0 0
      %1530 = vmatpush1.bf16.msra.mxu0 0
      %1531 = vmatprep.subr.bf16.mxu0 0
      %1532 = vmatpush1.bf16.msra.mxu0 0
      %1533 = vmatprep.subr.bf16.mxu0 0
      %1534 = vmatpush1.bf16.msra.mxu0 0
      %1535 = vmatprep.subr.bf16.mxu0 0
      %1536 = vmatpush1.bf16.msra.mxu0 0
      %1537 = vmatprep.subr.bf16.mxu0 0
      %1538 = vmatpush1.bf16.msra.mxu0 0
      %1539 = vmatprep.subr.bf16.mxu0 0
      %1540 = vmatpush1.bf16.msra.mxu0 0
      %1541 = vmatprep.subr.bf16.mxu0 0
      %1542 = vmatpush1.bf16.msra.mxu0 0
      %1543 = vmatprep.subr.bf16.mxu0 0
      %1544 = vmatpush1.bf16.msra.mxu0 0
      %1545 = vmatprep.mubr.bf16.mxu0 0
      %1546 = vmatmul.mubr.bf16.gmra.mrb[0].mxu0 %v1508
      %v1547 = vpop.f32.mrb[0].mxu0
      %v1548 = vadd.f32 0.0, %v1547
      %v1549 = vpop.f32.mrb[0].mxu0
      %v1550 = vpop.f32.mrb[0].mxu0
      %v1551 = vpop.f32.mrb[0].mxu0
      %1552 = vdwg.mxu0
      %1553 = vrot.lane.b32.xlu0 %v923, 64
      %v1554 = vpop.permute.xlu0 %1553
      %v1556 = vsel %vm1023, %v1504, 0
      %v1559 = vsel %vm1053, %v1554, 0
      %1561 = vmatprep.subr.bf16.mxu0 0
      %1562 = vmatpush1.bf16.msra.mxu0 %v1559
      %1563 = vmatprep.subr.bf16.mxu0 0
      %1564 = vmatpush1.bf16.msra.mxu0 0
      %1565 = vmatprep.subr.bf16.mxu0 0
      %1566 = vmatpush1.bf16.msra.mxu0 0
      %1567 = vmatprep.subr.bf16.mxu0 0
      %1568 = vmatpush1.bf16.msra.mxu0 0
      %1569 = vmatprep.subr.bf16.mxu0 0
      %1570 = vmatpush1.bf16.msra.mxu0 0
      %1571 = vmatprep.subr.bf16.mxu0 0
      %1572 = vmatpush1.bf16.msra.mxu0 0
      %1573 = vmatprep.subr.bf16.mxu0 0
      %1574 = vmatpush1.bf16.msra.mxu0 0
      %1575 = vmatprep.subr.bf16.mxu0 0
      %1576 = vmatpush1.bf16.msra.mxu0 0
      %1577 = vmatprep.subr.bf16.mxu0 0
      %1578 = vmatpush1.bf16.msra.mxu0 0
      %1579 = vmatprep.subr.bf16.mxu0 0
      %1580 = vmatpush1.bf16.msra.mxu0 0
      %1581 = vmatprep.subr.bf16.mxu0 0
      %1582 = vmatpush1.bf16.msra.mxu0 0
      %1583 = vmatprep.subr.bf16.mxu0 0
      %1584 = vmatpush1.bf16.msra.mxu0 0
      %1585 = vmatprep.subr.bf16.mxu0 0
      %1586 = vmatpush1.bf16.msra.mxu0 0
      %1587 = vmatprep.subr.bf16.mxu0 0
      %1588 = vmatpush1.bf16.msra.mxu0 0
      %1589 = vmatprep.subr.bf16.mxu0 0
      %1590 = vmatpush1.bf16.msra.mxu0 0
      %1591 = vmatprep.subr.bf16.mxu0 0
      %1592 = vmatpush1.bf16.msra.mxu0 0
      %1593 = vmatprep.mubr.bf16.mxu0 0
      %1594 = vmatmul.mubr.bf16.gmra.mrb[0].mxu0 %v1556
      %v1595 = vpop.f32.mrb[0].mxu0
      %v1596 = vadd.f32 0.0, %v1595
      %v1597 = vpop.f32.mrb[0].mxu0
      %v1598 = vpop.f32.mrb[0].mxu0
      %v1599 = vpop.f32.mrb[0].mxu0
      %1600 = vdwg.mxu0
      %1601 = vrot.lane.b32.xlu0 %v918, 32
      %v1602 = vpop.permute.xlu0 %1601
      %1603 = vrot.lane.b32.xlu0 %v920, 32
      %v1604 = vpop.permute.xlu0 %1603
      %v1606 = vsel %vm924, %v1602, 0
      %v1609 = vsel %vm924, %v1604, 0
      %1611 = vmatprep.subr.bf16.mxu0 0
      %1612 = vmatpush1.bf16.xpose.msra.mxu0 %v1609
      %1613 = vmatprep.subr.bf16.mxu0 0
      %1614 = vmatpush1.bf16.xpose.msra.mxu0 0
      %1615 = vmatprep.subr.bf16.mxu0 0
      %1616 = vmatpush1.bf16.xpose.msra.mxu0 0
      %1617 = vmatprep.subr.bf16.mxu0 0
      %1618 = vmatpush1.bf16.xpose.msra.mxu0 0
      %1619 = vmatprep.subr.bf16.mxu0 0
      %1620 = vmatpush1.bf16.xpose.msra.mxu0 0
      %1621 = vmatprep.subr.bf16.mxu0 0
      %1622 = vmatpush1.bf16.xpose.msra.mxu0 0
      %1623 = vmatprep.subr.bf16.mxu0 0
      %1624 = vmatpush1.bf16.xpose.msra.mxu0 0
      %1625 = vmatprep.subr.bf16.mxu0 0
      %1626 = vmatpush1.bf16.xpose.msra.mxu0 0
      %1627 = vmatprep.subr.bf16.mxu0 0
      %1628 = vmatpush1.bf16.xpose.msra.mxu0 0
      %1629 = vmatprep.subr.bf16.mxu0 0
      %1630 = vmatpush1.bf16.xpose.msra.mxu0 0
      %1631 = vmatprep.subr.bf16.mxu0 0
      %1632 = vmatpush1.bf16.xpose.msra.mxu0 0
      %1633 = vmatprep.subr.bf16.mxu0 0
      %1634 = vmatpush1.bf16.xpose.msra.mxu0 0
      %1635 = vmatprep.subr.bf16.mxu0 0
      %1636 = vmatpush1.bf16.xpose.msra.mxu0 0
      %1637 = vmatprep.subr.bf16.mxu0 0
      %1638 = vmatpush1.bf16.xpose.msra.mxu0 0
      %1639 = vmatprep.subr.bf16.mxu0 0
      %1640 = vmatpush1.bf16.xpose.msra.mxu0 0
      %1641 = vmatprep.subr.bf16.mxu0 0
      %1642 = vmatpush1.bf16.xpose.msra.mxu0 0
      %1643 = vmatprep.mubr.bf16.mxu0 0
      %1644 = vmatmul.mubr.bf16.gmra.mrb[0].mxu0 %v1606
      %v1645 = vpop.f32.mrb[0].mxu0
      %v1646 = vadd.f32 0.0, %v1645
      %v1647 = vpop.f32.mrb[0].mxu0
      %v1648 = vpop.f32.mrb[0].mxu0
      %v1649 = vpop.f32.mrb[0].mxu0
      %1650 = vdwg.mxu0
      %1651 = vrot.lane.b32.xlu0 %v919, 32
      %v1652 = vpop.permute.xlu0 %1651
      %1653 = vrot.lane.b32.xlu0 %v921, 32
      %v1654 = vpop.permute.xlu0 %1653
      %v1656 = vsel %vm924, %v1652, 0
      %v1659 = vsel %vm924, %v1654, 0
      %1661 = vmatprep.subr.bf16.mxu0 0
      %1662 = vmatpush1.bf16.xpose.msra.mxu0 %v1659
      %1663 = vmatprep.subr.bf16.mxu0 0
      %1664 = vmatpush1.bf16.xpose.msra.mxu0 0
      %1665 = vmatprep.subr.bf16.mxu0 0
      %1666 = vmatpush1.bf16.xpose.msra.mxu0 0
      %1667 = vmatprep.subr.bf16.mxu0 0
      %1668 = vmatpush1.bf16.xpose.msra.mxu0 0
      %1669 = vmatprep.subr.bf16.mxu0 0
      %1670 = vmatpush1.bf16.xpose.msra.mxu0 0
      %1671 = vmatprep.subr.bf16.mxu0 0
      %1672 = vmatpush1.bf16.xpose.msra.mxu0 0
      %1673 = vmatprep.subr.bf16.mxu0 0
      %1674 = vmatpush1.bf16.xpose.msra.mxu0 0
      %1675 = vmatprep.subr.bf16.mxu0 0
      %1676 = vmatpush1.bf16.xpose.msra.mxu0 0
      %1677 = vmatprep.subr.bf16.mxu0 0
      %1678 = vmatpush1.bf16.xpose.msra.mxu0 0
      %1679 = vmatprep.subr.bf16.mxu0 0
      %1680 = vmatpush1.bf16.xpose.msra.mxu0 0
      %1681 = vmatprep.subr.bf16.mxu0 0
      %1682 = vmatpush1.bf16.xpose.msra.mxu0 0
      %1683 = vmatprep.subr.bf16.mxu0 0
      %1684 = vmatpush1.bf16.xpose.msra.mxu0 0
      %1685 = vmatprep.subr.bf16.mxu0 0
      %1686 = vmatpush1.bf16.xpose.msra.mxu0 0
      %1687 = vmatprep.subr.bf16.mxu0 0
      %1688 = vmatpush1.bf16.xpose.msra.mxu0 0
      %1689 = vmatprep.subr.bf16.mxu0 0
      %1690 = vmatpush1.bf16.xpose.msra.mxu0 0
      %1691 = vmatprep.subr.bf16.mxu0 0
      %1692 = vmatpush1.bf16.xpose.msra.mxu0 0
      %1693 = vmatprep.mubr.bf16.mxu0 0
      %1694 = vmatmul.mubr.bf16.gmra.mrb[0].mxu0 %v1656
      %v1695 = vpop.f32.mrb[0].mxu0
      %v1696 = vadd.f32 0.0, %v1695
      %v1697 = vpop.f32.mrb[0].mxu0
      %v1698 = vpop.f32.mrb[0].mxu0
      %v1699 = vpop.f32.mrb[0].mxu0
      %1700 = vdwg.mxu0
      %v1701 = vsel %vm1018, -inf, %v1646
      %v1702 = vsel %vm1018, -inf, %v1696
      %v1703 = vmul.f32 %v1701, 0.17677669
      %v1704 = vmul.f32 %v1702, 0.17677669
      %v1705 = vsel %vm1023, %v1703, -inf
      %1706 = vmax.xlane.f32.xlu0 %v1705
      %v1707 = vpop.xlane.xlu0 %1706
      %v1708 = vsel %vm1023, %v1704, -inf
      %1709 = vmax.xlane.f32.xlu0 %v1708
      %v1710 = vpop.xlane.xlu0 %1709
      %v1711 = vsub.f32 %v1703, %v1707
      %v1712 = vsub.f32 %v1704, %v1710
      %v1713 = vmul.f32 %v1711, 1.442695
      %v1714 = vpow.pop %v1713
      %v1715 = vmul.f32 %v1712, 1.442695
      %v1716 = vpow.pop %v1715
      %v1717 = vsel %vm1023, %v1714, 0.0
      %1718 = vadd.xlane.f32.xlu0 %v1717
      %v1719 = vpop.xlane.xlu0 %1718
      %v1720 = vsel %vm1023, %v1716, 0.0
      %1721 = vadd.xlane.f32.xlu0 %v1720
      %v1722 = vpop.xlane.xlu0 %1721
      %v1723 = vrcp.pop %v1719
      %v1724 = vmul.f32 1.0, %v1723
      %v1725 = vrcp.pop %v1722
      %v1726 = vmul.f32 1.0, %v1725
      %v1727 = vmul.f32 %v1714, %v1724
      %v1728 = vmul.f32 %v1716, %v1726
      %v1729 = vpack.c.bf16 %v1727, %v1727
      %v1730 = vpack.c.bf16 %v1728, %v1728
      %1731 = vrot.lane.b32.xlu0 %v922, 32
      %v1732 = vpop.permute.xlu0 %1731
      %v1734 = vsel %vm1023, %v1729, 0
      %v1737 = vsel %vm1053, %v1732, 0
      %1739 = vmatprep.subr.bf16.mxu0 0
      %1740 = vmatpush1.bf16.msra.mxu0 %v1737
      %1741 = vmatprep.subr.bf16.mxu0 0
      %1742 = vmatpush1.bf16.msra.mxu0 0
      %1743 = vmatprep.subr.bf16.mxu0 0
      %1744 = vmatpush1.bf16.msra.mxu0 0
      %1745 = vmatprep.subr.bf16.mxu0 0
      %1746 = vmatpush1.bf16.msra.mxu0 0
      %1747 = vmatprep.subr.bf16.mxu0 0
      %1748 = vmatpush1.bf16.msra.mxu0 0
      %1749 = vmatprep.subr.bf16.mxu0 0
      %1750 = vmatpush1.bf16.msra.mxu0 0
      %1751 = vmatprep.subr.bf16.mxu0 0
      %1752 = vmatpush1.bf16.msra.mxu0 0
      %1753 = vmatprep.subr.bf16.mxu0 0
      %1754 = vmatpush1.bf16.msra.mxu0 0
      %1755 = vmatprep.subr.bf16.mxu0 0
      %1756 = vmatpush1.bf16.msra.mxu0 0
      %1757 = vmatprep.subr.bf16.mxu0 0
      %1758 = vmatpush1.bf16.msra.mxu0 0
      %1759 = vmatprep.subr.bf16.mxu0 0
      %1760 = vmatpush1.bf16.msra.mxu0 0
      %1761 = vmatprep.subr.bf16.mxu0 0
      %1762 = vmatpush1.bf16.msra.mxu0 0
      %1763 = vmatprep.subr.bf16.mxu0 0
      %1764 = vmatpush1.bf16.msra.mxu0 0
      %1765 = vmatprep.subr.bf16.mxu0 0
      %1766 = vmatpush1.bf16.msra.mxu0 0
      %1767 = vmatprep.subr.bf16.mxu0 0
      %1768 = vmatpush1.bf16.msra.mxu0 0
      %1769 = vmatprep.subr.bf16.mxu0 0
      %1770 = vmatpush1.bf16.msra.mxu0 0
      %1771 = vmatprep.mubr.bf16.mxu0 0
      %1772 = vmatmul.mubr.bf16.gmra.mrb[0].mxu0 %v1734
      %v1773 = vpop.f32.mrb[0].mxu0
      %v1774 = vadd.f32 0.0, %v1773
      %v1775 = vpop.f32.mrb[0].mxu0
      %v1776 = vpop.f32.mrb[0].mxu0
      %v1777 = vpop.f32.mrb[0].mxu0
      %1778 = vdwg.mxu0
      %1779 = vrot.lane.b32.xlu0 %v923, 32
      %v1780 = vpop.permute.xlu0 %1779
      %v1782 = vsel %vm1023, %v1730, 0
      %v1785 = vsel %vm1053, %v1780, 0
      %1787 = vmatprep.subr.bf16.mxu0 0
      %1788 = vmatpush1.bf16.msra.mxu0 %v1785
      %1789 = vmatprep.subr.bf16.mxu0 0
      %1790 = vmatpush1.bf16.msra.mxu0 0
      %1791 = vmatprep.subr.bf16.mxu0 0
      %1792 = vmatpush1.bf16.msra.mxu0 0
      %1793 = vmatprep.subr.bf16.mxu0 0
      %1794 = vmatpush1.bf16.msra.mxu0 0
      %1795 = vmatprep.subr.bf16.mxu0 0
      %1796 = vmatpush1.bf16.msra.mxu0 0
      %1797 = vmatprep.subr.bf16.mxu0 0
      %1798 = vmatpush1.bf16.msra.mxu0 0
      %1799 = vmatprep.subr.bf16.mxu0 0
      %1800 = vmatpush1.bf16.msra.mxu0 0
      %1801 = vmatprep.subr.bf16.mxu0 0
      %1802 = vmatpush1.bf16.msra.mxu0 0
      %1803 = vmatprep.subr.bf16.mxu0 0
      %1804 = vmatpush1.bf16.msra.mxu0 0
      %1805 = vmatprep.subr.bf16.mxu0 0
      %1806 = vmatpush1.bf16.msra.mxu0 0
      %1807 = vmatprep.subr.bf16.mxu0 0
      %1808 = vmatpush1.bf16.msra.mxu0 0
      %1809 = vmatprep.subr.bf16.mxu0 0
      %1810 = vmatpush1.bf16.msra.mxu0 0
      %1811 = vmatprep.subr.bf16.mxu0 0
      %1812 = vmatpush1.bf16.msra.mxu0 0
      %1813 = vmatprep.subr.bf16.mxu0 0
      %1814 = vmatpush1.bf16.msra.mxu0 0
      %1815 = vmatprep.subr.bf16.mxu0 0
      %1816 = vmatpush1.bf16.msra.mxu0 0
      %1817 = vmatprep.subr.bf16.mxu0 0
      %1818 = vmatpush1.bf16.msra.mxu0 0
      %1819 = vmatprep.mubr.bf16.mxu0 0
      %1820 = vmatmul.mubr.bf16.gmra.mrb[0].mxu0 %v1782
      %v1821 = vpop.f32.mrb[0].mxu0
      %v1822 = vadd.f32 0.0, %v1821
      %v1823 = vpop.f32.mrb[0].mxu0
      %v1824 = vpop.f32.mrb[0].mxu0
      %v1825 = vpop.f32.mrb[0].mxu0
      %1826 = vdwg.mxu0
      %1829 = vrot.lane.b32.xlu0 %v1321, 32
      %v1830 = vpop.permute.xlu0 %1829
      %1831 = vrot.lane.b32.xlu0 %v1370, 32
      %v1832 = vpop.permute.xlu0 %1831
      %1837 = vrot.lane.b32.xlu0 %v1548, 64
      %v1838 = vpop.permute.xlu0 %1837
      %1839 = vrot.lane.b32.xlu0 %v1596, 64
      %v1840 = vpop.permute.xlu0 %1839
      %1845 = vrot.lane.b32.xlu0 %v1774, 96
      %v1846 = vpop.permute.xlu0 %1845
      %1847 = vrot.lane.b32.xlu0 %v1822, 96
      %v1848 = vpop.permute.xlu0 %1847
      %v1851 = vsel %vm924, %v1092, %v1830
      %v1852 = vsel %vm924, %v1138, %v1832
      %vm1853 = vcmask 523264
      %v1854 = vsel %vm1853, %v1851, %v1838
      %v1855 = vsel %vm1853, %v1852, %v1840
      %vm1856 = vcmask 785408
      %v1857 = vsel %vm1856, %v1854, %v1846
      %v1858 = vsel %vm1856, %v1855, %v1848
      %v1859 = vadd.f32 %v604, %v1857
      %v1860 = vadd.f32 %v605, %v1858
      %v1861 = vrot.slane %v1859, 4
      %v1862 = vadd.f32 %v1859, %v1861
      %v1863 = vrot.slane %v1862, 2
      %v1864 = vadd.f32 %v1862, %v1863
      %v1865 = vrot.slane %v1864, 1
      %v1866 = vadd.f32 %v1864, %v1865
      %v1867 = vrot.slane %v1860, 4
      %v1868 = vadd.f32 %v1860, %v1867
      %v1869 = vrot.slane %v1868, 2
      %v1870 = vadd.f32 %v1868, %v1869
      %v1871 = vrot.slane %v1870, 1
      %v1872 = vadd.f32 %v1870, %v1871
      %v1873 = vmul.f32 %v1866, %v623
      %v1874 = vmul.f32 %v1872, %v623
      %v1875 = vsub.f32 %v1859, %v1873
      %v1876 = vsub.f32 %v1860, %v1874
      %v1877 = vmul.f32 %v1875, %v1875
      %v1878 = vmul.f32 %v1876, %v1876
      %v1879 = vrot.slane %v1877, 4
      %v1880 = vadd.f32 %v1877, %v1879
      %v1881 = vrot.slane %v1880, 2
      %v1882 = vadd.f32 %v1880, %v1881
      %v1883 = vrot.slane %v1882, 1
      %v1884 = vadd.f32 %v1882, %v1883
      %v1885 = vrot.slane %v1878, 4
      %v1886 = vadd.f32 %v1878, %v1885
      %v1887 = vrot.slane %v1886, 2
      %v1888 = vadd.f32 %v1886, %v1887
      %v1889 = vrot.slane %v1888, 1
      %v1890 = vadd.f32 %v1888, %v1889
      %v1891 = vmul.f32 %v1884, %v623
      %v1892 = vmul.f32 %v1890, %v623
      %v1893 = vadd.f32 %v1891, 1e-05
      %v1894 = vadd.f32 %v1892, 1e-05
      %v1895 = vrsqrt.pop %v1893
      %v1896 = vrsqrt.pop %v1894
      %v1897 = vmul.f32 %v1875, %v1895
      %v1898 = vmul.f32 %v1876, %v1896
      %v1899 = vld [vmem:[%s6] sm:$0xff]
      %v1900 = vmul.f32 %v1897, %v1899
      %v1901 = vmul.f32 %v1898, %v1899
      %v1902 = vld [vmem:[%s7] sm:$0xff]
      %v1903 = vadd.f32 %v1900, %v1902
      %v1904 = vadd.f32 %v1901, %v1902
      %v1905 = vpack.c.bf16 %v1904, %v1903
      %v1906 = vld [vmem:[%s8] sm:$0xf]
      %v1907 = vld [vmem:[%s8 + $0x4] sm:$0xf]
      %v1908 = vld [vmem:[%s8 + $0x8] sm:$0xf]
      %v1909 = vld [vmem:[%s8 + $0xc] sm:$0xf]
      %v1910 = vld [vmem:[%s8 + $0x10] sm:$0xf]
      %v1911 = vld [vmem:[%s8 + $0x14] sm:$0xf]
      %v1912 = vld [vmem:[%s8 + $0x18] sm:$0xf]
      %v1913 = vld [vmem:[%s8 + $0x1c] sm:$0xf]
      %v1914 = vld [vmem:[%s8 + $0x20] sm:$0xf]
      %v1915 = vld [vmem:[%s8 + $0x24] sm:$0xf]
      %v1916 = vld [vmem:[%s8 + $0x28] sm:$0xf]
      %v1917 = vld [vmem:[%s8 + $0x2c] sm:$0xf]
      %v1918 = vld [vmem:[%s8 + $0x30] sm:$0xf]
      %v1919 = vld [vmem:[%s8 + $0x34] sm:$0xf]
      %v1920 = vld [vmem:[%s8 + $0x38] sm:$0xf]
      %v1921 = vld [vmem:[%s8 + $0x3c] sm:$0xf]
      %v1922 = vld [vmem:[%s9] sm:$0x1]
      %v1924 = vlaneseq
      %v1925 = vshrl.u32 %v1924, 7
      %v1926 = vsub.s32 0, %v1925
      %v1927 = vrot.slane %v1922, %v1926
      %v1945 = vunpack.c.l.b16 %v1906
      %v1946 = vunpack.c.l.b16 %v1907
      %v1947 = vunpack.c.l.b16 %v1908
      %v1948 = vunpack.c.l.b16 %v1909
      %v1949 = vunpack.c.l.b16 %v1910
      %v1950 = vunpack.c.l.b16 %v1911
      %v1951 = vunpack.c.l.b16 %v1912
      %v1952 = vunpack.c.l.b16 %v1913
      %v1953 = vunpack.c.l.b16 %v1914
      %v1954 = vunpack.c.l.b16 %v1915
      %v1955 = vunpack.c.l.b16 %v1916
      %v1956 = vunpack.c.l.b16 %v1917
      %v1957 = vunpack.c.l.b16 %v1918
      %v1958 = vunpack.c.l.b16 %v1919
      %v1959 = vunpack.c.l.b16 %v1920
      %v1960 = vunpack.c.l.b16 %v1921
      %v1961 = vpack.c.b16 %v1946, %v1945
      %v1962 = vpack.c.b16 %v1948, %v1947
      %v1963 = vpack.c.b16 %v1950, %v1949
      %v1964 = vpack.c.b16 %v1952, %v1951
      %v1965 = vpack.c.b16 %v1954, %v1953
      %v1966 = vpack.c.b16 %v1956, %v1955
      %v1967 = vpack.c.b16 %v1958, %v1957
      %v1968 = vpack.c.b16 %v1960, %v1959
      %1977 = vmatprep.subr.bf16.mxu0 0
      %1978 = vmatpush1.bf16.msra.mxu0 %v1961
      %1979 = vmatprep.subr.bf16.mxu0 0
      %1980 = vmatpush1.bf16.msra.mxu0 %v1962
      %1981 = vmatprep.subr.bf16.mxu0 0
      %1982 = vmatpush1.bf16.msra.mxu0 %v1963
      %1983 = vmatprep.subr.bf16.mxu0 0
      %1984 = vmatpush1.bf16.msra.mxu0 %v1964
      %1985 = vmatprep.subr.bf16.mxu0 0
      %1986 = vmatpush1.bf16.msra.mxu0 %v1965
      %1987 = vmatprep.subr.bf16.mxu0 0
      %1988 = vmatpush1.bf16.msra.mxu0 %v1966
      %1989 = vmatprep.subr.bf16.mxu0 0
      %1990 = vmatpush1.bf16.msra.mxu0 %v1967
      %1991 = vmatprep.subr.bf16.mxu0 0
      %1992 = vmatpush1.bf16.msra.mxu0 %v1968
      %1993 = vmatprep.subr.bf16.mxu0 0
      %1994 = vmatpush1.bf16.msra.mxu0 0
      %1995 = vmatprep.subr.bf16.mxu0 0
      %1996 = vmatpush1.bf16.msra.mxu0 0
      %1997 = vmatprep.subr.bf16.mxu0 0
      %1998 = vmatpush1.bf16.msra.mxu0 0
      %1999 = vmatprep.subr.bf16.mxu0 0
      %2000 = vmatpush1.bf16.msra.mxu0 0
      %2001 = vmatprep.subr.bf16.mxu0 0
      %2002 = vmatpush1.bf16.msra.mxu0 0
      %2003 = vmatprep.subr.bf16.mxu0 0
      %2004 = vmatpush1.bf16.msra.mxu0 0
      %2005 = vmatprep.subr.bf16.mxu0 0
      %2006 = vmatpush1.bf16.msra.mxu0 0
      %2007 = vmatprep.subr.bf16.mxu0 0
      %2008 = vmatpush1.bf16.msra.mxu0 0
      %2009 = vmatprep.mubr.bf16.mxu0 0
      %2010 = vmatmul.mubr.bf16.gmra.mrb[0].mxu0 %v1905
      %v2011 = vpop.f32.mrb[0].mxu0
      %v2012 = vadd.f32 %v1927, %v2011
      %v2013 = vpop.f32.mrb[0].mxu0
      %v2014 = vpop.f32.mrb[0].mxu0
      %v2015 = vadd.f32 %v1927, %v2014
      %v2016 = vpop.f32.mrb[0].mxu0
      %2017 = vdwg.mxu0
      %v2018 = vpack.c.bf16 %v603, %v602
      %v2019 = vld [vmem:[%s10] sm:$0xff]
      %v2020 = vld [vmem:[%s10 + $0x8] sm:$0xff]
      %v2021 = vld [vmem:[%s10 + $0x10] sm:$0xff]
      %v2022 = vld [vmem:[%s10 + $0x18] sm:$0xff]
      %v2023 = vld [vmem:[%s10 + $0x20] sm:$0xff]
      %v2024 = vld [vmem:[%s10 + $0x28] sm:$0xff]
      %v2025 = vld [vmem:[%s10 + $0x30] sm:$0xff]
      %v2026 = vld [vmem:[%s10 + $0x38] sm:$0xff]
      %v2027 = vld [vmem:[%s10 + $0x40] sm:$0xff]
      %v2028 = vld [vmem:[%s10 + $0x48] sm:$0xff]
      %v2029 = vld [vmem:[%s10 + $0x50] sm:$0xff]
      %v2030 = vld [vmem:[%s10 + $0x58] sm:$0xff]
      %v2031 = vld [vmem:[%s10 + $0x60] sm:$0xff]
      %v2032 = vld [vmem:[%s10 + $0x68] sm:$0xff]
      %v2033 = vld [vmem:[%s10 + $0x70] sm:$0xff]
      %v2034 = vld [vmem:[%s10 + $0x78] sm:$0xff]
      %v2035 = vld [vmem:[%s11] sm:$0x3]
      %v2037 = vlaneseq
      %v2038 = vshrl.u32 %v2037, 7
      %v2039 = vsub.s32 0, %v2038
      %v2040 = vrot.slane %v2035, %v2039
      %v2041 = vlaneseq
      %v2042 = vshrl.u32 %v2041, 7
      %v2043 = vsub.s32 1, %v2042
      %v2044 = vrot.slane %v2035, %v2043
      %v2063 = vunpack.c.l.b16 %v2019
      %v2064 = vunpack.c.h.b16 %v2019
      %v2065 = vunpack.c.l.b16 %v2020
      %v2066 = vunpack.c.h.b16 %v2020
      %v2067 = vunpack.c.l.b16 %v2021
      %v2068 = vunpack.c.h.b16 %v2021
      %v2069 = vunpack.c.l.b16 %v2022
      %v2070 = vunpack.c.h.b16 %v2022
      %v2071 = vunpack.c.l.b16 %v2023
      %v2072 = vunpack.c.h.b16 %v2023
      %v2073 = vunpack.c.l.b16 %v2024
      %v2074 = vunpack.c.h.b16 %v2024
      %v2075 = vunpack.c.l.b16 %v2025
      %v2076 = vunpack.c.h.b16 %v2025
      %v2077 = vunpack.c.l.b16 %v2026
      %v2078 = vunpack.c.h.b16 %v2026
      %v2079 = vunpack.c.l.b16 %v2027
      %v2080 = vunpack.c.h.b16 %v2027
      %v2081 = vunpack.c.l.b16 %v2028
      %v2082 = vunpack.c.h.b16 %v2028
      %v2083 = vunpack.c.l.b16 %v2029
      %v2084 = vunpack.c.h.b16 %v2029
      %v2085 = vunpack.c.l.b16 %v2030
      %v2086 = vunpack.c.h.b16 %v2030
      %v2087 = vunpack.c.l.b16 %v2031
      %v2088 = vunpack.c.h.b16 %v2031
      %v2089 = vunpack.c.l.b16 %v2032
      %v2090 = vunpack.c.h.b16 %v2032
      %v2091 = vunpack.c.l.b16 %v2033
      %v2092 = vunpack.c.h.b16 %v2033
      %v2093 = vunpack.c.l.b16 %v2034
      %v2094 = vunpack.c.h.b16 %v2034
      %v2095 = vpack.c.b16 %v2065, %v2063
      %v2096 = vpack.c.b16 %v2066, %v2064
      %v2097 = vpack.c.b16 %v2069, %v2067
      %v2098 = vpack.c.b16 %v2070, %v2068
      %v2099 = vpack.c.b16 %v2073, %v2071
      %v2100 = vpack.c.b16 %v2074, %v2072
      %v2101 = vpack.c.b16 %v2077, %v2075
      %v2102 = vpack.c.b16 %v2078, %v2076
      %v2103 = vpack.c.b16 %v2081, %v2079
      %v2104 = vpack.c.b16 %v2082, %v2080
      %v2105 = vpack.c.b16 %v2085, %v2083
      %v2106 = vpack.c.b16 %v2086, %v2084
      %v2107 = vpack.c.b16 %v2089, %v2087
      %v2108 = vpack.c.b16 %v2090, %v2088
      %v2109 = vpack.c.b16 %v2093, %v2091
      %v2110 = vpack.c.b16 %v2094, %v2092
      %2127 = vmatprep.subr.bf16.mxu0 %v2096
      %2128 = vmatpush1.bf16.msra.mxu0 %v2095
      %2129 = vmatprep.subr.bf16.mxu0 %v2098
      %2130 = vmatpush1.bf16.msra.mxu0 %v2097
      %2131 = vmatprep.subr.bf16.mxu0 %v2100
      %2132 = vmatpush1.bf16.msra.mxu0 %v2099
      %2133 = vmatprep.subr.bf16.mxu0 %v2102
      %2134 = vmatpush1.bf16.msra.mxu0 %v2101
      %2135 = vmatprep.subr.bf16.mxu0 %v2104
      %2136 = vmatpush1.bf16.msra.mxu0 %v2103
      %2137 = vmatprep.subr.bf16.mxu0 %v2106
      %2138 = vmatpush1.bf16.msra.mxu0 %v2105
      %2139 = vmatprep.subr.bf16.mxu0 %v2108
      %2140 = vmatpush1.bf16.msra.mxu0 %v2107
      %2141 = vmatprep.subr.bf16.mxu0 %v2110
      %2142 = vmatpush1.bf16.msra.mxu0 %v2109
      %2143 = vmatprep.subr.bf16.mxu0 0
      %2144 = vmatpush1.bf16.msra.mxu0 0
      %2145 = vmatprep.subr.bf16.mxu0 0
      %2146 = vmatpush1.bf16.msra.mxu0 0
      %2147 = vmatprep.subr.bf16.mxu0 0
      %2148 = vmatpush1.bf16.msra.mxu0 0
      %2149 = vmatprep.subr.bf16.mxu0 0
      %2150 = vmatpush1.bf16.msra.mxu0 0
      %2151 = vmatprep.subr.bf16.mxu0 0
      %2152 = vmatpush1.bf16.msra.mxu0 0
      %2153 = vmatprep.subr.bf16.mxu0 0
      %2154 = vmatpush1.bf16.msra.mxu0 0
      %2155 = vmatprep.subr.bf16.mxu0 0
      %2156 = vmatpush1.bf16.msra.mxu0 0
      %2157 = vmatprep.subr.bf16.mxu0 0
      %2158 = vmatpush1.bf16.msra.mxu0 0
      %2159 = vmatprep.mubr.bf16.mxu0 0
      %2160 = vmatmul.mubr.bf16.gmra.mrb[0].mxu0 %v2018
      %v2161 = vpop.f32.mrb[0].mxu0
      %v2162 = vadd.f32 %v2040, %v2161
      %v2163 = vpop.f32.mrb[0].mxu0
      %v2164 = vadd.f32 %v2044, %v2163
      %v2165 = vpop.f32.mrb[0].mxu0
      %v2166 = vadd.f32 %v2040, %v2165
      %v2167 = vpop.f32.mrb[0].mxu0
      %v2168 = vadd.f32 %v2044, %v2167
      %2169 = vdwg.mxu0
      %v2170 = vpack.c.bf16 %v2012, %v2012
      %v2171 = vpack.c.bf16 %v2015, %v2015
      %v2172 = vpack.c.bf16 %v2162, %v2162
      %v2173 = vpack.c.bf16 %v2166, %v2166
      %v2174 = vpack.c.bf16 %v2164, %v2164
      %v2175 = vpack.c.bf16 %v2168, %v2168
      %v2177 = vsel %vm924, %v2170, 0
      %v2180 = vsel %vm924, %v2172, 0
      %2182 = vmatprep.subr.bf16.mxu0 0
      %2183 = vmatpush1.bf16.xpose.msra.mxu0 %v2180
      %2184 = vmatprep.subr.bf16.mxu0 0
      %2185 = vmatpush1.bf16.xpose.msra.mxu0 0
      %2186 = vmatprep.subr.bf16.mxu0 0
      %2187 = vmatpush1.bf16.xpose.msra.mxu0 0
      %2188 = vmatprep.subr.bf16.mxu0 0
      %2189 = vmatpush1.bf16.xpose.msra.mxu0 0
      %2190 = vmatprep.subr.bf16.mxu0 0
      %2191 = vmatpush1.bf16.xpose.msra.mxu0 0
      %2192 = vmatprep.subr.bf16.mxu0 0
      %2193 = vmatpush1.bf16.xpose.msra.mxu0 0
      %2194 = vmatprep.subr.bf16.mxu0 0
      %2195 = vmatpush1.bf16.xpose.msra.mxu0 0
      %2196 = vmatprep.subr.bf16.mxu0 0
      %2197 = vmatpush1.bf16.xpose.msra.mxu0 0
      %2198 = vmatprep.subr.bf16.mxu0 0
      %2199 = vmatpush1.bf16.xpose.msra.mxu0 0
      %2200 = vmatprep.subr.bf16.mxu0 0
      %2201 = vmatpush1.bf16.xpose.msra.mxu0 0
      %2202 = vmatprep.subr.bf16.mxu0 0
      %2203 = vmatpush1.bf16.xpose.msra.mxu0 0
      %2204 = vmatprep.subr.bf16.mxu0 0
      %2205 = vmatpush1.bf16.xpose.msra.mxu0 0
      %2206 = vmatprep.subr.bf16.mxu0 0
      %2207 = vmatpush1.bf16.xpose.msra.mxu0 0
      %2208 = vmatprep.subr.bf16.mxu0 0
      %2209 = vmatpush1.bf16.xpose.msra.mxu0 0
      %2210 = vmatprep.subr.bf16.mxu0 0
      %2211 = vmatpush1.bf16.xpose.msra.mxu0 0
      %2212 = vmatprep.subr.bf16.mxu0 0
      %2213 = vmatpush1.bf16.xpose.msra.mxu0 0
      %2214 = vmatprep.mubr.bf16.mxu0 0
      %2215 = vmatmul.mubr.bf16.gmra.mrb[0].mxu0 %v2177
      %v2216 = vpop.f32.mrb[0].mxu0
      %v2217 = vadd.f32 0.0, %v2216
      %v2218 = vpop.f32.mrb[0].mxu0
      %v2219 = vpop.f32.mrb[0].mxu0
      %v2220 = vpop.f32.mrb[0].mxu0
      %2221 = vdwg.mxu0
      %v2223 = vsel %vm924, %v2171, 0
      %v2226 = vsel %vm924, %v2173, 0
      %2228 = vmatprep.subr.bf16.mxu0 0
      %2229 = vmatpush1.bf16.xpose.msra.mxu0 %v2226
      %2230 = vmatprep.subr.bf16.mxu0 0
      %2231 = vmatpush1.bf16.xpose.msra.mxu0 0
      %2232 = vmatprep.subr.bf16.mxu0 0
      %2233 = vmatpush1.bf16.xpose.msra.mxu0 0
      %2234 = vmatprep.subr.bf16.mxu0 0
      %2235 = vmatpush1.bf16.xpose.msra.mxu0 0
      %2236 = vmatprep.subr.bf16.mxu0 0
      %2237 = vmatpush1.bf16.xpose.msra.mxu0 0
      %2238 = vmatprep.subr.bf16.mxu0 0
      %2239 = vmatpush1.bf16.xpose.msra.mxu0 0
      %2240 = vmatprep.subr.bf16.mxu0 0
      %2241 = vmatpush1.bf16.xpose.msra.mxu0 0
      %2242 = vmatprep.subr.bf16.mxu0 0
      %2243 = vmatpush1.bf16.xpose.msra.mxu0 0
      %2244 = vmatprep.subr.bf16.mxu0 0
      %2245 = vmatpush1.bf16.xpose.msra.mxu0 0
      %2246 = vmatprep.subr.bf16.mxu0 0
      %2247 = vmatpush1.bf16.xpose.msra.mxu0 0
      %2248 = vmatprep.subr.bf16.mxu0 0
      %2249 = vmatpush1.bf16.xpose.msra.mxu0 0
      %2250 = vmatprep.subr.bf16.mxu0 0
      %2251 = vmatpush1.bf16.xpose.msra.mxu0 0
      %2252 = vmatprep.subr.bf16.mxu0 0
      %2253 = vmatpush1.bf16.xpose.msra.mxu0 0
      %2254 = vmatprep.subr.bf16.mxu0 0
      %2255 = vmatpush1.bf16.xpose.msra.mxu0 0
      %2256 = vmatprep.subr.bf16.mxu0 0
      %2257 = vmatpush1.bf16.xpose.msra.mxu0 0
      %2258 = vmatprep.subr.bf16.mxu0 0
      %2259 = vmatpush1.bf16.xpose.msra.mxu0 0
      %2260 = vmatprep.mubr.bf16.mxu0 0
      %2261 = vmatmul.mubr.bf16.gmra.mrb[0].mxu0 %v2223
      %v2262 = vpop.f32.mrb[0].mxu0
      %v2263 = vadd.f32 0.0, %v2262
      %v2264 = vpop.f32.mrb[0].mxu0
      %v2265 = vpop.f32.mrb[0].mxu0
      %v2266 = vpop.f32.mrb[0].mxu0
      %2267 = vdwg.mxu0
      %v2268 = vmul.f32 %v2217, 0.17677669
      %v2269 = vmul.f32 %v2263, 0.17677669
      %v2270 = vsel %vm1023, %v2268, -inf
      %2271 = vmax.xlane.f32.xlu0 %v2270
      %v2272 = vpop.xlane.xlu0 %2271
      %v2273 = vsel %vm1023, %v2269, -inf
      %2274 = vmax.xlane.f32.xlu0 %v2273
      %v2275 = vpop.xlane.xlu0 %2274
      %v2276 = vsub.f32 %v2268, %v2272
      %v2277 = vsub.f32 %v2269, %v2275
      %v2278 = vmul.f32 %v2276, 1.442695
      %v2279 = vpow.pop %v2278
      %v2280 = vmul.f32 %v2277, 1.442695
      %v2281 = vpow.pop %v2280
      %v2282 = vsel %vm1023, %v2279, 0.0
      %2283 = vadd.xlane.f32.xlu0 %v2282
      %v2284 = vpop.xlane.xlu0 %2283
      %v2285 = vsel %vm1023, %v2281, 0.0
      %2286 = vadd.xlane.f32.xlu0 %v2285
      %v2287 = vpop.xlane.xlu0 %2286
      %v2288 = vrcp.pop %v2284
      %v2289 = vmul.f32 1.0, %v2288
      %v2290 = vrcp.pop %v2287
      %v2291 = vmul.f32 1.0, %v2290
      %v2292 = vmul.f32 %v2279, %v2289
      %v2293 = vmul.f32 %v2281, %v2291
      %v2294 = vpack.c.bf16 %v2292, %v2292
      %v2295 = vpack.c.bf16 %v2293, %v2293
      %v2297 = vsel %vm1023, %v2294, 0
      %v2300 = vsel %vm1053, %v2174, 0
      %2302 = vmatprep.subr.bf16.mxu0 0
      %2303 = vmatpush1.bf16.msra.mxu0 %v2300
      %2304 = vmatprep.subr.bf16.mxu0 0
      %2305 = vmatpush1.bf16.msra.mxu0 0
      %2306 = vmatprep.subr.bf16.mxu0 0
      %2307 = vmatpush1.bf16.msra.mxu0 0
      %2308 = vmatprep.subr.bf16.mxu0 0
      %2309 = vmatpush1.bf16.msra.mxu0 0
      %2310 = vmatprep.subr.bf16.mxu0 0
      %2311 = vmatpush1.bf16.msra.mxu0 0
      %2312 = vmatprep.subr.bf16.mxu0 0
      %2313 = vmatpush1.bf16.msra.mxu0 0
      %2314 = vmatprep.subr.bf16.mxu0 0
      %2315 = vmatpush1.bf16.msra.mxu0 0
      %2316 = vmatprep.subr.bf16.mxu0 0
      %2317 = vmatpush1.bf16.msra.mxu0 0
      %2318 = vmatprep.subr.bf16.mxu0 0
      %2319 = vmatpush1.bf16.msra.mxu0 0
      %2320 = vmatprep.subr.bf16.mxu0 0
      %2321 = vmatpush1.bf16.msra.mxu0 0
      %2322 = vmatprep.subr.bf16.mxu0 0
      %2323 = vmatpush1.bf16.msra.mxu0 0
      %2324 = vmatprep.subr.bf16.mxu0 0
      %2325 = vmatpush1.bf16.msra.mxu0 0
      %2326 = vmatprep.subr.bf16.mxu0 0
      %2327 = vmatpush1.bf16.msra.mxu0 0
      %2328 = vmatprep.subr.bf16.mxu0 0
      %2329 = vmatpush1.bf16.msra.mxu0 0
      %2330 = vmatprep.subr.bf16.mxu0 0
      %2331 = vmatpush1.bf16.msra.mxu0 0
      %2332 = vmatprep.subr.bf16.mxu0 0
      %2333 = vmatpush1.bf16.msra.mxu0 0
      %2334 = vmatprep.mubr.bf16.mxu0 0
      %2335 = vmatmul.mubr.bf16.gmra.mrb[0].mxu0 %v2297
      %v2336 = vpop.f32.mrb[0].mxu0
      %v2337 = vadd.f32 0.0, %v2336
      %v2338 = vpop.f32.mrb[0].mxu0
      %v2339 = vpop.f32.mrb[0].mxu0
      %v2340 = vpop.f32.mrb[0].mxu0
      %2341 = vdwg.mxu0
      %v2343 = vsel %vm1023, %v2295, 0
      %v2346 = vsel %vm1053, %v2175, 0
      %2348 = vmatprep.subr.bf16.mxu0 0
      %2349 = vmatpush1.bf16.msra.mxu0 %v2346
      %2350 = vmatprep.subr.bf16.mxu0 0
      %2351 = vmatpush1.bf16.msra.mxu0 0
      %2352 = vmatprep.subr.bf16.mxu0 0
      %2353 = vmatpush1.bf16.msra.mxu0 0
      %2354 = vmatprep.subr.bf16.mxu0 0
      %2355 = vmatpush1.bf16.msra.mxu0 0
      %2356 = vmatprep.subr.bf16.mxu0 0
      %2357 = vmatpush1.bf16.msra.mxu0 0
      %2358 = vmatprep.subr.bf16.mxu0 0
      %2359 = vmatpush1.bf16.msra.mxu0 0
      %2360 = vmatprep.subr.bf16.mxu0 0
      %2361 = vmatpush1.bf16.msra.mxu0 0
      %2362 = vmatprep.subr.bf16.mxu0 0
      %2363 = vmatpush1.bf16.msra.mxu0 0
      %2364 = vmatprep.subr.bf16.mxu0 0
      %2365 = vmatpush1.bf16.msra.mxu0 0
      %2366 = vmatprep.subr.bf16.mxu0 0
      %2367 = vmatpush1.bf16.msra.mxu0 0
      %2368 = vmatprep.subr.bf16.mxu0 0
      %2369 = vmatpush1.bf16.msra.mxu0 0
      %2370 = vmatprep.subr.bf16.mxu0 0
      %2371 = vmatpush1.bf16.msra.mxu0 0
      %2372 = vmatprep.subr.bf16.mxu0 0
      %2373 = vmatpush1.bf16.msra.mxu0 0
      %2374 = vmatprep.subr.bf16.mxu0 0
      %2375 = vmatpush1.bf16.msra.mxu0 0
      %2376 = vmatprep.subr.bf16.mxu0 0
      %2377 = vmatpush1.bf16.msra.mxu0 0
      %2378 = vmatprep.subr.bf16.mxu0 0
      %2379 = vmatpush1.bf16.msra.mxu0 0
      %2380 = vmatprep.mubr.bf16.mxu0 0
      %2381 = vmatmul.mubr.bf16.gmra.mrb[0].mxu0 %v2343
      %v2382 = vpop.f32.mrb[0].mxu0
      %v2383 = vadd.f32 0.0, %v2382
      %v2384 = vpop.f32.mrb[0].mxu0
      %v2385 = vpop.f32.mrb[0].mxu0
      %v2386 = vpop.f32.mrb[0].mxu0
      %2387 = vdwg.mxu0
      %2389 = vrot.lane.b32.xlu0 %v2170, 96
      %v2390 = vpop.permute.xlu0 %2389
      %2392 = vrot.lane.b32.xlu0 %v2172, 96
      %v2393 = vpop.permute.xlu0 %2392
      %v2395 = vsel %vm924, %v2390, 0
      %v2398 = vsel %vm924, %v2393, 0
      %2400 = vmatprep.subr.bf16.mxu0 0
      %2401 = vmatpush1.bf16.xpose.msra.mxu0 %v2398
      %2402 = vmatprep.subr.bf16.mxu0 0
      %2403 = vmatpush1.bf16.xpose.msra.mxu0 0
      %2404 = vmatprep.subr.bf16.mxu0 0
      %2405 = vmatpush1.bf16.xpose.msra.mxu0 0
      %2406 = vmatprep.subr.bf16.mxu0 0
      %2407 = vmatpush1.bf16.xpose.msra.mxu0 0
      %2408 = vmatprep.subr.bf16.mxu0 0
      %2409 = vmatpush1.bf16.xpose.msra.mxu0 0
      %2410 = vmatprep.subr.bf16.mxu0 0
      %2411 = vmatpush1.bf16.xpose.msra.mxu0 0
      %2412 = vmatprep.subr.bf16.mxu0 0
      %2413 = vmatpush1.bf16.xpose.msra.mxu0 0
      %2414 = vmatprep.subr.bf16.mxu0 0
      %2415 = vmatpush1.bf16.xpose.msra.mxu0 0
      %2416 = vmatprep.subr.bf16.mxu0 0
      %2417 = vmatpush1.bf16.xpose.msra.mxu0 0
      %2418 = vmatprep.subr.bf16.mxu0 0
      %2419 = vmatpush1.bf16.xpose.msra.mxu0 0
      %2420 = vmatprep.subr.bf16.mxu0 0
      %2421 = vmatpush1.bf16.xpose.msra.mxu0 0
      %2422 = vmatprep.subr.bf16.mxu0 0
      %2423 = vmatpush1.bf16.xpose.msra.mxu0 0
      %2424 = vmatprep.subr.bf16.mxu0 0
      %2425 = vmatpush1.bf16.xpose.msra.mxu0 0
      %2426 = vmatprep.subr.bf16.mxu0 0
      %2427 = vmatpush1.bf16.xpose.msra.mxu0 0
      %2428 = vmatprep.subr.bf16.mxu0 0
      %2429 = vmatpush1.bf16.xpose.msra.mxu0 0
      %2430 = vmatprep.subr.bf16.mxu0 0
      %2431 = vmatpush1.bf16.xpose.msra.mxu0 0
      %2432 = vmatprep.mubr.bf16.mxu0 0
      %2433 = vmatmul.mubr.bf16.gmra.mrb[0].mxu0 %v2395
      %v2434 = vpop.f32.mrb[0].mxu0
      %v2435 = vadd.f32 0.0, %v2434
      %v2436 = vpop.f32.mrb[0].mxu0
      %v2437 = vpop.f32.mrb[0].mxu0
      %v2438 = vpop.f32.mrb[0].mxu0
      %2439 = vdwg.mxu0
      %2441 = vrot.lane.b32.xlu0 %v2171, 96
      %v2442 = vpop.permute.xlu0 %2441
      %2444 = vrot.lane.b32.xlu0 %v2173, 96
      %v2445 = vpop.permute.xlu0 %2444
      %v2447 = vsel %vm924, %v2442, 0
      %v2450 = vsel %vm924, %v2445, 0
      %2452 = vmatprep.subr.bf16.mxu0 0
      %2453 = vmatpush1.bf16.xpose.msra.mxu0 %v2450
      %2454 = vmatprep.subr.bf16.mxu0 0
      %2455 = vmatpush1.bf16.xpose.msra.mxu0 0
      %2456 = vmatprep.subr.bf16.mxu0 0
      %2457 = vmatpush1.bf16.xpose.msra.mxu0 0
      %2458 = vmatprep.subr.bf16.mxu0 0
      %2459 = vmatpush1.bf16.xpose.msra.mxu0 0
      %2460 = vmatprep.subr.bf16.mxu0 0
      %2461 = vmatpush1.bf16.xpose.msra.mxu0 0
      %2462 = vmatprep.subr.bf16.mxu0 0
      %2463 = vmatpush1.bf16.xpose.msra.mxu0 0
      %2464 = vmatprep.subr.bf16.mxu0 0
      %2465 = vmatpush1.bf16.xpose.msra.mxu0 0
      %2466 = vmatprep.subr.bf16.mxu0 0
      %2467 = vmatpush1.bf16.xpose.msra.mxu0 0
      %2468 = vmatprep.subr.bf16.mxu0 0
      %2469 = vmatpush1.bf16.xpose.msra.mxu0 0
      %2470 = vmatprep.subr.bf16.mxu0 0
      %2471 = vmatpush1.bf16.xpose.msra.mxu0 0
      %2472 = vmatprep.subr.bf16.mxu0 0
      %2473 = vmatpush1.bf16.xpose.msra.mxu0 0
      %2474 = vmatprep.subr.bf16.mxu0 0
      %2475 = vmatpush1.bf16.xpose.msra.mxu0 0
      %2476 = vmatprep.subr.bf16.mxu0 0
      %2477 = vmatpush1.bf16.xpose.msra.mxu0 0
      %2478 = vmatprep.subr.bf16.mxu0 0
      %2479 = vmatpush1.bf16.xpose.msra.mxu0 0
      %2480 = vmatprep.subr.bf16.mxu0 0
      %2481 = vmatpush1.bf16.xpose.msra.mxu0 0
      %2482 = vmatprep.subr.bf16.mxu0 0
      %2483 = vmatpush1.bf16.xpose.msra.mxu0 0
      %2484 = vmatprep.mubr.bf16.mxu0 0
      %2485 = vmatmul.mubr.bf16.gmra.mrb[0].mxu0 %v2447
      %v2486 = vpop.f32.mrb[0].mxu0
      %v2487 = vadd.f32 0.0, %v2486
      %v2488 = vpop.f32.mrb[0].mxu0
      %v2489 = vpop.f32.mrb[0].mxu0
      %v2490 = vpop.f32.mrb[0].mxu0
      %2491 = vdwg.mxu0
      %v2492 = vmul.f32 %v2435, 0.17677669
      %v2493 = vmul.f32 %v2487, 0.17677669
      %v2494 = vsel %vm1023, %v2492, -inf
      %2495 = vmax.xlane.f32.xlu0 %v2494
      %v2496 = vpop.xlane.xlu0 %2495
      %v2497 = vsel %vm1023, %v2493, -inf
      %2498 = vmax.xlane.f32.xlu0 %v2497
      %v2499 = vpop.xlane.xlu0 %2498
      %v2500 = vsub.f32 %v2492, %v2496
      %v2501 = vsub.f32 %v2493, %v2499
      %v2502 = vmul.f32 %v2500, 1.442695
      %v2503 = vpow.pop %v2502
      %v2504 = vmul.f32 %v2501, 1.442695
      %v2505 = vpow.pop %v2504
      %v2506 = vsel %vm1023, %v2503, 0.0
      %2507 = vadd.xlane.f32.xlu0 %v2506
      %v2508 = vpop.xlane.xlu0 %2507
      %v2509 = vsel %vm1023, %v2505, 0.0
      %2510 = vadd.xlane.f32.xlu0 %v2509
      %v2511 = vpop.xlane.xlu0 %2510
      %v2512 = vrcp.pop %v2508
      %v2513 = vmul.f32 1.0, %v2512
      %v2514 = vrcp.pop %v2511
      %v2515 = vmul.f32 1.0, %v2514
      %v2516 = vmul.f32 %v2503, %v2513
      %v2517 = vmul.f32 %v2505, %v2515
      %v2518 = vpack.c.bf16 %v2516, %v2516
      %v2519 = vpack.c.bf16 %v2517, %v2517
      %2521 = vrot.lane.b32.xlu0 %v2174, 96
      %v2522 = vpop.permute.xlu0 %2521
      %v2524 = vsel %vm1023, %v2518, 0
      %v2527 = vsel %vm1053, %v2522, 0
      %2529 = vmatprep.subr.bf16.mxu0 0
      %2530 = vmatpush1.bf16.msra.mxu0 %v2527
      %2531 = vmatprep.subr.bf16.mxu0 0
      %2532 = vmatpush1.bf16.msra.mxu0 0
      %2533 = vmatprep.subr.bf16.mxu0 0
      %2534 = vmatpush1.bf16.msra.mxu0 0
      %2535 = vmatprep.subr.bf16.mxu0 0
      %2536 = vmatpush1.bf16.msra.mxu0 0
      %2537 = vmatprep.subr.bf16.mxu0 0
      %2538 = vmatpush1.bf16.msra.mxu0 0
      %2539 = vmatprep.subr.bf16.mxu0 0
      %2540 = vmatpush1.bf16.msra.mxu0 0
      %2541 = vmatprep.subr.bf16.mxu0 0
      %2542 = vmatpush1.bf16.msra.mxu0 0
      %2543 = vmatprep.subr.bf16.mxu0 0
      %2544 = vmatpush1.bf16.msra.mxu0 0
      %2545 = vmatprep.subr.bf16.mxu0 0
      %2546 = vmatpush1.bf16.msra.mxu0 0
      %2547 = vmatprep.subr.bf16.mxu0 0
      %2548 = vmatpush1.bf16.msra.mxu0 0
      %2549 = vmatprep.subr.bf16.mxu0 0
      %2550 = vmatpush1.bf16.msra.mxu0 0
      %2551 = vmatprep.subr.bf16.mxu0 0
      %2552 = vmatpush1.bf16.msra.mxu0 0
      %2553 = vmatprep.subr.bf16.mxu0 0
      %2554 = vmatpush1.bf16.msra.mxu0 0
      %2555 = vmatprep.subr.bf16.mxu0 0
      %2556 = vmatpush1.bf16.msra.mxu0 0
      %2557 = vmatprep.subr.bf16.mxu0 0
      %2558 = vmatpush1.bf16.msra.mxu0 0
      %2559 = vmatprep.subr.bf16.mxu0 0
      %2560 = vmatpush1.bf16.msra.mxu0 0
      %2561 = vmatprep.mubr.bf16.mxu0 0
      %2562 = vmatmul.mubr.bf16.gmra.mrb[0].mxu0 %v2524
      %v2563 = vpop.f32.mrb[0].mxu0
      %v2564 = vadd.f32 0.0, %v2563
      %v2565 = vpop.f32.mrb[0].mxu0
      %v2566 = vpop.f32.mrb[0].mxu0
      %v2567 = vpop.f32.mrb[0].mxu0
      %2568 = vdwg.mxu0
      %2570 = vrot.lane.b32.xlu0 %v2175, 96
      %v2571 = vpop.permute.xlu0 %2570
      %v2573 = vsel %vm1023, %v2519, 0
      %v2576 = vsel %vm1053, %v2571, 0
      %2578 = vmatprep.subr.bf16.mxu0 0
      %2579 = vmatpush1.bf16.msra.mxu0 %v2576
      %2580 = vmatprep.subr.bf16.mxu0 0
      %2581 = vmatpush1.bf16.msra.mxu0 0
      %2582 = vmatprep.subr.bf16.mxu0 0
      %2583 = vmatpush1.bf16.msra.mxu0 0
      %2584 = vmatprep.subr.bf16.mxu0 0
      %2585 = vmatpush1.bf16.msra.mxu0 0
      %2586 = vmatprep.subr.bf16.mxu0 0
      %2587 = vmatpush1.bf16.msra.mxu0 0
      %2588 = vmatprep.subr.bf16.mxu0 0
      %2589 = vmatpush1.bf16.msra.mxu0 0
      %2590 = vmatprep.subr.bf16.mxu0 0
      %2591 = vmatpush1.bf16.msra.mxu0 0
      %2592 = vmatprep.subr.bf16.mxu0 0
      %2593 = vmatpush1.bf16.msra.mxu0 0
      %2594 = vmatprep.subr.bf16.mxu0 0
      %2595 = vmatpush1.bf16.msra.mxu0 0
      %2596 = vmatprep.subr.bf16.mxu0 0
      %2597 = vmatpush1.bf16.msra.mxu0 0
      %2598 = vmatprep.subr.bf16.mxu0 0
      %2599 = vmatpush1.bf16.msra.mxu0 0
      %2600 = vmatprep.subr.bf16.mxu0 0
      %2601 = vmatpush1.bf16.msra.mxu0 0
      %2602 = vmatprep.subr.bf16.mxu0 0
      %2603 = vmatpush1.bf16.msra.mxu0 0
      %2604 = vmatprep.subr.bf16.mxu0 0
      %2605 = vmatpush1.bf16.msra.mxu0 0
      %2606 = vmatprep.subr.bf16.mxu0 0
      %2607 = vmatpush1.bf16.msra.mxu0 0
      %2608 = vmatprep.subr.bf16.mxu0 0
      %2609 = vmatpush1.bf16.msra.mxu0 0
      %2610 = vmatprep.mubr.bf16.mxu0 0
      %2611 = vmatmul.mubr.bf16.gmra.mrb[0].mxu0 %v2573
      %v2612 = vpop.f32.mrb[0].mxu0
      %v2613 = vadd.f32 0.0, %v2612
      %v2614 = vpop.f32.mrb[0].mxu0
      %v2615 = vpop.f32.mrb[0].mxu0
      %v2616 = vpop.f32.mrb[0].mxu0
      %2617 = vdwg.mxu0
      %2618 = vrot.lane.b32.xlu0 %v2170, 64
      %v2619 = vpop.permute.xlu0 %2618
      %2620 = vrot.lane.b32.xlu0 %v2172, 64
      %v2621 = vpop.permute.xlu0 %2620
      %v2623 = vsel %vm924, %v2619, 0
      %v2626 = vsel %vm924, %v2621, 0
      %2628 = vmatprep.subr.bf16.mxu0 0
      %2629 = vmatpush1.bf16.xpose.msra.mxu0 %v2626
      %2630 = vmatprep.subr.bf16.mxu0 0
      %2631 = vmatpush1.bf16.xpose.msra.mxu0 0
      %2632 = vmatprep.subr.bf16.mxu0 0
      %2633 = vmatpush1.bf16.xpose.msra.mxu0 0
      %2634 = vmatprep.subr.bf16.mxu0 0
      %2635 = vmatpush1.bf16.xpose.msra.mxu0 0
      %2636 = vmatprep.subr.bf16.mxu0 0
      %2637 = vmatpush1.bf16.xpose.msra.mxu0 0
      %2638 = vmatprep.subr.bf16.mxu0 0
      %2639 = vmatpush1.bf16.xpose.msra.mxu0 0
      %2640 = vmatprep.subr.bf16.mxu0 0
      %2641 = vmatpush1.bf16.xpose.msra.mxu0 0
      %2642 = vmatprep.subr.bf16.mxu0 0
      %2643 = vmatpush1.bf16.xpose.msra.mxu0 0
      %2644 = vmatprep.subr.bf16.mxu0 0
      %2645 = vmatpush1.bf16.xpose.msra.mxu0 0
      %2646 = vmatprep.subr.bf16.mxu0 0
      %2647 = vmatpush1.bf16.xpose.msra.mxu0 0
      %2648 = vmatprep.subr.bf16.mxu0 0
      %2649 = vmatpush1.bf16.xpose.msra.mxu0 0
      %2650 = vmatprep.subr.bf16.mxu0 0
      %2651 = vmatpush1.bf16.xpose.msra.mxu0 0
      %2652 = vmatprep.subr.bf16.mxu0 0
      %2653 = vmatpush1.bf16.xpose.msra.mxu0 0
      %2654 = vmatprep.subr.bf16.mxu0 0
      %2655 = vmatpush1.bf16.xpose.msra.mxu0 0
      %2656 = vmatprep.subr.bf16.mxu0 0
      %2657 = vmatpush1.bf16.xpose.msra.mxu0 0
      %2658 = vmatprep.subr.bf16.mxu0 0
      %2659 = vmatpush1.bf16.xpose.msra.mxu0 0
      %2660 = vmatprep.mubr.bf16.mxu0 0
      %2661 = vmatmul.mubr.bf16.gmra.mrb[0].mxu0 %v2623
      %v2662 = vpop.f32.mrb[0].mxu0
      %v2663 = vadd.f32 0.0, %v2662
      %v2664 = vpop.f32.mrb[0].mxu0
      %v2665 = vpop.f32.mrb[0].mxu0
      %v2666 = vpop.f32.mrb[0].mxu0
      %2667 = vdwg.mxu0
      %2668 = vrot.lane.b32.xlu0 %v2171, 64
      %v2669 = vpop.permute.xlu0 %2668
      %2670 = vrot.lane.b32.xlu0 %v2173, 64
      %v2671 = vpop.permute.xlu0 %2670
      %v2673 = vsel %vm924, %v2669, 0
      %v2676 = vsel %vm924, %v2671, 0
      %2678 = vmatprep.subr.bf16.mxu0 0
      %2679 = vmatpush1.bf16.xpose.msra.mxu0 %v2676
      %2680 = vmatprep.subr.bf16.mxu0 0
      %2681 = vmatpush1.bf16.xpose.msra.mxu0 0
      %2682 = vmatprep.subr.bf16.mxu0 0
      %2683 = vmatpush1.bf16.xpose.msra.mxu0 0
      %2684 = vmatprep.subr.bf16.mxu0 0
      %2685 = vmatpush1.bf16.xpose.msra.mxu0 0
      %2686 = vmatprep.subr.bf16.mxu0 0
      %2687 = vmatpush1.bf16.xpose.msra.mxu0 0
      %2688 = vmatprep.subr.bf16.mxu0 0
      %2689 = vmatpush1.bf16.xpose.msra.mxu0 0
      %2690 = vmatprep.subr.bf16.mxu0 0
      %2691 = vmatpush1.bf16.xpose.msra.mxu0 0
      %2692 = vmatprep.subr.bf16.mxu0 0
      %2693 = vmatpush1.bf16.xpose.msra.mxu0 0
      %2694 = vmatprep.subr.bf16.mxu0 0
      %2695 = vmatpush1.bf16.xpose.msra.mxu0 0
      %2696 = vmatprep.subr.bf16.mxu0 0
      %2697 = vmatpush1.bf16.xpose.msra.mxu0 0
      %2698 = vmatprep.subr.bf16.mxu0 0
      %2699 = vmatpush1.bf16.xpose.msra.mxu0 0
      %2700 = vmatprep.subr.bf16.mxu0 0
      %2701 = vmatpush1.bf16.xpose.msra.mxu0 0
      %2702 = vmatprep.subr.bf16.mxu0 0
      %2703 = vmatpush1.bf16.xpose.msra.mxu0 0
      %2704 = vmatprep.subr.bf16.mxu0 0
      %2705 = vmatpush1.bf16.xpose.msra.mxu0 0
      %2706 = vmatprep.subr.bf16.mxu0 0
      %2707 = vmatpush1.bf16.xpose.msra.mxu0 0
      %2708 = vmatprep.subr.bf16.mxu0 0
      %2709 = vmatpush1.bf16.xpose.msra.mxu0 0
      %2710 = vmatprep.mubr.bf16.mxu0 0
      %2711 = vmatmul.mubr.bf16.gmra.mrb[0].mxu0 %v2673
      %v2712 = vpop.f32.mrb[0].mxu0
      %v2713 = vadd.f32 0.0, %v2712
      %v2714 = vpop.f32.mrb[0].mxu0
      %v2715 = vpop.f32.mrb[0].mxu0
      %v2716 = vpop.f32.mrb[0].mxu0
      %2717 = vdwg.mxu0
      %v2718 = vmul.f32 %v2663, 0.17677669
      %v2719 = vmul.f32 %v2713, 0.17677669
      %v2720 = vsel %vm1023, %v2718, -inf
      %2721 = vmax.xlane.f32.xlu0 %v2720
      %v2722 = vpop.xlane.xlu0 %2721
      %v2723 = vsel %vm1023, %v2719, -inf
      %2724 = vmax.xlane.f32.xlu0 %v2723
      %v2725 = vpop.xlane.xlu0 %2724
      %v2726 = vsub.f32 %v2718, %v2722
      %v2727 = vsub.f32 %v2719, %v2725
      %v2728 = vmul.f32 %v2726, 1.442695
      %v2729 = vpow.pop %v2728
      %v2730 = vmul.f32 %v2727, 1.442695
      %v2731 = vpow.pop %v2730
      %v2732 = vsel %vm1023, %v2729, 0.0
      %2733 = vadd.xlane.f32.xlu0 %v2732
      %v2734 = vpop.xlane.xlu0 %2733
      %v2735 = vsel %vm1023, %v2731, 0.0
      %2736 = vadd.xlane.f32.xlu0 %v2735
      %v2737 = vpop.xlane.xlu0 %2736
      %v2738 = vrcp.pop %v2734
      %v2739 = vmul.f32 1.0, %v2738
      %v2740 = vrcp.pop %v2737
      %v2741 = vmul.f32 1.0, %v2740
      %v2742 = vmul.f32 %v2729, %v2739
      %v2743 = vmul.f32 %v2731, %v2741
      %v2744 = vpack.c.bf16 %v2742, %v2742
      %v2745 = vpack.c.bf16 %v2743, %v2743
      %2746 = vrot.lane.b32.xlu0 %v2174, 64
      %v2747 = vpop.permute.xlu0 %2746
      %v2749 = vsel %vm1023, %v2744, 0
      %v2752 = vsel %vm1053, %v2747, 0
      %2754 = vmatprep.subr.bf16.mxu0 0
      %2755 = vmatpush1.bf16.msra.mxu0 %v2752
      %2756 = vmatprep.subr.bf16.mxu0 0
      %2757 = vmatpush1.bf16.msra.mxu0 0
      %2758 = vmatprep.subr.bf16.mxu0 0
      %2759 = vmatpush1.bf16.msra.mxu0 0
      %2760 = vmatprep.subr.bf16.mxu0 0
      %2761 = vmatpush1.bf16.msra.mxu0 0
      %2762 = vmatprep.subr.bf16.mxu0 0
      %2763 = vmatpush1.bf16.msra.mxu0 0
      %2764 = vmatprep.subr.bf16.mxu0 0
      %2765 = vmatpush1.bf16.msra.mxu0 0
      %2766 = vmatprep.subr.bf16.mxu0 0
      %2767 = vmatpush1.bf16.msra.mxu0 0
      %2768 = vmatprep.subr.bf16.mxu0 0
      %2769 = vmatpush1.bf16.msra.mxu0 0
      %2770 = vmatprep.subr.bf16.mxu0 0
      %2771 = vmatpush1.bf16.msra.mxu0 0
      %2772 = vmatprep.subr.bf16.mxu0 0
      %2773 = vmatpush1.bf16.msra.mxu0 0
      %2774 = vmatprep.subr.bf16.mxu0 0
      %2775 = vmatpush1.bf16.msra.mxu0 0
      %2776 = vmatprep.subr.bf16.mxu0 0
      %2777 = vmatpush1.bf16.msra.mxu0 0
      %2778 = vmatprep.subr.bf16.mxu0 0
      %2779 = vmatpush1.bf16.msra.mxu0 0
      %2780 = vmatprep.subr.bf16.mxu0 0
      %2781 = vmatpush1.bf16.msra.mxu0 0
      %2782 = vmatprep.subr.bf16.mxu0 0
      %2783 = vmatpush1.bf16.msra.mxu0 0
      %2784 = vmatprep.subr.bf16.mxu0 0
      %2785 = vmatpush1.bf16.msra.mxu0 0
      %2786 = vmatprep.mubr.bf16.mxu0 0
      %2787 = vmatmul.mubr.bf16.gmra.mrb[0].mxu0 %v2749
      %v2788 = vpop.f32.mrb[0].mxu0
      %v2789 = vadd.f32 0.0, %v2788
      %v2790 = vpop.f32.mrb[0].mxu0
      %v2791 = vpop.f32.mrb[0].mxu0
      %v2792 = vpop.f32.mrb[0].mxu0
      %2793 = vdwg.mxu0
      %2794 = vrot.lane.b32.xlu0 %v2175, 64
      %v2795 = vpop.permute.xlu0 %2794
      %v2797 = vsel %vm1023, %v2745, 0
      %v2800 = vsel %vm1053, %v2795, 0
      %2802 = vmatprep.subr.bf16.mxu0 0
      %2803 = vmatpush1.bf16.msra.mxu0 %v2800
      %2804 = vmatprep.subr.bf16.mxu0 0
      %2805 = vmatpush1.bf16.msra.mxu0 0
      %2806 = vmatprep.subr.bf16.mxu0 0
      %2807 = vmatpush1.bf16.msra.mxu0 0
      %2808 = vmatprep.subr.bf16.mxu0 0
      %2809 = vmatpush1.bf16.msra.mxu0 0
      %2810 = vmatprep.subr.bf16.mxu0 0
      %2811 = vmatpush1.bf16.msra.mxu0 0
      %2812 = vmatprep.subr.bf16.mxu0 0
      %2813 = vmatpush1.bf16.msra.mxu0 0
      %2814 = vmatprep.subr.bf16.mxu0 0
      %2815 = vmatpush1.bf16.msra.mxu0 0
      %2816 = vmatprep.subr.bf16.mxu0 0
      %2817 = vmatpush1.bf16.msra.mxu0 0
      %2818 = vmatprep.subr.bf16.mxu0 0
      %2819 = vmatpush1.bf16.msra.mxu0 0
      %2820 = vmatprep.subr.bf16.mxu0 0
      %2821 = vmatpush1.bf16.msra.mxu0 0
      %2822 = vmatprep.subr.bf16.mxu0 0
      %2823 = vmatpush1.bf16.msra.mxu0 0
      %2824 = vmatprep.subr.bf16.mxu0 0
      %2825 = vmatpush1.bf16.msra.mxu0 0
      %2826 = vmatprep.subr.bf16.mxu0 0
      %2827 = vmatpush1.bf16.msra.mxu0 0
      %2828 = vmatprep.subr.bf16.mxu0 0
      %2829 = vmatpush1.bf16.msra.mxu0 0
      %2830 = vmatprep.subr.bf16.mxu0 0
      %2831 = vmatpush1.bf16.msra.mxu0 0
      %2832 = vmatprep.subr.bf16.mxu0 0
      %2833 = vmatpush1.bf16.msra.mxu0 0
      %2834 = vmatprep.mubr.bf16.mxu0 0
      %2835 = vmatmul.mubr.bf16.gmra.mrb[0].mxu0 %v2797
      %v2836 = vpop.f32.mrb[0].mxu0
      %v2837 = vadd.f32 0.0, %v2836
      %v2838 = vpop.f32.mrb[0].mxu0
      %v2839 = vpop.f32.mrb[0].mxu0
      %v2840 = vpop.f32.mrb[0].mxu0
      %2841 = vdwg.mxu0
      %2842 = vrot.lane.b32.xlu0 %v2170, 32
      %v2843 = vpop.permute.xlu0 %2842
      %2844 = vrot.lane.b32.xlu0 %v2172, 32
      %v2845 = vpop.permute.xlu0 %2844
      %v2847 = vsel %vm924, %v2843, 0
      %v2850 = vsel %vm924, %v2845, 0
      %2852 = vmatprep.subr.bf16.mxu0 0
      %2853 = vmatpush1.bf16.xpose.msra.mxu0 %v2850
      %2854 = vmatprep.subr.bf16.mxu0 0
      %2855 = vmatpush1.bf16.xpose.msra.mxu0 0
      %2856 = vmatprep.subr.bf16.mxu0 0
      %2857 = vmatpush1.bf16.xpose.msra.mxu0 0
      %2858 = vmatprep.subr.bf16.mxu0 0
      %2859 = vmatpush1.bf16.xpose.msra.mxu0 0
      %2860 = vmatprep.subr.bf16.mxu0 0
      %2861 = vmatpush1.bf16.xpose.msra.mxu0 0
      %2862 = vmatprep.subr.bf16.mxu0 0
      %2863 = vmatpush1.bf16.xpose.msra.mxu0 0
      %2864 = vmatprep.subr.bf16.mxu0 0
      %2865 = vmatpush1.bf16.xpose.msra.mxu0 0
      %2866 = vmatprep.subr.bf16.mxu0 0
      %2867 = vmatpush1.bf16.xpose.msra.mxu0 0
      %2868 = vmatprep.subr.bf16.mxu0 0
      %2869 = vmatpush1.bf16.xpose.msra.mxu0 0
      %2870 = vmatprep.subr.bf16.mxu0 0
      %2871 = vmatpush1.bf16.xpose.msra.mxu0 0
      %2872 = vmatprep.subr.bf16.mxu0 0
      %2873 = vmatpush1.bf16.xpose.msra.mxu0 0
      %2874 = vmatprep.subr.bf16.mxu0 0
      %2875 = vmatpush1.bf16.xpose.msra.mxu0 0
      %2876 = vmatprep.subr.bf16.mxu0 0
      %2877 = vmatpush1.bf16.xpose.msra.mxu0 0
      %2878 = vmatprep.subr.bf16.mxu0 0
      %2879 = vmatpush1.bf16.xpose.msra.mxu0 0
      %2880 = vmatprep.subr.bf16.mxu0 0
      %2881 = vmatpush1.bf16.xpose.msra.mxu0 0
      %2882 = vmatprep.subr.bf16.mxu0 0
      %2883 = vmatpush1.bf16.xpose.msra.mxu0 0
      %2884 = vmatprep.mubr.bf16.mxu0 0
      %2885 = vmatmul.mubr.bf16.gmra.mrb[0].mxu0 %v2847
      %v2886 = vpop.f32.mrb[0].mxu0
      %v2887 = vadd.f32 0.0, %v2886
      %v2888 = vpop.f32.mrb[0].mxu0
      %v2889 = vpop.f32.mrb[0].mxu0
      %v2890 = vpop.f32.mrb[0].mxu0
      %2891 = vdwg.mxu0
      %2892 = vrot.lane.b32.xlu0 %v2171, 32
      %v2893 = vpop.permute.xlu0 %2892
      %2894 = vrot.lane.b32.xlu0 %v2173, 32
      %v2895 = vpop.permute.xlu0 %2894
      %v2897 = vsel %vm924, %v2893, 0
      %v2900 = vsel %vm924, %v2895, 0
      %2902 = vmatprep.subr.bf16.mxu0 0
      %2903 = vmatpush1.bf16.xpose.msra.mxu0 %v2900
      %2904 = vmatprep.subr.bf16.mxu0 0
      %2905 = vmatpush1.bf16.xpose.msra.mxu0 0
      %2906 = vmatprep.subr.bf16.mxu0 0
      %2907 = vmatpush1.bf16.xpose.msra.mxu0 0
      %2908 = vmatprep.subr.bf16.mxu0 0
      %2909 = vmatpush1.bf16.xpose.msra.mxu0 0
      %2910 = vmatprep.subr.bf16.mxu0 0
      %2911 = vmatpush1.bf16.xpose.msra.mxu0 0
      %2912 = vmatprep.subr.bf16.mxu0 0
      %2913 = vmatpush1.bf16.xpose.msra.mxu0 0
      %2914 = vmatprep.subr.bf16.mxu0 0
      %2915 = vmatpush1.bf16.xpose.msra.mxu0 0
      %2916 = vmatprep.subr.bf16.mxu0 0
      %2917 = vmatpush1.bf16.xpose.msra.mxu0 0
      %2918 = vmatprep.subr.bf16.mxu0 0
      %2919 = vmatpush1.bf16.xpose.msra.mxu0 0
      %2920 = vmatprep.subr.bf16.mxu0 0
      %2921 = vmatpush1.bf16.xpose.msra.mxu0 0
      %2922 = vmatprep.subr.bf16.mxu0 0
      %2923 = vmatpush1.bf16.xpose.msra.mxu0 0
      %2924 = vmatprep.subr.bf16.mxu0 0
      %2925 = vmatpush1.bf16.xpose.msra.mxu0 0
      %2926 = vmatprep.subr.bf16.mxu0 0
      %2927 = vmatpush1.bf16.xpose.msra.mxu0 0
      %2928 = vmatprep.subr.bf16.mxu0 0
      %2929 = vmatpush1.bf16.xpose.msra.mxu0 0
      %2930 = vmatprep.subr.bf16.mxu0 0
      %2931 = vmatpush1.bf16.xpose.msra.mxu0 0
      %2932 = vmatprep.subr.bf16.mxu0 0
      %2933 = vmatpush1.bf16.xpose.msra.mxu0 0
      %2934 = vmatprep.mubr.bf16.mxu0 0
      %2935 = vmatmul.mubr.bf16.gmra.mrb[0].mxu0 %v2897
      %v2936 = vpop.f32.mrb[0].mxu0
      %v2937 = vadd.f32 0.0, %v2936
      %v2938 = vpop.f32.mrb[0].mxu0
      %v2939 = vpop.f32.mrb[0].mxu0
      %v2940 = vpop.f32.mrb[0].mxu0
      %2941 = vdwg.mxu0
      %v2942 = vmul.f32 %v2887, 0.17677669
      %v2943 = vmul.f32 %v2937, 0.17677669
      %v2944 = vsel %vm1023, %v2942, -inf
      %2945 = vmax.xlane.f32.xlu0 %v2944
      %v2946 = vpop.xlane.xlu0 %2945
      %v2947 = vsel %vm1023, %v2943, -inf
      %2948 = vmax.xlane.f32.xlu0 %v2947
      %v2949 = vpop.xlane.xlu0 %2948
      %v2950 = vsub.f32 %v2942, %v2946
      %v2951 = vsub.f32 %v2943, %v2949
      %v2952 = vmul.f32 %v2950, 1.442695
      %v2953 = vpow.pop %v2952
      %v2954 = vmul.f32 %v2951, 1.442695
      %v2955 = vpow.pop %v2954
      %v2956 = vsel %vm1023, %v2953, 0.0
      %2957 = vadd.xlane.f32.xlu0 %v2956
      %v2958 = vpop.xlane.xlu0 %2957
      %v2959 = vsel %vm1023, %v2955, 0.0
      %2960 = vadd.xlane.f32.xlu0 %v2959
      %v2961 = vpop.xlane.xlu0 %2960
      %v2962 = vrcp.pop %v2958
      %v2963 = vmul.f32 1.0, %v2962
      %v2964 = vrcp.pop %v2961
      %v2965 = vmul.f32 1.0, %v2964
      %v2966 = vmul.f32 %v2953, %v2963
      %v2967 = vmul.f32 %v2955, %v2965
      %v2968 = vpack.c.bf16 %v2966, %v2966
      %v2969 = vpack.c.bf16 %v2967, %v2967
      %2970 = vrot.lane.b32.xlu0 %v2174, 32
      %v2971 = vpop.permute.xlu0 %2970
      %v2973 = vsel %vm1023, %v2968, 0
      %v2976 = vsel %vm1053, %v2971, 0
      %2978 = vmatprep.subr.bf16.mxu0 0
      %2979 = vmatpush1.bf16.msra.mxu0 %v2976
      %2980 = vmatprep.subr.bf16.mxu0 0
      %2981 = vmatpush1.bf16.msra.mxu0 0
      %2982 = vmatprep.subr.bf16.mxu0 0
      %2983 = vmatpush1.bf16.msra.mxu0 0
      %2984 = vmatprep.subr.bf16.mxu0 0
      %2985 = vmatpush1.bf16.msra.mxu0 0
      %2986 = vmatprep.subr.bf16.mxu0 0
      %2987 = vmatpush1.bf16.msra.mxu0 0
      %2988 = vmatprep.subr.bf16.mxu0 0
      %2989 = vmatpush1.bf16.msra.mxu0 0
      %2990 = vmatprep.subr.bf16.mxu0 0
      %2991 = vmatpush1.bf16.msra.mxu0 0
      %2992 = vmatprep.subr.bf16.mxu0 0
      %2993 = vmatpush1.bf16.msra.mxu0 0
      %2994 = vmatprep.subr.bf16.mxu0 0
      %2995 = vmatpush1.bf16.msra.mxu0 0
      %2996 = vmatprep.subr.bf16.mxu0 0
      %2997 = vmatpush1.bf16.msra.mxu0 0
      %2998 = vmatprep.subr.bf16.mxu0 0
      %2999 = vmatpush1.bf16.msra.mxu0 0
      %3000 = vmatprep.subr.bf16.mxu0 0
      %3001 = vmatpush1.bf16.msra.mxu0 0
      %3002 = vmatprep.subr.bf16.mxu0 0
      %3003 = vmatpush1.bf16.msra.mxu0 0
      %3004 = vmatprep.subr.bf16.mxu0 0
      %3005 = vmatpush1.bf16.msra.mxu0 0
      %3006 = vmatprep.subr.bf16.mxu0 0
      %3007 = vmatpush1.bf16.msra.mxu0 0
      %3008 = vmatprep.subr.bf16.mxu0 0
      %3009 = vmatpush1.bf16.msra.mxu0 0
      %3010 = vmatprep.mubr.bf16.mxu0 0
      %3011 = vmatmul.mubr.bf16.gmra.mrb[0].mxu0 %v2973
      %v3012 = vpop.f32.mrb[0].mxu0
      %v3013 = vadd.f32 0.0, %v3012
      %v3014 = vpop.f32.mrb[0].mxu0
      %v3015 = vpop.f32.mrb[0].mxu0
      %v3016 = vpop.f32.mrb[0].mxu0
      %3017 = vdwg.mxu0
      %3018 = vrot.lane.b32.xlu0 %v2175, 32
      %v3019 = vpop.permute.xlu0 %3018
      %v3021 = vsel %vm1023, %v2969, 0
      %v3024 = vsel %vm1053, %v3019, 0
      %3026 = vmatprep.subr.bf16.mxu0 0
      %3027 = vmatpush1.bf16.msra.mxu0 %v3024
      %3028 = vmatprep.subr.bf16.mxu0 0
      %3029 = vmatpush1.bf16.msra.mxu0 0
      %3030 = vmatprep.subr.bf16.mxu0 0
      %3031 = vmatpush1.bf16.msra.mxu0 0
      %3032 = vmatprep.subr.bf16.mxu0 0
      %3033 = vmatpush1.bf16.msra.mxu0 0
      %3034 = vmatprep.subr.bf16.mxu0 0
      %3035 = vmatpush1.bf16.msra.mxu0 0
      %3036 = vmatprep.subr.bf16.mxu0 0
      %3037 = vmatpush1.bf16.msra.mxu0 0
      %3038 = vmatprep.subr.bf16.mxu0 0
      %3039 = vmatpush1.bf16.msra.mxu0 0
      %3040 = vmatprep.subr.bf16.mxu0 0
      %3041 = vmatpush1.bf16.msra.mxu0 0
      %3042 = vmatprep.subr.bf16.mxu0 0
      %3043 = vmatpush1.bf16.msra.mxu0 0
      %3044 = vmatprep.subr.bf16.mxu0 0
      %3045 = vmatpush1.bf16.msra.mxu0 0
      %3046 = vmatprep.subr.bf16.mxu0 0
      %3047 = vmatpush1.bf16.msra.mxu0 0
      %3048 = vmatprep.subr.bf16.mxu0 0
      %3049 = vmatpush1.bf16.msra.mxu0 0
      %3050 = vmatprep.subr.bf16.mxu0 0
      %3051 = vmatpush1.bf16.msra.mxu0 0
      %3052 = vmatprep.subr.bf16.mxu0 0
      %3053 = vmatpush1.bf16.msra.mxu0 0
      %3054 = vmatprep.subr.bf16.mxu0 0
      %3055 = vmatpush1.bf16.msra.mxu0 0
      %3056 = vmatprep.subr.bf16.mxu0 0
      %3057 = vmatpush1.bf16.msra.mxu0 0
      %3058 = vmatprep.mubr.bf16.mxu0 0
      %3059 = vmatmul.mubr.bf16.gmra.mrb[0].mxu0 %v3021
      %v3060 = vpop.f32.mrb[0].mxu0
      %v3061 = vadd.f32 0.0, %v3060
      %v3062 = vpop.f32.mrb[0].mxu0
      %v3063 = vpop.f32.mrb[0].mxu0
      %v3064 = vpop.f32.mrb[0].mxu0
      %3065 = vdwg.mxu0
      %3068 = vrot.lane.b32.xlu0 %v2564, 32
      %v3069 = vpop.permute.xlu0 %3068
      %3070 = vrot.lane.b32.xlu0 %v2613, 32
      %v3071 = vpop.permute.xlu0 %3070
      %3076 = vrot.lane.b32.xlu0 %v2789, 64
      %v3077 = vpop.permute.xlu0 %3076
      %3078 = vrot.lane.b32.xlu0 %v2837, 64
      %v3079 = vpop.permute.xlu0 %3078
      %3084 = vrot.lane.b32.xlu0 %v3013, 96
      %v3085 = vpop.permute.xlu0 %3084
      %3086 = vrot.lane.b32.xlu0 %v3061, 96
      %v3087 = vpop.permute.xlu0 %3086
      %v3090 = vsel %vm924, %v2337, %v3069
      %v3091 = vsel %vm924, %v2383, %v3071
      %v3092 = vsel %vm1853, %v3090, %v3077
      %v3093 = vsel %vm1853, %v3091, %v3079
      %v3094 = vsel %vm1856, %v3092, %v3085
      %v3095 = vsel %vm1856, %v3093, %v3087
      %v3096 = vadd.f32 %v1859, %v3094
      %v3097 = vadd.f32 %v1860, %v3095
      %v3098 = vrot.slane %v3096, 4
      %v3099 = vadd.f32 %v3096, %v3098
      %v3100 = vrot.slane %v3099, 2
      %v3101 = vadd.f32 %v3099, %v3100
      %v3102 = vrot.slane %v3101, 1
      %v3103 = vadd.f32 %v3101, %v3102
      %v3104 = vrot.slane %v3097, 4
      %v3105 = vadd.f32 %v3097, %v3104
      %v3106 = vrot.slane %v3105, 2
      %v3107 = vadd.f32 %v3105, %v3106
      %v3108 = vrot.slane %v3107, 1
      %v3109 = vadd.f32 %v3107, %v3108
      %v3110 = vmul.f32 %v3103, %v623
      %v3111 = vmul.f32 %v3109, %v623
      %v3112 = vsub.f32 %v3096, %v3110
      %v3113 = vsub.f32 %v3097, %v3111
      %v3114 = vmul.f32 %v3112, %v3112
      %v3115 = vmul.f32 %v3113, %v3113
      %v3116 = vrot.slane %v3114, 4
      %v3117 = vadd.f32 %v3114, %v3116
      %v3118 = vrot.slane %v3117, 2
      %v3119 = vadd.f32 %v3117, %v3118
      %v3120 = vrot.slane %v3119, 1
      %v3121 = vadd.f32 %v3119, %v3120
      %v3122 = vrot.slane %v3115, 4
      %v3123 = vadd.f32 %v3115, %v3122
      %v3124 = vrot.slane %v3123, 2
      %v3125 = vadd.f32 %v3123, %v3124
      %v3126 = vrot.slane %v3125, 1
      %v3127 = vadd.f32 %v3125, %v3126
      %v3128 = vmul.f32 %v3121, %v623
      %v3129 = vmul.f32 %v3127, %v623
      %v3130 = vadd.f32 %v3128, 1e-05
      %v3131 = vadd.f32 %v3129, 1e-05
      %v3132 = vrsqrt.pop %v3130
      %v3133 = vrsqrt.pop %v3131
      %v3134 = vmul.f32 %v3112, %v3132
      %v3135 = vmul.f32 %v3113, %v3133
      %v3136 = vld [vmem:[%s12] sm:$0xff]
      %v3137 = vmul.f32 %v3134, %v3136
      %v3138 = vmul.f32 %v3135, %v3136
      %v3139 = vld [vmem:[%s13] sm:$0xff]
      %v3140 = vadd.f32 %v3137, %v3139
      %v3141 = vadd.f32 %v3138, %v3139
      %v3142 = vpack.c.bf16 %v3141, %v3140
      %v3143 = vld [vmem:[%s14] sm:$0xff]
      %v3144 = vld [vmem:[%s14 + $0x8] sm:$0xff]
      %v3145 = vld [vmem:[%s14 + $0x10] sm:$0xff]
      %v3146 = vld [vmem:[%s14 + $0x18] sm:$0xff]
      %v3147 = vld [vmem:[%s14 + $0x20] sm:$0xff]
      %v3148 = vld [vmem:[%s14 + $0x28] sm:$0xff]
      %v3149 = vld [vmem:[%s14 + $0x30] sm:$0xff]
      %v3150 = vld [vmem:[%s14 + $0x38] sm:$0xff]
      %v3151 = vld [vmem:[%s14 + $0x40] sm:$0xff]
      %v3152 = vld [vmem:[%s14 + $0x48] sm:$0xff]
      %v3153 = vld [vmem:[%s14 + $0x50] sm:$0xff]
      %v3154 = vld [vmem:[%s14 + $0x58] sm:$0xff]
      %v3155 = vld [vmem:[%s14 + $0x60] sm:$0xff]
      %v3156 = vld [vmem:[%s14 + $0x68] sm:$0xff]
      %v3157 = vld [vmem:[%s14 + $0x70] sm:$0xff]
      %v3158 = vld [vmem:[%s14 + $0x78] sm:$0xff]
      %v3159 = vld [vmem:[%s14 + $0x80] sm:$0xff]
      %v3160 = vld [vmem:[%s14 + $0x88] sm:$0xff]
      %v3161 = vld [vmem:[%s14 + $0x90] sm:$0xff]
      %v3162 = vld [vmem:[%s14 + $0x98] sm:$0xff]
      %v3163 = vld [vmem:[%s14 + $0xa0] sm:$0xff]
      %v3164 = vld [vmem:[%s14 + $0xa8] sm:$0xff]
      %v3165 = vld [vmem:[%s14 + $0xb0] sm:$0xff]
      %v3166 = vld [vmem:[%s14 + $0xb8] sm:$0xff]
      %v3167 = vld [vmem:[%s14 + $0xc0] sm:$0xff]
      %v3168 = vld [vmem:[%s14 + $0xc8] sm:$0xff]
      %v3169 = vld [vmem:[%s14 + $0xd0] sm:$0xff]
      %v3170 = vld [vmem:[%s14 + $0xd8] sm:$0xff]
      %v3171 = vld [vmem:[%s14 + $0xe0] sm:$0xff]
      %v3172 = vld [vmem:[%s14 + $0xe8] sm:$0xff]
      %v3173 = vld [vmem:[%s14 + $0xf0] sm:$0xff]
      %v3174 = vld [vmem:[%s14 + $0xf8] sm:$0xff]
      %v3175 = vld [vmem:[%s15] sm:$0xf]
      %v3177 = vlaneseq
      %v3178 = vshrl.u32 %v3177, 7
      %v3179 = vsub.s32 0, %v3178
      %v3180 = vrot.slane %v3175, %v3179
      %v3181 = vlaneseq
      %v3182 = vshrl.u32 %v3181, 7
      %v3183 = vsub.s32 1, %v3182
      %v3184 = vrot.slane %v3175, %v3183
      %v3185 = vlaneseq
      %v3186 = vshrl.u32 %v3185, 7
      %v3187 = vsub.s32 2, %v3186
      %v3188 = vrot.slane %v3175, %v3187
      %v3189 = vlaneseq
      %v3190 = vshrl.u32 %v3189, 7
      %v3191 = vsub.s32 3, %v3190
      %v3192 = vrot.slane %v3175, %v3191
      %v3229 = vunpack.c.l.b16 %v3143
      %v3230 = vunpack.c.h.b16 %v3143
      %v3231 = vunpack.c.l.b16 %v3144
      %v3232 = vunpack.c.h.b16 %v3144
      %v3233 = vunpack.c.l.b16 %v3145
      %v3234 = vunpack.c.h.b16 %v3145
      %v3235 = vunpack.c.l.b16 %v3146
      %v3236 = vunpack.c.h.b16 %v3146
      %v3237 = vunpack.c.l.b16 %v3147
      %v3238 = vunpack.c.h.b16 %v3147
      %v3239 = vunpack.c.l.b16 %v3148
      %v3240 = vunpack.c.h.b16 %v3148
      %v3241 = vunpack.c.l.b16 %v3149
      %v3242 = vunpack.c.h.b16 %v3149
      %v3243 = vunpack.c.l.b16 %v3150
      %v3244 = vunpack.c.h.b16 %v3150
      %v3245 = vunpack.c.l.b16 %v3151
      %v3246 = vunpack.c.h.b16 %v3151
      %v3247 = vunpack.c.l.b16 %v3152
      %v3248 = vunpack.c.h.b16 %v3152
      %v3249 = vunpack.c.l.b16 %v3153
      %v3250 = vunpack.c.h.b16 %v3153
      %v3251 = vunpack.c.l.b16 %v3154
      %v3252 = vunpack.c.h.b16 %v3154
      %v3253 = vunpack.c.l.b16 %v3155
      %v3254 = vunpack.c.h.b16 %v3155
      %v3255 = vunpack.c.l.b16 %v3156
      %v3256 = vunpack.c.h.b16 %v3156
      %v3257 = vunpack.c.l.b16 %v3157
      %v3258 = vunpack.c.h.b16 %v3157
      %v3259 = vunpack.c.l.b16 %v3158
      %v3260 = vunpack.c.h.b16 %v3158
      %v3261 = vunpack.c.l.b16 %v3159
      %v3262 = vunpack.c.h.b16 %v3159
      %v3263 = vunpack.c.l.b16 %v3160
      %v3264 = vunpack.c.h.b16 %v3160
      %v3265 = vunpack.c.l.b16 %v3161
      %v3266 = vunpack.c.h.b16 %v3161
      %v3267 = vunpack.c.l.b16 %v3162
      %v3268 = vunpack.c.h.b16 %v3162
      %v3269 = vunpack.c.l.b16 %v3163
      %v3270 = vunpack.c.h.b16 %v3163
      %v3271 = vunpack.c.l.b16 %v3164
      %v3272 = vunpack.c.h.b16 %v3164
      %v3273 = vunpack.c.l.b16 %v3165
      %v3274 = vunpack.c.h.b16 %v3165
      %v3275 = vunpack.c.l.b16 %v3166
      %v3276 = vunpack.c.h.b16 %v3166
      %v3277 = vunpack.c.l.b16 %v3167
      %v3278 = vunpack.c.h.b16 %v3167
      %v3279 = vunpack.c.l.b16 %v3168
      %v3280 = vunpack.c.h.b16 %v3168
      %v3281 = vunpack.c.l.b16 %v3169
      %v3282 = vunpack.c.h.b16 %v3169
      %v3283 = vunpack.c.l.b16 %v3170
      %v3284 = vunpack.c.h.b16 %v3170
      %v3285 = vunpack.c.l.b16 %v3171
      %v3286 = vunpack.c.h.b16 %v3171
      %v3287 = vunpack.c.l.b16 %v3172
      %v3288 = vunpack.c.h.b16 %v3172
      %v3289 = vunpack.c.l.b16 %v3173
      %v3290 = vunpack.c.h.b16 %v3173
      %v3291 = vunpack.c.l.b16 %v3174
      %v3292 = vunpack.c.h.b16 %v3174
      %v3293 = vpack.c.b16 %v3233, %v3229
      %v3294 = vpack.c.b16 %v3234, %v3230
      %v3295 = vpack.c.b16 %v3235, %v3231
      %v3296 = vpack.c.b16 %v3236, %v3232
      %v3297 = vpack.c.b16 %v3241, %v3237
      %v3298 = vpack.c.b16 %v3242, %v3238
      %v3299 = vpack.c.b16 %v3243, %v3239
      %v3300 = vpack.c.b16 %v3244, %v3240
      %v3301 = vpack.c.b16 %v3249, %v3245
      %v3302 = vpack.c.b16 %v3250, %v3246
      %v3303 = vpack.c.b16 %v3251, %v3247
      %v3304 = vpack.c.b16 %v3252, %v3248
      %v3305 = vpack.c.b16 %v3257, %v3253
      %v3306 = vpack.c.b16 %v3258, %v3254
      %v3307 = vpack.c.b16 %v3259, %v3255
      %v3308 = vpack.c.b16 %v3260, %v3256
      %v3309 = vpack.c.b16 %v3265, %v3261
      %v3310 = vpack.c.b16 %v3266, %v3262
      %v3311 = vpack.c.b16 %v3267, %v3263
      %v3312 = vpack.c.b16 %v3268, %v3264
      %v3313 = vpack.c.b16 %v3273, %v3269
      %v3314 = vpack.c.b16 %v3274, %v3270
      %v3315 = vpack.c.b16 %v3275, %v3271
      %v3316 = vpack.c.b16 %v3276, %v3272
      %v3317 = vpack.c.b16 %v3281, %v3277
      %v3318 = vpack.c.b16 %v3282, %v3278
      %v3319 = vpack.c.b16 %v3283, %v3279
      %v3320 = vpack.c.b16 %v3284, %v3280
      %v3321 = vpack.c.b16 %v3289, %v3285
      %v3322 = vpack.c.b16 %v3290, %v3286
      %v3323 = vpack.c.b16 %v3291, %v3287
      %v3324 = vpack.c.b16 %v3292, %v3288
      %3357 = vmatprep.subr.bf16.mxu0 %v3294
      %3358 = vmatpush1.bf16.msra.mxu0 %v3293
      %3359 = vmatprep.subr.bf16.mxu0 %v3298
      %3360 = vmatpush1.bf16.msra.mxu0 %v3297
      %3361 = vmatprep.subr.bf16.mxu0 %v3302
      %3362 = vmatpush1.bf16.msra.mxu0 %v3301
      %3363 = vmatprep.subr.bf16.mxu0 %v3306
      %3364 = vmatpush1.bf16.msra.mxu0 %v3305
      %3365 = vmatprep.subr.bf16.mxu0 %v3310
      %3366 = vmatpush1.bf16.msra.mxu0 %v3309
      %3367 = vmatprep.subr.bf16.mxu0 %v3314
      %3368 = vmatpush1.bf16.msra.mxu0 %v3313
      %3369 = vmatprep.subr.bf16.mxu0 %v3318
      %3370 = vmatpush1.bf16.msra.mxu0 %v3317
      %3371 = vmatprep.subr.bf16.mxu0 %v3322
      %3372 = vmatpush1.bf16.msra.mxu0 %v3321
      %3373 = vmatprep.subr.bf16.mxu0 0
      %3374 = vmatpush1.bf16.msra.mxu0 0
      %3375 = vmatprep.subr.bf16.mxu0 0
      %3376 = vmatpush1.bf16.msra.mxu0 0
      %3377 = vmatprep.subr.bf16.mxu0 0
      %3378 = vmatpush1.bf16.msra.mxu0 0
      %3379 = vmatprep.subr.bf16.mxu0 0
      %3380 = vmatpush1.bf16.msra.mxu0 0
      %3381 = vmatprep.subr.bf16.mxu0 0
      %3382 = vmatpush1.bf16.msra.mxu0 0
      %3383 = vmatprep.subr.bf16.mxu0 0
      %3384 = vmatpush1.bf16.msra.mxu0 0
      %3385 = vmatprep.subr.bf16.mxu0 0
      %3386 = vmatpush1.bf16.msra.mxu0 0
      %3387 = vmatprep.subr.bf16.mxu0 0
      %3388 = vmatpush1.bf16.msra.mxu0 0
      %3389 = vmatprep.mubr.bf16.mxu0 0
      %3390 = vmatmul.mubr.bf16.gmra.mrb[0].mxu0 %v3142
      %v3391 = vpop.f32.mrb[0].mxu0
      %v3392 = vadd.f32 %v3180, %v3391
      %v3393 = vpop.f32.mrb[0].mxu0
      %v3394 = vadd.f32 %v3184, %v3393
      %v3395 = vpop.f32.mrb[0].mxu0
      %v3396 = vadd.f32 %v3180, %v3395
      %v3397 = vpop.f32.mrb[0].mxu0
      %v3398 = vadd.f32 %v3184, %v3397
      %3399 = vdwg.mxu0
      %3400 = vmatprep.subr.bf16.mxu0 %v3296
      %3401 = vmatpush1.bf16.msra.mxu0 %v3295
      %3402 = vmatprep.subr.bf16.mxu0 %v3300
      %3403 = vmatpush1.bf16.msra.mxu0 %v3299
      %3404 = vmatprep.subr.bf16.mxu0 %v3304
      %3405 = vmatpush1.bf16.msra.mxu0 %v3303
      %3406 = vmatprep.subr.bf16.mxu0 %v3308
      %3407 = vmatpush1.bf16.msra.mxu0 %v3307
      %3408 = vmatprep.subr.bf16.mxu0 %v3312
      %3409 = vmatpush1.bf16.msra.mxu0 %v3311
      %3410 = vmatprep.subr.bf16.mxu0 %v3316
      %3411 = vmatpush1.bf16.msra.mxu0 %v3315
      %3412 = vmatprep.subr.bf16.mxu0 %v3320
      %3413 = vmatpush1.bf16.msra.mxu0 %v3319
      %3414 = vmatprep.subr.bf16.mxu0 %v3324
      %3415 = vmatpush1.bf16.msra.mxu0 %v3323
      %3416 = vmatprep.subr.bf16.mxu0 0
      %3417 = vmatpush1.bf16.msra.mxu0 0
      %3418 = vmatprep.subr.bf16.mxu0 0
      %3419 = vmatpush1.bf16.msra.mxu0 0
      %3420 = vmatprep.subr.bf16.mxu0 0
      %3421 = vmatpush1.bf16.msra.mxu0 0
      %3422 = vmatprep.subr.bf16.mxu0 0
      %3423 = vmatpush1.bf16.msra.mxu0 0
      %3424 = vmatprep.subr.bf16.mxu0 0
      %3425 = vmatpush1.bf16.msra.mxu0 0
      %3426 = vmatprep.subr.bf16.mxu0 0
      %3427 = vmatpush1.bf16.msra.mxu0 0
      %3428 = vmatprep.subr.bf16.mxu0 0
      %3429 = vmatpush1.bf16.msra.mxu0 0
      %3430 = vmatprep.subr.bf16.mxu0 0
      %3431 = vmatpush1.bf16.msra.mxu0 0
      %3432 = vmatprep.mubr.bf16.mxu0 0
      %3433 = vmatmul.mubr.bf16.gmra.mrb[0].mxu0 %v3142
      %v3434 = vpop.f32.mrb[0].mxu0
      %v3435 = vadd.f32 %v3188, %v3434
      %v3436 = vpop.f32.mrb[0].mxu0
      %v3437 = vadd.f32 %v3192, %v3436
      %v3438 = vpop.f32.mrb[0].mxu0
      %v3439 = vadd.f32 %v3188, %v3438
      %v3440 = vpop.f32.mrb[0].mxu0
      %v3441 = vadd.f32 %v3192, %v3440
      %3442 = vdwg.mxu0
      %v3443 = vmax.f32 %v3392, 0.0
      %v3444 = vmax.f32 %v3394, 0.0
      %v3445 = vmax.f32 %v3435, 0.0
      %v3446 = vmax.f32 %v3437, 0.0
      %v3447 = vmax.f32 %v3396, 0.0
      %v3448 = vmax.f32 %v3398, 0.0
      %v3449 = vmax.f32 %v3439, 0.0
      %v3450 = vmax.f32 %v3441, 0.0
      %v3451 = vpack.c.bf16 %v3447, %v3443
      %v3452 = vpack.c.bf16 %v3448, %v3444
      %v3453 = vpack.c.bf16 %v3449, %v3445
      %v3454 = vpack.c.bf16 %v3450, %v3446
      %v3455 = vld [vmem:[%s16] sm:$0xf]
      %v3456 = vld [vmem:[%s16 + $0x4] sm:$0xf]
      %v3457 = vld [vmem:[%s16 + $0x8] sm:$0xf]
      %v3458 = vld [vmem:[%s16 + $0xc] sm:$0xf]
      %v3459 = vld [vmem:[%s16 + $0x10] sm:$0xf]
      %v3460 = vld [vmem:[%s16 + $0x14] sm:$0xf]
      %v3461 = vld [vmem:[%s16 + $0x18] sm:$0xf]
      %v3462 = vld [vmem:[%s16 + $0x1c] sm:$0xf]
      %v3463 = vld [vmem:[%s16 + $0x20] sm:$0xf]
      %v3464 = vld [vmem:[%s16 + $0x24] sm:$0xf]
      %v3465 = vld [vmem:[%s16 + $0x28] sm:$0xf]
      %v3466 = vld [vmem:[%s16 + $0x2c] sm:$0xf]
      %v3467 = vld [vmem:[%s16 + $0x30] sm:$0xf]
      %v3468 = vld [vmem:[%s16 + $0x34] sm:$0xf]
      %v3469 = vld [vmem:[%s16 + $0x38] sm:$0xf]
      %v3470 = vld [vmem:[%s16 + $0x3c] sm:$0xf]
      %v3471 = vld [vmem:[%s16 + $0x40] sm:$0xf]
      %v3472 = vld [vmem:[%s16 + $0x44] sm:$0xf]
      %v3473 = vld [vmem:[%s16 + $0x48] sm:$0xf]
      %v3474 = vld [vmem:[%s16 + $0x4c] sm:$0xf]
      %v3475 = vld [vmem:[%s16 + $0x50] sm:$0xf]
      %v3476 = vld [vmem:[%s16 + $0x54] sm:$0xf]
      %v3477 = vld [vmem:[%s16 + $0x58] sm:$0xf]
      %v3478 = vld [vmem:[%s16 + $0x5c] sm:$0xf]
      %v3479 = vld [vmem:[%s16 + $0x60] sm:$0xf]
      %v3480 = vld [vmem:[%s16 + $0x64] sm:$0xf]
      %v3481 = vld [vmem:[%s16 + $0x68] sm:$0xf]
      %v3482 = vld [vmem:[%s16 + $0x6c] sm:$0xf]
      %v3483 = vld [vmem:[%s16 + $0x70] sm:$0xf]
      %v3484 = vld [vmem:[%s16 + $0x74] sm:$0xf]
      %v3485 = vld [vmem:[%s16 + $0x78] sm:$0xf]
      %v3486 = vld [vmem:[%s16 + $0x7c] sm:$0xf]
      %v3487 = vld [vmem:[%s16 + $0x80] sm:$0xf]
      %v3488 = vld [vmem:[%s16 + $0x84] sm:$0xf]
      %v3489 = vld [vmem:[%s16 + $0x88] sm:$0xf]
      %v3490 = vld [vmem:[%s16 + $0x8c] sm:$0xf]
      %v3491 = vld [vmem:[%s16 + $0x90] sm:$0xf]
      %v3492 = vld [vmem:[%s16 + $0x94] sm:$0xf]
      %v3493 = vld [vmem:[%s16 + $0x98] sm:$0xf]
      %v3494 = vld [vmem:[%s16 + $0x9c] sm:$0xf]
      %v3495 = vld [vmem:[%s16 + $0xa0] sm:$0xf]
      %v3496 = vld [vmem:[%s16 + $0xa4] sm:$0xf]
      %v3497 = vld [vmem:[%s16 + $0xa8] sm:$0xf]
      %v3498 = vld [vmem:[%s16 + $0xac] sm:$0xf]
      %v3499 = vld [vmem:[%s16 + $0xb0] sm:$0xf]
      %v3500 = vld [vmem:[%s16 + $0xb4] sm:$0xf]
      %v3501 = vld [vmem:[%s16 + $0xb8] sm:$0xf]
      %v3502 = vld [vmem:[%s16 + $0xbc] sm:$0xf]
      %v3503 = vld [vmem:[%s16 + $0xc0] sm:$0xf]
      %v3504 = vld [vmem:[%s16 + $0xc4] sm:$0xf]
      %v3505 = vld [vmem:[%s16 + $0xc8] sm:$0xf]
      %v3506 = vld [vmem:[%s16 + $0xcc] sm:$0xf]
      %v3507 = vld [vmem:[%s16 + $0xd0] sm:$0xf]
      %v3508 = vld [vmem:[%s16 + $0xd4] sm:$0xf]
      %v3509 = vld [vmem:[%s16 + $0xd8] sm:$0xf]
      %v3510 = vld [vmem:[%s16 + $0xdc] sm:$0xf]
      %v3511 = vld [vmem:[%s16 + $0xe0] sm:$0xf]
      %v3512 = vld [vmem:[%s16 + $0xe4] sm:$0xf]
      %v3513 = vld [vmem:[%s16 + $0xe8] sm:$0xf]
      %v3514 = vld [vmem:[%s16 + $0xec] sm:$0xf]
      %v3515 = vld [vmem:[%s16 + $0xf0] sm:$0xf]
      %v3516 = vld [vmem:[%s16 + $0xf4] sm:$0xf]
      %v3517 = vld [vmem:[%s16 + $0xf8] sm:$0xf]
      %v3518 = vld [vmem:[%s16 + $0xfc] sm:$0xf]
      %v3519 = vld [vmem:[%s17] sm:$0x1]
      %v3521 = vlaneseq
      %v3522 = vshrl.u32 %v3521, 7
      %v3523 = vsub.s32 0, %v3522
      %v3524 = vrot.slane %v3519, %v3523
      %v3590 = vunpack.c.l.b16 %v3455
      %v3591 = vunpack.c.l.b16 %v3456
      %v3592 = vunpack.c.l.b16 %v3457
      %v3593 = vunpack.c.l.b16 %v3458
      %v3594 = vunpack.c.l.b16 %v3459
      %v3595 = vunpack.c.l.b16 %v3460
      %v3596 = vunpack.c.l.b16 %v3461
      %v3597 = vunpack.c.l.b16 %v3462
      %v3598 = vunpack.c.l.b16 %v3463
      %v3599 = vunpack.c.l.b16 %v3464
      %v3600 = vunpack.c.l.b16 %v3465
      %v3601 = vunpack.c.l.b16 %v3466
      %v3602 = vunpack.c.l.b16 %v3467
      %v3603 = vunpack.c.l.b16 %v3468
      %v3604 = vunpack.c.l.b16 %v3469
      %v3605 = vunpack.c.l.b16 %v3470
      %v3606 = vunpack.c.l.b16 %v3471
      %v3607 = vunpack.c.l.b16 %v3472
      %v3608 = vunpack.c.l.b16 %v3473
      %v3609 = vunpack.c.l.b16 %v3474
      %v3610 = vunpack.c.l.b16 %v3475
      %v3611 = vunpack.c.l.b16 %v3476
      %v3612 = vunpack.c.l.b16 %v3477
      %v3613 = vunpack.c.l.b16 %v3478
      %v3614 = vunpack.c.l.b16 %v3479
      %v3615 = vunpack.c.l.b16 %v3480
      %v3616 = vunpack.c.l.b16 %v3481
      %v3617 = vunpack.c.l.b16 %v3482
      %v3618 = vunpack.c.l.b16 %v3483
      %v3619 = vunpack.c.l.b16 %v3484
      %v3620 = vunpack.c.l.b16 %v3485
      %v3621 = vunpack.c.l.b16 %v3486
      %v3622 = vunpack.c.l.b16 %v3487
      %v3623 = vunpack.c.l.b16 %v3488
      %v3624 = vunpack.c.l.b16 %v3489
      %v3625 = vunpack.c.l.b16 %v3490
      %v3626 = vunpack.c.l.b16 %v3491
      %v3627 = vunpack.c.l.b16 %v3492
      %v3628 = vunpack.c.l.b16 %v3493
      %v3629 = vunpack.c.l.b16 %v3494
      %v3630 = vunpack.c.l.b16 %v3495
      %v3631 = vunpack.c.l.b16 %v3496
      %v3632 = vunpack.c.l.b16 %v3497
      %v3633 = vunpack.c.l.b16 %v3498
      %v3634 = vunpack.c.l.b16 %v3499
      %v3635 = vunpack.c.l.b16 %v3500
      %v3636 = vunpack.c.l.b16 %v3501
      %v3637 = vunpack.c.l.b16 %v3502
      %v3638 = vunpack.c.l.b16 %v3503
      %v3639 = vunpack.c.l.b16 %v3504
      %v3640 = vunpack.c.l.b16 %v3505
      %v3641 = vunpack.c.l.b16 %v3506
      %v3642 = vunpack.c.l.b16 %v3507
      %v3643 = vunpack.c.l.b16 %v3508
      %v3644 = vunpack.c.l.b16 %v3509
      %v3645 = vunpack.c.l.b16 %v3510
      %v3646 = vunpack.c.l.b16 %v3511
      %v3647 = vunpack.c.l.b16 %v3512
      %v3648 = vunpack.c.l.b16 %v3513
      %v3649 = vunpack.c.l.b16 %v3514
      %v3650 = vunpack.c.l.b16 %v3515
      %v3651 = vunpack.c.l.b16 %v3516
      %v3652 = vunpack.c.l.b16 %v3517
      %v3653 = vunpack.c.l.b16 %v3518
      %v3654 = vpack.c.b16 %v3591, %v3590
      %v3655 = vpack.c.b16 %v3593, %v3592
      %v3656 = vpack.c.b16 %v3595, %v3594
      %v3657 = vpack.c.b16 %v3597, %v3596
      %v3658 = vpack.c.b16 %v3599, %v3598
      %v3659 = vpack.c.b16 %v3601, %v3600
      %v3660 = vpack.c.b16 %v3603, %v3602
      %v3661 = vpack.c.b16 %v3605, %v3604
      %v3662 = vpack.c.b16 %v3607, %v3606
      %v3663 = vpack.c.b16 %v3609, %v3608
      %v3664 = vpack.c.b16 %v3611, %v3610
      %v3665 = vpack.c.b16 %v3613, %v3612
      %v3666 = vpack.c.b16 %v3615, %v3614
      %v3667 = vpack.c.b16 %v3617, %v3616
      %v3668 = vpack.c.b16 %v3619, %v3618
      %v3669 = vpack.c.b16 %v3621, %v3620
      %v3670 = vpack.c.b16 %v3623, %v3622
      %v3671 = vpack.c.b16 %v3625, %v3624
      %v3672 = vpack.c.b16 %v3627, %v3626
      %v3673 = vpack.c.b16 %v3629, %v3628
      %v3674 = vpack.c.b16 %v3631, %v3630
      %v3675 = vpack.c.b16 %v3633, %v3632
      %v3676 = vpack.c.b16 %v3635, %v3634
      %v3677 = vpack.c.b16 %v3637, %v3636
      %v3678 = vpack.c.b16 %v3639, %v3638
      %v3679 = vpack.c.b16 %v3641, %v3640
      %v3680 = vpack.c.b16 %v3643, %v3642
      %v3681 = vpack.c.b16 %v3645, %v3644
      %v3682 = vpack.c.b16 %v3647, %v3646
      %v3683 = vpack.c.b16 %v3649, %v3648
      %v3684 = vpack.c.b16 %v3651, %v3650
      %v3685 = vpack.c.b16 %v3653, %v3652
      %3718 = vmatprep.subr.bf16.mxu0 0
      %3719 = vmatpush1.bf16.msra.mxu0 %v3654
      %3720 = vmatprep.subr.bf16.mxu0 0
      %3721 = vmatpush1.bf16.msra.mxu0 %v3655
      %3722 = vmatprep.subr.bf16.mxu0 0
      %3723 = vmatpush1.bf16.msra.mxu0 %v3656
      %3724 = vmatprep.subr.bf16.mxu0 0
      %3725 = vmatpush1.bf16.msra.mxu0 %v3657
      %3726 = vmatprep.subr.bf16.mxu0 0
      %3727 = vmatpush1.bf16.msra.mxu0 %v3658
      %3728 = vmatprep.subr.bf16.mxu0 0
      %3729 = vmatpush1.bf16.msra.mxu0 %v3659
      %3730 = vmatprep.subr.bf16.mxu0 0
      %3731 = vmatpush1.bf16.msra.mxu0 %v3660
      %3732 = vmatprep.subr.bf16.mxu0 0
      %3733 = vmatpush1.bf16.msra.mxu0 %v3661
      %3734 = vmatprep.subr.bf16.mxu0 0
      %3735 = vmatpush1.bf16.msra.mxu0 %v3662
      %3736 = vmatprep.subr.bf16.mxu0 0
      %3737 = vmatpush1.bf16.msra.mxu0 %v3663
      %3738 = vmatprep.subr.bf16.mxu0 0
      %3739 = vmatpush1.bf16.msra.mxu0 %v3664
      %3740 = vmatprep.subr.bf16.mxu0 0
      %3741 = vmatpush1.bf16.msra.mxu0 %v3665
      %3742 = vmatprep.subr.bf16.mxu0 0
      %3743 = vmatpush1.bf16.msra.mxu0 %v3666
      %3744 = vmatprep.subr.bf16.mxu0 0
      %3745 = vmatpush1.bf16.msra.mxu0 %v3667
      %3746 = vmatprep.subr.bf16.mxu0 0
      %3747 = vmatpush1.bf16.msra.mxu0 %v3668
      %3748 = vmatprep.subr.bf16.mxu0 0
      %3749 = vmatpush1.bf16.msra.mxu0 %v3669
      %3750 = vmatprep.mubr.bf16.mxu0 %v3452
      %3751 = vmatmul.mubr.bf16.gmra.mrb[0].mxu0 %v3451
      %v3752 = vpop.f32.mrb[0].mxu0
      %v3753 = vadd.f32 %v3524, %v3752
      %v3754 = vpop.f32.mrb[0].mxu0
      %v3755 = vpop.f32.mrb[0].mxu0
      %v3756 = vadd.f32 %v3524, %v3755
      %v3757 = vpop.f32.mrb[0].mxu0
      %3758 = vdwg.mxu0
      %3759 = vmatprep.subr.bf16.mxu0 0
      %3760 = vmatpush1.bf16.msra.mxu0 %v3670
      %3761 = vmatprep.subr.bf16.mxu0 0
      %3762 = vmatpush1.bf16.msra.mxu0 %v3671
      %3763 = vmatprep.subr.bf16.mxu0 0
      %3764 = vmatpush1.bf16.msra.mxu0 %v3672
      %3765 = vmatprep.subr.bf16.mxu0 0
      %3766 = vmatpush1.bf16.msra.mxu0 %v3673
      %3767 = vmatprep.subr.bf16.mxu0 0
      %3768 = vmatpush1.bf16.msra.mxu0 %v3674
      %3769 = vmatprep.subr.bf16.mxu0 0
      %3770 = vmatpush1.bf16.msra.mxu0 %v3675
      %3771 = vmatprep.subr.bf16.mxu0 0
      %3772 = vmatpush1.bf16.msra.mxu0 %v3676
      %3773 = vmatprep.subr.bf16.mxu0 0
      %3774 = vmatpush1.bf16.msra.mxu0 %v3677
      %3775 = vmatprep.subr.bf16.mxu0 0
      %3776 = vmatpush1.bf16.msra.mxu0 %v3678
      %3777 = vmatprep.subr.bf16.mxu0 0
      %3778 = vmatpush1.bf16.msra.mxu0 %v3679
      %3779 = vmatprep.subr.bf16.mxu0 0
      %3780 = vmatpush1.bf16.msra.mxu0 %v3680
      %3781 = vmatprep.subr.bf16.mxu0 0
      %3782 = vmatpush1.bf16.msra.mxu0 %v3681
      %3783 = vmatprep.subr.bf16.mxu0 0
      %3784 = vmatpush1.bf16.msra.mxu0 %v3682
      %3785 = vmatprep.subr.bf16.mxu0 0
      %3786 = vmatpush1.bf16.msra.mxu0 %v3683
      %3787 = vmatprep.subr.bf16.mxu0 0
      %3788 = vmatpush1.bf16.msra.mxu0 %v3684
      %3789 = vmatprep.subr.bf16.mxu0 0
      %3790 = vmatpush1.bf16.msra.mxu0 %v3685
      %3791 = vmatprep.mubr.bf16.mxu0 %v3454
      %3792 = vmatmul.mubr.bf16.gmra.mrb[0].mxu0 %v3453
      %v3793 = vpop.f32.mrb[0].mxu0
      %v3794 = vadd.f32 %v3753, %v3793
      %v3795 = vpop.f32.mrb[0].mxu0
      %v3796 = vpop.f32.mrb[0].mxu0
      %v3797 = vadd.f32 %v3756, %v3796
      %v3798 = vpop.f32.mrb[0].mxu0
      %3799 = vdwg.mxu0
      %v3800 = vadd.f32 %v3096, %v3794
      %v3801 = vadd.f32 %v3097, %v3797
      %3802 = vst [vmem:[%s599] sm:$0xff] %v3800
      %3803 = vst [vmem:[%s599 + $0x8] sm:$0xff] %v3801
      %s3804 = smul.u32 2, %s29
      %p3805 = scmp.lt.s32.totalorder %s3804, 3
      %s3806 = scalar_select %p3805, %s3804, 3
      %s3807 = smul.addr %s3806, 8
      %s3808 = scalar_lea.vmem %s18, %s3807
      // Predicated region
      $region93: #{decoder_forward_pallas.5} parent=91 // pred_check
        %p3809 = pneg %p435
      $region94: #{decoder_forward_pallas.5} parent=91 // pred_check_branch
        %3811 = sbr.rel (%p3809) target = $region96
      $region95: #{decoder_forward_pallas.5} parent=91 // pred_region
        %s3812 = smul.u32 2, %s29
      $region96: #{decoder_forward_pallas.5} parent=91 // pred_fallthru
        _
    $region92: #{decoder_forward_pallas.5} parent=5 // pred_fallthru
      _
    %p3813 = scmp.le.s32.totalorder 2, %s24
    // Predicated region
    $region97: #{decoder_forward_pallas.5} parent=5 // pred_check
      %p3814 = pneg %p3813
    $region98: #{decoder_forward_pallas.5} parent=5 // pred_check_branch
      %3816 = sbr.rel (%p3814) target = $region100
    $region99: #{decoder_forward_pallas.5} parent=5 // pred_region
      %s3817 = ssub.s32 %s24, 2
      // Predicated region
      $region101: #{decoder_forward_pallas.5} parent=99 // pred_check
        %p3818 = pneg %p441
      $region102: #{decoder_forward_pallas.5} parent=99 // pred_check_branch
        %3820 = sbr.rel (%p3818) target = $region104
      $region103: #{decoder_forward_pallas.5} parent=99 // pred_region
        %s3821 = smul.u32 2, %s30
        %p3822 = scmp.lt.s32.totalorder %s3821, 3
        %s3823 = scalar_select %p3822, %s3821, 3
        %s3824 = smul.addr %s3823, 8
        %s3825 = scalar_lea.vmem %s18, %s3824
      $region104: #{decoder_forward_pallas.5} parent=99 // pred_fallthru
        _
    $region100: #{decoder_forward_pallas.5} parent=5 // pred_fallthru
      _
  $region6: #{decoder_forward_pallas.5} parent=0 // loop_footer
    %s28 = sadd.s32 1, %s24
  $region7: #{decoder_forward_pallas.5} parent=0 // loop_footer_branch
    %23 = sbr.rel target = $region3
  $region8: #{decoder_forward_pallas.5} parent=0 // loop_exit
    _

// kernel: decoder_forward_pallas.4
$region0: #{decoder_forward_pallas.4}
  #allocation0 [shape = 'u32[]', space=smem, size = 0x4, offset = 0x4, fixed_abs, tag = 'smem constant byte address 0x4 - core index']
  #allocation1 [shape = 'u32[144,128]{1,0:T(1,128)}', space=vmem, size = 0x12000, scoped, tag = 'internal scratch']
  %s0 = inlined_call_operand.vmem [shape: f32[4,8,128], index: 0, kind: input, shape index: {}]
  %s1 = inlined_call_operand.vmem [shape: f32[4,8,128], index: 1, kind: input, shape index: {}, may-alias: {1,18}]
  %s2 = inlined_call_operand.hbm [shape: f32[8,128], index: 2, kind: input, shape index: {}]
  %s3 = inlined_call_operand.hbm [shape: f32[8,128], index: 3, kind: input, shape index: {}]
  %s4 = inlined_call_operand.hbm [shape: bf16[128,384], index: 4, kind: input, shape index: {}]
  %s5 = inlined_call_operand.hbm [shape: f32[1,384], index: 5, kind: input, shape index: {}]
  %s6 = inlined_call_operand.hbm [shape: f32[8,128], index: 6, kind: input, shape index: {}]
  %s7 = inlined_call_operand.hbm [shape: f32[8,128], index: 7, kind: input, shape index: {}]
  %s8 = inlined_call_operand.hbm [shape: bf16[128,128], index: 8, kind: input, shape index: {}]
  %s9 = inlined_call_operand.hbm [shape: f32[1,128], index: 9, kind: input, shape index: {}]
  %s10 = inlined_call_operand.vmem [shape: bf16[128,256], index: 10, kind: input, shape index: {}]
  %s11 = inlined_call_operand.hbm [shape: f32[1,256], index: 11, kind: input, shape index: {}]
  %s12 = inlined_call_operand.hbm [shape: f32[8,128], index: 12, kind: input, shape index: {}]
  %s13 = inlined_call_operand.hbm [shape: f32[8,128], index: 13, kind: input, shape index: {}]
  %s14 = inlined_call_operand.hbm [shape: bf16[128,512], index: 14, kind: input, shape index: {}]
  %s15 = inlined_call_operand.hbm [shape: f32[1,512], index: 15, kind: input, shape index: {}]
  %s16 = inlined_call_operand.hbm [shape: bf16[512,128], index: 16, kind: input, shape index: {}]
  %s17 = inlined_call_operand.hbm [shape: f32[1,128], index: 17, kind: input, shape index: {}]
  %s18 = inlined_call_operand.vmem [shape: f32[4,8,128], index: 18, kind: output, shape index: {}, may-alias: {1,18}]
  %s19 = sld [smem:[#allocation0]]
  $region165: #{decoder_forward_pallas.4} parent=0
    _
  %s21 = ssub.s32 1, %s19
  %s22 = scalar_select 0, %s21, %s19
  $region1: #{decoder_forward_pallas.4} parent=0
    #allocation2 [shape = 'u8[4096]{0}', space=vmem, size = 0x1000, scoped, tag = 'input window, operand 2, single buffered']
    #allocation3 [shape = 's32[2]{0}', space=sflag, size = 0x8, scoped, tag = 'scoped memory for decoder_forward_pallas.4']
    #allocation4 [shape = 'u8[4096]{0}', space=vmem, size = 0x1000, scoped, tag = 'input window, operand 3, single buffered']
    #allocation5 [shape = 's32[1]{0}', space=sflag, size = 0x4, scoped, tag = 'scoped memory for decoder_forward_pallas.4']
    #allocation6 [shape = 'u8[98304]{0}', space=vmem, size = 0x18000, scoped, tag = 'input window, operand 4, single buffered']
    #allocation7 [shape = 'u8[1536]{0}', space=vmem, size = 0x800, scoped, tag = 'input window, operand 5, single buffered']
    #allocation8 [shape = 's32[1]{0}', space=sflag, size = 0x4, scoped, tag = 'scoped memory for decoder_forward_pallas.4']
    #allocation9 [shape = 'u8[4096]{0}', space=vmem, size = 0x1000, scoped, tag = 'input window, operand 6, single buffered']
    #allocation10 [shape = 'u8[4096]{0}', space=vmem, size = 0x1000, scoped, tag = 'input window, operand 7, single buffered']
    #allocation11 [shape = 's32[1]{0}', space=sflag, size = 0x4, scoped, tag = 'scoped memory for decoder_forward_pallas.4']
    #allocation12 [shape = 'u8[32768]{0}', space=vmem, size = 0x8000, scoped, tag = 'input window, operand 8, single buffered']
    #allocation13 [shape = 'u8[512]{0}', space=vmem, size = 0x400, scoped, tag = 'input window, operand 9, single buffered']
    #allocation14 [shape = 's32[1]{0}', space=sflag, size = 0x4, scoped, tag = 'scoped memory for decoder_forward_pallas.4']
    #allocation15 [shape = 'u8[1024]{0}', space=vmem, size = 0x400, scoped, tag = 'input window, operand 11, single buffered']
    #allocation16 [shape = 'u8[4096]{0}', space=vmem, size = 0x1000, scoped, tag = 'input window, operand 12, single buffered']
    #allocation17 [shape = 's32[1]{0}', space=sflag, size = 0x4, scoped, tag = 'scoped memory for decoder_forward_pallas.4']
    #allocation18 [shape = 'u8[4096]{0}', space=vmem, size = 0x1000, scoped, tag = 'input window, operand 13, single buffered']
    #allocation19 [shape = 'u8[131072]{0}', space=vmem, size = 0x20000, scoped, tag = 'input window, operand 14, single buffered']
    #allocation20 [shape = 's32[1]{0}', space=sflag, size = 0x4, scoped, tag = 'scoped memory for decoder_forward_pallas.4']
    #allocation21 [shape = 'u8[2048]{0}', space=vmem, size = 0x800, scoped, tag = 'input window, operand 15, single buffered']
    #allocation22 [shape = 'u8[131072]{0}', space=vmem, size = 0x20000, scoped, tag = 'input window, operand 16, single buffered']
    #allocation23 [shape = 's32[1]{0}', space=sflag, size = 0x4, scoped, tag = 'scoped memory for decoder_forward_pallas.4']
    #allocation24 [shape = 'u8[512]{0}', space=vmem, size = 0x400, scoped, tag = 'input window, operand 17, single buffered']
    %23 = vsyncpa [#allocation3], 0
    %24 = vsyncpa [#allocation5], 0
    %25 = vsyncpa [#allocation8], 0
    %26 = vsyncpa [#allocation11], 0
    %27 = vsyncpa [#allocation14], 0
    %28 = vsyncpa [#allocation17], 0
    %29 = vsyncpa [#allocation20], 0
    %30 = vsyncpa [#allocation23], 0
    loop: start=0, step=1, limit=4
    $region2: #{decoder_forward_pallas.4} parent=1 // loop_pre_header
      _
    $region3: #{decoder_forward_pallas.4} parent=1 // loop_header
      %s32 = sphi 0, %s36
      %p33 = scmp.ge.s32.totalorder %s32, 4
      %s42 = sphi 0, %s44
      %s45 = sphi 0, %s42
      %s46 = sphi 0, %s45
      %s62 = sphi 0, %s46
      %s68 = sphi 0, %s70
      %s71 = sphi 0, %s68
      %s72 = sphi 0, %s71
      %s88 = sphi 0, %s72
      %s92 = sphi 0, %s92
      %s94 = sphi 0, %s92
      %s95 = sphi 0, %s94
      %s109 = sphi 0, %s95
      %s113 = sphi 0, %s113
      %s115 = sphi 0, %s113
      %s116 = sphi 0, %s115
      %s130 = sphi 0, %s116
      %s134 = sphi 0, %s134
      %s136 = sphi 0, %s134
      %s137 = sphi 0, %s136
      %s151 = sphi 0, %s137
      %s155 = sphi 0, %s155
      %s157 = sphi 0, %s155
      %s158 = sphi 0, %s157
      %s172 = sphi 0, %s158
      %s176 = sphi 0, %s176
      %s178 = sphi 0, %s176
      %s179 = sphi 0, %s178
      %s193 = sphi 0, %s179
      %s197 = sphi 0, %s197
      %s199 = sphi 0, %s197
      %s200 = sphi 0, %s199
      %s214 = sphi 0, %s200
      %s218 = sphi 0, %s218
      %s220 = sphi 0, %s218
      %s221 = sphi 0, %s220
      %s235 = sphi 0, %s221
      %s239 = sphi 0, %s239
      %s241 = sphi 0, %s239
      %s242 = sphi 0, %s241
      %s256 = sphi 0, %s242
      %s260 = sphi 0, %s260
      %s262 = sphi 0, %s260
      %s263 = sphi 0, %s262
      %s277 = sphi 0, %s263
      %s281 = sphi 0, %s281
      %s283 = sphi 0, %s281
      %s284 = sphi 0, %s283
      %s298 = sphi 0, %s284
      %s302 = sphi 0, %s302
      %s304 = sphi 0, %s302
      %s305 = sphi 0, %s304
      %s319 = sphi 0, %s305
      %s323 = sphi 0, %s323
      %s325 = sphi 0, %s323
      %s326 = sphi 0, %s325
      %s340 = sphi 0, %s326
      %s344 = sphi 0, %s344
      %s346 = sphi 0, %s344
      %s347 = sphi 0, %s346
      %s361 = sphi 0, %s347
      %s365 = sphi 0, %s365
      %s367 = sphi 0, %s365
      %s368 = sphi 0, %s367
      %s382 = sphi 0, %s368
      %s386 = sphi 0, %s386
      %s388 = sphi 0, %s386
      %s389 = sphi 0, %s388
      %s403 = sphi 0, %s389
      %s407 = sphi 0, %s407
      %s409 = sphi 0, %s407
      %s410 = sphi 0, %s409
      %s424 = sphi 0, %s410
      %s430 = sphi 0, %s432
      %s433 = sphi 0, %s430
      %s434 = sphi 0, %s433
      %s450 = sphi 0, %s434
    $region4: #{decoder_forward_pallas.4} parent=1 // loop_header_branch
      %35 = sbr.rel (%p33) target = $region8
    $region5: #{decoder_forward_pallas.4} parent=1 // loop_body
      %s37 = ssub.s32 %s32, 1
      %s38 = ssub.s32 %s32, 2
      %s39 = sadd.s32 %s32, 1
      %s40 = ssub.s32 %s32, %s39
      %p41 = scmp.eq.s32.totalorder %s40, 0
      %s43 = sadd.s32 %s42, 1
      %s44 = scalar_select %p41, %s42, %s43
      %p47 = pneg %p41
      %p48 = scmp.eq.s32.totalorder %s32, 1
      %p49 = por %p47, %p48
      %p50 = scmp.ne.s32.totalorder %s42, %s45
      %p51 = scmp.eq.s32.totalorder %s32, 0
      %p52 = por %p50, %p51
      %p53 = scmp.ne.s32.totalorder %s42, %s45
      %p54 = scmp.eq.s32.totalorder %s37, 1
      %p55 = por %p53, %p54
      %p56 = scmp.ne.s32.totalorder %s45, %s46
      %p57 = scmp.eq.s32.totalorder %s37, 0
      %p58 = por %p56, %p57
      %p59 = scmp.ne.s32.totalorder %s45, %s46
      %p60 = scmp.eq.s32.totalorder %s38, 1
      %p61 = por %p59, %p60
      %p63 = scmp.ne.s32.totalorder %s46, %s62
      %p64 = scmp.eq.s32.totalorder %s38, 0
      %p65 = por %p63, %p64
      %s66 = ssub.s32 %s32, %s39
      %p67 = scmp.eq.s32.totalorder %s66, 0
      %s69 = sadd.s32 %s68, 1
      %s70 = scalar_select %p67, %s68, %s69
      %p73 = pneg %p67
      %p74 = scmp.eq.s32.totalorder %s32, 1
      %p75 = por %p73, %p74
      %p76 = scmp.ne.s32.totalorder %s68, %s71
      %p77 = scmp.eq.s32.totalorder %s32, 0
      %p78 = por %p76, %p77
      %p79 = scmp.ne.s32.totalorder %s68, %s71
      %p80 = scmp.eq.s32.totalorder %s37, 1
      %p81 = por %p79, %p80
      %p82 = scmp.ne.s32.totalorder %s71, %s72
      %p83 = scmp.eq.s32.totalorder %s37, 0
      %p84 = por %p82, %p83
      %p85 = scmp.ne.s32.totalorder %s71, %s72
      %p86 = scmp.eq.s32.totalorder %s38, 1
      %p87 = por %p85, %p86
      %p89 = scmp.ne.s32.totalorder %s72, %s88
      %p90 = scmp.eq.s32.totalorder %s38, 0
      %p91 = por %p89, %p90
      %s93 = sadd.s32 %s92, 1
      %p96 = scmp.eq.s32.totalorder %s32, 1
      %p97 = scmp.ne.s32.totalorder %s92, %s94
      %p98 = scmp.eq.s32.totalorder %s32, 0
      %p99 = por %p97, %p98
      %p100 = scmp.ne.s32.totalorder %s92, %s94
      %p101 = scmp.eq.s32.totalorder %s37, 1
      %p102 = por %p100, %p101
      %p103 = scmp.ne.s32.totalorder %s94, %s95
      %p104 = scmp.eq.s32.totalorder %s37, 0
      %p105 = por %p103, %p104
      %p106 = scmp.ne.s32.totalorder %s94, %s95
      %p107 = scmp.eq.s32.totalorder %s38, 1
      %p108 = por %p106, %p107
      %p110 = scmp.ne.s32.totalorder %s95, %s109
      %p111 = scmp.eq.s32.totalorder %s38, 0
      %p112 = por %p110, %p111
      %s114 = sadd.s32 %s113, 1
      %p117 = scmp.eq.s32.totalorder %s32, 1
      %p118 = scmp.ne.s32.totalorder %s113, %s115
      %p119 = scmp.eq.s32.totalorder %s32, 0
      %p120 = por %p118, %p119
      %p121 = scmp.ne.s32.totalorder %s113, %s115
      %p122 = scmp.eq.s32.totalorder %s37, 1
      %p123 = por %p121, %p122
      %p124 = scmp.ne.s32.totalorder %s115, %s116
      %p125 = scmp.eq.s32.totalorder %s37, 0
      %p126 = por %p124, %p125
      %p127 = scmp.ne.s32.totalorder %s115, %s116
      %p128 = scmp.eq.s32.totalorder %s38, 1
      %p129 = por %p127, %p128
      %p131 = scmp.ne.s32.totalorder %s116, %s130
      %p132 = scmp.eq.s32.totalorder %s38, 0
      %p133 = por %p131, %p132
      %s135 = sadd.s32 %s134, 1
      %p138 = scmp.eq.s32.totalorder %s32, 1
      %p139 = scmp.ne.s32.totalorder %s134, %s136
      %p140 = scmp.eq.s32.totalorder %s32, 0
      %p141 = por %p139, %p140
      %p142 = scmp.ne.s32.totalorder %s134, %s136
      %p143 = scmp.eq.s32.totalorder %s37, 1
      %p144 = por %p142, %p143
      %p145 = scmp.ne.s32.totalorder %s136, %s137
      %p146 = scmp.eq.s32.totalorder %s37, 0
      %p147 = por %p145, %p146
      %p148 = scmp.ne.s32.totalorder %s136, %s137
      %p149 = scmp.eq.s32.totalorder %s38, 1
      %p150 = por %p148, %p149
      %p152 = scmp.ne.s32.totalorder %s137, %s151
      %p153 = scmp.eq.s32.totalorder %s38, 0
      %p154 = por %p152, %p153
      %s156 = sadd.s32 %s155, 1
      %p159 = scmp.eq.s32.totalorder %s32, 1
      %p160 = scmp.ne.s32.totalorder %s155, %s157
      %p161 = scmp.eq.s32.totalorder %s32, 0
      %p162 = por %p160, %p161
      %p163 = scmp.ne.s32.totalorder %s155, %s157
      %p164 = scmp.eq.s32.totalorder %s37, 1
      %p165 = por %p163, %p164
      %p166 = scmp.ne.s32.totalorder %s157, %s158
      %p167 = scmp.eq.s32.totalorder %s37, 0
      %p168 = por %p166, %p167
      %p169 = scmp.ne.s32.totalorder %s157, %s158
      %p170 = scmp.eq.s32.totalorder %s38, 1
      %p171 = por %p169, %p170
      %p173 = scmp.ne.s32.totalorder %s158, %s172
      %p174 = scmp.eq.s32.totalorder %s38, 0
      %p175 = por %p173, %p174
      %s177 = sadd.s32 %s176, 1
      %p180 = scmp.eq.s32.totalorder %s32, 1
      %p181 = scmp.ne.s32.totalorder %s176, %s178
      %p182 = scmp.eq.s32.totalorder %s32, 0
      %p183 = por %p181, %p182
      %p184 = scmp.ne.s32.totalorder %s176, %s178
      %p185 = scmp.eq.s32.totalorder %s37, 1
      %p186 = por %p184, %p185
      %p187 = scmp.ne.s32.totalorder %s178, %s179
      %p188 = scmp.eq.s32.totalorder %s37, 0
      %p189 = por %p187, %p188
      %p190 = scmp.ne.s32.totalorder %s178, %s179
      %p191 = scmp.eq.s32.totalorder %s38, 1
      %p192 = por %p190, %p191
      %p194 = scmp.ne.s32.totalorder %s179, %s193
      %p195 = scmp.eq.s32.totalorder %s38, 0
      %p196 = por %p194, %p195
      %s198 = sadd.s32 %s197, 1
      %p201 = scmp.eq.s32.totalorder %s32, 1
      %p202 = scmp.ne.s32.totalorder %s197, %s199
      %p203 = scmp.eq.s32.totalorder %s32, 0
      %p204 = por %p202, %p203
      %p205 = scmp.ne.s32.totalorder %s197, %s199
      %p206 = scmp.eq.s32.totalorder %s37, 1
      %p207 = por %p205, %p206
      %p208 = scmp.ne.s32.totalorder %s199, %s200
      %p209 = scmp.eq.s32.totalorder %s37, 0
      %p210 = por %p208, %p209
      %p211 = scmp.ne.s32.totalorder %s199, %s200
      %p212 = scmp.eq.s32.totalorder %s38, 1
      %p213 = por %p211, %p212
      %p215 = scmp.ne.s32.totalorder %s200, %s214
      %p216 = scmp.eq.s32.totalorder %s38, 0
      %p217 = por %p215, %p216
      %s219 = sadd.s32 %s218, 1
      %p222 = scmp.eq.s32.totalorder %s32, 1
      %p223 = scmp.ne.s32.totalorder %s218, %s220
      %p224 = scmp.eq.s32.totalorder %s32, 0
      %p225 = por %p223, %p224
      %p226 = scmp.ne.s32.totalorder %s218, %s220
      %p227 = scmp.eq.s32.totalorder %s37, 1
      %p228 = por %p226, %p227
      %p229 = scmp.ne.s32.totalorder %s220, %s221
      %p230 = scmp.eq.s32.totalorder %s37, 0
      %p231 = por %p229, %p230
      %p232 = scmp.ne.s32.totalorder %s220, %s221
      %p233 = scmp.eq.s32.totalorder %s38, 1
      %p234 = por %p232, %p233
      %p236 = scmp.ne.s32.totalorder %s221, %s235
      %p237 = scmp.eq.s32.totalorder %s38, 0
      %p238 = por %p236, %p237
      %s240 = sadd.s32 %s239, 1
      %p243 = scmp.eq.s32.totalorder %s32, 1
      %p244 = scmp.ne.s32.totalorder %s239, %s241
      %p245 = scmp.eq.s32.totalorder %s32, 0
      %p246 = por %p244, %p245
      %p247 = scmp.ne.s32.totalorder %s239, %s241
      %p248 = scmp.eq.s32.totalorder %s37, 1
      %p249 = por %p247, %p248
      %p250 = scmp.ne.s32.totalorder %s241, %s242
      %p251 = scmp.eq.s32.totalorder %s37, 0
      %p252 = por %p250, %p251
      %p253 = scmp.ne.s32.totalorder %s241, %s242
      %p254 = scmp.eq.s32.totalorder %s38, 1
      %p255 = por %p253, %p254
      %p257 = scmp.ne.s32.totalorder %s242, %s256
      %p258 = scmp.eq.s32.totalorder %s38, 0
      %p259 = por %p257, %p258
      %s261 = sadd.s32 %s260, 1
      %p264 = scmp.eq.s32.totalorder %s32, 1
      %p265 = scmp.ne.s32.totalorder %s260, %s262
      %p266 = scmp.eq.s32.totalorder %s32, 0
      %p267 = por %p265, %p266
      %p268 = scmp.ne.s32.totalorder %s260, %s262
      %p269 = scmp.eq.s32.totalorder %s37, 1
      %p270 = por %p268, %p269
      %p271 = scmp.ne.s32.totalorder %s262, %s263
      %p272 = scmp.eq.s32.totalorder %s37, 0
      %p273 = por %p271, %p272
      %p274 = scmp.ne.s32.totalorder %s262, %s263
      %p275 = scmp.eq.s32.totalorder %s38, 1
      %p276 = por %p274, %p275
      %p278 = scmp.ne.s32.totalorder %s263, %s277
      %p279 = scmp.eq.s32.totalorder %s38, 0
      %p280 = por %p278, %p279
      %s282 = sadd.s32 %s281, 1
      %p285 = scmp.eq.s32.totalorder %s32, 1
      %p286 = scmp.ne.s32.totalorder %s281, %s283
      %p287 = scmp.eq.s32.totalorder %s32, 0
      %p288 = por %p286, %p287
      %p289 = scmp.ne.s32.totalorder %s281, %s283
      %p290 = scmp.eq.s32.totalorder %s37, 1
      %p291 = por %p289, %p290
      %p292 = scmp.ne.s32.totalorder %s283, %s284
      %p293 = scmp.eq.s32.totalorder %s37, 0
      %p294 = por %p292, %p293
      %p295 = scmp.ne.s32.totalorder %s283, %s284
      %p296 = scmp.eq.s32.totalorder %s38, 1
      %p297 = por %p295, %p296
      %p299 = scmp.ne.s32.totalorder %s284, %s298
      %p300 = scmp.eq.s32.totalorder %s38, 0
      %p301 = por %p299, %p300
      %s303 = sadd.s32 %s302, 1
      %p306 = scmp.eq.s32.totalorder %s32, 1
      %p307 = scmp.ne.s32.totalorder %s302, %s304
      %p308 = scmp.eq.s32.totalorder %s32, 0
      %p309 = por %p307, %p308
      %p310 = scmp.ne.s32.totalorder %s302, %s304
      %p311 = scmp.eq.s32.totalorder %s37, 1
      %p312 = por %p310, %p311
      %p313 = scmp.ne.s32.totalorder %s304, %s305
      %p314 = scmp.eq.s32.totalorder %s37, 0
      %p315 = por %p313, %p314
      %p316 = scmp.ne.s32.totalorder %s304, %s305
      %p317 = scmp.eq.s32.totalorder %s38, 1
      %p318 = por %p316, %p317
      %p320 = scmp.ne.s32.totalorder %s305, %s319
      %p321 = scmp.eq.s32.totalorder %s38, 0
      %p322 = por %p320, %p321
      %s324 = sadd.s32 %s323, 1
      %p327 = scmp.eq.s32.totalorder %s32, 1
      %p328 = scmp.ne.s32.totalorder %s323, %s325
      %p329 = scmp.eq.s32.totalorder %s32, 0
      %p330 = por %p328, %p329
      %p331 = scmp.ne.s32.totalorder %s323, %s325
      %p332 = scmp.eq.s32.totalorder %s37, 1
      %p333 = por %p331, %p332
      %p334 = scmp.ne.s32.totalorder %s325, %s326
      %p335 = scmp.eq.s32.totalorder %s37, 0
      %p336 = por %p334, %p335
      %p337 = scmp.ne.s32.totalorder %s325, %s326
      %p338 = scmp.eq.s32.totalorder %s38, 1
      %p339 = por %p337, %p338
      %p341 = scmp.ne.s32.totalorder %s326, %s340
      %p342 = scmp.eq.s32.totalorder %s38, 0
      %p343 = por %p341, %p342
      %s345 = sadd.s32 %s344, 1
      %p348 = scmp.eq.s32.totalorder %s32, 1
      %p349 = scmp.ne.s32.totalorder %s344, %s346
      %p350 = scmp.eq.s32.totalorder %s32, 0
      %p351 = por %p349, %p350
      %p352 = scmp.ne.s32.totalorder %s344, %s346
      %p353 = scmp.eq.s32.totalorder %s37, 1
      %p354 = por %p352, %p353
      %p355 = scmp.ne.s32.totalorder %s346, %s347
      %p356 = scmp.eq.s32.totalorder %s37, 0
      %p357 = por %p355, %p356
      %p358 = scmp.ne.s32.totalorder %s346, %s347
      %p359 = scmp.eq.s32.totalorder %s38, 1
      %p360 = por %p358, %p359
      %p362 = scmp.ne.s32.totalorder %s347, %s361
      %p363 = scmp.eq.s32.totalorder %s38, 0
      %p364 = por %p362, %p363
      %s366 = sadd.s32 %s365, 1
      %p369 = scmp.eq.s32.totalorder %s32, 1
      %p370 = scmp.ne.s32.totalorder %s365, %s367
      %p371 = scmp.eq.s32.totalorder %s32, 0
      %p372 = por %p370, %p371
      %p373 = scmp.ne.s32.totalorder %s365, %s367
      %p374 = scmp.eq.s32.totalorder %s37, 1
      %p375 = por %p373, %p374
      %p376 = scmp.ne.s32.totalorder %s367, %s368
      %p377 = scmp.eq.s32.totalorder %s37, 0
      %p378 = por %p376, %p377
      %p379 = scmp.ne.s32.totalorder %s367, %s368
      %p380 = scmp.eq.s32.totalorder %s38, 1
      %p381 = por %p379, %p380
      %p383 = scmp.ne.s32.totalorder %s368, %s382
      %p384 = scmp.eq.s32.totalorder %s38, 0
      %p385 = por %p383, %p384
      %s387 = sadd.s32 %s386, 1
      %p390 = scmp.eq.s32.totalorder %s32, 1
      %p391 = scmp.ne.s32.totalorder %s386, %s388
      %p392 = scmp.eq.s32.totalorder %s32, 0
      %p393 = por %p391, %p392
      %p394 = scmp.ne.s32.totalorder %s386, %s388
      %p395 = scmp.eq.s32.totalorder %s37, 1
      %p396 = por %p394, %p395
      %p397 = scmp.ne.s32.totalorder %s388, %s389
      %p398 = scmp.eq.s32.totalorder %s37, 0
      %p399 = por %p397, %p398
      %p400 = scmp.ne.s32.totalorder %s388, %s389
      %p401 = scmp.eq.s32.totalorder %s38, 1
      %p402 = por %p400, %p401
      %p404 = scmp.ne.s32.totalorder %s389, %s403
      %p405 = scmp.eq.s32.totalorder %s38, 0
      %p406 = por %p404, %p405
      %s408 = sadd.s32 %s407, 1
      %p411 = scmp.eq.s32.totalorder %s32, 1
      %p412 = scmp.ne.s32.totalorder %s407, %s409
      %p413 = scmp.eq.s32.totalorder %s32, 0
      %p414 = por %p412, %p413
      %p415 = scmp.ne.s32.totalorder %s407, %s409
      %p416 = scmp.eq.s32.totalorder %s37, 1
      %p417 = por %p415, %p416
      %p418 = scmp.ne.s32.totalorder %s409, %s410
      %p419 = scmp.eq.s32.totalorder %s37, 0
      %p420 = por %p418, %p419
      %p421 = scmp.ne.s32.totalorder %s409, %s410
      %p422 = scmp.eq.s32.totalorder %s38, 1
      %p423 = por %p421, %p422
      %p425 = scmp.ne.s32.totalorder %s410, %s424
      %p426 = scmp.eq.s32.totalorder %s38, 0
      %p427 = por %p425, %p426
      %s428 = ssub.s32 %s32, %s39
      %p429 = scmp.eq.s32.totalorder %s428, 0
      %s431 = sadd.s32 %s430, 1
      %s432 = scalar_select %p429, %s430, %s431
      %p435 = pneg %p429
      %p436 = scmp.eq.s32.totalorder %s32, 1
      %p437 = por %p435, %p436
      %p438 = scmp.ne.s32.totalorder %s430, %s433
      %p439 = scmp.eq.s32.totalorder %s32, 0
      %p440 = por %p438, %p439
      %p441 = scmp.ne.s32.totalorder %s430, %s433
      %p442 = scmp.eq.s32.totalorder %s37, 1
      %p443 = por %p441, %p442
      %p444 = scmp.ne.s32.totalorder %s433, %s434
      %p445 = scmp.eq.s32.totalorder %s37, 0
      %p446 = por %p444, %p445
      %p447 = scmp.ne.s32.totalorder %s433, %s434
      %p448 = scmp.eq.s32.totalorder %s38, 1
      %p449 = por %p447, %p448
      %p451 = scmp.ne.s32.totalorder %s434, %s450
      %p452 = scmp.eq.s32.totalorder %s38, 0
      %p453 = por %p451, %p452
      %p454 = scmp.le.s32.totalorder 1, %s32
      %p455 = scmp.lt.s32.totalorder %s32, 3
      %p456 = pnand %p454, %p455
      %p457 = pneg %p456
      // Predicated region
      $region9: #{decoder_forward_pallas.4} parent=5 // pred_check
        _
      $region10: #{decoder_forward_pallas.4} parent=5 // pred_check_branch
        %459 = sbr.rel (%p456) target = $region12
      $region11: #{decoder_forward_pallas.4} parent=5 // pred_region
        %s460 = ssub.s32 %s32, 1
        // Predicated region
        $region13: #{decoder_forward_pallas.4} parent=11 // pred_check
          %p461 = pneg %p105
        $region14: #{decoder_forward_pallas.4} parent=11 // pred_check_branch
          %463 = sbr.rel (%p461) target = $region16
        $region15: #{decoder_forward_pallas.4} parent=11 // pred_region
          %s465 = ssub.s32 128, 128
          %466 = vsyncadd [#allocation3], %s465
          %s468 = sshll.u32 [#allocation2], 4
          %s469 = int_to_ptr.vmem [resolvable:$true] %s468
          %471 = dma.hbm_to_vmem [thread:$0]  %s2, 128, %s469, [#allocation3]
        $region16: #{decoder_forward_pallas.4} parent=11 // pred_fallthru
          _
        // Predicated region
        $region17: #{decoder_forward_pallas.4} parent=11 // pred_check
          %p472 = pneg %p126
        $region18: #{decoder_forward_pallas.4} parent=11 // pred_check_branch
          %474 = sbr.rel (%p472) target = $region20
        $region19: #{decoder_forward_pallas.4} parent=11 // pred_region
          %s476 = ssub.s32 128, 128
          %477 = vsyncadd [#allocation5], %s476
          %s479 = sshll.u32 [#allocation4], 4
          %s480 = int_to_ptr.vmem [resolvable:$true] %s479
          %482 = dma.hbm_to_vmem [thread:$0]  %s3, 128, %s480, [#allocation5]
        $region20: #{decoder_forward_pallas.4} parent=11 // pred_fallthru
          _
        // Predicated region
        $region21: #{decoder_forward_pallas.4} parent=11 // pred_check
          %p483 = pneg %p147
        $region22: #{decoder_forward_pallas.4} parent=11 // pred_check_branch
          %485 = sbr.rel (%p483) target = $region24
        $region23: #{decoder_forward_pallas.4} parent=11 // pred_region
          %s487 = ssub.s32 3072, 3072
          %488 = vsyncadd [#allocation5], %s487
          %s489 = sshll.u32 [#allocation6], 4
          %s490 = int_to_ptr.vmem [resolvable:$true] %s489
          %495 = dma.hbm_to_vmem [thread:$0]  %s4, 3072, %s490, [#allocation5], 192, 192, 12
        $region24: #{decoder_forward_pallas.4} parent=11 // pred_fallthru
          _
        // Predicated region
        $region25: #{decoder_forward_pallas.4} parent=11 // pred_check
          %p496 = pneg %p168
        $region26: #{decoder_forward_pallas.4} parent=11 // pred_check_branch
          %498 = sbr.rel (%p496) target = $region28
        $region27: #{decoder_forward_pallas.4} parent=11 // pred_region
          %s500 = ssub.s32 48, 48
          %501 = vsyncadd [#allocation8], %s500
          %s503 = sshll.u32 [#allocation7], 4
          %s504 = int_to_ptr.vmem [resolvable:$true] %s503
          %506 = dma.hbm_to_vmem [thread:$0]  %s5, 48, %s504, [#allocation8]
        $region28: #{decoder_forward_pallas.4} parent=11 // pred_fallthru
          _
        // Predicated region
        $region29: #{decoder_forward_pallas.4} parent=11 // pred_check
          %p507 = pneg %p189
        $region30: #{decoder_forward_pallas.4} parent=11 // pred_check_branch
          %509 = sbr.rel (%p507) target = $region32
        $region31: #{decoder_forward_pallas.4} parent=11 // pred_region
          %s511 = ssub.s32 128, 128
          %512 = vsyncadd [#allocation8], %s511
          %s514 = sshll.u32 [#allocation9], 4
          %s515 = int_to_ptr.vmem [resolvable:$true] %s514
          %517 = dma.hbm_to_vmem [thread:$0]  %s6, 128, %s515, [#allocation8]
        $region32: #{decoder_forward_pallas.4} parent=11 // pred_fallthru
          _
        // Predicated region
        $region33: #{decoder_forward_pallas.4} parent=11 // pred_check
          %p518 = pneg %p210
        $region34: #{decoder_forward_pallas.4} parent=11 // pred_check_branch
          %520 = sbr.rel (%p518) target = $region36
        $region35: #{decoder_forward_pallas.4} parent=11 // pred_region
          %s522 = ssub.s32 128, 128
          %523 = vsyncadd [#allocation11], %s522
          %s525 = sshll.u32 [#allocation10], 4
          %s526 = int_to_ptr.vmem [resolvable:$true] %s525
          %528 = dma.hbm_to_vmem [thread:$0]  %s7, 128, %s526, [#allocation11]
        $region36: #{decoder_forward_pallas.4} parent=11 // pred_fallthru
          _
        // Predicated region
        $region37: #{decoder_forward_pallas.4} parent=11 // pred_check
          %p529 = pneg %p231
        $region38: #{decoder_forward_pallas.4} parent=11 // pred_check_branch
          %531 = sbr.rel (%p529) target = $region40
        $region39: #{decoder_forward_pallas.4} parent=11 // pred_region
          %s533 = ssub.s32 1024, 1024
          %534 = vsyncadd [#allocation11], %s533
          %s535 = sshll.u32 [#allocation12], 4
          %s536 = int_to_ptr.vmem [resolvable:$true] %s535
          %541 = dma.hbm_to_vmem [thread:$0]  %s8, 1024, %s536, [#allocation11], 64, 64, 4
        $region40: #{decoder_forward_pallas.4} parent=11 // pred_fallthru
          _
        // Predicated region
        $region41: #{decoder_forward_pallas.4} parent=11 // pred_check
          %p542 = pneg %p252
        $region42: #{decoder_forward_pallas.4} parent=11 // pred_check_branch
          %544 = sbr.rel (%p542) target = $region44
        $region43: #{decoder_forward_pallas.4} parent=11 // pred_region
          %s546 = ssub.s32 16, 16
          %547 = vsyncadd [#allocation14], %s546
          %s549 = sshll.u32 [#allocation13], 4
          %s550 = int_to_ptr.vmem [resolvable:$true] %s549
          %552 = dma.hbm_to_vmem [thread:$0]  %s9, 16, %s550, [#allocation14]
        $region44: #{decoder_forward_pallas.4} parent=11 // pred_fallthru
          _
        // Predicated region
        $region45: #{decoder_forward_pallas.4} parent=11 // pred_check
          %p553 = pneg %p273
        $region46: #{decoder_forward_pallas.4} parent=11 // pred_check_branch
          %555 = sbr.rel (%p553) target = $region48
        $region47: #{decoder_forward_pallas.4} parent=11 // pred_region
          _
        $region48: #{decoder_forward_pallas.4} parent=11 // pred_fallthru
          _
        // Predicated region
        $region49: #{decoder_forward_pallas.4} parent=11 // pred_check
          %p556 = pneg %p294
        $region50: #{decoder_forward_pallas.4} parent=11 // pred_check_branch
          %558 = sbr.rel (%p556) target = $region52
        $region51: #{decoder_forward_pallas.4} parent=11 // pred_region
          %s560 = ssub.s32 32, 32
          %561 = vsyncadd [#allocation14], %s560
          %s563 = sshll.u32 [#allocation15], 4
          %s564 = int_to_ptr.vmem [resolvable:$true] %s563
          %566 = dma.hbm_to_vmem [thread:$0]  %s11, 32, %s564, [#allocation14]
        $region52: #{decoder_forward_pallas.4} parent=11 // pred_fallthru
          _
        // Predicated region
        $region53: #{decoder_forward_pallas.4} parent=11 // pred_check
          %p567 = pneg %p315
        $region54: #{decoder_forward_pallas.4} parent=11 // pred_check_branch
          %569 = sbr.rel (%p567) target = $region56
        $region55: #{decoder_forward_pallas.4} parent=11 // pred_region
          %s571 = ssub.s32 128, 128
          %572 = vsyncadd [#allocation17], %s571
          %s574 = sshll.u32 [#allocation16], 4
          %s575 = int_to_ptr.vmem [resolvable:$true] %s574
          %577 = dma.hbm_to_vmem [thread:$0]  %s12, 128, %s575, [#allocation17]
        $region56: #{decoder_forward_pallas.4} parent=11 // pred_fallthru
          _
        // Predicated region
        $region57: #{decoder_forward_pallas.4} parent=11 // pred_check
          %p578 = pneg %p336
        $region58: #{decoder_forward_pallas.4} parent=11 // pred_check_branch
          %580 = sbr.rel (%p578) target = $region60
        $region59: #{decoder_forward_pallas.4} parent=11 // pred_region
          %s582 = ssub.s32 128, 128
          %583 = vsyncadd [#allocation17], %s582
          %s585 = sshll.u32 [#allocation18], 4
          %s586 = int_to_ptr.vmem [resolvable:$true] %s585
          %588 = dma.hbm_to_vmem [thread:$0]  %s13, 128, %s586, [#allocation17]
        $region60: #{decoder_forward_pallas.4} parent=11 // pred_fallthru
          _
        // Predicated region
        $region61: #{decoder_forward_pallas.4} parent=11 // pred_check
          %p589 = pneg %p357
        $region62: #{decoder_forward_pallas.4} parent=11 // pred_check_branch
          %591 = sbr.rel (%p589) target = $region64
        $region63: #{decoder_forward_pallas.4} parent=11 // pred_region
          %s593 = ssub.s32 4096, 4096
          %594 = vsyncadd [#allocation20], %s593
          %s595 = sshll.u32 [#allocation19], 4
          %s596 = int_to_ptr.vmem [resolvable:$true] %s595
          %601 = dma.hbm_to_vmem [thread:$0]  %s14, 4096, %s596, [#allocation20], 256, 256, 16
        $region64: #{decoder_forward_pallas.4} parent=11 // pred_fallthru
          _
        // Predicated region
        $region65: #{decoder_forward_pallas.4} parent=11 // pred_check
          %p602 = pneg %p378
        $region66: #{decoder_forward_pallas.4} parent=11 // pred_check_branch
          %604 = sbr.rel (%p602) target = $region68
        $region67: #{decoder_forward_pallas.4} parent=11 // pred_region
          %s606 = ssub.s32 64, 64
          %607 = vsyncadd [#allocation20], %s606
          %s609 = sshll.u32 [#allocation21], 4
          %s610 = int_to_ptr.vmem [resolvable:$true] %s609
          %612 = dma.hbm_to_vmem [thread:$0]  %s15, 64, %s610, [#allocation20]
        $region68: #{decoder_forward_pallas.4} parent=11 // pred_fallthru
          _
        // Predicated region
        $region69: #{decoder_forward_pallas.4} parent=11 // pred_check
          %p613 = pneg %p399
        $region70: #{decoder_forward_pallas.4} parent=11 // pred_check_branch
          %615 = sbr.rel (%p613) target = $region72
        $region71: #{decoder_forward_pallas.4} parent=11 // pred_region
          %s617 = ssub.s32 4096, 4096
          %618 = vsyncadd [#allocation23], %s617
          %s619 = sshll.u32 [#allocation22], 4
          %s620 = int_to_ptr.vmem [resolvable:$true] %s619
          %625 = dma.hbm_to_vmem [thread:$0]  %s16, 4096, %s620, [#allocation23], 64, 64, 4
        $region72: #{decoder_forward_pallas.4} parent=11 // pred_fallthru
          _
        // Predicated region
        $region73: #{decoder_forward_pallas.4} parent=11 // pred_check
          %p626 = pneg %p420
        $region74: #{decoder_forward_pallas.4} parent=11 // pred_check_branch
          %628 = sbr.rel (%p626) target = $region76
        $region75: #{decoder_forward_pallas.4} parent=11 // pred_region
          %s630 = ssub.s32 16, 16
          %631 = vsyncadd [#allocation23], %s630
          %s633 = sshll.u32 [#allocation24], 4
          %s634 = int_to_ptr.vmem [resolvable:$true] %s633
          %636 = dma.hbm_to_vmem [thread:$0]  %s17, 16, %s634, [#allocation23]
        $region76: #{decoder_forward_pallas.4} parent=11 // pred_fallthru
          _
      $region12: #{decoder_forward_pallas.4} parent=5 // pred_fallthru
        _
      %p637 = scmp.lt.s32.totalorder %s32, 2
      // Predicated region
      $region77: #{decoder_forward_pallas.4} parent=5 // pred_check
        %p638 = pneg %p637
      $region78: #{decoder_forward_pallas.4} parent=5 // pred_check_branch
        %640 = sbr.rel (%p638) target = $region80
      $region79: #{decoder_forward_pallas.4} parent=5 // pred_region
        // Predicated region
        $region81: #{decoder_forward_pallas.4} parent=79 // pred_check
          %p641 = pneg %p52
        $region82: #{decoder_forward_pallas.4} parent=79 // pred_check_branch
          %643 = sbr.rel (%p641) target = $region84
        $region83: #{decoder_forward_pallas.4} parent=79 // pred_region
          %s644 = smul.u32 2, %s32
          %p645 = scmp.lt.s32.totalorder %s644, 3
          %s646 = scalar_select %p645, %s644, 3
          %s647 = smul.addr %s646, 8
          %s648 = scalar_lea.vmem %s0, %s647
          %s649 = smul.u32 2, %s32
        $region84: #{decoder_forward_pallas.4} parent=79 // pred_fallthru
          _
        // Predicated region
        $region85: #{decoder_forward_pallas.4} parent=79 // pred_check
          %p650 = pneg %p78
        $region86: #{decoder_forward_pallas.4} parent=79 // pred_check_branch
          %652 = sbr.rel (%p650) target = $region88
        $region87: #{decoder_forward_pallas.4} parent=79 // pred_region
          %s653 = smul.u32 2, %s32
          %p654 = scmp.lt.s32.totalorder %s653, 3
          %s655 = scalar_select %p654, %s653, 3
          %s656 = smul.addr %s655, 8
          %s657 = scalar_lea.vmem %s1, %s656
          %s658 = smul.u32 2, %s32
        $region88: #{decoder_forward_pallas.4} parent=79 // pred_fallthru
          _
      $region80: #{decoder_forward_pallas.4} parent=5 // pred_fallthru
        _
      %p659 = scmp.le.s32.totalorder 1, %s32
      %p660 = scmp.lt.s32.totalorder %s32, 3
      %p661 = pnand %p659, %p660
      %p662 = pneg %p661
      // Predicated region
      $region89: #{decoder_forward_pallas.4} parent=5 // pred_check
        _
      $region90: #{decoder_forward_pallas.4} parent=5 // pred_check_branch
        %664 = sbr.rel (%p661) target = $region92
      $region91: #{decoder_forward_pallas.4} parent=5 // pred_region
        %s665 = ssub.s32 %s32, 1
        // Predicated region
        $region93: #{decoder_forward_pallas.4} parent=91 // pred_check
          %p666 = pneg %p105
        $region94: #{decoder_forward_pallas.4} parent=91 // pred_check_branch
          %668 = sbr.rel (%p666) target = $region96
        $region95: #{decoder_forward_pallas.4} parent=91 // pred_region
          %669 = dma.done [#allocation3], 128
        $region96: #{decoder_forward_pallas.4} parent=91 // pred_fallthru
          _
        // Predicated region
        $region97: #{decoder_forward_pallas.4} parent=91 // pred_check
          %p670 = pneg %p126
        $region98: #{decoder_forward_pallas.4} parent=91 // pred_check_branch
          %672 = sbr.rel (%p670) target = $region100
        $region99: #{decoder_forward_pallas.4} parent=91 // pred_region
          %673 = dma.done [#allocation5], 128
        $region100: #{decoder_forward_pallas.4} parent=91 // pred_fallthru
          _
        // Predicated region
        $region101: #{decoder_forward_pallas.4} parent=91 // pred_check
          %p674 = pneg %p147
        $region102: #{decoder_forward_pallas.4} parent=91 // pred_check_branch
          %676 = sbr.rel (%p674) target = $region104
        $region103: #{decoder_forward_pallas.4} parent=91 // pred_region
          %677 = dma.done [#allocation5], 3072
        $region104: #{decoder_forward_pallas.4} parent=91 // pred_fallthru
          _
        // Predicated region
        $region105: #{decoder_forward_pallas.4} parent=91 // pred_check
          %p678 = pneg %p168
        $region106: #{decoder_forward_pallas.4} parent=91 // pred_check_branch
          %680 = sbr.rel (%p678) target = $region108
        $region107: #{decoder_forward_pallas.4} parent=91 // pred_region
          %681 = dma.done [#allocation8], 48
        $region108: #{decoder_forward_pallas.4} parent=91 // pred_fallthru
          _
        // Predicated region
        $region109: #{decoder_forward_pallas.4} parent=91 // pred_check
          %p682 = pneg %p189
        $region110: #{decoder_forward_pallas.4} parent=91 // pred_check_branch
          %684 = sbr.rel (%p682) target = $region112
        $region111: #{decoder_forward_pallas.4} parent=91 // pred_region
          %685 = dma.done [#allocation8], 128
        $region112: #{decoder_forward_pallas.4} parent=91 // pred_fallthru
          _
        // Predicated region
        $region113: #{decoder_forward_pallas.4} parent=91 // pred_check
          %p686 = pneg %p210
        $region114: #{decoder_forward_pallas.4} parent=91 // pred_check_branch
          %688 = sbr.rel (%p686) target = $region116
        $region115: #{decoder_forward_pallas.4} parent=91 // pred_region
          %689 = dma.done [#allocation11], 128
        $region116: #{decoder_forward_pallas.4} parent=91 // pred_fallthru
          _
        // Predicated region
        $region117: #{decoder_forward_pallas.4} parent=91 // pred_check
          %p690 = pneg %p231
        $region118: #{decoder_forward_pallas.4} parent=91 // pred_check_branch
          %692 = sbr.rel (%p690) target = $region120
        $region119: #{decoder_forward_pallas.4} parent=91 // pred_region
          %693 = dma.done [#allocation11], 1024
        $region120: #{decoder_forward_pallas.4} parent=91 // pred_fallthru
          _
        // Predicated region
        $region121: #{decoder_forward_pallas.4} parent=91 // pred_check
          %p694 = pneg %p252
        $region122: #{decoder_forward_pallas.4} parent=91 // pred_check_branch
          %696 = sbr.rel (%p694) target = $region124
        $region123: #{decoder_forward_pallas.4} parent=91 // pred_region
          %697 = dma.done [#allocation14], 16
        $region124: #{decoder_forward_pallas.4} parent=91 // pred_fallthru
          _
        // Predicated region
        $region125: #{decoder_forward_pallas.4} parent=91 // pred_check
          %p698 = pneg %p294
        $region126: #{decoder_forward_pallas.4} parent=91 // pred_check_branch
          %700 = sbr.rel (%p698) target = $region128
        $region127: #{decoder_forward_pallas.4} parent=91 // pred_region
          %701 = dma.done [#allocation14], 32
        $region128: #{decoder_forward_pallas.4} parent=91 // pred_fallthru
          _
        // Predicated region
        $region129: #{decoder_forward_pallas.4} parent=91 // pred_check
          %p702 = pneg %p315
        $region130: #{decoder_forward_pallas.4} parent=91 // pred_check_branch
          %704 = sbr.rel (%p702) target = $region132
        $region131: #{decoder_forward_pallas.4} parent=91 // pred_region
          %705 = dma.done [#allocation17], 128
        $region132: #{decoder_forward_pallas.4} parent=91 // pred_fallthru
          _
        // Predicated region
        $region133: #{decoder_forward_pallas.4} parent=91 // pred_check
          %p706 = pneg %p336
        $region134: #{decoder_forward_pallas.4} parent=91 // pred_check_branch
          %708 = sbr.rel (%p706) target = $region136
        $region135: #{decoder_forward_pallas.4} parent=91 // pred_region
          %709 = dma.done [#allocation17], 128
        $region136: #{decoder_forward_pallas.4} parent=91 // pred_fallthru
          _
        // Predicated region
        $region137: #{decoder_forward_pallas.4} parent=91 // pred_check
          %p710 = pneg %p357
        $region138: #{decoder_forward_pallas.4} parent=91 // pred_check_branch
          %712 = sbr.rel (%p710) target = $region140
        $region139: #{decoder_forward_pallas.4} parent=91 // pred_region
          %713 = dma.done [#allocation20], 4096
        $region140: #{decoder_forward_pallas.4} parent=91 // pred_fallthru
          _
        // Predicated region
        $region141: #{decoder_forward_pallas.4} parent=91 // pred_check
          %p714 = pneg %p378
        $region142: #{decoder_forward_pallas.4} parent=91 // pred_check_branch
          %716 = sbr.rel (%p714) target = $region144
        $region143: #{decoder_forward_pallas.4} parent=91 // pred_region
          %717 = dma.done [#allocation20], 64
        $region144: #{decoder_forward_pallas.4} parent=91 // pred_fallthru
          _
        // Predicated region
        $region145: #{decoder_forward_pallas.4} parent=91 // pred_check
          %p718 = pneg %p399
        $region146: #{decoder_forward_pallas.4} parent=91 // pred_check_branch
          %720 = sbr.rel (%p718) target = $region148
        $region147: #{decoder_forward_pallas.4} parent=91 // pred_region
          %721 = dma.done [#allocation23], 4096
        $region148: #{decoder_forward_pallas.4} parent=91 // pred_fallthru
          _
        // Predicated region
        $region149: #{decoder_forward_pallas.4} parent=91 // pred_check
          %p722 = pneg %p420
        $region150: #{decoder_forward_pallas.4} parent=91 // pred_check_branch
          %724 = sbr.rel (%p722) target = $region152
        $region151: #{decoder_forward_pallas.4} parent=91 // pred_region
          %725 = dma.done [#allocation23], 16
        $region152: #{decoder_forward_pallas.4} parent=91 // pred_fallthru
          _
        %s726 = smul.u32 2, %s37
        %p727 = scmp.lt.s32.totalorder %s726, 3
        %s728 = scalar_select %p727, %s726, 3
        %s729 = smul.addr %s728, 8
        %s730 = scalar_lea.vmem %s0, %s729
        %p731 = pneg %p58
        %p732 = pneg %p55
        %s733 = smul.u32 2, %s37
        %p734 = scmp.lt.s32.totalorder %s733, 3
        %s735 = scalar_select %p734, %s733, 3
        %s736 = smul.addr %s735, 8
        %s737 = scalar_lea.vmem %s1, %s736
        %p738 = pneg %p84
        %p739 = pneg %p81
        %p740 = pneg %p105
        %p741 = pneg %p102
        %p742 = pneg %p126
        %p743 = pneg %p123
        %p744 = pneg %p147
        %p745 = pneg %p144
        %p746 = pneg %p168
        %p747 = pneg %p165
        %p748 = pneg %p189
        %p749 = pneg %p186
        %p750 = pneg %p210
        %p751 = pneg %p207
        %p752 = pneg %p231
        %p753 = pneg %p228
        %p754 = pneg %p252
        %p755 = pneg %p249
        %p756 = pneg %p273
        %p757 = pneg %p270
        %p758 = pneg %p294
        %p759 = pneg %p291
        %p760 = pneg %p315
        %p761 = pneg %p312
        %p762 = pneg %p336
        %p763 = pneg %p333
        %p764 = pneg %p357
        %p765 = pneg %p354
        %p766 = pneg %p378
        %p767 = pneg %p375
        %p768 = pneg %p399
        %p769 = pneg %p396
        %p770 = pneg %p420
        %p771 = pneg %p417
        %p772 = pneg %p446
        %p773 = pneg %p443
        %s774 = smul.u32 2, %s37
        %p775 = scmp.lt.s32.totalorder %s774, 3
        %s776 = scalar_select %p775, %s774, 3
        %s777 = smul.addr %s776, 8
        %s778 = scalar_lea.vmem %s18, %s777
        %s779 = smul.u32 2, %s37
        %p780 = scmp.lt.s32.totalorder %s779, 3
        %s781 = scalar_select %p780, %s779, 3
        %s782 = smul.addr %s781, 8
        %s783 = scalar_lea.vmem %s0, %s782
        %s784 = smul.u32 2, %s37
        %s785 = smul.u32 2, %s37
        %p786 = scmp.lt.s32.totalorder %s785, 3
        %s787 = scalar_select %p786, %s785, 3
        %s788 = smul.addr %s787, 8
        %s789 = scalar_lea.vmem %s1, %s788
        %s790 = smul.u32 2, %s37
        %s791 = smul.u32 2, %s37
        %p792 = scmp.lt.s32.totalorder %s791, 3
        %s793 = scalar_select %p792, %s791, 3
        %s794 = smul.addr %s793, 8
        %s795 = scalar_lea.vmem %s18, %s794
        %s796 = smul.u32 2, %s37
        %v798 = vld [vmem:[%s783] sm:$0xff]
        %v799 = vld [vmem:[%s783 + $0x8] sm:$0xff]
        %v800 = vld [vmem:[%s789] sm:$0xff]
        %v801 = vld [vmem:[%s789 + $0x8] sm:$0xff]
        %v802 = vlaneseq
        %v803 = vshrl.u32 %v802, 7
        %v804 = vlaneseq
        %v805 = vand.u32 %v804, 127
        %vm806 = vcmp.gt.s32.totalorder %v805, %v803
        %v807 = vrot.slane %v800, 4
        %v808 = vadd.f32 %v800, %v807
        %v809 = vrot.slane %v808, 2
        %v810 = vadd.f32 %v808, %v809
        %v811 = vrot.slane %v810, 1
        %v812 = vadd.f32 %v810, %v811
        %v813 = vrot.slane %v801, 4
        %v814 = vadd.f32 %v801, %v813
        %v815 = vrot.slane %v814, 2
        %v816 = vadd.f32 %v814, %v815
        %v817 = vrot.slane %v816, 1
        %v818 = vadd.f32 %v816, %v817
        %v819 = vrcp.pop 8.0
        %v820 = vmul.f32 %v812, %v819
        %v821 = vmul.f32 %v818, %v819
        %v822 = vsub.f32 %v800, %v820
        %v823 = vsub.f32 %v801, %v821
        %v824 = vmul.f32 %v822, %v822
        %v825 = vmul.f32 %v823, %v823
        %v826 = vrot.slane %v824, 4
        %v827 = vadd.f32 %v824, %v826
        %v828 = vrot.slane %v827, 2
        %v829 = vadd.f32 %v827, %v828
        %v830 = vrot.slane %v829, 1
        %v831 = vadd.f32 %v829, %v830
        %v832 = vrot.slane %v825, 4
        %v833 = vadd.f32 %v825, %v832
        %v834 = vrot.slane %v833, 2
        %v835 = vadd.f32 %v833, %v834
        %v836 = vrot.slane %v835, 1
        %v837 = vadd.f32 %v835, %v836
        %v838 = vmul.f32 %v831, %v819
        %v839 = vmul.f32 %v837, %v819
        %v840 = vadd.f32 %v838, 1e-05
        %v841 = vadd.f32 %v839, 1e-05
        %v842 = vrsqrt.pop %v840
        %v843 = vrsqrt.pop %v841
        %v844 = vmul.f32 %v822, %v842
        %v845 = vmul.f32 %v823, %v843
        %v846 = vld [vmem:[#allocation2] sm:$0xff]
        %v847 = vmul.f32 %v844, %v846
        %v848 = vmul.f32 %v845, %v846
        %v849 = vld [vmem:[#allocation4] sm:$0xff]
        %v850 = vadd.f32 %v847, %v849
        %v851 = vadd.f32 %v848, %v849
        %v852 = vpack.c.bf16 %v851, %v850
        %v853 = vld [vmem:[#allocation6] sm:$0xff]
        %v854 = vld [vmem:[#allocation6 + $0x8] sm:$0xf]
        %v855 = vld [vmem:[#allocation6 + $0xc] sm:$0xff]
        %v856 = vld [vmem:[#allocation6 + $0x14] sm:$0xf]
        %v857 = vld [vmem:[#allocation6 + $0x18] sm:$0xff]
        %v858 = vld [vmem:[#allocation6 + $0x20] sm:$0xf]
        %v859 = vld [vmem:[#allocation6 + $0x24] sm:$0xff]
        %v860 = vld [vmem:[#allocation6 + $0x2c] sm:$0xf]
        %v861 = vld [vmem:[#allocation6 + $0x30] sm:$0xff]
        %v862 = vld [vmem:[#allocation6 + $0x38] sm:$0xf]
        %v863 = vld [vmem:[#allocation6 + $0x3c] sm:$0xff]
        %v864 = vld [vmem:[#allocation6 + $0x44] sm:$0xf]
        %v865 = vld [vmem:[#allocation6 + $0x48] sm:$0xff]
        %v866 = vld [vmem:[#allocation6 + $0x50] sm:$0xf]
        %v867 = vld [vmem:[#allocation6 + $0x54] sm:$0xff]
        %v868 = vld [vmem:[#allocation6 + $0x5c] sm:$0xf]
        %v869 = vld [vmem:[#allocation6 + $0x60] sm:$0xff]
        %v870 = vld [vmem:[#allocation6 + $0x68] sm:$0xf]
        %v871 = vld [vmem:[#allocation6 + $0x6c] sm:$0xff]
        %v872 = vld [vmem:[#allocation6 + $0x74] sm:$0xf]
        %v873 = vld [vmem:[#allocation6 + $0x78] sm:$0xff]
        %v874 = vld [vmem:[#allocation6 + $0x80] sm:$0xf]
        %v875 = vld [vmem:[#allocation6 + $0x84] sm:$0xff]
        %v876 = vld [vmem:[#allocation6 + $0x8c] sm:$0xf]
        %v877 = vld [vmem:[#allocation6 + $0x90] sm:$0xff]
        %v878 = vld [vmem:[#allocation6 + $0x98] sm:$0xf]
        %v879 = vld [vmem:[#allocation6 + $0x9c] sm:$0xff]
        %v880 = vld [vmem:[#allocation6 + $0xa4] sm:$0xf]
        %v881 = vld [vmem:[#allocation6 + $0xa8] sm:$0xff]
        %v882 = vld [vmem:[#allocation6 + $0xb0] sm:$0xf]
        %v883 = vld [vmem:[#allocation6 + $0xb4] sm:$0xff]
        %v884 = vld [vmem:[#allocation6 + $0xbc] sm:$0xf]
        %v885 = vld [vmem:[#allocation7] sm:$0x7]
        %v887 = vlaneseq
        %v888 = vshrl.u32 %v887, 7
        %v889 = vsub.s32 0, %v888
        %v890 = vrot.slane %v885, %v889
        %v891 = vlaneseq
        %v892 = vshrl.u32 %v891, 7
        %v893 = vsub.s32 1, %v892
        %v894 = vrot.slane %v885, %v893
        %v895 = vlaneseq
        %v896 = vshrl.u32 %v895, 7
        %v897 = vsub.s32 2, %v896
        %v898 = vrot.slane %v885, %v897
        %v934 = vunpack.c.l.b16 %v853
        %v935 = vunpack.c.h.b16 %v853
        %v936 = vunpack.c.l.b16 %v854
        %v937 = vunpack.c.l.b16 %v855
        %v938 = vunpack.c.h.b16 %v855
        %v939 = vunpack.c.l.b16 %v856
        %v940 = vunpack.c.l.b16 %v857
        %v941 = vunpack.c.h.b16 %v857
        %v942 = vunpack.c.l.b16 %v858
        %v943 = vunpack.c.l.b16 %v859
        %v944 = vunpack.c.h.b16 %v859
        %v945 = vunpack.c.l.b16 %v860
        %v946 = vunpack.c.l.b16 %v861
        %v947 = vunpack.c.h.b16 %v861
        %v948 = vunpack.c.l.b16 %v862
        %v949 = vunpack.c.l.b16 %v863
        %v950 = vunpack.c.h.b16 %v863
        %v951 = vunpack.c.l.b16 %v864
        %v952 = vunpack.c.l.b16 %v865
        %v953 = vunpack.c.h.b16 %v865
        %v954 = vunpack.c.l.b16 %v866
        %v955 = vunpack.c.l.b16 %v867
        %v956 = vunpack.c.h.b16 %v867
        %v957 = vunpack.c.l.b16 %v868
        %v958 = vunpack.c.l.b16 %v869
        %v959 = vunpack.c.h.b16 %v869
        %v960 = vunpack.c.l.b16 %v870
        %v961 = vunpack.c.l.b16 %v871
        %v962 = vunpack.c.h.b16 %v871
        %v963 = vunpack.c.l.b16 %v872
        %v964 = vunpack.c.l.b16 %v873
        %v965 = vunpack.c.h.b16 %v873
        %v966 = vunpack.c.l.b16 %v874
        %v967 = vunpack.c.l.b16 %v875
        %v968 = vunpack.c.h.b16 %v875
        %v969 = vunpack.c.l.b16 %v876
        %v970 = vunpack.c.l.b16 %v877
        %v971 = vunpack.c.h.b16 %v877
        %v972 = vunpack.c.l.b16 %v878
        %v973 = vunpack.c.l.b16 %v879
        %v974 = vunpack.c.h.b16 %v879
        %v975 = vunpack.c.l.b16 %v880
        %v976 = vunpack.c.l.b16 %v881
        %v977 = vunpack.c.h.b16 %v881
        %v978 = vunpack.c.l.b16 %v882
        %v979 = vunpack.c.l.b16 %v883
        %v980 = vunpack.c.h.b16 %v883
        %v981 = vunpack.c.l.b16 %v884
        %v982 = vpack.c.b16 %v937, %v934
        %v983 = vpack.c.b16 %v938, %v935
        %v984 = vpack.c.b16 %v939, %v936
        %v985 = vpack.c.b16 %v943, %v940
        %v986 = vpack.c.b16 %v944, %v941
        %v987 = vpack.c.b16 %v945, %v942
        %v988 = vpack.c.b16 %v949, %v946
        %v989 = vpack.c.b16 %v950, %v947
        %v990 = vpack.c.b16 %v951, %v948
        %v991 = vpack.c.b16 %v955, %v952
        %v992 = vpack.c.b16 %v956, %v953
        %v993 = vpack.c.b16 %v957, %v954
        %v994 = vpack.c.b16 %v961, %v958
        %v995 = vpack.c.b16 %v962, %v959
        %v996 = vpack.c.b16 %v963, %v960
        %v997 = vpack.c.b16 %v967, %v964
        %v998 = vpack.c.b16 %v968, %v965
        %v999 = vpack.c.b16 %v969, %v966
        %v1000 = vpack.c.b16 %v973, %v970
        %v1001 = vpack.c.b16 %v974, %v971
        %v1002 = vpack.c.b16 %v975, %v972
        %v1003 = vpack.c.b16 %v979, %v976
        %v1004 = vpack.c.b16 %v980, %v977
        %v1005 = vpack.c.b16 %v981, %v978
        %1030 = vmatprep.subr.bf16.mxu0 %v983
        %1031 = vmatpush1.bf16.msra.mxu0 %v982
        %1032 = vmatprep.subr.bf16.mxu0 %v986
        %1033 = vmatpush1.bf16.msra.mxu0 %v985
        %1034 = vmatprep.subr.bf16.mxu0 %v989
        %1035 = vmatpush1.bf16.msra.mxu0 %v988
        %1036 = vmatprep.subr.bf16.mxu0 %v992
        %1037 = vmatpush1.bf16.msra.mxu0 %v991
        %1038 = vmatprep.subr.bf16.mxu0 %v995
        %1039 = vmatpush1.bf16.msra.mxu0 %v994
        %1040 = vmatprep.subr.bf16.mxu0 %v998
        %1041 = vmatpush1.bf16.msra.mxu0 %v997
        %1042 = vmatprep.subr.bf16.mxu0 %v1001
        %1043 = vmatpush1.bf16.msra.mxu0 %v1000
        %1044 = vmatprep.subr.bf16.mxu0 %v1004
        %1045 = vmatpush1.bf16.msra.mxu0 %v1003
        %1046 = vmatprep.subr.bf16.mxu0 0
        %1047 = vmatpush1.bf16.msra.mxu0 0
        %1048 = vmatprep.subr.bf16.mxu0 0
        %1049 = vmatpush1.bf16.msra.mxu0 0
        %1050 = vmatprep.subr.bf16.mxu0 0
        %1051 = vmatpush1.bf16.msra.mxu0 0
        %1052 = vmatprep.subr.bf16.mxu0 0
        %1053 = vmatpush1.bf16.msra.mxu0 0
        %1054 = vmatprep.subr.bf16.mxu0 0
        %1055 = vmatpush1.bf16.msra.mxu0 0
        %1056 = vmatprep.subr.bf16.mxu0 0
        %1057 = vmatpush1.bf16.msra.mxu0 0
        %1058 = vmatprep.subr.bf16.mxu0 0
        %1059 = vmatpush1.bf16.msra.mxu0 0
        %1060 = vmatprep.subr.bf16.mxu0 0
        %1061 = vmatpush1.bf16.msra.mxu0 0
        %1062 = vmatprep.mubr.bf16.mxu0 0
        %1063 = vmatmul.mubr.bf16.gmra.mrb[0].mxu0 %v852
        %v1064 = vpop.f32.mrb[0].mxu0
        %v1065 = vadd.f32 %v890, %v1064
        %v1066 = vpop.f32.mrb[0].mxu0
        %v1067 = vadd.f32 %v894, %v1066
        %v1068 = vpop.f32.mrb[0].mxu0
        %v1069 = vadd.f32 %v890, %v1068
        %v1070 = vpop.f32.mrb[0].mxu0
        %v1071 = vadd.f32 %v894, %v1070
        %1072 = vdwg.mxu0
        %1073 = vmatprep.subr.bf16.mxu0 0
        %1074 = vmatpush1.bf16.msra.mxu0 %v984
        %1075 = vmatprep.subr.bf16.mxu0 0
        %1076 = vmatpush1.bf16.msra.mxu0 %v987
        %1077 = vmatprep.subr.bf16.mxu0 0
        %1078 = vmatpush1.bf16.msra.mxu0 %v990
        %1079 = vmatprep.subr.bf16.mxu0 0
        %1080 = vmatpush1.bf16.msra.mxu0 %v993
        %1081 = vmatprep.subr.bf16.mxu0 0
        %1082 = vmatpush1.bf16.msra.mxu0 %v996
        %1083 = vmatprep.subr.bf16.mxu0 0
        %1084 = vmatpush1.bf16.msra.mxu0 %v999
        %1085 = vmatprep.subr.bf16.mxu0 0
        %1086 = vmatpush1.bf16.msra.mxu0 %v1002
        %1087 = vmatprep.subr.bf16.mxu0 0
        %1088 = vmatpush1.bf16.msra.mxu0 %v1005
        %1089 = vmatprep.subr.bf16.mxu0 0
        %1090 = vmatpush1.bf16.msra.mxu0 0
        %1091 = vmatprep.subr.bf16.mxu0 0
        %1092 = vmatpush1.bf16.msra.mxu0 0
        %1093 = vmatprep.subr.bf16.mxu0 0
        %1094 = vmatpush1.bf16.msra.mxu0 0
        %1095 = vmatprep.subr.bf16.mxu0 0
        %1096 = vmatpush1.bf16.msra.mxu0 0
        %1097 = vmatprep.subr.bf16.mxu0 0
        %1098 = vmatpush1.bf16.msra.mxu0 0
        %1099 = vmatprep.subr.bf16.mxu0 0
        %1100 = vmatpush1.bf16.msra.mxu0 0
        %1101 = vmatprep.subr.bf16.mxu0 0
        %1102 = vmatpush1.bf16.msra.mxu0 0
        %1103 = vmatprep.subr.bf16.mxu0 0
        %1104 = vmatpush1.bf16.msra.mxu0 0
        %1105 = vmatprep.mubr.bf16.mxu0 0
        %1106 = vmatmul.mubr.bf16.gmra.mrb[0].mxu0 %v852
        %v1107 = vpop.f32.mrb[0].mxu0
        %v1108 = vadd.f32 %v898, %v1107
        %v1109 = vpop.f32.mrb[0].mxu0
        %v1110 = vpop.f32.mrb[0].mxu0
        %v1111 = vadd.f32 %v898, %v1110
        %v1112 = vpop.f32.mrb[0].mxu0
        %1113 = vdwg.mxu0
        %v1114 = vpack.c.bf16 %v1065, %v1065
        %v1115 = vpack.c.bf16 %v1069, %v1069
        %v1116 = vpack.c.bf16 %v1067, %v1067
        %v1117 = vpack.c.bf16 %v1071, %v1071
        %v1118 = vpack.c.bf16 %v1108, %v1108
        %v1119 = vpack.c.bf16 %v1111, %v1111
        %vm1120 = vcmask 261120
        %v1122 = vsel %vm1120, %v1114, 0
        %v1125 = vsel %vm1120, %v1116, 0
        %1127 = vmatprep.subr.bf16.mxu0 0
        %1128 = vmatpush1.bf16.xpose.msra.mxu0 %v1125
        %1129 = vmatprep.subr.bf16.mxu0 0
        %1130 = vmatpush1.bf16.xpose.msra.mxu0 0
        %1131 = vmatprep.subr.bf16.mxu0 0
        %1132 = vmatpush1.bf16.xpose.msra.mxu0 0
        %1133 = vmatprep.subr.bf16.mxu0 0
        %1134 = vmatpush1.bf16.xpose.msra.mxu0 0
        %1135 = vmatprep.subr.bf16.mxu0 0
        %1136 = vmatpush1.bf16.xpose.msra.mxu0 0
        %1137 = vmatprep.subr.bf16.mxu0 0
        %1138 = vmatpush1.bf16.xpose.msra.mxu0 0
        %1139 = vmatprep.subr.bf16.mxu0 0
        %1140 = vmatpush1.bf16.xpose.msra.mxu0 0
        %1141 = vmatprep.subr.bf16.mxu0 0
        %1142 = vmatpush1.bf16.xpose.msra.mxu0 0
        %1143 = vmatprep.subr.bf16.mxu0 0
        %1144 = vmatpush1.bf16.xpose.msra.mxu0 0
        %1145 = vmatprep.subr.bf16.mxu0 0
        %1146 = vmatpush1.bf16.xpose.msra.mxu0 0
        %1147 = vmatprep.subr.bf16.mxu0 0
        %1148 = vmatpush1.bf16.xpose.msra.mxu0 0
        %1149 = vmatprep.subr.bf16.mxu0 0
        %1150 = vmatpush1.bf16.xpose.msra.mxu0 0
        %1151 = vmatprep.subr.bf16.mxu0 0
        %1152 = vmatpush1.bf16.xpose.msra.mxu0 0
        %1153 = vmatprep.subr.bf16.mxu0 0
        %1154 = vmatpush1.bf16.xpose.msra.mxu0 0
        %1155 = vmatprep.subr.bf16.mxu0 0
        %1156 = vmatpush1.bf16.xpose.msra.mxu0 0
        %1157 = vmatprep.subr.bf16.mxu0 0
        %1158 = vmatpush1.bf16.xpose.msra.mxu0 0
        %1159 = vmatprep.mubr.bf16.mxu0 0
        %1160 = vmatmul.mubr.bf16.gmra.mrb[0].mxu0 %v1122
        %v1161 = vpop.f32.mrb[0].mxu0
        %v1162 = vadd.f32 0.0, %v1161
        %v1163 = vpop.f32.mrb[0].mxu0
        %v1164 = vpop.f32.mrb[0].mxu0
        %v1165 = vpop.f32.mrb[0].mxu0
        %1166 = vdwg.mxu0
        %v1168 = vsel %vm1120, %v1115, 0
        %v1171 = vsel %vm1120, %v1117, 0
        %1173 = vmatprep.subr.bf16.mxu0 0
        %1174 = vmatpush1.bf16.xpose.msra.mxu0 %v1171
        %1175 = vmatprep.subr.bf16.mxu0 0
        %1176 = vmatpush1.bf16.xpose.msra.mxu0 0
        %1177 = vmatprep.subr.bf16.mxu0 0
        %1178 = vmatpush1.bf16.xpose.msra.mxu0 0
        %1179 = vmatprep.subr.bf16.mxu0 0
        %1180 = vmatpush1.bf16.xpose.msra.mxu0 0
        %1181 = vmatprep.subr.bf16.mxu0 0
        %1182 = vmatpush1.bf16.xpose.msra.mxu0 0
        %1183 = vmatprep.subr.bf16.mxu0 0
        %1184 = vmatpush1.bf16.xpose.msra.mxu0 0
        %1185 = vmatprep.subr.bf16.mxu0 0
        %1186 = vmatpush1.bf16.xpose.msra.mxu0 0
        %1187 = vmatprep.subr.bf16.mxu0 0
        %1188 = vmatpush1.bf16.xpose.msra.mxu0 0
        %1189 = vmatprep.subr.bf16.mxu0 0
        %1190 = vmatpush1.bf16.xpose.msra.mxu0 0
        %1191 = vmatprep.subr.bf16.mxu0 0
        %1192 = vmatpush1.bf16.xpose.msra.mxu0 0
        %1193 = vmatprep.subr.bf16.mxu0 0
        %1194 = vmatpush1.bf16.xpose.msra.mxu0 0
        %1195 = vmatprep.subr.bf16.mxu0 0
        %1196 = vmatpush1.bf16.xpose.msra.mxu0 0
        %1197 = vmatprep.subr.bf16.mxu0 0
        %1198 = vmatpush1.bf16.xpose.msra.mxu0 0
        %1199 = vmatprep.subr.bf16.mxu0 0
        %1200 = vmatpush1.bf16.xpose.msra.mxu0 0
        %1201 = vmatprep.subr.bf16.mxu0 0
        %1202 = vmatpush1.bf16.xpose.msra.mxu0 0
        %1203 = vmatprep.subr.bf16.mxu0 0
        %1204 = vmatpush1.bf16.xpose.msra.mxu0 0
        %1205 = vmatprep.mubr.bf16.mxu0 0
        %1206 = vmatmul.mubr.bf16.gmra.mrb[0].mxu0 %v1168
        %v1207 = vpop.f32.mrb[0].mxu0
        %v1208 = vadd.f32 0.0, %v1207
        %v1209 = vpop.f32.mrb[0].mxu0
        %v1210 = vpop.f32.mrb[0].mxu0
        %v1211 = vpop.f32.mrb[0].mxu0
        %1212 = vdwg.mxu0
        %v1213 = vsel %vm806, 1, 0
        %vm1214 = vcmp.eq.s32.totalorder %v1213, 1
        %v1215 = vsel %vm1214, -inf, %v1162
        %v1216 = vsel %vm1214, -inf, %v1208
        %v1217 = vmul.f32 %v1215, 0.17677669
        %v1218 = vmul.f32 %v1216, 0.17677669
        %vm1219 = vcmask 64512
        %v1220 = vsel %vm1219, %v1217, -inf
        %1221 = vmax.xlane.f32.xlu0 %v1220
        %v1222 = vpop.xlane.xlu0 %1221
        %v1223 = vsel %vm1219, %v1218, -inf
        %1224 = vmax.xlane.f32.xlu0 %v1223
        %v1225 = vpop.xlane.xlu0 %1224
        %v1226 = vsub.f32 %v1217, %v1222
        %v1227 = vsub.f32 %v1218, %v1225
        %v1228 = vmul.f32 %v1226, 1.442695
        %v1229 = vpow.pop %v1228
        %v1230 = vmul.f32 %v1227, 1.442695
        %v1231 = vpow.pop %v1230
        %v1232 = vsel %vm1219, %v1229, 0.0
        %1233 = vadd.xlane.f32.xlu0 %v1232
        %v1234 = vpop.xlane.xlu0 %1233
        %v1235 = vsel %vm1219, %v1231, 0.0
        %1236 = vadd.xlane.f32.xlu0 %v1235
        %v1237 = vpop.xlane.xlu0 %1236
        %v1238 = vrcp.pop %v1234
        %v1239 = vmul.f32 1.0, %v1238
        %v1240 = vrcp.pop %v1237
        %v1241 = vmul.f32 1.0, %v1240
        %v1242 = vmul.f32 %v1229, %v1239
        %v1243 = vmul.f32 %v1231, %v1241
        %v1244 = vpack.c.bf16 %v1242, %v1242
        %v1245 = vpack.c.bf16 %v1243, %v1243
        %v1247 = vsel %vm1219, %v1244, 0
        %vm1249 = vcmask 1043456
        %v1251 = vsel %vm1249, %v1118, 0
        %1253 = vmatprep.subr.bf16.mxu0 0
        %1254 = vmatpush1.bf16.msra.mxu0 %v1251
        %1255 = vmatprep.subr.bf16.mxu0 0
        %1256 = vmatpush1.bf16.msra.mxu0 0
        %1257 = vmatprep.subr.bf16.mxu0 0
        %1258 = vmatpush1.bf16.msra.mxu0 0
        %1259 = vmatprep.subr.bf16.mxu0 0
        %1260 = vmatpush1.bf16.msra.mxu0 0
        %1261 = vmatprep.subr.bf16.mxu0 0
        %1262 = vmatpush1.bf16.msra.mxu0 0
        %1263 = vmatprep.subr.bf16.mxu0 0
        %1264 = vmatpush1.bf16.msra.mxu0 0
        %1265 = vmatprep.subr.bf16.mxu0 0
        %1266 = vmatpush1.bf16.msra.mxu0 0
        %1267 = vmatprep.subr.bf16.mxu0 0
        %1268 = vmatpush1.bf16.msra.mxu0 0
        %1269 = vmatprep.subr.bf16.mxu0 0
        %1270 = vmatpush1.bf16.msra.mxu0 0
        %1271 = vmatprep.subr.bf16.mxu0 0
        %1272 = vmatpush1.bf16.msra.mxu0 0
        %1273 = vmatprep.subr.bf16.mxu0 0
        %1274 = vmatpush1.bf16.msra.mxu0 0
        %1275 = vmatprep.subr.bf16.mxu0 0
        %1276 = vmatpush1.bf16.msra.mxu0 0
        %1277 = vmatprep.subr.bf16.mxu0 0
        %1278 = vmatpush1.bf16.msra.mxu0 0
        %1279 = vmatprep.subr.bf16.mxu0 0
        %1280 = vmatpush1.bf16.msra.mxu0 0
        %1281 = vmatprep.subr.bf16.mxu0 0
        %1282 = vmatpush1.bf16.msra.mxu0 0
        %1283 = vmatprep.subr.bf16.mxu0 0
        %1284 = vmatpush1.bf16.msra.mxu0 0
        %1285 = vmatprep.mubr.bf16.mxu0 0
        %1286 = vmatmul.mubr.bf16.gmra.mrb[0].mxu0 %v1247
        %v1287 = vpop.f32.mrb[0].mxu0
        %v1288 = vadd.f32 0.0, %v1287
        %v1289 = vpop.f32.mrb[0].mxu0
        %v1290 = vpop.f32.mrb[0].mxu0
        %v1291 = vpop.f32.mrb[0].mxu0
        %1292 = vdwg.mxu0
        %v1294 = vsel %vm1219, %v1245, 0
        %v1297 = vsel %vm1249, %v1119, 0
        %1299 = vmatprep.subr.bf16.mxu0 0
        %1300 = vmatpush1.bf16.msra.mxu0 %v1297
        %1301 = vmatprep.subr.bf16.mxu0 0
        %1302 = vmatpush1.bf16.msra.mxu0 0
        %1303 = vmatprep.subr.bf16.mxu0 0
        %1304 = vmatpush1.bf16.msra.mxu0 0
        %1305 = vmatprep.subr.bf16.mxu0 0
        %1306 = vmatpush1.bf16.msra.mxu0 0
        %1307 = vmatprep.subr.bf16.mxu0 0
        %1308 = vmatpush1.bf16.msra.mxu0 0
        %1309 = vmatprep.subr.bf16.mxu0 0
        %1310 = vmatpush1.bf16.msra.mxu0 0
        %1311 = vmatprep.subr.bf16.mxu0 0
        %1312 = vmatpush1.bf16.msra.mxu0 0
        %1313 = vmatprep.subr.bf16.mxu0 0
        %1314 = vmatpush1.bf16.msra.mxu0 0
        %1315 = vmatprep.subr.bf16.mxu0 0
        %1316 = vmatpush1.bf16.msra.mxu0 0
        %1317 = vmatprep.subr.bf16.mxu0 0
        %1318 = vmatpush1.bf16.msra.mxu0 0
        %1319 = vmatprep.subr.bf16.mxu0 0
        %1320 = vmatpush1.bf16.msra.mxu0 0
        %1321 = vmatprep.subr.bf16.mxu0 0
        %1322 = vmatpush1.bf16.msra.mxu0 0
        %1323 = vmatprep.subr.bf16.mxu0 0
        %1324 = vmatpush1.bf16.msra.mxu0 0
        %1325 = vmatprep.subr.bf16.mxu0 0
        %1326 = vmatpush1.bf16.msra.mxu0 0
        %1327 = vmatprep.subr.bf16.mxu0 0
        %1328 = vmatpush1.bf16.msra.mxu0 0
        %1329 = vmatprep.subr.bf16.mxu0 0
        %1330 = vmatpush1.bf16.msra.mxu0 0
        %1331 = vmatprep.mubr.bf16.mxu0 0
        %1332 = vmatmul.mubr.bf16.gmra.mrb[0].mxu0 %v1294
        %v1333 = vpop.f32.mrb[0].mxu0
        %v1334 = vadd.f32 0.0, %v1333
        %v1335 = vpop.f32.mrb[0].mxu0
        %v1336 = vpop.f32.mrb[0].mxu0
        %v1337 = vpop.f32.mrb[0].mxu0
        %1338 = vdwg.mxu0
        %1340 = vrot.lane.b32.xlu0 %v1114, 96
        %v1341 = vpop.permute.xlu0 %1340
        %1343 = vrot.lane.b32.xlu0 %v1116, 96
        %v1344 = vpop.permute.xlu0 %1343
        %v1346 = vsel %vm1120, %v1341, 0
        %v1349 = vsel %vm1120, %v1344, 0
        %1351 = vmatprep.subr.bf16.mxu0 0
        %1352 = vmatpush1.bf16.xpose.msra.mxu0 %v1349
        %1353 = vmatprep.subr.bf16.mxu0 0
        %1354 = vmatpush1.bf16.xpose.msra.mxu0 0
        %1355 = vmatprep.subr.bf16.mxu0 0
        %1356 = vmatpush1.bf16.xpose.msra.mxu0 0
        %1357 = vmatprep.subr.bf16.mxu0 0
        %1358 = vmatpush1.bf16.xpose.msra.mxu0 0
        %1359 = vmatprep.subr.bf16.mxu0 0
        %1360 = vmatpush1.bf16.xpose.msra.mxu0 0
        %1361 = vmatprep.subr.bf16.mxu0 0
        %1362 = vmatpush1.bf16.xpose.msra.mxu0 0
        %1363 = vmatprep.subr.bf16.mxu0 0
        %1364 = vmatpush1.bf16.xpose.msra.mxu0 0
        %1365 = vmatprep.subr.bf16.mxu0 0
        %1366 = vmatpush1.bf16.xpose.msra.mxu0 0
        %1367 = vmatprep.subr.bf16.mxu0 0
        %1368 = vmatpush1.bf16.xpose.msra.mxu0 0
        %1369 = vmatprep.subr.bf16.mxu0 0
        %1370 = vmatpush1.bf16.xpose.msra.mxu0 0
        %1371 = vmatprep.subr.bf16.mxu0 0
        %1372 = vmatpush1.bf16.xpose.msra.mxu0 0
        %1373 = vmatprep.subr.bf16.mxu0 0
        %1374 = vmatpush1.bf16.xpose.msra.mxu0 0
        %1375 = vmatprep.subr.bf16.mxu0 0
        %1376 = vmatpush1.bf16.xpose.msra.mxu0 0
        %1377 = vmatprep.subr.bf16.mxu0 0
        %1378 = vmatpush1.bf16.xpose.msra.mxu0 0
        %1379 = vmatprep.subr.bf16.mxu0 0
        %1380 = vmatpush1.bf16.xpose.msra.mxu0 0
        %1381 = vmatprep.subr.bf16.mxu0 0
        %1382 = vmatpush1.bf16.xpose.msra.mxu0 0
        %1383 = vmatprep.mubr.bf16.mxu0 0
        %1384 = vmatmul.mubr.bf16.gmra.mrb[0].mxu0 %v1346
        %v1385 = vpop.f32.mrb[0].mxu0
        %v1386 = vadd.f32 0.0, %v1385
        %v1387 = vpop.f32.mrb[0].mxu0
        %v1388 = vpop.f32.mrb[0].mxu0
        %v1389 = vpop.f32.mrb[0].mxu0
        %1390 = vdwg.mxu0
        %1392 = vrot.lane.b32.xlu0 %v1115, 96
        %v1393 = vpop.permute.xlu0 %1392
        %1395 = vrot.lane.b32.xlu0 %v1117, 96
        %v1396 = vpop.permute.xlu0 %1395
        %v1398 = vsel %vm1120, %v1393, 0
        %v1401 = vsel %vm1120, %v1396, 0
        %1403 = vmatprep.subr.bf16.mxu0 0
        %1404 = vmatpush1.bf16.xpose.msra.mxu0 %v1401
        %1405 = vmatprep.subr.bf16.mxu0 0
        %1406 = vmatpush1.bf16.xpose.msra.mxu0 0
        %1407 = vmatprep.subr.bf16.mxu0 0
        %1408 = vmatpush1.bf16.xpose.msra.mxu0 0
        %1409 = vmatprep.subr.bf16.mxu0 0
        %1410 = vmatpush1.bf16.xpose.msra.mxu0 0
        %1411 = vmatprep.subr.bf16.mxu0 0
        %1412 = vmatpush1.bf16.xpose.msra.mxu0 0
        %1413 = vmatprep.subr.bf16.mxu0 0
        %1414 = vmatpush1.bf16.xpose.msra.mxu0 0
        %1415 = vmatprep.subr.bf16.mxu0 0
        %1416 = vmatpush1.bf16.xpose.msra.mxu0 0
        %1417 = vmatprep.subr.bf16.mxu0 0
        %1418 = vmatpush1.bf16.xpose.msra.mxu0 0
        %1419 = vmatprep.subr.bf16.mxu0 0
        %1420 = vmatpush1.bf16.xpose.msra.mxu0 0
        %1421 = vmatprep.subr.bf16.mxu0 0
        %1422 = vmatpush1.bf16.xpose.msra.mxu0 0
        %1423 = vmatprep.subr.bf16.mxu0 0
        %1424 = vmatpush1.bf16.xpose.msra.mxu0 0
        %1425 = vmatprep.subr.bf16.mxu0 0
        %1426 = vmatpush1.bf16.xpose.msra.mxu0 0
        %1427 = vmatprep.subr.bf16.mxu0 0
        %1428 = vmatpush1.bf16.xpose.msra.mxu0 0
        %1429 = vmatprep.subr.bf16.mxu0 0
        %1430 = vmatpush1.bf16.xpose.msra.mxu0 0
        %1431 = vmatprep.subr.bf16.mxu0 0
        %1432 = vmatpush1.bf16.xpose.msra.mxu0 0
        %1433 = vmatprep.subr.bf16.mxu0 0
        %1434 = vmatpush1.bf16.xpose.msra.mxu0 0
        %1435 = vmatprep.mubr.bf16.mxu0 0
        %1436 = vmatmul.mubr.bf16.gmra.mrb[0].mxu0 %v1398
        %v1437 = vpop.f32.mrb[0].mxu0
        %v1438 = vadd.f32 0.0, %v1437
        %v1439 = vpop.f32.mrb[0].mxu0
        %v1440 = vpop.f32.mrb[0].mxu0
        %v1441 = vpop.f32.mrb[0].mxu0
        %1442 = vdwg.mxu0
        %v1443 = vsel %vm1214, -inf, %v1386
        %v1444 = vsel %vm1214, -inf, %v1438
        %v1445 = vmul.f32 %v1443, 0.17677669
        %v1446 = vmul.f32 %v1444, 0.17677669
        %v1447 = vsel %vm1219, %v1445, -inf
        %1448 = vmax.xlane.f32.xlu0 %v1447
        %v1449 = vpop.xlane.xlu0 %1448
        %v1450 = vsel %vm1219, %v1446, -inf
        %1451 = vmax.xlane.f32.xlu0 %v1450
        %v1452 = vpop.xlane.xlu0 %1451
        %v1453 = vsub.f32 %v1445, %v1449
        %v1454 = vsub.f32 %v1446, %v1452
        %v1455 = vmul.f32 %v1453, 1.442695
        %v1456 = vpow.pop %v1455
        %v1457 = vmul.f32 %v1454, 1.442695
        %v1458 = vpow.pop %v1457
        %v1459 = vsel %vm1219, %v1456, 0.0
        %1460 = vadd.xlane.f32.xlu0 %v1459
        %v1461 = vpop.xlane.xlu0 %1460
        %v1462 = vsel %vm1219, %v1458, 0.0
        %1463 = vadd.xlane.f32.xlu0 %v1462
        %v1464 = vpop.xlane.xlu0 %1463
        %v1465 = vrcp.pop %v1461
        %v1466 = vmul.f32 1.0, %v1465
        %v1467 = vrcp.pop %v1464
        %v1468 = vmul.f32 1.0, %v1467
        %v1469 = vmul.f32 %v1456, %v1466
        %v1470 = vmul.f32 %v1458, %v1468
        %v1471 = vpack.c.bf16 %v1469, %v1469
        %v1472 = vpack.c.bf16 %v1470, %v1470
        %1474 = vrot.lane.b32.xlu0 %v1118, 96
        %v1475 = vpop.permute.xlu0 %1474
        %v1477 = vsel %vm1219, %v1471, 0
        %v1480 = vsel %vm1249, %v1475, 0
        %1482 = vmatprep.subr.bf16.mxu0 0
        %1483 = vmatpush1.bf16.msra.mxu0 %v1480
        %1484 = vmatprep.subr.bf16.mxu0 0
        %1485 = vmatpush1.bf16.msra.mxu0 0
        %1486 = vmatprep.subr.bf16.mxu0 0
        %1487 = vmatpush1.bf16.msra.mxu0 0
        %1488 = vmatprep.subr.bf16.mxu0 0
        %1489 = vmatpush1.bf16.msra.mxu0 0
        %1490 = vmatprep.subr.bf16.mxu0 0
        %1491 = vmatpush1.bf16.msra.mxu0 0
        %1492 = vmatprep.subr.bf16.mxu0 0
        %1493 = vmatpush1.bf16.msra.mxu0 0
        %1494 = vmatprep.subr.bf16.mxu0 0
        %1495 = vmatpush1.bf16.msra.mxu0 0
        %1496 = vmatprep.subr.bf16.mxu0 0
        %1497 = vmatpush1.bf16.msra.mxu0 0
        %1498 = vmatprep.subr.bf16.mxu0 0
        %1499 = vmatpush1.bf16.msra.mxu0 0
        %1500 = vmatprep.subr.bf16.mxu0 0
        %1501 = vmatpush1.bf16.msra.mxu0 0
        %1502 = vmatprep.subr.bf16.mxu0 0
        %1503 = vmatpush1.bf16.msra.mxu0 0
        %1504 = vmatprep.subr.bf16.mxu0 0
        %1505 = vmatpush1.bf16.msra.mxu0 0
        %1506 = vmatprep.subr.bf16.mxu0 0
        %1507 = vmatpush1.bf16.msra.mxu0 0
        %1508 = vmatprep.subr.bf16.mxu0 0
        %1509 = vmatpush1.bf16.msra.mxu0 0
        %1510 = vmatprep.subr.bf16.mxu0 0
        %1511 = vmatpush1.bf16.msra.mxu0 0
        %1512 = vmatprep.subr.bf16.mxu0 0
        %1513 = vmatpush1.bf16.msra.mxu0 0
        %1514 = vmatprep.mubr.bf16.mxu0 0
        %1515 = vmatmul.mubr.bf16.gmra.mrb[0].mxu0 %v1477
        %v1516 = vpop.f32.mrb[0].mxu0
        %v1517 = vadd.f32 0.0, %v1516
        %v1518 = vpop.f32.mrb[0].mxu0
        %v1519 = vpop.f32.mrb[0].mxu0
        %v1520 = vpop.f32.mrb[0].mxu0
        %1521 = vdwg.mxu0
        %1523 = vrot.lane.b32.xlu0 %v1119, 96
        %v1524 = vpop.permute.xlu0 %1523
        %v1526 = vsel %vm1219, %v1472, 0
        %v1529 = vsel %vm1249, %v1524, 0
        %1531 = vmatprep.subr.bf16.mxu0 0
        %1532 = vmatpush1.bf16.msra.mxu0 %v1529
        %1533 = vmatprep.subr.bf16.mxu0 0
        %1534 = vmatpush1.bf16.msra.mxu0 0
        %1535 = vmatprep.subr.bf16.mxu0 0
        %1536 = vmatpush1.bf16.msra.mxu0 0
        %1537 = vmatprep.subr.bf16.mxu0 0
        %1538 = vmatpush1.bf16.msra.mxu0 0
        %1539 = vmatprep.subr.bf16.mxu0 0
        %1540 = vmatpush1.bf16.msra.mxu0 0
        %1541 = vmatprep.subr.bf16.mxu0 0
        %1542 = vmatpush1.bf16.msra.mxu0 0
        %1543 = vmatprep.subr.bf16.mxu0 0
        %1544 = vmatpush1.bf16.msra.mxu0 0
        %1545 = vmatprep.subr.bf16.mxu0 0
        %1546 = vmatpush1.bf16.msra.mxu0 0
        %1547 = vmatprep.subr.bf16.mxu0 0
        %1548 = vmatpush1.bf16.msra.mxu0 0
        %1549 = vmatprep.subr.bf16.mxu0 0
        %1550 = vmatpush1.bf16.msra.mxu0 0
        %1551 = vmatprep.subr.bf16.mxu0 0
        %1552 = vmatpush1.bf16.msra.mxu0 0
        %1553 = vmatprep.subr.bf16.mxu0 0
        %1554 = vmatpush1.bf16.msra.mxu0 0
        %1555 = vmatprep.subr.bf16.mxu0 0
        %1556 = vmatpush1.bf16.msra.mxu0 0
        %1557 = vmatprep.subr.bf16.mxu0 0
        %1558 = vmatpush1.bf16.msra.mxu0 0
        %1559 = vmatprep.subr.bf16.mxu0 0
        %1560 = vmatpush1.bf16.msra.mxu0 0
        %1561 = vmatprep.subr.bf16.mxu0 0
        %1562 = vmatpush1.bf16.msra.mxu0 0
        %1563 = vmatprep.mubr.bf16.mxu0 0
        %1564 = vmatmul.mubr.bf16.gmra.mrb[0].mxu0 %v1526
        %v1565 = vpop.f32.mrb[0].mxu0
        %v1566 = vadd.f32 0.0, %v1565
        %v1567 = vpop.f32.mrb[0].mxu0
        %v1568 = vpop.f32.mrb[0].mxu0
        %v1569 = vpop.f32.mrb[0].mxu0
        %1570 = vdwg.mxu0
        %1571 = vrot.lane.b32.xlu0 %v1114, 64
        %v1572 = vpop.permute.xlu0 %1571
        %1573 = vrot.lane.b32.xlu0 %v1116, 64
        %v1574 = vpop.permute.xlu0 %1573
        %v1576 = vsel %vm1120, %v1572, 0
        %v1579 = vsel %vm1120, %v1574, 0
        %1581 = vmatprep.subr.bf16.mxu0 0
        %1582 = vmatpush1.bf16.xpose.msra.mxu0 %v1579
        %1583 = vmatprep.subr.bf16.mxu0 0
        %1584 = vmatpush1.bf16.xpose.msra.mxu0 0
        %1585 = vmatprep.subr.bf16.mxu0 0
        %1586 = vmatpush1.bf16.xpose.msra.mxu0 0
        %1587 = vmatprep.subr.bf16.mxu0 0
        %1588 = vmatpush1.bf16.xpose.msra.mxu0 0
        %1589 = vmatprep.subr.bf16.mxu0 0
        %1590 = vmatpush1.bf16.xpose.msra.mxu0 0
        %1591 = vmatprep.subr.bf16.mxu0 0
        %1592 = vmatpush1.bf16.xpose.msra.mxu0 0
        %1593 = vmatprep.subr.bf16.mxu0 0
        %1594 = vmatpush1.bf16.xpose.msra.mxu0 0
        %1595 = vmatprep.subr.bf16.mxu0 0
        %1596 = vmatpush1.bf16.xpose.msra.mxu0 0
        %1597 = vmatprep.subr.bf16.mxu0 0
        %1598 = vmatpush1.bf16.xpose.msra.mxu0 0
        %1599 = vmatprep.subr.bf16.mxu0 0
        %1600 = vmatpush1.bf16.xpose.msra.mxu0 0
        %1601 = vmatprep.subr.bf16.mxu0 0
        %1602 = vmatpush1.bf16.xpose.msra.mxu0 0
        %1603 = vmatprep.subr.bf16.mxu0 0
        %1604 = vmatpush1.bf16.xpose.msra.mxu0 0
        %1605 = vmatprep.subr.bf16.mxu0 0
        %1606 = vmatpush1.bf16.xpose.msra.mxu0 0
        %1607 = vmatprep.subr.bf16.mxu0 0
        %1608 = vmatpush1.bf16.xpose.msra.mxu0 0
        %1609 = vmatprep.subr.bf16.mxu0 0
        %1610 = vmatpush1.bf16.xpose.msra.mxu0 0
        %1611 = vmatprep.subr.bf16.mxu0 0
        %1612 = vmatpush1.bf16.xpose.msra.mxu0 0
        %1613 = vmatprep.mubr.bf16.mxu0 0
        %1614 = vmatmul.mubr.bf16.gmra.mrb[0].mxu0 %v1576
        %v1615 = vpop.f32.mrb[0].mxu0
        %v1616 = vadd.f32 0.0, %v1615
        %v1617 = vpop.f32.mrb[0].mxu0
        %v1618 = vpop.f32.mrb[0].mxu0
        %v1619 = vpop.f32.mrb[0].mxu0
        %1620 = vdwg.mxu0
        %1621 = vrot.lane.b32.xlu0 %v1115, 64
        %v1622 = vpop.permute.xlu0 %1621
        %1623 = vrot.lane.b32.xlu0 %v1117, 64
        %v1624 = vpop.permute.xlu0 %1623
        %v1626 = vsel %vm1120, %v1622, 0
        %v1629 = vsel %vm1120, %v1624, 0
        %1631 = vmatprep.subr.bf16.mxu0 0
        %1632 = vmatpush1.bf16.xpose.msra.mxu0 %v1629
        %1633 = vmatprep.subr.bf16.mxu0 0
        %1634 = vmatpush1.bf16.xpose.msra.mxu0 0
        %1635 = vmatprep.subr.bf16.mxu0 0
        %1636 = vmatpush1.bf16.xpose.msra.mxu0 0
        %1637 = vmatprep.subr.bf16.mxu0 0
        %1638 = vmatpush1.bf16.xpose.msra.mxu0 0
        %1639 = vmatprep.subr.bf16.mxu0 0
        %1640 = vmatpush1.bf16.xpose.msra.mxu0 0
        %1641 = vmatprep.subr.bf16.mxu0 0
        %1642 = vmatpush1.bf16.xpose.msra.mxu0 0
        %1643 = vmatprep.subr.bf16.mxu0 0
        %1644 = vmatpush1.bf16.xpose.msra.mxu0 0
        %1645 = vmatprep.subr.bf16.mxu0 0
        %1646 = vmatpush1.bf16.xpose.msra.mxu0 0
        %1647 = vmatprep.subr.bf16.mxu0 0
        %1648 = vmatpush1.bf16.xpose.msra.mxu0 0
        %1649 = vmatprep.subr.bf16.mxu0 0
        %1650 = vmatpush1.bf16.xpose.msra.mxu0 0
        %1651 = vmatprep.subr.bf16.mxu0 0
        %1652 = vmatpush1.bf16.xpose.msra.mxu0 0
        %1653 = vmatprep.subr.bf16.mxu0 0
        %1654 = vmatpush1.bf16.xpose.msra.mxu0 0
        %1655 = vmatprep.subr.bf16.mxu0 0
        %1656 = vmatpush1.bf16.xpose.msra.mxu0 0
        %1657 = vmatprep.subr.bf16.mxu0 0
        %1658 = vmatpush1.bf16.xpose.msra.mxu0 0
        %1659 = vmatprep.subr.bf16.mxu0 0
        %1660 = vmatpush1.bf16.xpose.msra.mxu0 0
        %1661 = vmatprep.subr.bf16.mxu0 0
        %1662 = vmatpush1.bf16.xpose.msra.mxu0 0
        %1663 = vmatprep.mubr.bf16.mxu0 0
        %1664 = vmatmul.mubr.bf16.gmra.mrb[0].mxu0 %v1626
        %v1665 = vpop.f32.mrb[0].mxu0
        %v1666 = vadd.f32 0.0, %v1665
        %v1667 = vpop.f32.mrb[0].mxu0
        %v1668 = vpop.f32.mrb[0].mxu0
        %v1669 = vpop.f32.mrb[0].mxu0
        %1670 = vdwg.mxu0
        %v1671 = vsel %vm1214, -inf, %v1616
        %v1672 = vsel %vm1214, -inf, %v1666
        %v1673 = vmul.f32 %v1671, 0.17677669
        %v1674 = vmul.f32 %v1672, 0.17677669
        %v1675 = vsel %vm1219, %v1673, -inf
        %1676 = vmax.xlane.f32.xlu0 %v1675
        %v1677 = vpop.xlane.xlu0 %1676
        %v1678 = vsel %vm1219, %v1674, -inf
        %1679 = vmax.xlane.f32.xlu0 %v1678
        %v1680 = vpop.xlane.xlu0 %1679
        %v1681 = vsub.f32 %v1673, %v1677
        %v1682 = vsub.f32 %v1674, %v1680
        %v1683 = vmul.f32 %v1681, 1.442695
        %v1684 = vpow.pop %v1683
        %v1685 = vmul.f32 %v1682, 1.442695
        %v1686 = vpow.pop %v1685
        %v1687 = vsel %vm1219, %v1684, 0.0
        %1688 = vadd.xlane.f32.xlu0 %v1687
        %v1689 = vpop.xlane.xlu0 %1688
        %v1690 = vsel %vm1219, %v1686, 0.0
        %1691 = vadd.xlane.f32.xlu0 %v1690
        %v1692 = vpop.xlane.xlu0 %1691
        %v1693 = vrcp.pop %v1689
        %v1694 = vmul.f32 1.0, %v1693
        %v1695 = vrcp.pop %v1692
        %v1696 = vmul.f32 1.0, %v1695
        %v1697 = vmul.f32 %v1684, %v1694
        %v1698 = vmul.f32 %v1686, %v1696
        %v1699 = vpack.c.bf16 %v1697, %v1697
        %v1700 = vpack.c.bf16 %v1698, %v1698
        %1701 = vrot.lane.b32.xlu0 %v1118, 64
        %v1702 = vpop.permute.xlu0 %1701
        %v1704 = vsel %vm1219, %v1699, 0
        %v1707 = vsel %vm1249, %v1702, 0
        %1709 = vmatprep.subr.bf16.mxu0 0
        %1710 = vmatpush1.bf16.msra.mxu0 %v1707
        %1711 = vmatprep.subr.bf16.mxu0 0
        %1712 = vmatpush1.bf16.msra.mxu0 0
        %1713 = vmatprep.subr.bf16.mxu0 0
        %1714 = vmatpush1.bf16.msra.mxu0 0
        %1715 = vmatprep.subr.bf16.mxu0 0
        %1716 = vmatpush1.bf16.msra.mxu0 0
        %1717 = vmatprep.subr.bf16.mxu0 0
        %1718 = vmatpush1.bf16.msra.mxu0 0
        %1719 = vmatprep.subr.bf16.mxu0 0
        %1720 = vmatpush1.bf16.msra.mxu0 0
        %1721 = vmatprep.subr.bf16.mxu0 0
        %1722 = vmatpush1.bf16.msra.mxu0 0
        %1723 = vmatprep.subr.bf16.mxu0 0
        %1724 = vmatpush1.bf16.msra.mxu0 0
        %1725 = vmatprep.subr.bf16.mxu0 0
        %1726 = vmatpush1.bf16.msra.mxu0 0
        %1727 = vmatprep.subr.bf16.mxu0 0
        %1728 = vmatpush1.bf16.msra.mxu0 0
        %1729 = vmatprep.subr.bf16.mxu0 0
        %1730 = vmatpush1.bf16.msra.mxu0 0
        %1731 = vmatprep.subr.bf16.mxu0 0
        %1732 = vmatpush1.bf16.msra.mxu0 0
        %1733 = vmatprep.subr.bf16.mxu0 0
        %1734 = vmatpush1.bf16.msra.mxu0 0
        %1735 = vmatprep.subr.bf16.mxu0 0
        %1736 = vmatpush1.bf16.msra.mxu0 0
        %1737 = vmatprep.subr.bf16.mxu0 0
        %1738 = vmatpush1.bf16.msra.mxu0 0
        %1739 = vmatprep.subr.bf16.mxu0 0
        %1740 = vmatpush1.bf16.msra.mxu0 0
        %1741 = vmatprep.mubr.bf16.mxu0 0
        %1742 = vmatmul.mubr.bf16.gmra.mrb[0].mxu0 %v1704
        %v1743 = vpop.f32.mrb[0].mxu0
        %v1744 = vadd.f32 0.0, %v1743
        %v1745 = vpop.f32.mrb[0].mxu0
        %v1746 = vpop.f32.mrb[0].mxu0
        %v1747 = vpop.f32.mrb[0].mxu0
        %1748 = vdwg.mxu0
        %1749 = vrot.lane.b32.xlu0 %v1119, 64
        %v1750 = vpop.permute.xlu0 %1749
        %v1752 = vsel %vm1219, %v1700, 0
        %v1755 = vsel %vm1249, %v1750, 0
        %1757 = vmatprep.subr.bf16.mxu0 0
        %1758 = vmatpush1.bf16.msra.mxu0 %v1755
        %1759 = vmatprep.subr.bf16.mxu0 0
        %1760 = vmatpush1.bf16.msra.mxu0 0
        %1761 = vmatprep.subr.bf16.mxu0 0
        %1762 = vmatpush1.bf16.msra.mxu0 0
        %1763 = vmatprep.subr.bf16.mxu0 0
        %1764 = vmatpush1.bf16.msra.mxu0 0
        %1765 = vmatprep.subr.bf16.mxu0 0
        %1766 = vmatpush1.bf16.msra.mxu0 0
        %1767 = vmatprep.subr.bf16.mxu0 0
        %1768 = vmatpush1.bf16.msra.mxu0 0
        %1769 = vmatprep.subr.bf16.mxu0 0
        %1770 = vmatpush1.bf16.msra.mxu0 0
        %1771 = vmatprep.subr.bf16.mxu0 0
        %1772 = vmatpush1.bf16.msra.mxu0 0
        %1773 = vmatprep.subr.bf16.mxu0 0
        %1774 = vmatpush1.bf16.msra.mxu0 0
        %1775 = vmatprep.subr.bf16.mxu0 0
        %1776 = vmatpush1.bf16.msra.mxu0 0
        %1777 = vmatprep.subr.bf16.mxu0 0
        %1778 = vmatpush1.bf16.msra.mxu0 0
        %1779 = vmatprep.subr.bf16.mxu0 0
        %1780 = vmatpush1.bf16.msra.mxu0 0
        %1781 = vmatprep.subr.bf16.mxu0 0
        %1782 = vmatpush1.bf16.msra.mxu0 0
        %1783 = vmatprep.subr.bf16.mxu0 0
        %1784 = vmatpush1.bf16.msra.mxu0 0
        %1785 = vmatprep.subr.bf16.mxu0 0
        %1786 = vmatpush1.bf16.msra.mxu0 0
        %1787 = vmatprep.subr.bf16.mxu0 0
        %1788 = vmatpush1.bf16.msra.mxu0 0
        %1789 = vmatprep.mubr.bf16.mxu0 0
        %1790 = vmatmul.mubr.bf16.gmra.mrb[0].mxu0 %v1752
        %v1791 = vpop.f32.mrb[0].mxu0
        %v1792 = vadd.f32 0.0, %v1791
        %v1793 = vpop.f32.mrb[0].mxu0
        %v1794 = vpop.f32.mrb[0].mxu0
        %v1795 = vpop.f32.mrb[0].mxu0
        %1796 = vdwg.mxu0
        %1797 = vrot.lane.b32.xlu0 %v1114, 32
        %v1798 = vpop.permute.xlu0 %1797
        %1799 = vrot.lane.b32.xlu0 %v1116, 32
        %v1800 = vpop.permute.xlu0 %1799
        %v1802 = vsel %vm1120, %v1798, 0
        %v1805 = vsel %vm1120, %v1800, 0
        %1807 = vmatprep.subr.bf16.mxu0 0
        %1808 = vmatpush1.bf16.xpose.msra.mxu0 %v1805
        %1809 = vmatprep.subr.bf16.mxu0 0
        %1810 = vmatpush1.bf16.xpose.msra.mxu0 0
        %1811 = vmatprep.subr.bf16.mxu0 0
        %1812 = vmatpush1.bf16.xpose.msra.mxu0 0
        %1813 = vmatprep.subr.bf16.mxu0 0
        %1814 = vmatpush1.bf16.xpose.msra.mxu0 0
        %1815 = vmatprep.subr.bf16.mxu0 0
        %1816 = vmatpush1.bf16.xpose.msra.mxu0 0
        %1817 = vmatprep.subr.bf16.mxu0 0
        %1818 = vmatpush1.bf16.xpose.msra.mxu0 0
        %1819 = vmatprep.subr.bf16.mxu0 0
        %1820 = vmatpush1.bf16.xpose.msra.mxu0 0
        %1821 = vmatprep.subr.bf16.mxu0 0
        %1822 = vmatpush1.bf16.xpose.msra.mxu0 0
        %1823 = vmatprep.subr.bf16.mxu0 0
        %1824 = vmatpush1.bf16.xpose.msra.mxu0 0
        %1825 = vmatprep.subr.bf16.mxu0 0
        %1826 = vmatpush1.bf16.xpose.msra.mxu0 0
        %1827 = vmatprep.subr.bf16.mxu0 0
        %1828 = vmatpush1.bf16.xpose.msra.mxu0 0
        %1829 = vmatprep.subr.bf16.mxu0 0
        %1830 = vmatpush1.bf16.xpose.msra.mxu0 0
        %1831 = vmatprep.subr.bf16.mxu0 0
        %1832 = vmatpush1.bf16.xpose.msra.mxu0 0
        %1833 = vmatprep.subr.bf16.mxu0 0
        %1834 = vmatpush1.bf16.xpose.msra.mxu0 0
        %1835 = vmatprep.subr.bf16.mxu0 0
        %1836 = vmatpush1.bf16.xpose.msra.mxu0 0
        %1837 = vmatprep.subr.bf16.mxu0 0
        %1838 = vmatpush1.bf16.xpose.msra.mxu0 0
        %1839 = vmatprep.mubr.bf16.mxu0 0
        %1840 = vmatmul.mubr.bf16.gmra.mrb[0].mxu0 %v1802
        %v1841 = vpop.f32.mrb[0].mxu0
        %v1842 = vadd.f32 0.0, %v1841
        %v1843 = vpop.f32.mrb[0].mxu0
        %v1844 = vpop.f32.mrb[0].mxu0
        %v1845 = vpop.f32.mrb[0].mxu0
        %1846 = vdwg.mxu0
        %1847 = vrot.lane.b32.xlu0 %v1115, 32
        %v1848 = vpop.permute.xlu0 %1847
        %1849 = vrot.lane.b32.xlu0 %v1117, 32
        %v1850 = vpop.permute.xlu0 %1849
        %v1852 = vsel %vm1120, %v1848, 0
        %v1855 = vsel %vm1120, %v1850, 0
        %1857 = vmatprep.subr.bf16.mxu0 0
        %1858 = vmatpush1.bf16.xpose.msra.mxu0 %v1855
        %1859 = vmatprep.subr.bf16.mxu0 0
        %1860 = vmatpush1.bf16.xpose.msra.mxu0 0
        %1861 = vmatprep.subr.bf16.mxu0 0
        %1862 = vmatpush1.bf16.xpose.msra.mxu0 0
        %1863 = vmatprep.subr.bf16.mxu0 0
        %1864 = vmatpush1.bf16.xpose.msra.mxu0 0
        %1865 = vmatprep.subr.bf16.mxu0 0
        %1866 = vmatpush1.bf16.xpose.msra.mxu0 0
        %1867 = vmatprep.subr.bf16.mxu0 0
        %1868 = vmatpush1.bf16.xpose.msra.mxu0 0
        %1869 = vmatprep.subr.bf16.mxu0 0
        %1870 = vmatpush1.bf16.xpose.msra.mxu0 0
        %1871 = vmatprep.subr.bf16.mxu0 0
        %1872 = vmatpush1.bf16.xpose.msra.mxu0 0
        %1873 = vmatprep.subr.bf16.mxu0 0
        %1874 = vmatpush1.bf16.xpose.msra.mxu0 0
        %1875 = vmatprep.subr.bf16.mxu0 0
        %1876 = vmatpush1.bf16.xpose.msra.mxu0 0
        %1877 = vmatprep.subr.bf16.mxu0 0
        %1878 = vmatpush1.bf16.xpose.msra.mxu0 0
        %1879 = vmatprep.subr.bf16.mxu0 0
        %1880 = vmatpush1.bf16.xpose.msra.mxu0 0
        %1881 = vmatprep.subr.bf16.mxu0 0
        %1882 = vmatpush1.bf16.xpose.msra.mxu0 0
        %1883 = vmatprep.subr.bf16.mxu0 0
        %1884 = vmatpush1.bf16.xpose.msra.mxu0 0
        %1885 = vmatprep.subr.bf16.mxu0 0
        %1886 = vmatpush1.bf16.xpose.msra.mxu0 0
        %1887 = vmatprep.subr.bf16.mxu0 0
        %1888 = vmatpush1.bf16.xpose.msra.mxu0 0
        %1889 = vmatprep.mubr.bf16.mxu0 0
        %1890 = vmatmul.mubr.bf16.gmra.mrb[0].mxu0 %v1852
        %v1891 = vpop.f32.mrb[0].mxu0
        %v1892 = vadd.f32 0.0, %v1891
        %v1893 = vpop.f32.mrb[0].mxu0
        %v1894 = vpop.f32.mrb[0].mxu0
        %v1895 = vpop.f32.mrb[0].mxu0
        %1896 = vdwg.mxu0
        %v1897 = vsel %vm1214, -inf, %v1842
        %v1898 = vsel %vm1214, -inf, %v1892
        %v1899 = vmul.f32 %v1897, 0.17677669
        %v1900 = vmul.f32 %v1898, 0.17677669
        %v1901 = vsel %vm1219, %v1899, -inf
        %1902 = vmax.xlane.f32.xlu0 %v1901
        %v1903 = vpop.xlane.xlu0 %1902
        %v1904 = vsel %vm1219, %v1900, -inf
        %1905 = vmax.xlane.f32.xlu0 %v1904
        %v1906 = vpop.xlane.xlu0 %1905
        %v1907 = vsub.f32 %v1899, %v1903
        %v1908 = vsub.f32 %v1900, %v1906
        %v1909 = vmul.f32 %v1907, 1.442695
        %v1910 = vpow.pop %v1909
        %v1911 = vmul.f32 %v1908, 1.442695
        %v1912 = vpow.pop %v1911
        %v1913 = vsel %vm1219, %v1910, 0.0
        %1914 = vadd.xlane.f32.xlu0 %v1913
        %v1915 = vpop.xlane.xlu0 %1914
        %v1916 = vsel %vm1219, %v1912, 0.0
        %1917 = vadd.xlane.f32.xlu0 %v1916
        %v1918 = vpop.xlane.xlu0 %1917
        %v1919 = vrcp.pop %v1915
        %v1920 = vmul.f32 1.0, %v1919
        %v1921 = vrcp.pop %v1918
        %v1922 = vmul.f32 1.0, %v1921
        %v1923 = vmul.f32 %v1910, %v1920
        %v1924 = vmul.f32 %v1912, %v1922
        %v1925 = vpack.c.bf16 %v1923, %v1923
        %v1926 = vpack.c.bf16 %v1924, %v1924
        %1927 = vrot.lane.b32.xlu0 %v1118, 32
        %v1928 = vpop.permute.xlu0 %1927
        %v1930 = vsel %vm1219, %v1925, 0
        %v1933 = vsel %vm1249, %v1928, 0
        %1935 = vmatprep.subr.bf16.mxu0 0
        %1936 = vmatpush1.bf16.msra.mxu0 %v1933
        %1937 = vmatprep.subr.bf16.mxu0 0
        %1938 = vmatpush1.bf16.msra.mxu0 0
        %1939 = vmatprep.subr.bf16.mxu0 0
        %1940 = vmatpush1.bf16.msra.mxu0 0
        %1941 = vmatprep.subr.bf16.mxu0 0
        %1942 = vmatpush1.bf16.msra.mxu0 0
        %1943 = vmatprep.subr.bf16.mxu0 0
        %1944 = vmatpush1.bf16.msra.mxu0 0
        %1945 = vmatprep.subr.bf16.mxu0 0
        %1946 = vmatpush1.bf16.msra.mxu0 0
        %1947 = vmatprep.subr.bf16.mxu0 0
        %1948 = vmatpush1.bf16.msra.mxu0 0
        %1949 = vmatprep.subr.bf16.mxu0 0
        %1950 = vmatpush1.bf16.msra.mxu0 0
        %1951 = vmatprep.subr.bf16.mxu0 0
        %1952 = vmatpush1.bf16.msra.mxu0 0
        %1953 = vmatprep.subr.bf16.mxu0 0
        %1954 = vmatpush1.bf16.msra.mxu0 0
        %1955 = vmatprep.subr.bf16.mxu0 0
        %1956 = vmatpush1.bf16.msra.mxu0 0
        %1957 = vmatprep.subr.bf16.mxu0 0
        %1958 = vmatpush1.bf16.msra.mxu0 0
        %1959 = vmatprep.subr.bf16.mxu0 0
        %1960 = vmatpush1.bf16.msra.mxu0 0
        %1961 = vmatprep.subr.bf16.mxu0 0
        %1962 = vmatpush1.bf16.msra.mxu0 0
        %1963 = vmatprep.subr.bf16.mxu0 0
        %1964 = vmatpush1.bf16.msra.mxu0 0
        %1965 = vmatprep.subr.bf16.mxu0 0
        %1966 = vmatpush1.bf16.msra.mxu0 0
        %1967 = vmatprep.mubr.bf16.mxu0 0
        %1968 = vmatmul.mubr.bf16.gmra.mrb[0].mxu0 %v1930
        %v1969 = vpop.f32.mrb[0].mxu0
        %v1970 = vadd.f32 0.0, %v1969
        %v1971 = vpop.f32.mrb[0].mxu0
        %v1972 = vpop.f32.mrb[0].mxu0
        %v1973 = vpop.f32.mrb[0].mxu0
        %1974 = vdwg.mxu0
        %1975 = vrot.lane.b32.xlu0 %v1119, 32
        %v1976 = vpop.permute.xlu0 %1975
        %v1978 = vsel %vm1219, %v1926, 0
        %v1981 = vsel %vm1249, %v1976, 0
        %1983 = vmatprep.subr.bf16.mxu0 0
        %1984 = vmatpush1.bf16.msra.mxu0 %v1981
        %1985 = vmatprep.subr.bf16.mxu0 0
        %1986 = vmatpush1.bf16.msra.mxu0 0
        %1987 = vmatprep.subr.bf16.mxu0 0
        %1988 = vmatpush1.bf16.msra.mxu0 0
        %1989 = vmatprep.subr.bf16.mxu0 0
        %1990 = vmatpush1.bf16.msra.mxu0 0
        %1991 = vmatprep.subr.bf16.mxu0 0
        %1992 = vmatpush1.bf16.msra.mxu0 0
        %1993 = vmatprep.subr.bf16.mxu0 0
        %1994 = vmatpush1.bf16.msra.mxu0 0
        %1995 = vmatprep.subr.bf16.mxu0 0
        %1996 = vmatpush1.bf16.msra.mxu0 0
        %1997 = vmatprep.subr.bf16.mxu0 0
        %1998 = vmatpush1.bf16.msra.mxu0 0
        %1999 = vmatprep.subr.bf16.mxu0 0
        %2000 = vmatpush1.bf16.msra.mxu0 0
        %2001 = vmatprep.subr.bf16.mxu0 0
        %2002 = vmatpush1.bf16.msra.mxu0 0
        %2003 = vmatprep.subr.bf16.mxu0 0
        %2004 = vmatpush1.bf16.msra.mxu0 0
        %2005 = vmatprep.subr.bf16.mxu0 0
        %2006 = vmatpush1.bf16.msra.mxu0 0
        %2007 = vmatprep.subr.bf16.mxu0 0
        %2008 = vmatpush1.bf16.msra.mxu0 0
        %2009 = vmatprep.subr.bf16.mxu0 0
        %2010 = vmatpush1.bf16.msra.mxu0 0
        %2011 = vmatprep.subr.bf16.mxu0 0
        %2012 = vmatpush1.bf16.msra.mxu0 0
        %2013 = vmatprep.subr.bf16.mxu0 0
        %2014 = vmatpush1.bf16.msra.mxu0 0
        %2015 = vmatprep.mubr.bf16.mxu0 0
        %2016 = vmatmul.mubr.bf16.gmra.mrb[0].mxu0 %v1978
        %v2017 = vpop.f32.mrb[0].mxu0
        %v2018 = vadd.f32 0.0, %v2017
        %v2019 = vpop.f32.mrb[0].mxu0
        %v2020 = vpop.f32.mrb[0].mxu0
        %v2021 = vpop.f32.mrb[0].mxu0
        %2022 = vdwg.mxu0
        %2025 = vrot.lane.b32.xlu0 %v1517, 32
        %v2026 = vpop.permute.xlu0 %2025
        %2027 = vrot.lane.b32.xlu0 %v1566, 32
        %v2028 = vpop.permute.xlu0 %2027
        %2033 = vrot.lane.b32.xlu0 %v1744, 64
        %v2034 = vpop.permute.xlu0 %2033
        %2035 = vrot.lane.b32.xlu0 %v1792, 64
        %v2036 = vpop.permute.xlu0 %2035
        %2041 = vrot.lane.b32.xlu0 %v1970, 96
        %v2042 = vpop.permute.xlu0 %2041
        %2043 = vrot.lane.b32.xlu0 %v2018, 96
        %v2044 = vpop.permute.xlu0 %2043
        %v2047 = vsel %vm1120, %v1288, %v2026
        %v2048 = vsel %vm1120, %v1334, %v2028
        %vm2049 = vcmask 523264
        %v2050 = vsel %vm2049, %v2047, %v2034
        %v2051 = vsel %vm2049, %v2048, %v2036
        %vm2052 = vcmask 785408
        %v2053 = vsel %vm2052, %v2050, %v2042
        %v2054 = vsel %vm2052, %v2051, %v2044
        %v2055 = vadd.f32 %v800, %v2053
        %v2056 = vadd.f32 %v801, %v2054
        %v2057 = vrot.slane %v2055, 4
        %v2058 = vadd.f32 %v2055, %v2057
        %v2059 = vrot.slane %v2058, 2
        %v2060 = vadd.f32 %v2058, %v2059
        %v2061 = vrot.slane %v2060, 1
        %v2062 = vadd.f32 %v2060, %v2061
        %v2063 = vrot.slane %v2056, 4
        %v2064 = vadd.f32 %v2056, %v2063
        %v2065 = vrot.slane %v2064, 2
        %v2066 = vadd.f32 %v2064, %v2065
        %v2067 = vrot.slane %v2066, 1
        %v2068 = vadd.f32 %v2066, %v2067
        %v2069 = vmul.f32 %v2062, %v819
        %v2070 = vmul.f32 %v2068, %v819
        %v2071 = vsub.f32 %v2055, %v2069
        %v2072 = vsub.f32 %v2056, %v2070
        %v2073 = vmul.f32 %v2071, %v2071
        %v2074 = vmul.f32 %v2072, %v2072
        %v2075 = vrot.slane %v2073, 4
        %v2076 = vadd.f32 %v2073, %v2075
        %v2077 = vrot.slane %v2076, 2
        %v2078 = vadd.f32 %v2076, %v2077
        %v2079 = vrot.slane %v2078, 1
        %v2080 = vadd.f32 %v2078, %v2079
        %v2081 = vrot.slane %v2074, 4
        %v2082 = vadd.f32 %v2074, %v2081
        %v2083 = vrot.slane %v2082, 2
        %v2084 = vadd.f32 %v2082, %v2083
        %v2085 = vrot.slane %v2084, 1
        %v2086 = vadd.f32 %v2084, %v2085
        %v2087 = vmul.f32 %v2080, %v819
        %v2088 = vmul.f32 %v2086, %v819
        %v2089 = vadd.f32 %v2087, 1e-05
        %v2090 = vadd.f32 %v2088, 1e-05
        %v2091 = vrsqrt.pop %v2089
        %v2092 = vrsqrt.pop %v2090
        %v2093 = vmul.f32 %v2071, %v2091
        %v2094 = vmul.f32 %v2072, %v2092
        %v2095 = vld [vmem:[#allocation9] sm:$0xff]
        %v2096 = vmul.f32 %v2093, %v2095
        %v2097 = vmul.f32 %v2094, %v2095
        %v2098 = vld [vmem:[#allocation10] sm:$0xff]
        %v2099 = vadd.f32 %v2096, %v2098
        %v2100 = vadd.f32 %v2097, %v2098
        %v2101 = vpack.c.bf16 %v2100, %v2099
        %v2102 = vld [vmem:[#allocation12] sm:$0xf]
        %v2103 = vld [vmem:[#allocation12 + $0x4] sm:$0xf]
        %v2104 = vld [vmem:[#allocation12 + $0x8] sm:$0xf]
        %v2105 = vld [vmem:[#allocation12 + $0xc] sm:$0xf]
        %v2106 = vld [vmem:[#allocation12 + $0x10] sm:$0xf]
        %v2107 = vld [vmem:[#allocation12 + $0x14] sm:$0xf]
        %v2108 = vld [vmem:[#allocation12 + $0x18] sm:$0xf]
        %v2109 = vld [vmem:[#allocation12 + $0x1c] sm:$0xf]
        %v2110 = vld [vmem:[#allocation12 + $0x20] sm:$0xf]
        %v2111 = vld [vmem:[#allocation12 + $0x24] sm:$0xf]
        %v2112 = vld [vmem:[#allocation12 + $0x28] sm:$0xf]
        %v2113 = vld [vmem:[#allocation12 + $0x2c] sm:$0xf]
        %v2114 = vld [vmem:[#allocation12 + $0x30] sm:$0xf]
        %v2115 = vld [vmem:[#allocation12 + $0x34] sm:$0xf]
        %v2116 = vld [vmem:[#allocation12 + $0x38] sm:$0xf]
        %v2117 = vld [vmem:[#allocation12 + $0x3c] sm:$0xf]
        %v2118 = vld [vmem:[#allocation13] sm:$0x1]
        %v2120 = vlaneseq
        %v2121 = vshrl.u32 %v2120, 7
        %v2122 = vsub.s32 0, %v2121
        %v2123 = vrot.slane %v2118, %v2122
        %v2141 = vunpack.c.l.b16 %v2102
        %v2142 = vunpack.c.l.b16 %v2103
        %v2143 = vunpack.c.l.b16 %v2104
        %v2144 = vunpack.c.l.b16 %v2105
        %v2145 = vunpack.c.l.b16 %v2106
        %v2146 = vunpack.c.l.b16 %v2107
        %v2147 = vunpack.c.l.b16 %v2108
        %v2148 = vunpack.c.l.b16 %v2109
        %v2149 = vunpack.c.l.b16 %v2110
        %v2150 = vunpack.c.l.b16 %v2111
        %v2151 = vunpack.c.l.b16 %v2112
        %v2152 = vunpack.c.l.b16 %v2113
        %v2153 = vunpack.c.l.b16 %v2114
        %v2154 = vunpack.c.l.b16 %v2115
        %v2155 = vunpack.c.l.b16 %v2116
        %v2156 = vunpack.c.l.b16 %v2117
        %v2157 = vpack.c.b16 %v2142, %v2141
        %v2158 = vpack.c.b16 %v2144, %v2143
        %v2159 = vpack.c.b16 %v2146, %v2145
        %v2160 = vpack.c.b16 %v2148, %v2147
        %v2161 = vpack.c.b16 %v2150, %v2149
        %v2162 = vpack.c.b16 %v2152, %v2151
        %v2163 = vpack.c.b16 %v2154, %v2153
        %v2164 = vpack.c.b16 %v2156, %v2155
        %2173 = vmatprep.subr.bf16.mxu0 0
        %2174 = vmatpush1.bf16.msra.mxu0 %v2157
        %2175 = vmatprep.subr.bf16.mxu0 0
        %2176 = vmatpush1.bf16.msra.mxu0 %v2158
        %2177 = vmatprep.subr.bf16.mxu0 0
        %2178 = vmatpush1.bf16.msra.mxu0 %v2159
        %2179 = vmatprep.subr.bf16.mxu0 0
        %2180 = vmatpush1.bf16.msra.mxu0 %v2160
        %2181 = vmatprep.subr.bf16.mxu0 0
        %2182 = vmatpush1.bf16.msra.mxu0 %v2161
        %2183 = vmatprep.subr.bf16.mxu0 0
        %2184 = vmatpush1.bf16.msra.mxu0 %v2162
        %2185 = vmatprep.subr.bf16.mxu0 0
        %2186 = vmatpush1.bf16.msra.mxu0 %v2163
        %2187 = vmatprep.subr.bf16.mxu0 0
        %2188 = vmatpush1.bf16.msra.mxu0 %v2164
        %2189 = vmatprep.subr.bf16.mxu0 0
        %2190 = vmatpush1.bf16.msra.mxu0 0
        %2191 = vmatprep.subr.bf16.mxu0 0
        %2192 = vmatpush1.bf16.msra.mxu0 0
        %2193 = vmatprep.subr.bf16.mxu0 0
        %2194 = vmatpush1.bf16.msra.mxu0 0
        %2195 = vmatprep.subr.bf16.mxu0 0
        %2196 = vmatpush1.bf16.msra.mxu0 0
        %2197 = vmatprep.subr.bf16.mxu0 0
        %2198 = vmatpush1.bf16.msra.mxu0 0
        %2199 = vmatprep.subr.bf16.mxu0 0
        %2200 = vmatpush1.bf16.msra.mxu0 0
        %2201 = vmatprep.subr.bf16.mxu0 0
        %2202 = vmatpush1.bf16.msra.mxu0 0
        %2203 = vmatprep.subr.bf16.mxu0 0
        %2204 = vmatpush1.bf16.msra.mxu0 0
        %2205 = vmatprep.mubr.bf16.mxu0 0
        %2206 = vmatmul.mubr.bf16.gmra.mrb[0].mxu0 %v2101
        %v2207 = vpop.f32.mrb[0].mxu0
        %v2208 = vadd.f32 %v2123, %v2207
        %v2209 = vpop.f32.mrb[0].mxu0
        %v2210 = vpop.f32.mrb[0].mxu0
        %v2211 = vadd.f32 %v2123, %v2210
        %v2212 = vpop.f32.mrb[0].mxu0
        %2213 = vdwg.mxu0
        %v2214 = vpack.c.bf16 %v799, %v798
        %v2215 = vld [vmem:[%s10] sm:$0xff]
        %v2216 = vld [vmem:[%s10 + $0x8] sm:$0xff]
        %v2217 = vld [vmem:[%s10 + $0x10] sm:$0xff]
        %v2218 = vld [vmem:[%s10 + $0x18] sm:$0xff]
        %v2219 = vld [vmem:[%s10 + $0x20] sm:$0xff]
        %v2220 = vld [vmem:[%s10 + $0x28] sm:$0xff]
        %v2221 = vld [vmem:[%s10 + $0x30] sm:$0xff]
        %v2222 = vld [vmem:[%s10 + $0x38] sm:$0xff]
        %v2223 = vld [vmem:[%s10 + $0x40] sm:$0xff]
        %v2224 = vld [vmem:[%s10 + $0x48] sm:$0xff]
        %v2225 = vld [vmem:[%s10 + $0x50] sm:$0xff]
        %v2226 = vld [vmem:[%s10 + $0x58] sm:$0xff]
        %v2227 = vld [vmem:[%s10 + $0x60] sm:$0xff]
        %v2228 = vld [vmem:[%s10 + $0x68] sm:$0xff]
        %v2229 = vld [vmem:[%s10 + $0x70] sm:$0xff]
        %v2230 = vld [vmem:[%s10 + $0x78] sm:$0xff]
        %v2231 = vld [vmem:[#allocation15] sm:$0x3]
        %v2233 = vlaneseq
        %v2234 = vshrl.u32 %v2233, 7
        %v2235 = vsub.s32 0, %v2234
        %v2236 = vrot.slane %v2231, %v2235
        %v2237 = vlaneseq
        %v2238 = vshrl.u32 %v2237, 7
        %v2239 = vsub.s32 1, %v2238
        %v2240 = vrot.slane %v2231, %v2239
        %v2259 = vunpack.c.l.b16 %v2215
        %v2260 = vunpack.c.h.b16 %v2215
        %v2261 = vunpack.c.l.b16 %v2216
        %v2262 = vunpack.c.h.b16 %v2216
        %v2263 = vunpack.c.l.b16 %v2217
        %v2264 = vunpack.c.h.b16 %v2217
        %v2265 = vunpack.c.l.b16 %v2218
        %v2266 = vunpack.c.h.b16 %v2218
        %v2267 = vunpack.c.l.b16 %v2219
        %v2268 = vunpack.c.h.b16 %v2219
        %v2269 = vunpack.c.l.b16 %v2220
        %v2270 = vunpack.c.h.b16 %v2220
        %v2271 = vunpack.c.l.b16 %v2221
        %v2272 = vunpack.c.h.b16 %v2221
        %v2273 = vunpack.c.l.b16 %v2222
        %v2274 = vunpack.c.h.b16 %v2222
        %v2275 = vunpack.c.l.b16 %v2223
        %v2276 = vunpack.c.h.b16 %v2223
        %v2277 = vunpack.c.l.b16 %v2224
        %v2278 = vunpack.c.h.b16 %v2224
        %v2279 = vunpack.c.l.b16 %v2225
        %v2280 = vunpack.c.h.b16 %v2225
        %v2281 = vunpack.c.l.b16 %v2226
        %v2282 = vunpack.c.h.b16 %v2226
        %v2283 = vunpack.c.l.b16 %v2227
        %v2284 = vunpack.c.h.b16 %v2227
        %v2285 = vunpack.c.l.b16 %v2228
        %v2286 = vunpack.c.h.b16 %v2228
        %v2287 = vunpack.c.l.b16 %v2229
        %v2288 = vunpack.c.h.b16 %v2229
        %v2289 = vunpack.c.l.b16 %v2230
        %v2290 = vunpack.c.h.b16 %v2230
        %v2291 = vpack.c.b16 %v2261, %v2259
        %v2292 = vpack.c.b16 %v2262, %v2260
        %v2293 = vpack.c.b16 %v2265, %v2263
        %v2294 = vpack.c.b16 %v2266, %v2264
        %v2295 = vpack.c.b16 %v2269, %v2267
        %v2296 = vpack.c.b16 %v2270, %v2268
        %v2297 = vpack.c.b16 %v2273, %v2271
        %v2298 = vpack.c.b16 %v2274, %v2272
        %v2299 = vpack.c.b16 %v2277, %v2275
        %v2300 = vpack.c.b16 %v2278, %v2276
        %v2301 = vpack.c.b16 %v2281, %v2279
        %v2302 = vpack.c.b16 %v2282, %v2280
        %v2303 = vpack.c.b16 %v2285, %v2283
        %v2304 = vpack.c.b16 %v2286, %v2284
        %v2305 = vpack.c.b16 %v2289, %v2287
        %v2306 = vpack.c.b16 %v2290, %v2288
        %2323 = vmatprep.subr.bf16.mxu0 %v2292
        %2324 = vmatpush1.bf16.msra.mxu0 %v2291
        %2325 = vmatprep.subr.bf16.mxu0 %v2294
        %2326 = vmatpush1.bf16.msra.mxu0 %v2293
        %2327 = vmatprep.subr.bf16.mxu0 %v2296
        %2328 = vmatpush1.bf16.msra.mxu0 %v2295
        %2329 = vmatprep.subr.bf16.mxu0 %v2298
        %2330 = vmatpush1.bf16.msra.mxu0 %v2297
        %2331 = vmatprep.subr.bf16.mxu0 %v2300
        %2332 = vmatpush1.bf16.msra.mxu0 %v2299
        %2333 = vmatprep.subr.bf16.mxu0 %v2302
        %2334 = vmatpush1.bf16.msra.mxu0 %v2301
        %2335 = vmatprep.subr.bf16.mxu0 %v2304
        %2336 = vmatpush1.bf16.msra.mxu0 %v2303
        %2337 = vmatprep.subr.bf16.mxu0 %v2306
        %2338 = vmatpush1.bf16.msra.mxu0 %v2305
        %2339 = vmatprep.subr.bf16.mxu0 0
        %2340 = vmatpush1.bf16.msra.mxu0 0
        %2341 = vmatprep.subr.bf16.mxu0 0
        %2342 = vmatpush1.bf16.msra.mxu0 0
        %2343 = vmatprep.subr.bf16.mxu0 0
        %2344 = vmatpush1.bf16.msra.mxu0 0
        %2345 = vmatprep.subr.bf16.mxu0 0
        %2346 = vmatpush1.bf16.msra.mxu0 0
        %2347 = vmatprep.subr.bf16.mxu0 0
        %2348 = vmatpush1.bf16.msra.mxu0 0
        %2349 = vmatprep.subr.bf16.mxu0 0
        %2350 = vmatpush1.bf16.msra.mxu0 0
        %2351 = vmatprep.subr.bf16.mxu0 0
        %2352 = vmatpush1.bf16.msra.mxu0 0
        %2353 = vmatprep.subr.bf16.mxu0 0
        %2354 = vmatpush1.bf16.msra.mxu0 0
        %2355 = vmatprep.mubr.bf16.mxu0 0
        %2356 = vmatmul.mubr.bf16.gmra.mrb[0].mxu0 %v2214
        %v2357 = vpop.f32.mrb[0].mxu0
        %v2358 = vadd.f32 %v2236, %v2357
        %v2359 = vpop.f32.mrb[0].mxu0
        %v2360 = vadd.f32 %v2240, %v2359
        %v2361 = vpop.f32.mrb[0].mxu0
        %v2362 = vadd.f32 %v2236, %v2361
        %v2363 = vpop.f32.mrb[0].mxu0
        %v2364 = vadd.f32 %v2240, %v2363
        %2365 = vdwg.mxu0
        %v2366 = vpack.c.bf16 %v2208, %v2208
        %v2367 = vpack.c.bf16 %v2211, %v2211
        %v2368 = vpack.c.bf16 %v2358, %v2358
        %v2369 = vpack.c.bf16 %v2362, %v2362
        %v2370 = vpack.c.bf16 %v2360, %v2360
        %v2371 = vpack.c.bf16 %v2364, %v2364
        %v2373 = vsel %vm1120, %v2366, 0
        %v2376 = vsel %vm1120, %v2368, 0
        %2378 = vmatprep.subr.bf16.mxu0 0
        %2379 = vmatpush1.bf16.xpose.msra.mxu0 %v2376
        %2380 = vmatprep.subr.bf16.mxu0 0
        %2381 = vmatpush1.bf16.xpose.msra.mxu0 0
        %2382 = vmatprep.subr.bf16.mxu0 0
        %2383 = vmatpush1.bf16.xpose.msra.mxu0 0
        %2384 = vmatprep.subr.bf16.mxu0 0
        %2385 = vmatpush1.bf16.xpose.msra.mxu0 0
        %2386 = vmatprep.subr.bf16.mxu0 0
        %2387 = vmatpush1.bf16.xpose.msra.mxu0 0
        %2388 = vmatprep.subr.bf16.mxu0 0
        %2389 = vmatpush1.bf16.xpose.msra.mxu0 0
        %2390 = vmatprep.subr.bf16.mxu0 0
        %2391 = vmatpush1.bf16.xpose.msra.mxu0 0
        %2392 = vmatprep.subr.bf16.mxu0 0
        %2393 = vmatpush1.bf16.xpose.msra.mxu0 0
        %2394 = vmatprep.subr.bf16.mxu0 0
        %2395 = vmatpush1.bf16.xpose.msra.mxu0 0
        %2396 = vmatprep.subr.bf16.mxu0 0
        %2397 = vmatpush1.bf16.xpose.msra.mxu0 0
        %2398 = vmatprep.subr.bf16.mxu0 0
        %2399 = vmatpush1.bf16.xpose.msra.mxu0 0
        %2400 = vmatprep.subr.bf16.mxu0 0
        %2401 = vmatpush1.bf16.xpose.msra.mxu0 0
        %2402 = vmatprep.subr.bf16.mxu0 0
        %2403 = vmatpush1.bf16.xpose.msra.mxu0 0
        %2404 = vmatprep.subr.bf16.mxu0 0
        %2405 = vmatpush1.bf16.xpose.msra.mxu0 0
        %2406 = vmatprep.subr.bf16.mxu0 0
        %2407 = vmatpush1.bf16.xpose.msra.mxu0 0
        %2408 = vmatprep.subr.bf16.mxu0 0
        %2409 = vmatpush1.bf16.xpose.msra.mxu0 0
        %2410 = vmatprep.mubr.bf16.mxu0 0
        %2411 = vmatmul.mubr.bf16.gmra.mrb[0].mxu0 %v2373
        %v2412 = vpop.f32.mrb[0].mxu0
        %v2413 = vadd.f32 0.0, %v2412
        %v2414 = vpop.f32.mrb[0].mxu0
        %v2415 = vpop.f32.mrb[0].mxu0
        %v2416 = vpop.f32.mrb[0].mxu0
        %2417 = vdwg.mxu0
        %v2419 = vsel %vm1120, %v2367, 0
        %v2422 = vsel %vm1120, %v2369, 0
        %2424 = vmatprep.subr.bf16.mxu0 0
        %2425 = vmatpush1.bf16.xpose.msra.mxu0 %v2422
        %2426 = vmatprep.subr.bf16.mxu0 0
        %2427 = vmatpush1.bf16.xpose.msra.mxu0 0
        %2428 = vmatprep.subr.bf16.mxu0 0
        %2429 = vmatpush1.bf16.xpose.msra.mxu0 0
        %2430 = vmatprep.subr.bf16.mxu0 0
        %2431 = vmatpush1.bf16.xpose.msra.mxu0 0
        %2432 = vmatprep.subr.bf16.mxu0 0
        %2433 = vmatpush1.bf16.xpose.msra.mxu0 0
        %2434 = vmatprep.subr.bf16.mxu0 0
        %2435 = vmatpush1.bf16.xpose.msra.mxu0 0
        %2436 = vmatprep.subr.bf16.mxu0 0
        %2437 = vmatpush1.bf16.xpose.msra.mxu0 0
        %2438 = vmatprep.subr.bf16.mxu0 0
        %2439 = vmatpush1.bf16.xpose.msra.mxu0 0
        %2440 = vmatprep.subr.bf16.mxu0 0
        %2441 = vmatpush1.bf16.xpose.msra.mxu0 0
        %2442 = vmatprep.subr.bf16.mxu0 0
        %2443 = vmatpush1.bf16.xpose.msra.mxu0 0
        %2444 = vmatprep.subr.bf16.mxu0 0
        %2445 = vmatpush1.bf16.xpose.msra.mxu0 0
        %2446 = vmatprep.subr.bf16.mxu0 0
        %2447 = vmatpush1.bf16.xpose.msra.mxu0 0
        %2448 = vmatprep.subr.bf16.mxu0 0
        %2449 = vmatpush1.bf16.xpose.msra.mxu0 0
        %2450 = vmatprep.subr.bf16.mxu0 0
        %2451 = vmatpush1.bf16.xpose.msra.mxu0 0
        %2452 = vmatprep.subr.bf16.mxu0 0
        %2453 = vmatpush1.bf16.xpose.msra.mxu0 0
        %2454 = vmatprep.subr.bf16.mxu0 0
        %2455 = vmatpush1.bf16.xpose.msra.mxu0 0
        %2456 = vmatprep.mubr.bf16.mxu0 0
        %2457 = vmatmul.mubr.bf16.gmra.mrb[0].mxu0 %v2419
        %v2458 = vpop.f32.mrb[0].mxu0
        %v2459 = vadd.f32 0.0, %v2458
        %v2460 = vpop.f32.mrb[0].mxu0
        %v2461 = vpop.f32.mrb[0].mxu0
        %v2462 = vpop.f32.mrb[0].mxu0
        %2463 = vdwg.mxu0
        %v2464 = vmul.f32 %v2413, 0.17677669
        %v2465 = vmul.f32 %v2459, 0.17677669
        %v2466 = vsel %vm1219, %v2464, -inf
        %2467 = vmax.xlane.f32.xlu0 %v2466
        %v2468 = vpop.xlane.xlu0 %2467
        %v2469 = vsel %vm1219, %v2465, -inf
        %2470 = vmax.xlane.f32.xlu0 %v2469
        %v2471 = vpop.xlane.xlu0 %2470
        %v2472 = vsub.f32 %v2464, %v2468
        %v2473 = vsub.f32 %v2465, %v2471
        %v2474 = vmul.f32 %v2472, 1.442695
        %v2475 = vpow.pop %v2474
        %v2476 = vmul.f32 %v2473, 1.442695
        %v2477 = vpow.pop %v2476
        %v2478 = vsel %vm1219, %v2475, 0.0
        %2479 = vadd.xlane.f32.xlu0 %v2478
        %v2480 = vpop.xlane.xlu0 %2479
        %v2481 = vsel %vm1219, %v2477, 0.0
        %2482 = vadd.xlane.f32.xlu0 %v2481
        %v2483 = vpop.xlane.xlu0 %2482
        %v2484 = vrcp.pop %v2480
        %v2485 = vmul.f32 1.0, %v2484
        %v2486 = vrcp.pop %v2483
        %v2487 = vmul.f32 1.0, %v2486
        %v2488 = vmul.f32 %v2475, %v2485
        %v2489 = vmul.f32 %v2477, %v2487
        %v2490 = vpack.c.bf16 %v2488, %v2488
        %v2491 = vpack.c.bf16 %v2489, %v2489
        %v2493 = vsel %vm1219, %v2490, 0
        %v2496 = vsel %vm1249, %v2370, 0
        %2498 = vmatprep.subr.bf16.mxu0 0
        %2499 = vmatpush1.bf16.msra.mxu0 %v2496
        %2500 = vmatprep.subr.bf16.mxu0 0
        %2501 = vmatpush1.bf16.msra.mxu0 0
        %2502 = vmatprep.subr.bf16.mxu0 0
        %2503 = vmatpush1.bf16.msra.mxu0 0
        %2504 = vmatprep.subr.bf16.mxu0 0
        %2505 = vmatpush1.bf16.msra.mxu0 0
        %2506 = vmatprep.subr.bf16.mxu0 0
        %2507 = vmatpush1.bf16.msra.mxu0 0
        %2508 = vmatprep.subr.bf16.mxu0 0
        %2509 = vmatpush1.bf16.msra.mxu0 0
        %2510 = vmatprep.subr.bf16.mxu0 0
        %2511 = vmatpush1.bf16.msra.mxu0 0
        %2512 = vmatprep.subr.bf16.mxu0 0
        %2513 = vmatpush1.bf16.msra.mxu0 0
        %2514 = vmatprep.subr.bf16.mxu0 0
        %2515 = vmatpush1.bf16.msra.mxu0 0
        %2516 = vmatprep.subr.bf16.mxu0 0
        %2517 = vmatpush1.bf16.msra.mxu0 0
        %2518 = vmatprep.subr.bf16.mxu0 0
        %2519 = vmatpush1.bf16.msra.mxu0 0
        %2520 = vmatprep.subr.bf16.mxu0 0
        %2521 = vmatpush1.bf16.msra.mxu0 0
        %2522 = vmatprep.subr.bf16.mxu0 0
        %2523 = vmatpush1.bf16.msra.mxu0 0
        %2524 = vmatprep.subr.bf16.mxu0 0
        %2525 = vmatpush1.bf16.msra.mxu0 0
        %2526 = vmatprep.subr.bf16.mxu0 0
        %2527 = vmatpush1.bf16.msra.mxu0 0
        %2528 = vmatprep.subr.bf16.mxu0 0
        %2529 = vmatpush1.bf16.msra.mxu0 0
        %2530 = vmatprep.mubr.bf16.mxu0 0
        %2531 = vmatmul.mubr.bf16.gmra.mrb[0].mxu0 %v2493
        %v2532 = vpop.f32.mrb[0].mxu0
        %v2533 = vadd.f32 0.0, %v2532
        %v2534 = vpop.f32.mrb[0].mxu0
        %v2535 = vpop.f32.mrb[0].mxu0
        %v2536 = vpop.f32.mrb[0].mxu0
        %2537 = vdwg.mxu0
        %v2539 = vsel %vm1219, %v2491, 0
        %v2542 = vsel %vm1249, %v2371, 0
        %2544 = vmatprep.subr.bf16.mxu0 0
        %2545 = vmatpush1.bf16.msra.mxu0 %v2542
        %2546 = vmatprep.subr.bf16.mxu0 0
        %2547 = vmatpush1.bf16.msra.mxu0 0
        %2548 = vmatprep.subr.bf16.mxu0 0
        %2549 = vmatpush1.bf16.msra.mxu0 0
        %2550 = vmatprep.subr.bf16.mxu0 0
        %2551 = vmatpush1.bf16.msra.mxu0 0
        %2552 = vmatprep.subr.bf16.mxu0 0
        %2553 = vmatpush1.bf16.msra.mxu0 0
        %2554 = vmatprep.subr.bf16.mxu0 0
        %2555 = vmatpush1.bf16.msra.mxu0 0
        %2556 = vmatprep.subr.bf16.mxu0 0
        %2557 = vmatpush1.bf16.msra.mxu0 0
        %2558 = vmatprep.subr.bf16.mxu0 0
        %2559 = vmatpush1.bf16.msra.mxu0 0
        %2560 = vmatprep.subr.bf16.mxu0 0
        %2561 = vmatpush1.bf16.msra.mxu0 0
        %2562 = vmatprep.subr.bf16.mxu0 0
        %2563 = vmatpush1.bf16.msra.mxu0 0
        %2564 = vmatprep.subr.bf16.mxu0 0
        %2565 = vmatpush1.bf16.msra.mxu0 0
        %2566 = vmatprep.subr.bf16.mxu0 0
        %2567 = vmatpush1.bf16.msra.mxu0 0
        %2568 = vmatprep.subr.bf16.mxu0 0
        %2569 = vmatpush1.bf16.msra.mxu0 0
        %2570 = vmatprep.subr.bf16.mxu0 0
        %2571 = vmatpush1.bf16.msra.mxu0 0
        %2572 = vmatprep.subr.bf16.mxu0 0
        %2573 = vmatpush1.bf16.msra.mxu0 0
        %2574 = vmatprep.subr.bf16.mxu0 0
        %2575 = vmatpush1.bf16.msra.mxu0 0
        %2576 = vmatprep.mubr.bf16.mxu0 0
        %2577 = vmatmul.mubr.bf16.gmra.mrb[0].mxu0 %v2539
        %v2578 = vpop.f32.mrb[0].mxu0
        %v2579 = vadd.f32 0.0, %v2578
        %v2580 = vpop.f32.mrb[0].mxu0
        %v2581 = vpop.f32.mrb[0].mxu0
        %v2582 = vpop.f32.mrb[0].mxu0
        %2583 = vdwg.mxu0
        %2585 = vrot.lane.b32.xlu0 %v2366, 96
        %v2586 = vpop.permute.xlu0 %2585
        %2588 = vrot.lane.b32.xlu0 %v2368, 96
        %v2589 = vpop.permute.xlu0 %2588
        %v2591 = vsel %vm1120, %v2586, 0
        %v2594 = vsel %vm1120, %v2589, 0
        %2596 = vmatprep.subr.bf16.mxu0 0
        %2597 = vmatpush1.bf16.xpose.msra.mxu0 %v2594
        %2598 = vmatprep.subr.bf16.mxu0 0
        %2599 = vmatpush1.bf16.xpose.msra.mxu0 0
        %2600 = vmatprep.subr.bf16.mxu0 0
        %2601 = vmatpush1.bf16.xpose.msra.mxu0 0
        %2602 = vmatprep.subr.bf16.mxu0 0
        %2603 = vmatpush1.bf16.xpose.msra.mxu0 0
        %2604 = vmatprep.subr.bf16.mxu0 0
        %2605 = vmatpush1.bf16.xpose.msra.mxu0 0
        %2606 = vmatprep.subr.bf16.mxu0 0
        %2607 = vmatpush1.bf16.xpose.msra.mxu0 0
        %2608 = vmatprep.subr.bf16.mxu0 0
        %2609 = vmatpush1.bf16.xpose.msra.mxu0 0
        %2610 = vmatprep.subr.bf16.mxu0 0
        %2611 = vmatpush1.bf16.xpose.msra.mxu0 0
        %2612 = vmatprep.subr.bf16.mxu0 0
        %2613 = vmatpush1.bf16.xpose.msra.mxu0 0
        %2614 = vmatprep.subr.bf16.mxu0 0
        %2615 = vmatpush1.bf16.xpose.msra.mxu0 0
        %2616 = vmatprep.subr.bf16.mxu0 0
        %2617 = vmatpush1.bf16.xpose.msra.mxu0 0
        %2618 = vmatprep.subr.bf16.mxu0 0
        %2619 = vmatpush1.bf16.xpose.msra.mxu0 0
        %2620 = vmatprep.subr.bf16.mxu0 0
        %2621 = vmatpush1.bf16.xpose.msra.mxu0 0
        %2622 = vmatprep.subr.bf16.mxu0 0
        %2623 = vmatpush1.bf16.xpose.msra.mxu0 0
        %2624 = vmatprep.subr.bf16.mxu0 0
        %2625 = vmatpush1.bf16.xpose.msra.mxu0 0
        %2626 = vmatprep.subr.bf16.mxu0 0
        %2627 = vmatpush1.bf16.xpose.msra.mxu0 0
        %2628 = vmatprep.mubr.bf16.mxu0 0
        %2629 = vmatmul.mubr.bf16.gmra.mrb[0].mxu0 %v2591
        %v2630 = vpop.f32.mrb[0].mxu0
        %v2631 = vadd.f32 0.0, %v2630
        %v2632 = vpop.f32.mrb[0].mxu0
        %v2633 = vpop.f32.mrb[0].mxu0
        %v2634 = vpop.f32.mrb[0].mxu0
        %2635 = vdwg.mxu0
        %2637 = vrot.lane.b32.xlu0 %v2367, 96
        %v2638 = vpop.permute.xlu0 %2637
        %2640 = vrot.lane.b32.xlu0 %v2369, 96
        %v2641 = vpop.permute.xlu0 %2640
        %v2643 = vsel %vm1120, %v2638, 0
        %v2646 = vsel %vm1120, %v2641, 0
        %2648 = vmatprep.subr.bf16.mxu0 0
        %2649 = vmatpush1.bf16.xpose.msra.mxu0 %v2646
        %2650 = vmatprep.subr.bf16.mxu0 0
        %2651 = vmatpush1.bf16.xpose.msra.mxu0 0
        %2652 = vmatprep.subr.bf16.mxu0 0
        %2653 = vmatpush1.bf16.xpose.msra.mxu0 0
        %2654 = vmatprep.subr.bf16.mxu0 0
        %2655 = vmatpush1.bf16.xpose.msra.mxu0 0
        %2656 = vmatprep.subr.bf16.mxu0 0
        %2657 = vmatpush1.bf16.xpose.msra.mxu0 0
        %2658 = vmatprep.subr.bf16.mxu0 0
        %2659 = vmatpush1.bf16.xpose.msra.mxu0 0
        %2660 = vmatprep.subr.bf16.mxu0 0
        %2661 = vmatpush1.bf16.xpose.msra.mxu0 0
        %2662 = vmatprep.subr.bf16.mxu0 0
        %2663 = vmatpush1.bf16.xpose.msra.mxu0 0
        %2664 = vmatprep.subr.bf16.mxu0 0
        %2665 = vmatpush1.bf16.xpose.msra.mxu0 0
        %2666 = vmatprep.subr.bf16.mxu0 0
        %2667 = vmatpush1.bf16.xpose.msra.mxu0 0
        %2668 = vmatprep.subr.bf16.mxu0 0
        %2669 = vmatpush1.bf16.xpose.msra.mxu0 0
        %2670 = vmatprep.subr.bf16.mxu0 0
        %2671 = vmatpush1.bf16.xpose.msra.mxu0 0
        %2672 = vmatprep.subr.bf16.mxu0 0
        %2673 = vmatpush1.bf16.xpose.msra.mxu0 0
        %2674 = vmatprep.subr.bf16.mxu0 0
        %2675 = vmatpush1.bf16.xpose.msra.mxu0 0
        %2676 = vmatprep.subr.bf16.mxu0 0
        %2677 = vmatpush1.bf16.xpose.msra.mxu0 0
        %2678 = vmatprep.subr.bf16.mxu0 0
        %2679 = vmatpush1.bf16.xpose.msra.mxu0 0
        %2680 = vmatprep.mubr.bf16.mxu0 0
        %2681 = vmatmul.mubr.bf16.gmra.mrb[0].mxu0 %v2643
        %v2682 = vpop.f32.mrb[0].mxu0
        %v2683 = vadd.f32 0.0, %v2682
        %v2684 = vpop.f32.mrb[0].mxu0
        %v2685 = vpop.f32.mrb[0].mxu0
        %v2686 = vpop.f32.mrb[0].mxu0
        %2687 = vdwg.mxu0
        %v2688 = vmul.f32 %v2631, 0.17677669
        %v2689 = vmul.f32 %v2683, 0.17677669
        %v2690 = vsel %vm1219, %v2688, -inf
        %2691 = vmax.xlane.f32.xlu0 %v2690
        %v2692 = vpop.xlane.xlu0 %2691
        %v2693 = vsel %vm1219, %v2689, -inf
        %2694 = vmax.xlane.f32.xlu0 %v2693
        %v2695 = vpop.xlane.xlu0 %2694
        %v2696 = vsub.f32 %v2688, %v2692
        %v2697 = vsub.f32 %v2689, %v2695
        %v2698 = vmul.f32 %v2696, 1.442695
        %v2699 = vpow.pop %v2698
        %v2700 = vmul.f32 %v2697, 1.442695
        %v2701 = vpow.pop %v2700
        %v2702 = vsel %vm1219, %v2699, 0.0
        %2703 = vadd.xlane.f32.xlu0 %v2702
        %v2704 = vpop.xlane.xlu0 %2703
        %v2705 = vsel %vm1219, %v2701, 0.0
        %2706 = vadd.xlane.f32.xlu0 %v2705
        %v2707 = vpop.xlane.xlu0 %2706
        %v2708 = vrcp.pop %v2704
        %v2709 = vmul.f32 1.0, %v2708
        %v2710 = vrcp.pop %v2707
        %v2711 = vmul.f32 1.0, %v2710
        %v2712 = vmul.f32 %v2699, %v2709
        %v2713 = vmul.f32 %v2701, %v2711
        %v2714 = vpack.c.bf16 %v2712, %v2712
        %v2715 = vpack.c.bf16 %v2713, %v2713
        %2717 = vrot.lane.b32.xlu0 %v2370, 96
        %v2718 = vpop.permute.xlu0 %2717
        %v2720 = vsel %vm1219, %v2714, 0
        %v2723 = vsel %vm1249, %v2718, 0
        %2725 = vmatprep.subr.bf16.mxu0 0
        %2726 = vmatpush1.bf16.msra.mxu0 %v2723
        %2727 = vmatprep.subr.bf16.mxu0 0
        %2728 = vmatpush1.bf16.msra.mxu0 0
        %2729 = vmatprep.subr.bf16.mxu0 0
        %2730 = vmatpush1.bf16.msra.mxu0 0
        %2731 = vmatprep.subr.bf16.mxu0 0
        %2732 = vmatpush1.bf16.msra.mxu0 0
        %2733 = vmatprep.subr.bf16.mxu0 0
        %2734 = vmatpush1.bf16.msra.mxu0 0
        %2735 = vmatprep.subr.bf16.mxu0 0
        %2736 = vmatpush1.bf16.msra.mxu0 0
        %2737 = vmatprep.subr.bf16.mxu0 0
        %2738 = vmatpush1.bf16.msra.mxu0 0
        %2739 = vmatprep.subr.bf16.mxu0 0
        %2740 = vmatpush1.bf16.msra.mxu0 0
        %2741 = vmatprep.subr.bf16.mxu0 0
        %2742 = vmatpush1.bf16.msra.mxu0 0
        %2743 = vmatprep.subr.bf16.mxu0 0
        %2744 = vmatpush1.bf16.msra.mxu0 0
        %2745 = vmatprep.subr.bf16.mxu0 0
        %2746 = vmatpush1.bf16.msra.mxu0 0
        %2747 = vmatprep.subr.bf16.mxu0 0
        %2748 = vmatpush1.bf16.msra.mxu0 0
        %2749 = vmatprep.subr.bf16.mxu0 0
        %2750 = vmatpush1.bf16.msra.mxu0 0
        %2751 = vmatprep.subr.bf16.mxu0 0
        %2752 = vmatpush1.bf16.msra.mxu0 0
        %2753 = vmatprep.subr.bf16.mxu0 0
        %2754 = vmatpush1.bf16.msra.mxu0 0
        %2755 = vmatprep.subr.bf16.mxu0 0
        %2756 = vmatpush1.bf16.msra.mxu0 0
        %2757 = vmatprep.mubr.bf16.mxu0 0
        %2758 = vmatmul.mubr.bf16.gmra.mrb[0].mxu0 %v2720
        %v2759 = vpop.f32.mrb[0].mxu0
        %v2760 = vadd.f32 0.0, %v2759
        %v2761 = vpop.f32.mrb[0].mxu0
        %v2762 = vpop.f32.mrb[0].mxu0
        %v2763 = vpop.f32.mrb[0].mxu0
        %2764 = vdwg.mxu0
        %2766 = vrot.lane.b32.xlu0 %v2371, 96
        %v2767 = vpop.permute.xlu0 %2766
        %v2769 = vsel %vm1219, %v2715, 0
        %v2772 = vsel %vm1249, %v2767, 0
        %2774 = vmatprep.subr.bf16.mxu0 0
        %2775 = vmatpush1.bf16.msra.mxu0 %v2772
        %2776 = vmatprep.subr.bf16.mxu0 0
        %2777 = vmatpush1.bf16.msra.mxu0 0
        %2778 = vmatprep.subr.bf16.mxu0 0
        %2779 = vmatpush1.bf16.msra.mxu0 0
        %2780 = vmatprep.subr.bf16.mxu0 0
        %2781 = vmatpush1.bf16.msra.mxu0 0
        %2782 = vmatprep.subr.bf16.mxu0 0
        %2783 = vmatpush1.bf16.msra.mxu0 0
        %2784 = vmatprep.subr.bf16.mxu0 0
        %2785 = vmatpush1.bf16.msra.mxu0 0
        %2786 = vmatprep.subr.bf16.mxu0 0
        %2787 = vmatpush1.bf16.msra.mxu0 0
        %2788 = vmatprep.subr.bf16.mxu0 0
        %2789 = vmatpush1.bf16.msra.mxu0 0
        %2790 = vmatprep.subr.bf16.mxu0 0
        %2791 = vmatpush1.bf16.msra.mxu0 0
        %2792 = vmatprep.subr.bf16.mxu0 0
        %2793 = vmatpush1.bf16.msra.mxu0 0
        %2794 = vmatprep.subr.bf16.mxu0 0
        %2795 = vmatpush1.bf16.msra.mxu0 0
        %2796 = vmatprep.subr.bf16.mxu0 0
        %2797 = vmatpush1.bf16.msra.mxu0 0
        %2798 = vmatprep.subr.bf16.mxu0 0
        %2799 = vmatpush1.bf16.msra.mxu0 0
        %2800 = vmatprep.subr.bf16.mxu0 0
        %2801 = vmatpush1.bf16.msra.mxu0 0
        %2802 = vmatprep.subr.bf16.mxu0 0
        %2803 = vmatpush1.bf16.msra.mxu0 0
        %2804 = vmatprep.subr.bf16.mxu0 0
        %2805 = vmatpush1.bf16.msra.mxu0 0
        %2806 = vmatprep.mubr.bf16.mxu0 0
        %2807 = vmatmul.mubr.bf16.gmra.mrb[0].mxu0 %v2769
        %v2808 = vpop.f32.mrb[0].mxu0
        %v2809 = vadd.f32 0.0, %v2808
        %v2810 = vpop.f32.mrb[0].mxu0
        %v2811 = vpop.f32.mrb[0].mxu0
        %v2812 = vpop.f32.mrb[0].mxu0
        %2813 = vdwg.mxu0
        %2814 = vrot.lane.b32.xlu0 %v2366, 64
        %v2815 = vpop.permute.xlu0 %2814
        %2816 = vrot.lane.b32.xlu0 %v2368, 64
        %v2817 = vpop.permute.xlu0 %2816
        %v2819 = vsel %vm1120, %v2815, 0
        %v2822 = vsel %vm1120, %v2817, 0
        %2824 = vmatprep.subr.bf16.mxu0 0
        %2825 = vmatpush1.bf16.xpose.msra.mxu0 %v2822
        %2826 = vmatprep.subr.bf16.mxu0 0
        %2827 = vmatpush1.bf16.xpose.msra.mxu0 0
        %2828 = vmatprep.subr.bf16.mxu0 0
        %2829 = vmatpush1.bf16.xpose.msra.mxu0 0
        %2830 = vmatprep.subr.bf16.mxu0 0
        %2831 = vmatpush1.bf16.xpose.msra.mxu0 0
        %2832 = vmatprep.subr.bf16.mxu0 0
        %2833 = vmatpush1.bf16.xpose.msra.mxu0 0
        %2834 = vmatprep.subr.bf16.mxu0 0
        %2835 = vmatpush1.bf16.xpose.msra.mxu0 0
        %2836 = vmatprep.subr.bf16.mxu0 0
        %2837 = vmatpush1.bf16.xpose.msra.mxu0 0
        %2838 = vmatprep.subr.bf16.mxu0 0
        %2839 = vmatpush1.bf16.xpose.msra.mxu0 0
        %2840 = vmatprep.subr.bf16.mxu0 0
        %2841 = vmatpush1.bf16.xpose.msra.mxu0 0
        %2842 = vmatprep.subr.bf16.mxu0 0
        %2843 = vmatpush1.bf16.xpose.msra.mxu0 0
        %2844 = vmatprep.subr.bf16.mxu0 0
        %2845 = vmatpush1.bf16.xpose.msra.mxu0 0
        %2846 = vmatprep.subr.bf16.mxu0 0
        %2847 = vmatpush1.bf16.xpose.msra.mxu0 0
        %2848 = vmatprep.subr.bf16.mxu0 0
        %2849 = vmatpush1.bf16.xpose.msra.mxu0 0
        %2850 = vmatprep.subr.bf16.mxu0 0
        %2851 = vmatpush1.bf16.xpose.msra.mxu0 0
        %2852 = vmatprep.subr.bf16.mxu0 0
        %2853 = vmatpush1.bf16.xpose.msra.mxu0 0
        %2854 = vmatprep.subr.bf16.mxu0 0
        %2855 = vmatpush1.bf16.xpose.msra.mxu0 0
        %2856 = vmatprep.mubr.bf16.mxu0 0
        %2857 = vmatmul.mubr.bf16.gmra.mrb[0].mxu0 %v2819
        %v2858 = vpop.f32.mrb[0].mxu0
        %v2859 = vadd.f32 0.0, %v2858
        %v2860 = vpop.f32.mrb[0].mxu0
        %v2861 = vpop.f32.mrb[0].mxu0
        %v2862 = vpop.f32.mrb[0].mxu0
        %2863 = vdwg.mxu0
        %2864 = vrot.lane.b32.xlu0 %v2367, 64
        %v2865 = vpop.permute.xlu0 %2864
        %2866 = vrot.lane.b32.xlu0 %v2369, 64
        %v2867 = vpop.permute.xlu0 %2866
        %v2869 = vsel %vm1120, %v2865, 0
        %v2872 = vsel %vm1120, %v2867, 0
        %2874 = vmatprep.subr.bf16.mxu0 0
        %2875 = vmatpush1.bf16.xpose.msra.mxu0 %v2872
        %2876 = vmatprep.subr.bf16.mxu0 0
        %2877 = vmatpush1.bf16.xpose.msra.mxu0 0
        %2878 = vmatprep.subr.bf16.mxu0 0
        %2879 = vmatpush1.bf16.xpose.msra.mxu0 0
        %2880 = vmatprep.subr.bf16.mxu0 0
        %2881 = vmatpush1.bf16.xpose.msra.mxu0 0
        %2882 = vmatprep.subr.bf16.mxu0 0
        %2883 = vmatpush1.bf16.xpose.msra.mxu0 0
        %2884 = vmatprep.subr.bf16.mxu0 0
        %2885 = vmatpush1.bf16.xpose.msra.mxu0 0
        %2886 = vmatprep.subr.bf16.mxu0 0
        %2887 = vmatpush1.bf16.xpose.msra.mxu0 0
        %2888 = vmatprep.subr.bf16.mxu0 0
        %2889 = vmatpush1.bf16.xpose.msra.mxu0 0
        %2890 = vmatprep.subr.bf16.mxu0 0
        %2891 = vmatpush1.bf16.xpose.msra.mxu0 0
        %2892 = vmatprep.subr.bf16.mxu0 0
        %2893 = vmatpush1.bf16.xpose.msra.mxu0 0
        %2894 = vmatprep.subr.bf16.mxu0 0
        %2895 = vmatpush1.bf16.xpose.msra.mxu0 0
        %2896 = vmatprep.subr.bf16.mxu0 0
        %2897 = vmatpush1.bf16.xpose.msra.mxu0 0
        %2898 = vmatprep.subr.bf16.mxu0 0
        %2899 = vmatpush1.bf16.xpose.msra.mxu0 0
        %2900 = vmatprep.subr.bf16.mxu0 0
        %2901 = vmatpush1.bf16.xpose.msra.mxu0 0
        %2902 = vmatprep.subr.bf16.mxu0 0
        %2903 = vmatpush1.bf16.xpose.msra.mxu0 0
        %2904 = vmatprep.subr.bf16.mxu0 0
        %2905 = vmatpush1.bf16.xpose.msra.mxu0 0
        %2906 = vmatprep.mubr.bf16.mxu0 0
        %2907 = vmatmul.mubr.bf16.gmra.mrb[0].mxu0 %v2869
        %v2908 = vpop.f32.mrb[0].mxu0
        %v2909 = vadd.f32 0.0, %v2908
        %v2910 = vpop.f32.mrb[0].mxu0
        %v2911 = vpop.f32.mrb[0].mxu0
        %v2912 = vpop.f32.mrb[0].mxu0
        %2913 = vdwg.mxu0
        %v2914 = vmul.f32 %v2859, 0.17677669
        %v2915 = vmul.f32 %v2909, 0.17677669
        %v2916 = vsel %vm1219, %v2914, -inf
        %2917 = vmax.xlane.f32.xlu0 %v2916
        %v2918 = vpop.xlane.xlu0 %2917
        %v2919 = vsel %vm1219, %v2915, -inf
        %2920 = vmax.xlane.f32.xlu0 %v2919
        %v2921 = vpop.xlane.xlu0 %2920
        %v2922 = vsub.f32 %v2914, %v2918
        %v2923 = vsub.f32 %v2915, %v2921
        %v2924 = vmul.f32 %v2922, 1.442695
        %v2925 = vpow.pop %v2924
        %v2926 = vmul.f32 %v2923, 1.442695
        %v2927 = vpow.pop %v2926
        %v2928 = vsel %vm1219, %v2925, 0.0
        %2929 = vadd.xlane.f32.xlu0 %v2928
        %v2930 = vpop.xlane.xlu0 %2929
        %v2931 = vsel %vm1219, %v2927, 0.0
        %2932 = vadd.xlane.f32.xlu0 %v2931
        %v2933 = vpop.xlane.xlu0 %2932
        %v2934 = vrcp.pop %v2930
        %v2935 = vmul.f32 1.0, %v2934
        %v2936 = vrcp.pop %v2933
        %v2937 = vmul.f32 1.0, %v2936
        %v2938 = vmul.f32 %v2925, %v2935
        %v2939 = vmul.f32 %v2927, %v2937
        %v2940 = vpack.c.bf16 %v2938, %v2938
        %v2941 = vpack.c.bf16 %v2939, %v2939
        %2942 = vrot.lane.b32.xlu0 %v2370, 64
        %v2943 = vpop.permute.xlu0 %2942
        %v2945 = vsel %vm1219, %v2940, 0
        %v2948 = vsel %vm1249, %v2943, 0
        %2950 = vmatprep.subr.bf16.mxu0 0
        %2951 = vmatpush1.bf16.msra.mxu0 %v2948
        %2952 = vmatprep.subr.bf16.mxu0 0
        %2953 = vmatpush1.bf16.msra.mxu0 0
        %2954 = vmatprep.subr.bf16.mxu0 0
        %2955 = vmatpush1.bf16.msra.mxu0 0
        %2956 = vmatprep.subr.bf16.mxu0 0
        %2957 = vmatpush1.bf16.msra.mxu0 0
        %2958 = vmatprep.subr.bf16.mxu0 0
        %2959 = vmatpush1.bf16.msra.mxu0 0
        %2960 = vmatprep.subr.bf16.mxu0 0
        %2961 = vmatpush1.bf16.msra.mxu0 0
        %2962 = vmatprep.subr.bf16.mxu0 0
        %2963 = vmatpush1.bf16.msra.mxu0 0
        %2964 = vmatprep.subr.bf16.mxu0 0
        %2965 = vmatpush1.bf16.msra.mxu0 0
        %2966 = vmatprep.subr.bf16.mxu0 0
        %2967 = vmatpush1.bf16.msra.mxu0 0
        %2968 = vmatprep.subr.bf16.mxu0 0
        %2969 = vmatpush1.bf16.msra.mxu0 0
        %2970 = vmatprep.subr.bf16.mxu0 0
        %2971 = vmatpush1.bf16.msra.mxu0 0
        %2972 = vmatprep.subr.bf16.mxu0 0
        %2973 = vmatpush1.bf16.msra.mxu0 0
        %2974 = vmatprep.subr.bf16.mxu0 0
        %2975 = vmatpush1.bf16.msra.mxu0 0
        %2976 = vmatprep.subr.bf16.mxu0 0
        %2977 = vmatpush1.bf16.msra.mxu0 0
        %2978 = vmatprep.subr.bf16.mxu0 0
        %2979 = vmatpush1.bf16.msra.mxu0 0
        %2980 = vmatprep.subr.bf16.mxu0 0
        %2981 = vmatpush1.bf16.msra.mxu0 0
        %2982 = vmatprep.mubr.bf16.mxu0 0
        %2983 = vmatmul.mubr.bf16.gmra.mrb[0].mxu0 %v2945
        %v2984 = vpop.f32.mrb[0].mxu0
        %v2985 = vadd.f32 0.0, %v2984
        %v2986 = vpop.f32.mrb[0].mxu0
        %v2987 = vpop.f32.mrb[0].mxu0
        %v2988 = vpop.f32.mrb[0].mxu0
        %2989 = vdwg.mxu0
        %2990 = vrot.lane.b32.xlu0 %v2371, 64
        %v2991 = vpop.permute.xlu0 %2990
        %v2993 = vsel %vm1219, %v2941, 0
        %v2996 = vsel %vm1249, %v2991, 0
        %2998 = vmatprep.subr.bf16.mxu0 0
        %2999 = vmatpush1.bf16.msra.mxu0 %v2996
        %3000 = vmatprep.subr.bf16.mxu0 0
        %3001 = vmatpush1.bf16.msra.mxu0 0
        %3002 = vmatprep.subr.bf16.mxu0 0
        %3003 = vmatpush1.bf16.msra.mxu0 0
        %3004 = vmatprep.subr.bf16.mxu0 0
        %3005 = vmatpush1.bf16.msra.mxu0 0
        %3006 = vmatprep.subr.bf16.mxu0 0
        %3007 = vmatpush1.bf16.msra.mxu0 0
        %3008 = vmatprep.subr.bf16.mxu0 0
        %3009 = vmatpush1.bf16.msra.mxu0 0
        %3010 = vmatprep.subr.bf16.mxu0 0
        %3011 = vmatpush1.bf16.msra.mxu0 0
        %3012 = vmatprep.subr.bf16.mxu0 0
        %3013 = vmatpush1.bf16.msra.mxu0 0
        %3014 = vmatprep.subr.bf16.mxu0 0
        %3015 = vmatpush1.bf16.msra.mxu0 0
        %3016 = vmatprep.subr.bf16.mxu0 0
        %3017 = vmatpush1.bf16.msra.mxu0 0
        %3018 = vmatprep.subr.bf16.mxu0 0
        %3019 = vmatpush1.bf16.msra.mxu0 0
        %3020 = vmatprep.subr.bf16.mxu0 0
        %3021 = vmatpush1.bf16.msra.mxu0 0
        %3022 = vmatprep.subr.bf16.mxu0 0
        %3023 = vmatpush1.bf16.msra.mxu0 0
        %3024 = vmatprep.subr.bf16.mxu0 0
        %3025 = vmatpush1.bf16.msra.mxu0 0
        %3026 = vmatprep.subr.bf16.mxu0 0
        %3027 = vmatpush1.bf16.msra.mxu0 0
        %3028 = vmatprep.subr.bf16.mxu0 0
        %3029 = vmatpush1.bf16.msra.mxu0 0
        %3030 = vmatprep.mubr.bf16.mxu0 0
        %3031 = vmatmul.mubr.bf16.gmra.mrb[0].mxu0 %v2993
        %v3032 = vpop.f32.mrb[0].mxu0
        %v3033 = vadd.f32 0.0, %v3032
        %v3034 = vpop.f32.mrb[0].mxu0
        %v3035 = vpop.f32.mrb[0].mxu0
        %v3036 = vpop.f32.mrb[0].mxu0
        %3037 = vdwg.mxu0
        %3038 = vrot.lane.b32.xlu0 %v2366, 32
        %v3039 = vpop.permute.xlu0 %3038
        %3040 = vrot.lane.b32.xlu0 %v2368, 32
        %v3041 = vpop.permute.xlu0 %3040
        %v3043 = vsel %vm1120, %v3039, 0
        %v3046 = vsel %vm1120, %v3041, 0
        %3048 = vmatprep.subr.bf16.mxu0 0
        %3049 = vmatpush1.bf16.xpose.msra.mxu0 %v3046
        %3050 = vmatprep.subr.bf16.mxu0 0
        %3051 = vmatpush1.bf16.xpose.msra.mxu0 0
        %3052 = vmatprep.subr.bf16.mxu0 0
        %3053 = vmatpush1.bf16.xpose.msra.mxu0 0
        %3054 = vmatprep.subr.bf16.mxu0 0
        %3055 = vmatpush1.bf16.xpose.msra.mxu0 0
        %3056 = vmatprep.subr.bf16.mxu0 0
        %3057 = vmatpush1.bf16.xpose.msra.mxu0 0
        %3058 = vmatprep.subr.bf16.mxu0 0
        %3059 = vmatpush1.bf16.xpose.msra.mxu0 0
        %3060 = vmatprep.subr.bf16.mxu0 0
        %3061 = vmatpush1.bf16.xpose.msra.mxu0 0
        %3062 = vmatprep.subr.bf16.mxu0 0
        %3063 = vmatpush1.bf16.xpose.msra.mxu0 0
        %3064 = vmatprep.subr.bf16.mxu0 0
        %3065 = vmatpush1.bf16.xpose.msra.mxu0 0
        %3066 = vmatprep.subr.bf16.mxu0 0
        %3067 = vmatpush1.bf16.xpose.msra.mxu0 0
        %3068 = vmatprep.subr.bf16.mxu0 0
        %3069 = vmatpush1.bf16.xpose.msra.mxu0 0
        %3070 = vmatprep.subr.bf16.mxu0 0
        %3071 = vmatpush1.bf16.xpose.msra.mxu0 0
        %3072 = vmatprep.subr.bf16.mxu0 0
        %3073 = vmatpush1.bf16.xpose.msra.mxu0 0
        %3074 = vmatprep.subr.bf16.mxu0 0
        %3075 = vmatpush1.bf16.xpose.msra.mxu0 0
        %3076 = vmatprep.subr.bf16.mxu0 0
        %3077 = vmatpush1.bf16.xpose.msra.mxu0 0
        %3078 = vmatprep.subr.bf16.mxu0 0
        %3079 = vmatpush1.bf16.xpose.msra.mxu0 0
        %3080 = vmatprep.mubr.bf16.mxu0 0
        %3081 = vmatmul.mubr.bf16.gmra.mrb[0].mxu0 %v3043
        %v3082 = vpop.f32.mrb[0].mxu0
        %v3083 = vadd.f32 0.0, %v3082
        %v3084 = vpop.f32.mrb[0].mxu0
        %v3085 = vpop.f32.mrb[0].mxu0
        %v3086 = vpop.f32.mrb[0].mxu0
        %3087 = vdwg.mxu0
        %3088 = vrot.lane.b32.xlu0 %v2367, 32
        %v3089 = vpop.permute.xlu0 %3088
        %3090 = vrot.lane.b32.xlu0 %v2369, 32
        %v3091 = vpop.permute.xlu0 %3090
        %v3093 = vsel %vm1120, %v3089, 0
        %v3096 = vsel %vm1120, %v3091, 0
        %3098 = vmatprep.subr.bf16.mxu0 0
        %3099 = vmatpush1.bf16.xpose.msra.mxu0 %v3096
        %3100 = vmatprep.subr.bf16.mxu0 0
        %3101 = vmatpush1.bf16.xpose.msra.mxu0 0
        %3102 = vmatprep.subr.bf16.mxu0 0
        %3103 = vmatpush1.bf16.xpose.msra.mxu0 0
        %3104 = vmatprep.subr.bf16.mxu0 0
        %3105 = vmatpush1.bf16.xpose.msra.mxu0 0
        %3106 = vmatprep.subr.bf16.mxu0 0
        %3107 = vmatpush1.bf16.xpose.msra.mxu0 0
        %3108 = vmatprep.subr.bf16.mxu0 0
        %3109 = vmatpush1.bf16.xpose.msra.mxu0 0
        %3110 = vmatprep.subr.bf16.mxu0 0
        %3111 = vmatpush1.bf16.xpose.msra.mxu0 0
        %3112 = vmatprep.subr.bf16.mxu0 0
        %3113 = vmatpush1.bf16.xpose.msra.mxu0 0
        %3114 = vmatprep.subr.bf16.mxu0 0
        %3115 = vmatpush1.bf16.xpose.msra.mxu0 0
        %3116 = vmatprep.subr.bf16.mxu0 0
        %3117 = vmatpush1.bf16.xpose.msra.mxu0 0
        %3118 = vmatprep.subr.bf16.mxu0 0
        %3119 = vmatpush1.bf16.xpose.msra.mxu0 0
        %3120 = vmatprep.subr.bf16.mxu0 0
        %3121 = vmatpush1.bf16.xpose.msra.mxu0 0
        %3122 = vmatprep.subr.bf16.mxu0 0
        %3123 = vmatpush1.bf16.xpose.msra.mxu0 0
        %3124 = vmatprep.subr.bf16.mxu0 0
        %3125 = vmatpush1.bf16.xpose.msra.mxu0 0
        %3126 = vmatprep.subr.bf16.mxu0 0
        %3127 = vmatpush1.bf16.xpose.msra.mxu0 0
        %3128 = vmatprep.subr.bf16.mxu0 0
        %3129 = vmatpush1.bf16.xpose.msra.mxu0 0
        %3130 = vmatprep.mubr.bf16.mxu0 0
        %3131 = vmatmul.mubr.bf16.gmra.mrb[0].mxu0 %v3093
        %v3132 = vpop.f32.mrb[0].mxu0
        %v3133 = vadd.f32 0.0, %v3132
        %v3134 = vpop.f32.mrb[0].mxu0
        %v3135 = vpop.f32.mrb[0].mxu0
        %v3136 = vpop.f32.mrb[0].mxu0
        %3137 = vdwg.mxu0
        %v3138 = vmul.f32 %v3083, 0.17677669
        %v3139 = vmul.f32 %v3133, 0.17677669
        %v3140 = vsel %vm1219, %v3138, -inf
        %3141 = vmax.xlane.f32.xlu0 %v3140
        %v3142 = vpop.xlane.xlu0 %3141
        %v3143 = vsel %vm1219, %v3139, -inf
        %3144 = vmax.xlane.f32.xlu0 %v3143
        %v3145 = vpop.xlane.xlu0 %3144
        %v3146 = vsub.f32 %v3138, %v3142
        %v3147 = vsub.f32 %v3139, %v3145
        %v3148 = vmul.f32 %v3146, 1.442695
        %v3149 = vpow.pop %v3148
        %v3150 = vmul.f32 %v3147, 1.442695
        %v3151 = vpow.pop %v3150
        %v3152 = vsel %vm1219, %v3149, 0.0
        %3153 = vadd.xlane.f32.xlu0 %v3152
        %v3154 = vpop.xlane.xlu0 %3153
        %v3155 = vsel %vm1219, %v3151, 0.0
        %3156 = vadd.xlane.f32.xlu0 %v3155
        %v3157 = vpop.xlane.xlu0 %3156
        %v3158 = vrcp.pop %v3154
        %v3159 = vmul.f32 1.0, %v3158
        %v3160 = vrcp.pop %v3157
        %v3161 = vmul.f32 1.0, %v3160
        %v3162 = vmul.f32 %v3149, %v3159
        %v3163 = vmul.f32 %v3151, %v3161
        %v3164 = vpack.c.bf16 %v3162, %v3162
        %v3165 = vpack.c.bf16 %v3163, %v3163
        %3166 = vrot.lane.b32.xlu0 %v2370, 32
        %v3167 = vpop.permute.xlu0 %3166
        %v3169 = vsel %vm1219, %v3164, 0
        %v3172 = vsel %vm1249, %v3167, 0
        %3174 = vmatprep.subr.bf16.mxu0 0
        %3175 = vmatpush1.bf16.msra.mxu0 %v3172
        %3176 = vmatprep.subr.bf16.mxu0 0
        %3177 = vmatpush1.bf16.msra.mxu0 0
        %3178 = vmatprep.subr.bf16.mxu0 0
        %3179 = vmatpush1.bf16.msra.mxu0 0
        %3180 = vmatprep.subr.bf16.mxu0 0
        %3181 = vmatpush1.bf16.msra.mxu0 0
        %3182 = vmatprep.subr.bf16.mxu0 0
        %3183 = vmatpush1.bf16.msra.mxu0 0
        %3184 = vmatprep.subr.bf16.mxu0 0
        %3185 = vmatpush1.bf16.msra.mxu0 0
        %3186 = vmatprep.subr.bf16.mxu0 0
        %3187 = vmatpush1.bf16.msra.mxu0 0
        %3188 = vmatprep.subr.bf16.mxu0 0
        %3189 = vmatpush1.bf16.msra.mxu0 0
        %3190 = vmatprep.subr.bf16.mxu0 0
        %3191 = vmatpush1.bf16.msra.mxu0 0
        %3192 = vmatprep.subr.bf16.mxu0 0
        %3193 = vmatpush1.bf16.msra.mxu0 0
        %3194 = vmatprep.subr.bf16.mxu0 0
        %3195 = vmatpush1.bf16.msra.mxu0 0
        %3196 = vmatprep.subr.bf16.mxu0 0
        %3197 = vmatpush1.bf16.msra.mxu0 0
        %3198 = vmatprep.subr.bf16.mxu0 0
        %3199 = vmatpush1.bf16.msra.mxu0 0
        %3200 = vmatprep.subr.bf16.mxu0 0
        %3201 = vmatpush1.bf16.msra.mxu0 0
        %3202 = vmatprep.subr.bf16.mxu0 0
        %3203 = vmatpush1.bf16.msra.mxu0 0
        %3204 = vmatprep.subr.bf16.mxu0 0
        %3205 = vmatpush1.bf16.msra.mxu0 0
        %3206 = vmatprep.mubr.bf16.mxu0 0
        %3207 = vmatmul.mubr.bf16.gmra.mrb[0].mxu0 %v3169
        %v3208 = vpop.f32.mrb[0].mxu0
        %v3209 = vadd.f32 0.0, %v3208
        %v3210 = vpop.f32.mrb[0].mxu0
        %v3211 = vpop.f32.mrb[0].mxu0
        %v3212 = vpop.f32.mrb[0].mxu0
        %3213 = vdwg.mxu0
        %3214 = vrot.lane.b32.xlu0 %v2371, 32
        %v3215 = vpop.permute.xlu0 %3214
        %v3217 = vsel %vm1219, %v3165, 0
        %v3220 = vsel %vm1249, %v3215, 0
        %3222 = vmatprep.subr.bf16.mxu0 0
        %3223 = vmatpush1.bf16.msra.mxu0 %v3220
        %3224 = vmatprep.subr.bf16.mxu0 0
        %3225 = vmatpush1.bf16.msra.mxu0 0
        %3226 = vmatprep.subr.bf16.mxu0 0
        %3227 = vmatpush1.bf16.msra.mxu0 0
        %3228 = vmatprep.subr.bf16.mxu0 0
        %3229 = vmatpush1.bf16.msra.mxu0 0
        %3230 = vmatprep.subr.bf16.mxu0 0
        %3231 = vmatpush1.bf16.msra.mxu0 0
        %3232 = vmatprep.subr.bf16.mxu0 0
        %3233 = vmatpush1.bf16.msra.mxu0 0
        %3234 = vmatprep.subr.bf16.mxu0 0
        %3235 = vmatpush1.bf16.msra.mxu0 0
        %3236 = vmatprep.subr.bf16.mxu0 0
        %3237 = vmatpush1.bf16.msra.mxu0 0
        %3238 = vmatprep.subr.bf16.mxu0 0
        %3239 = vmatpush1.bf16.msra.mxu0 0
        %3240 = vmatprep.subr.bf16.mxu0 0
        %3241 = vmatpush1.bf16.msra.mxu0 0
        %3242 = vmatprep.subr.bf16.mxu0 0
        %3243 = vmatpush1.bf16.msra.mxu0 0
        %3244 = vmatprep.subr.bf16.mxu0 0
        %3245 = vmatpush1.bf16.msra.mxu0 0
        %3246 = vmatprep.subr.bf16.mxu0 0
        %3247 = vmatpush1.bf16.msra.mxu0 0
        %3248 = vmatprep.subr.bf16.mxu0 0
        %3249 = vmatpush1.bf16.msra.mxu0 0
        %3250 = vmatprep.subr.bf16.mxu0 0
        %3251 = vmatpush1.bf16.msra.mxu0 0
        %3252 = vmatprep.subr.bf16.mxu0 0
        %3253 = vmatpush1.bf16.msra.mxu0 0
        %3254 = vmatprep.mubr.bf16.mxu0 0
        %3255 = vmatmul.mubr.bf16.gmra.mrb[0].mxu0 %v3217
        %v3256 = vpop.f32.mrb[0].mxu0
        %v3257 = vadd.f32 0.0, %v3256
        %v3258 = vpop.f32.mrb[0].mxu0
        %v3259 = vpop.f32.mrb[0].mxu0
        %v3260 = vpop.f32.mrb[0].mxu0
        %3261 = vdwg.mxu0
        %3264 = vrot.lane.b32.xlu0 %v2760, 32
        %v3265 = vpop.permute.xlu0 %3264
        %3266 = vrot.lane.b32.xlu0 %v2809, 32
        %v3267 = vpop.permute.xlu0 %3266
        %3272 = vrot.lane.b32.xlu0 %v2985, 64
        %v3273 = vpop.permute.xlu0 %3272
        %3274 = vrot.lane.b32.xlu0 %v3033, 64
        %v3275 = vpop.permute.xlu0 %3274
        %3280 = vrot.lane.b32.xlu0 %v3209, 96
        %v3281 = vpop.permute.xlu0 %3280
        %3282 = vrot.lane.b32.xlu0 %v3257, 96
        %v3283 = vpop.permute.xlu0 %3282
        %v3286 = vsel %vm1120, %v2533, %v3265
        %v3287 = vsel %vm1120, %v2579, %v3267
        %v3288 = vsel %vm2049, %v3286, %v3273
        %v3289 = vsel %vm2049, %v3287, %v3275
        %v3290 = vsel %vm2052, %v3288, %v3281
        %v3291 = vsel %vm2052, %v3289, %v3283
        %v3292 = vadd.f32 %v2055, %v3290
        %v3293 = vadd.f32 %v2056, %v3291
        %v3294 = vrot.slane %v3292, 4
        %v3295 = vadd.f32 %v3292, %v3294
        %v3296 = vrot.slane %v3295, 2
        %v3297 = vadd.f32 %v3295, %v3296
        %v3298 = vrot.slane %v3297, 1
        %v3299 = vadd.f32 %v3297, %v3298
        %v3300 = vrot.slane %v3293, 4
        %v3301 = vadd.f32 %v3293, %v3300
        %v3302 = vrot.slane %v3301, 2
        %v3303 = vadd.f32 %v3301, %v3302
        %v3304 = vrot.slane %v3303, 1
        %v3305 = vadd.f32 %v3303, %v3304
        %v3306 = vmul.f32 %v3299, %v819
        %v3307 = vmul.f32 %v3305, %v819
        %v3308 = vsub.f32 %v3292, %v3306
        %v3309 = vsub.f32 %v3293, %v3307
        %v3310 = vmul.f32 %v3308, %v3308
        %v3311 = vmul.f32 %v3309, %v3309
        %v3312 = vrot.slane %v3310, 4
        %v3313 = vadd.f32 %v3310, %v3312
        %v3314 = vrot.slane %v3313, 2
        %v3315 = vadd.f32 %v3313, %v3314
        %v3316 = vrot.slane %v3315, 1
        %v3317 = vadd.f32 %v3315, %v3316
        %v3318 = vrot.slane %v3311, 4
        %v3319 = vadd.f32 %v3311, %v3318
        %v3320 = vrot.slane %v3319, 2
        %v3321 = vadd.f32 %v3319, %v3320
        %v3322 = vrot.slane %v3321, 1
        %v3323 = vadd.f32 %v3321, %v3322
        %v3324 = vmul.f32 %v3317, %v819
        %v3325 = vmul.f32 %v3323, %v819
        %v3326 = vadd.f32 %v3324, 1e-05
        %v3327 = vadd.f32 %v3325, 1e-05
        %v3328 = vrsqrt.pop %v3326
        %v3329 = vrsqrt.pop %v3327
        %v3330 = vmul.f32 %v3308, %v3328
        %v3331 = vmul.f32 %v3309, %v3329
        %v3332 = vld [vmem:[#allocation16] sm:$0xff]
        %v3333 = vmul.f32 %v3330, %v3332
        %v3334 = vmul.f32 %v3331, %v3332
        %v3335 = vld [vmem:[#allocation18] sm:$0xff]
        %v3336 = vadd.f32 %v3333, %v3335
        %v3337 = vadd.f32 %v3334, %v3335
        %v3338 = vpack.c.bf16 %v3337, %v3336
        %v3339 = vld [vmem:[#allocation19] sm:$0xff]
        %v3340 = vld [vmem:[#allocation19 + $0x8] sm:$0xff]
        %v3341 = vld [vmem:[#allocation19 + $0x10] sm:$0xff]
        %v3342 = vld [vmem:[#allocation19 + $0x18] sm:$0xff]
        %v3343 = vld [vmem:[#allocation19 + $0x20] sm:$0xff]
        %v3344 = vld [vmem:[#allocation19 + $0x28] sm:$0xff]
        %v3345 = vld [vmem:[#allocation19 + $0x30] sm:$0xff]
        %v3346 = vld [vmem:[#allocation19 + $0x38] sm:$0xff]
        %v3347 = vld [vmem:[#allocation19 + $0x40] sm:$0xff]
        %v3348 = vld [vmem:[#allocation19 + $0x48] sm:$0xff]
        %v3349 = vld [vmem:[#allocation19 + $0x50] sm:$0xff]
        %v3350 = vld [vmem:[#allocation19 + $0x58] sm:$0xff]
        %v3351 = vld [vmem:[#allocation19 + $0x60] sm:$0xff]
        %v3352 = vld [vmem:[#allocation19 + $0x68] sm:$0xff]
        %v3353 = vld [vmem:[#allocation19 + $0x70] sm:$0xff]
        %v3354 = vld [vmem:[#allocation19 + $0x78] sm:$0xff]
        %v3355 = vld [vmem:[#allocation19 + $0x80] sm:$0xff]
        %v3356 = vld [vmem:[#allocation19 + $0x88] sm:$0xff]
        %v3357 = vld [vmem:[#allocation19 + $0x90] sm:$0xff]
        %v3358 = vld [vmem:[#allocation19 + $0x98] sm:$0xff]
        %v3359 = vld [vmem:[#allocation19 + $0xa0] sm:$0xff]
        %v3360 = vld [vmem:[#allocation19 + $0xa8] sm:$0xff]
        %v3361 = vld [vmem:[#allocation19 + $0xb0] sm:$0xff]
        %v3362 = vld [vmem:[#allocation19 + $0xb8] sm:$0xff]
        %v3363 = vld [vmem:[#allocation19 + $0xc0] sm:$0xff]
        %v3364 = vld [vmem:[#allocation19 + $0xc8] sm:$0xff]
        %v3365 = vld [vmem:[#allocation19 + $0xd0] sm:$0xff]
        %v3366 = vld [vmem:[#allocation19 + $0xd8] sm:$0xff]
        %v3367 = vld [vmem:[#allocation19 + $0xe0] sm:$0xff]
        %v3368 = vld [vmem:[#allocation19 + $0xe8] sm:$0xff]
        %v3369 = vld [vmem:[#allocation19 + $0xf0] sm:$0xff]
        %v3370 = vld [vmem:[#allocation19 + $0xf8] sm:$0xff]
        %v3371 = vld [vmem:[#allocation21] sm:$0xf]
        %v3373 = vlaneseq
        %v3374 = vshrl.u32 %v3373, 7
        %v3375 = vsub.s32 0, %v3374
        %v3376 = vrot.slane %v3371, %v3375
        %v3377 = vlaneseq
        %v3378 = vshrl.u32 %v3377, 7
        %v3379 = vsub.s32 1, %v3378
        %v3380 = vrot.slane %v3371, %v3379
        %v3381 = vlaneseq
        %v3382 = vshrl.u32 %v3381, 7
        %v3383 = vsub.s32 2, %v3382
        %v3384 = vrot.slane %v3371, %v3383
        %v3385 = vlaneseq
        %v3386 = vshrl.u32 %v3385, 7
        %v3387 = vsub.s32 3, %v3386
        %v3388 = vrot.slane %v3371, %v3387
        %v3425 = vunpack.c.l.b16 %v3339
        %v3426 = vunpack.c.h.b16 %v3339
        %v3427 = vunpack.c.l.b16 %v3340
        %v3428 = vunpack.c.h.b16 %v3340
        %v3429 = vunpack.c.l.b16 %v3341
        %v3430 = vunpack.c.h.b16 %v3341
        %v3431 = vunpack.c.l.b16 %v3342
        %v3432 = vunpack.c.h.b16 %v3342
        %v3433 = vunpack.c.l.b16 %v3343
        %v3434 = vunpack.c.h.b16 %v3343
        %v3435 = vunpack.c.l.b16 %v3344
        %v3436 = vunpack.c.h.b16 %v3344
        %v3437 = vunpack.c.l.b16 %v3345
        %v3438 = vunpack.c.h.b16 %v3345
        %v3439 = vunpack.c.l.b16 %v3346
        %v3440 = vunpack.c.h.b16 %v3346
        %v3441 = vunpack.c.l.b16 %v3347
        %v3442 = vunpack.c.h.b16 %v3347
        %v3443 = vunpack.c.l.b16 %v3348
        %v3444 = vunpack.c.h.b16 %v3348
        %v3445 = vunpack.c.l.b16 %v3349
        %v3446 = vunpack.c.h.b16 %v3349
        %v3447 = vunpack.c.l.b16 %v3350
        %v3448 = vunpack.c.h.b16 %v3350
        %v3449 = vunpack.c.l.b16 %v3351
        %v3450 = vunpack.c.h.b16 %v3351
        %v3451 = vunpack.c.l.b16 %v3352
        %v3452 = vunpack.c.h.b16 %v3352
        %v3453 = vunpack.c.l.b16 %v3353
        %v3454 = vunpack.c.h.b16 %v3353
        %v3455 = vunpack.c.l.b16 %v3354
        %v3456 = vunpack.c.h.b16 %v3354
        %v3457 = vunpack.c.l.b16 %v3355
        %v3458 = vunpack.c.h.b16 %v3355
        %v3459 = vunpack.c.l.b16 %v3356
        %v3460 = vunpack.c.h.b16 %v3356
        %v3461 = vunpack.c.l.b16 %v3357
        %v3462 = vunpack.c.h.b16 %v3357
        %v3463 = vunpack.c.l.b16 %v3358
        %v3464 = vunpack.c.h.b16 %v3358
        %v3465 = vunpack.c.l.b16 %v3359
        %v3466 = vunpack.c.h.b16 %v3359
        %v3467 = vunpack.c.l.b16 %v3360
        %v3468 = vunpack.c.h.b16 %v3360
        %v3469 = vunpack.c.l.b16 %v3361
        %v3470 = vunpack.c.h.b16 %v3361
        %v3471 = vunpack.c.l.b16 %v3362
        %v3472 = vunpack.c.h.b16 %v3362
        %v3473 = vunpack.c.l.b16 %v3363
        %v3474 = vunpack.c.h.b16 %v3363
        %v3475 = vunpack.c.l.b16 %v3364
        %v3476 = vunpack.c.h.b16 %v3364
        %v3477 = vunpack.c.l.b16 %v3365
        %v3478 = vunpack.c.h.b16 %v3365
        %v3479 = vunpack.c.l.b16 %v3366
        %v3480 = vunpack.c.h.b16 %v3366
        %v3481 = vunpack.c.l.b16 %v3367
        %v3482 = vunpack.c.h.b16 %v3367
        %v3483 = vunpack.c.l.b16 %v3368
        %v3484 = vunpack.c.h.b16 %v3368
        %v3485 = vunpack.c.l.b16 %v3369
        %v3486 = vunpack.c.h.b16 %v3369
        %v3487 = vunpack.c.l.b16 %v3370
        %v3488 = vunpack.c.h.b16 %v3370
        %v3489 = vpack.c.b16 %v3429, %v3425
        %v3490 = vpack.c.b16 %v3430, %v3426
        %v3491 = vpack.c.b16 %v3431, %v3427
        %v3492 = vpack.c.b16 %v3432, %v3428
        %v3493 = vpack.c.b16 %v3437, %v3433
        %v3494 = vpack.c.b16 %v3438, %v3434
        %v3495 = vpack.c.b16 %v3439, %v3435
        %v3496 = vpack.c.b16 %v3440, %v3436
        %v3497 = vpack.c.b16 %v3445, %v3441
        %v3498 = vpack.c.b16 %v3446, %v3442
        %v3499 = vpack.c.b16 %v3447, %v3443
        %v3500 = vpack.c.b16 %v3448, %v3444
        %v3501 = vpack.c.b16 %v3453, %v3449
        %v3502 = vpack.c.b16 %v3454, %v3450
        %v3503 = vpack.c.b16 %v3455, %v3451
        %v3504 = vpack.c.b16 %v3456, %v3452
        %v3505 = vpack.c.b16 %v3461, %v3457
        %v3506 = vpack.c.b16 %v3462, %v3458
        %v3507 = vpack.c.b16 %v3463, %v3459
        %v3508 = vpack.c.b16 %v3464, %v3460
        %v3509 = vpack.c.b16 %v3469, %v3465
        %v3510 = vpack.c.b16 %v3470, %v3466
        %v3511 = vpack.c.b16 %v3471, %v3467
        %v3512 = vpack.c.b16 %v3472, %v3468
        %v3513 = vpack.c.b16 %v3477, %v3473
        %v3514 = vpack.c.b16 %v3478, %v3474
        %v3515 = vpack.c.b16 %v3479, %v3475
        %v3516 = vpack.c.b16 %v3480, %v3476
        %v3517 = vpack.c.b16 %v3485, %v3481
        %v3518 = vpack.c.b16 %v3486, %v3482
        %v3519 = vpack.c.b16 %v3487, %v3483
        %v3520 = vpack.c.b16 %v3488, %v3484
        %3553 = vmatprep.subr.bf16.mxu0 %v3490
        %3554 = vmatpush1.bf16.msra.mxu0 %v3489
        %3555 = vmatprep.subr.bf16.mxu0 %v3494
        %3556 = vmatpush1.bf16.msra.mxu0 %v3493
        %3557 = vmatprep.subr.bf16.mxu0 %v3498
        %3558 = vmatpush1.bf16.msra.mxu0 %v3497
        %3559 = vmatprep.subr.bf16.mxu0 %v3502
        %3560 = vmatpush1.bf16.msra.mxu0 %v3501
        %3561 = vmatprep.subr.bf16.mxu0 %v3506
        %3562 = vmatpush1.bf16.msra.mxu0 %v3505
        %3563 = vmatprep.subr.bf16.mxu0 %v3510
        %3564 = vmatpush1.bf16.msra.mxu0 %v3509
        %3565 = vmatprep.subr.bf16.mxu0 %v3514
        %3566 = vmatpush1.bf16.msra.mxu0 %v3513
        %3567 = vmatprep.subr.bf16.mxu0 %v3518
        %3568 = vmatpush1.bf16.msra.mxu0 %v3517
        %3569 = vmatprep.subr.bf16.mxu0 0
        %3570 = vmatpush1.bf16.msra.mxu0 0
        %3571 = vmatprep.subr.bf16.mxu0 0
        %3572 = vmatpush1.bf16.msra.mxu0 0
        %3573 = vmatprep.subr.bf16.mxu0 0
        %3574 = vmatpush1.bf16.msra.mxu0 0
        %3575 = vmatprep.subr.bf16.mxu0 0
        %3576 = vmatpush1.bf16.msra.mxu0 0
        %3577 = vmatprep.subr.bf16.mxu0 0
        %3578 = vmatpush1.bf16.msra.mxu0 0
        %3579 = vmatprep.subr.bf16.mxu0 0
        %3580 = vmatpush1.bf16.msra.mxu0 0
        %3581 = vmatprep.subr.bf16.mxu0 0
        %3582 = vmatpush1.bf16.msra.mxu0 0
        %3583 = vmatprep.subr.bf16.mxu0 0
        %3584 = vmatpush1.bf16.msra.mxu0 0
        %3585 = vmatprep.mubr.bf16.mxu0 0
        %3586 = vmatmul.mubr.bf16.gmra.mrb[0].mxu0 %v3338
        %v3587 = vpop.f32.mrb[0].mxu0
        %v3588 = vadd.f32 %v3376, %v3587
        %v3589 = vpop.f32.mrb[0].mxu0
        %v3590 = vadd.f32 %v3380, %v3589
        %v3591 = vpop.f32.mrb[0].mxu0
        %v3592 = vadd.f32 %v3376, %v3591
        %v3593 = vpop.f32.mrb[0].mxu0
        %v3594 = vadd.f32 %v3380, %v3593
        %3595 = vdwg.mxu0
        %3596 = vmatprep.subr.bf16.mxu0 %v3492
        %3597 = vmatpush1.bf16.msra.mxu0 %v3491
        %3598 = vmatprep.subr.bf16.mxu0 %v3496
        %3599 = vmatpush1.bf16.msra.mxu0 %v3495
        %3600 = vmatprep.subr.bf16.mxu0 %v3500
        %3601 = vmatpush1.bf16.msra.mxu0 %v3499
        %3602 = vmatprep.subr.bf16.mxu0 %v3504
        %3603 = vmatpush1.bf16.msra.mxu0 %v3503
        %3604 = vmatprep.subr.bf16.mxu0 %v3508
        %3605 = vmatpush1.bf16.msra.mxu0 %v3507
        %3606 = vmatprep.subr.bf16.mxu0 %v3512
        %3607 = vmatpush1.bf16.msra.mxu0 %v3511
        %3608 = vmatprep.subr.bf16.mxu0 %v3516
        %3609 = vmatpush1.bf16.msra.mxu0 %v3515
        %3610 = vmatprep.subr.bf16.mxu0 %v3520
        %3611 = vmatpush1.bf16.msra.mxu0 %v3519
        %3612 = vmatprep.subr.bf16.mxu0 0
        %3613 = vmatpush1.bf16.msra.mxu0 0
        %3614 = vmatprep.subr.bf16.mxu0 0
        %3615 = vmatpush1.bf16.msra.mxu0 0
        %3616 = vmatprep.subr.bf16.mxu0 0
        %3617 = vmatpush1.bf16.msra.mxu0 0
        %3618 = vmatprep.subr.bf16.mxu0 0
        %3619 = vmatpush1.bf16.msra.mxu0 0
        %3620 = vmatprep.subr.bf16.mxu0 0
        %3621 = vmatpush1.bf16.msra.mxu0 0
        %3622 = vmatprep.subr.bf16.mxu0 0
        %3623 = vmatpush1.bf16.msra.mxu0 0
        %3624 = vmatprep.subr.bf16.mxu0 0
        %3625 = vmatpush1.bf16.msra.mxu0 0
        %3626 = vmatprep.subr.bf16.mxu0 0
        %3627 = vmatpush1.bf16.msra.mxu0 0
        %3628 = vmatprep.mubr.bf16.mxu0 0
        %3629 = vmatmul.mubr.bf16.gmra.mrb[0].mxu0 %v3338
        %v3630 = vpop.f32.mrb[0].mxu0
        %v3631 = vadd.f32 %v3384, %v3630
        %v3632 = vpop.f32.mrb[0].mxu0
        %v3633 = vadd.f32 %v3388, %v3632
        %v3634 = vpop.f32.mrb[0].mxu0
        %v3635 = vadd.f32 %v3384, %v3634
        %v3636 = vpop.f32.mrb[0].mxu0
        %v3637 = vadd.f32 %v3388, %v3636
        %3638 = vdwg.mxu0
        %v3639 = vmax.f32 %v3588, 0.0
        %v3640 = vmax.f32 %v3590, 0.0
        %v3641 = vmax.f32 %v3631, 0.0
        %v3642 = vmax.f32 %v3633, 0.0
        %v3643 = vmax.f32 %v3592, 0.0
        %v3644 = vmax.f32 %v3594, 0.0
        %v3645 = vmax.f32 %v3635, 0.0
        %v3646 = vmax.f32 %v3637, 0.0
        %v3647 = vpack.c.bf16 %v3643, %v3639
        %v3648 = vpack.c.bf16 %v3644, %v3640
        %v3649 = vpack.c.bf16 %v3645, %v3641
        %v3650 = vpack.c.bf16 %v3646, %v3642
        %v3651 = vld [vmem:[#allocation22] sm:$0xf]
        %v3652 = vld [vmem:[#allocation22 + $0x4] sm:$0xf]
        %v3653 = vld [vmem:[#allocation22 + $0x8] sm:$0xf]
        %v3654 = vld [vmem:[#allocation22 + $0xc] sm:$0xf]
        %v3655 = vld [vmem:[#allocation22 + $0x10] sm:$0xf]
        %v3656 = vld [vmem:[#allocation22 + $0x14] sm:$0xf]
        %v3657 = vld [vmem:[#allocation22 + $0x18] sm:$0xf]
        %v3658 = vld [vmem:[#allocation22 + $0x1c] sm:$0xf]
        %v3659 = vld [vmem:[#allocation22 + $0x20] sm:$0xf]
        %v3660 = vld [vmem:[#allocation22 + $0x24] sm:$0xf]
        %v3661 = vld [vmem:[#allocation22 + $0x28] sm:$0xf]
        %v3662 = vld [vmem:[#allocation22 + $0x2c] sm:$0xf]
        %v3663 = vld [vmem:[#allocation22 + $0x30] sm:$0xf]
        %v3664 = vld [vmem:[#allocation22 + $0x34] sm:$0xf]
        %v3665 = vld [vmem:[#allocation22 + $0x38] sm:$0xf]
        %v3666 = vld [vmem:[#allocation22 + $0x3c] sm:$0xf]
        %v3667 = vld [vmem:[#allocation22 + $0x40] sm:$0xf]
        %v3668 = vld [vmem:[#allocation22 + $0x44] sm:$0xf]
        %v3669 = vld [vmem:[#allocation22 + $0x48] sm:$0xf]
        %v3670 = vld [vmem:[#allocation22 + $0x4c] sm:$0xf]
        %v3671 = vld [vmem:[#allocation22 + $0x50] sm:$0xf]
        %v3672 = vld [vmem:[#allocation22 + $0x54] sm:$0xf]
        %v3673 = vld [vmem:[#allocation22 + $0x58] sm:$0xf]
        %v3674 = vld [vmem:[#allocation22 + $0x5c] sm:$0xf]
        %v3675 = vld [vmem:[#allocation22 + $0x60] sm:$0xf]
        %v3676 = vld [vmem:[#allocation22 + $0x64] sm:$0xf]
        %v3677 = vld [vmem:[#allocation22 + $0x68] sm:$0xf]
        %v3678 = vld [vmem:[#allocation22 + $0x6c] sm:$0xf]
        %v3679 = vld [vmem:[#allocation22 + $0x70] sm:$0xf]
        %v3680 = vld [vmem:[#allocation22 + $0x74] sm:$0xf]
        %v3681 = vld [vmem:[#allocation22 + $0x78] sm:$0xf]
        %v3682 = vld [vmem:[#allocation22 + $0x7c] sm:$0xf]
        %v3683 = vld [vmem:[#allocation22 + $0x80] sm:$0xf]
        %v3684 = vld [vmem:[#allocation22 + $0x84] sm:$0xf]
        %v3685 = vld [vmem:[#allocation22 + $0x88] sm:$0xf]
        %v3686 = vld [vmem:[#allocation22 + $0x8c] sm:$0xf]
        %v3687 = vld [vmem:[#allocation22 + $0x90] sm:$0xf]
        %v3688 = vld [vmem:[#allocation22 + $0x94] sm:$0xf]
        %v3689 = vld [vmem:[#allocation22 + $0x98] sm:$0xf]
        %v3690 = vld [vmem:[#allocation22 + $0x9c] sm:$0xf]
        %v3691 = vld [vmem:[#allocation22 + $0xa0] sm:$0xf]
        %v3692 = vld [vmem:[#allocation22 + $0xa4] sm:$0xf]
        %v3693 = vld [vmem:[#allocation22 + $0xa8] sm:$0xf]
        %v3694 = vld [vmem:[#allocation22 + $0xac] sm:$0xf]
        %v3695 = vld [vmem:[#allocation22 + $0xb0] sm:$0xf]
        %v3696 = vld [vmem:[#allocation22 + $0xb4] sm:$0xf]
        %v3697 = vld [vmem:[#allocation22 + $0xb8] sm:$0xf]
        %v3698 = vld [vmem:[#allocation22 + $0xbc] sm:$0xf]
        %v3699 = vld [vmem:[#allocation22 + $0xc0] sm:$0xf]
        %v3700 = vld [vmem:[#allocation22 + $0xc4] sm:$0xf]
        %v3701 = vld [vmem:[#allocation22 + $0xc8] sm:$0xf]
        %v3702 = vld [vmem:[#allocation22 + $0xcc] sm:$0xf]
        %v3703 = vld [vmem:[#allocation22 + $0xd0] sm:$0xf]
        %v3704 = vld [vmem:[#allocation22 + $0xd4] sm:$0xf]
        %v3705 = vld [vmem:[#allocation22 + $0xd8] sm:$0xf]
        %v3706 = vld [vmem:[#allocation22 + $0xdc] sm:$0xf]
        %v3707 = vld [vmem:[#allocation22 + $0xe0] sm:$0xf]
        %v3708 = vld [vmem:[#allocation22 + $0xe4] sm:$0xf]
        %v3709 = vld [vmem:[#allocation22 + $0xe8] sm:$0xf]
        %v3710 = vld [vmem:[#allocation22 + $0xec] sm:$0xf]
        %v3711 = vld [vmem:[#allocation22 + $0xf0] sm:$0xf]
        %v3712 = vld [vmem:[#allocation22 + $0xf4] sm:$0xf]
        %v3713 = vld [vmem:[#allocation22 + $0xf8] sm:$0xf]
        %v3714 = vld [vmem:[#allocation22 + $0xfc] sm:$0xf]
        %v3715 = vld [vmem:[#allocation24] sm:$0x1]
        %v3717 = vlaneseq
        %v3718 = vshrl.u32 %v3717, 7
        %v3719 = vsub.s32 0, %v3718
        %v3720 = vrot.slane %v3715, %v3719
        %v3786 = vunpack.c.l.b16 %v3651
        %v3787 = vunpack.c.l.b16 %v3652
        %v3788 = vunpack.c.l.b16 %v3653
        %v3789 = vunpack.c.l.b16 %v3654
        %v3790 = vunpack.c.l.b16 %v3655
        %v3791 = vunpack.c.l.b16 %v3656
        %v3792 = vunpack.c.l.b16 %v3657
        %v3793 = vunpack.c.l.b16 %v3658
        %v3794 = vunpack.c.l.b16 %v3659
        %v3795 = vunpack.c.l.b16 %v3660
        %v3796 = vunpack.c.l.b16 %v3661
        %v3797 = vunpack.c.l.b16 %v3662
        %v3798 = vunpack.c.l.b16 %v3663
        %v3799 = vunpack.c.l.b16 %v3664
        %v3800 = vunpack.c.l.b16 %v3665
        %v3801 = vunpack.c.l.b16 %v3666
        %v3802 = vunpack.c.l.b16 %v3667
        %v3803 = vunpack.c.l.b16 %v3668
        %v3804 = vunpack.c.l.b16 %v3669
        %v3805 = vunpack.c.l.b16 %v3670
        %v3806 = vunpack.c.l.b16 %v3671
        %v3807 = vunpack.c.l.b16 %v3672
        %v3808 = vunpack.c.l.b16 %v3673
        %v3809 = vunpack.c.l.b16 %v3674
        %v3810 = vunpack.c.l.b16 %v3675
        %v3811 = vunpack.c.l.b16 %v3676
        %v3812 = vunpack.c.l.b16 %v3677
        %v3813 = vunpack.c.l.b16 %v3678
        %v3814 = vunpack.c.l.b16 %v3679
        %v3815 = vunpack.c.l.b16 %v3680
        %v3816 = vunpack.c.l.b16 %v3681
        %v3817 = vunpack.c.l.b16 %v3682
        %v3818 = vunpack.c.l.b16 %v3683
        %v3819 = vunpack.c.l.b16 %v3684
        %v3820 = vunpack.c.l.b16 %v3685
        %v3821 = vunpack.c.l.b16 %v3686
        %v3822 = vunpack.c.l.b16 %v3687
        %v3823 = vunpack.c.l.b16 %v3688
        %v3824 = vunpack.c.l.b16 %v3689
        %v3825 = vunpack.c.l.b16 %v3690
        %v3826 = vunpack.c.l.b16 %v3691
        %v3827 = vunpack.c.l.b16 %v3692
        %v3828 = vunpack.c.l.b16 %v3693
        %v3829 = vunpack.c.l.b16 %v3694
        %v3830 = vunpack.c.l.b16 %v3695
        %v3831 = vunpack.c.l.b16 %v3696
        %v3832 = vunpack.c.l.b16 %v3697
        %v3833 = vunpack.c.l.b16 %v3698
        %v3834 = vunpack.c.l.b16 %v3699
        %v3835 = vunpack.c.l.b16 %v3700
        %v3836 = vunpack.c.l.b16 %v3701
        %v3837 = vunpack.c.l.b16 %v3702
        %v3838 = vunpack.c.l.b16 %v3703
        %v3839 = vunpack.c.l.b16 %v3704
        %v3840 = vunpack.c.l.b16 %v3705
        %v3841 = vunpack.c.l.b16 %v3706
        %v3842 = vunpack.c.l.b16 %v3707
        %v3843 = vunpack.c.l.b16 %v3708
        %v3844 = vunpack.c.l.b16 %v3709
        %v3845 = vunpack.c.l.b16 %v3710
        %v3846 = vunpack.c.l.b16 %v3711
        %v3847 = vunpack.c.l.b16 %v3712
        %v3848 = vunpack.c.l.b16 %v3713
        %v3849 = vunpack.c.l.b16 %v3714
        %v3850 = vpack.c.b16 %v3787, %v3786
        %v3851 = vpack.c.b16 %v3789, %v3788
        %v3852 = vpack.c.b16 %v3791, %v3790
        %v3853 = vpack.c.b16 %v3793, %v3792
        %v3854 = vpack.c.b16 %v3795, %v3794
        %v3855 = vpack.c.b16 %v3797, %v3796
        %v3856 = vpack.c.b16 %v3799, %v3798
        %v3857 = vpack.c.b16 %v3801, %v3800
        %v3858 = vpack.c.b16 %v3803, %v3802
        %v3859 = vpack.c.b16 %v3805, %v3804
        %v3860 = vpack.c.b16 %v3807, %v3806
        %v3861 = vpack.c.b16 %v3809, %v3808
        %v3862 = vpack.c.b16 %v3811, %v3810
        %v3863 = vpack.c.b16 %v3813, %v3812
        %v3864 = vpack.c.b16 %v3815, %v3814
        %v3865 = vpack.c.b16 %v3817, %v3816
        %v3866 = vpack.c.b16 %v3819, %v3818
        %v3867 = vpack.c.b16 %v3821, %v3820
        %v3868 = vpack.c.b16 %v3823, %v3822
        %v3869 = vpack.c.b16 %v3825, %v3824
        %v3870 = vpack.c.b16 %v3827, %v3826
        %v3871 = vpack.c.b16 %v3829, %v3828
        %v3872 = vpack.c.b16 %v3831, %v3830
        %v3873 = vpack.c.b16 %v3833, %v3832
        %v3874 = vpack.c.b16 %v3835, %v3834
        %v3875 = vpack.c.b16 %v3837, %v3836
        %v3876 = vpack.c.b16 %v3839, %v3838
        %v3877 = vpack.c.b16 %v3841, %v3840
        %v3878 = vpack.c.b16 %v3843, %v3842
        %v3879 = vpack.c.b16 %v3845, %v3844
        %v3880 = vpack.c.b16 %v3847, %v3846
        %v3881 = vpack.c.b16 %v3849, %v3848
        %3914 = vmatprep.subr.bf16.mxu0 0
        %3915 = vmatpush1.bf16.msra.mxu0 %v3850
        %3916 = vmatprep.subr.bf16.mxu0 0
        %3917 = vmatpush1.bf16.msra.mxu0 %v3851
        %3918 = vmatprep.subr.bf16.mxu0 0
        %3919 = vmatpush1.bf16.msra.mxu0 %v3852
        %3920 = vmatprep.subr.bf16.mxu0 0
        %3921 = vmatpush1.bf16.msra.mxu0 %v3853
        %3922 = vmatprep.subr.bf16.mxu0 0
        %3923 = vmatpush1.bf16.msra.mxu0 %v3854
        %3924 = vmatprep.subr.bf16.mxu0 0
        %3925 = vmatpush1.bf16.msra.mxu0 %v3855
        %3926 = vmatprep.subr.bf16.mxu0 0
        %3927 = vmatpush1.bf16.msra.mxu0 %v3856
        %3928 = vmatprep.subr.bf16.mxu0 0
        %3929 = vmatpush1.bf16.msra.mxu0 %v3857
        %3930 = vmatprep.subr.bf16.mxu0 0
        %3931 = vmatpush1.bf16.msra.mxu0 %v3858
        %3932 = vmatprep.subr.bf16.mxu0 0
        %3933 = vmatpush1.bf16.msra.mxu0 %v3859
        %3934 = vmatprep.subr.bf16.mxu0 0
        %3935 = vmatpush1.bf16.msra.mxu0 %v3860
        %3936 = vmatprep.subr.bf16.mxu0 0
        %3937 = vmatpush1.bf16.msra.mxu0 %v3861
        %3938 = vmatprep.subr.bf16.mxu0 0
        %3939 = vmatpush1.bf16.msra.mxu0 %v3862
        %3940 = vmatprep.subr.bf16.mxu0 0
        %3941 = vmatpush1.bf16.msra.mxu0 %v3863
        %3942 = vmatprep.subr.bf16.mxu0 0
        %3943 = vmatpush1.bf16.msra.mxu0 %v3864
        %3944 = vmatprep.subr.bf16.mxu0 0
        %3945 = vmatpush1.bf16.msra.mxu0 %v3865
        %3946 = vmatprep.mubr.bf16.mxu0 %v3648
        %3947 = vmatmul.mubr.bf16.gmra.mrb[0].mxu0 %v3647
        %v3948 = vpop.f32.mrb[0].mxu0
        %v3949 = vadd.f32 %v3720, %v3948
        %v3950 = vpop.f32.mrb[0].mxu0
        %v3951 = vpop.f32.mrb[0].mxu0
        %v3952 = vadd.f32 %v3720, %v3951
        %v3953 = vpop.f32.mrb[0].mxu0
        %3954 = vdwg.mxu0
        %3955 = vmatprep.subr.bf16.mxu0 0
        %3956 = vmatpush1.bf16.msra.mxu0 %v3866
        %3957 = vmatprep.subr.bf16.mxu0 0
        %3958 = vmatpush1.bf16.msra.mxu0 %v3867
        %3959 = vmatprep.subr.bf16.mxu0 0
        %3960 = vmatpush1.bf16.msra.mxu0 %v3868
        %3961 = vmatprep.subr.bf16.mxu0 0
        %3962 = vmatpush1.bf16.msra.mxu0 %v3869
        %3963 = vmatprep.subr.bf16.mxu0 0
        %3964 = vmatpush1.bf16.msra.mxu0 %v3870
        %3965 = vmatprep.subr.bf16.mxu0 0
        %3966 = vmatpush1.bf16.msra.mxu0 %v3871
        %3967 = vmatprep.subr.bf16.mxu0 0
        %3968 = vmatpush1.bf16.msra.mxu0 %v3872
        %3969 = vmatprep.subr.bf16.mxu0 0
        %3970 = vmatpush1.bf16.msra.mxu0 %v3873
        %3971 = vmatprep.subr.bf16.mxu0 0
        %3972 = vmatpush1.bf16.msra.mxu0 %v3874
        %3973 = vmatprep.subr.bf16.mxu0 0
        %3974 = vmatpush1.bf16.msra.mxu0 %v3875
        %3975 = vmatprep.subr.bf16.mxu0 0
        %3976 = vmatpush1.bf16.msra.mxu0 %v3876
        %3977 = vmatprep.subr.bf16.mxu0 0
        %3978 = vmatpush1.bf16.msra.mxu0 %v3877
        %3979 = vmatprep.subr.bf16.mxu0 0
        %3980 = vmatpush1.bf16.msra.mxu0 %v3878
        %3981 = vmatprep.subr.bf16.mxu0 0
        %3982 = vmatpush1.bf16.msra.mxu0 %v3879
        %3983 = vmatprep.subr.bf16.mxu0 0
        %3984 = vmatpush1.bf16.msra.mxu0 %v3880
        %3985 = vmatprep.subr.bf16.mxu0 0
        %3986 = vmatpush1.bf16.msra.mxu0 %v3881
        %3987 = vmatprep.mubr.bf16.mxu0 %v3650
        %3988 = vmatmul.mubr.bf16.gmra.mrb[0].mxu0 %v3649
        %v3989 = vpop.f32.mrb[0].mxu0
        %v3990 = vadd.f32 %v3949, %v3989
        %v3991 = vpop.f32.mrb[0].mxu0
        %v3992 = vpop.f32.mrb[0].mxu0
        %v3993 = vadd.f32 %v3952, %v3992
        %v3994 = vpop.f32.mrb[0].mxu0
        %3995 = vdwg.mxu0
        %v3996 = vadd.f32 %v3292, %v3990
        %v3997 = vadd.f32 %v3293, %v3993
        %3998 = vst [vmem:[%s795] sm:$0xff] %v3996
        %3999 = vst [vmem:[%s795 + $0x8] sm:$0xff] %v3997
        %s4000 = smul.u32 2, %s37
        %p4001 = scmp.lt.s32.totalorder %s4000, 3
        %s4002 = scalar_select %p4001, %s4000, 3
        %s4003 = smul.addr %s4002, 8
        %s4004 = scalar_lea.vmem %s18, %s4003
        // Predicated region
        $region153: #{decoder_forward_pallas.4} parent=91 // pred_check
          %p4005 = pneg %p443
        $region154: #{decoder_forward_pallas.4} parent=91 // pred_check_branch
          %4007 = sbr.rel (%p4005) target = $region156
        $region155: #{decoder_forward_pallas.4} parent=91 // pred_region
          %s4008 = smul.u32 2, %s37
        $region156: #{decoder_forward_pallas.4} parent=91 // pred_fallthru
          _
      $region92: #{decoder_forward_pallas.4} parent=5 // pred_fallthru
        _
      %p4009 = scmp.le.s32.totalorder 2, %s32
      // Predicated region
      $region157: #{decoder_forward_pallas.4} parent=5 // pred_check
        %p4010 = pneg %p4009
      $region158: #{decoder_forward_pallas.4} parent=5 // pred_check_branch
        %4012 = sbr.rel (%p4010) target = $region160
      $region159: #{decoder_forward_pallas.4} parent=5 // pred_region
        %s4013 = ssub.s32 %s32, 2
        // Predicated region
        $region161: #{decoder_forward_pallas.4} parent=159 // pred_check
          %p4014 = pneg %p449
        $region162: #{decoder_forward_pallas.4} parent=159 // pred_check_branch
          %4016 = sbr.rel (%p4014) target = $region164
        $region163: #{decoder_forward_pallas.4} parent=159 // pred_region
          %s4017 = smul.u32 2, %s38
          %p4018 = scmp.lt.s32.totalorder %s4017, 3
          %s4019 = scalar_select %p4018, %s4017, 3
          %s4020 = smul.addr %s4019, 8
          %s4021 = scalar_lea.vmem %s18, %s4020
        $region164: #{decoder_forward_pallas.4} parent=159 // pred_fallthru
          _
      $region160: #{decoder_forward_pallas.4} parent=5 // pred_fallthru
        _
    $region6: #{decoder_forward_pallas.4} parent=1 // loop_footer
      %s36 = sadd.s32 1, %s32
    $region7: #{decoder_forward_pallas.4} parent=1 // loop_footer_branch
      %31 = sbr.rel target = $region3
    $region8: #{decoder_forward_pallas.4} parent=1 // loop_exit
      _
    %4022 = vsyncpa [#allocation3], 1
    %s4023 = scalar_lea.sflag [#allocation3], 1
    %4024 = vsyncpa %s4023, 1
    %4025 = vsyncpa [#allocation5], 1
    %4026 = vsyncpa [#allocation8], 1
    %4027 = vsyncpa [#allocation11], 1
    %4028 = vsyncpa [#allocation14], 1
    %4029 = vsyncpa [#allocation17], 1
    %4030 = vsyncpa [#allocation20], 1
    %4031 = vsyncpa [#allocation23], 1

</llo_original>
